<compile_context>
chip_gen: v5e
topology: v5e:2x2
jax: 0.10.0
libtpu: 0.0.40
codegen_flags: <defaults>
</compile_context>

<pallas_src>
import functools

import jax
import jax.numpy as jnp
from jax.experimental import pallas as pl
from jax.experimental.pallas import tpu as pltpu

F32 = jnp.float32
MXU_DTYPE = jnp.bfloat16            # MXU operand dtype; accumulation stays f32


# ---------------------------------------------------------------------------
# in-kernel helpers
# ---------------------------------------------------------------------------
def _gelu(x):
    # TODO(synk): PyTorch F.gelu defaults to the exact erf form; the tanh
    # approximation is used here for guaranteed TPU (EUP) lowering.
    c = jnp.asarray(0.7978845608028654, x.dtype)   # sqrt(2/pi)
    return 0.5 * x * (1.0 + jnp.tanh(c * (x + 0.044715 * x * x * x)))


def _shift2d(x3, dy, dx):
    """y[h, w, :] = x3[h+dy, w+dx, :] with zero fill outside the image.

    dy/dx are static ints in {-1, 0, 1}.  dy shifts the leading (vreg) dim
    (free); dx is a 1-sublane shift.  Replaces the old zero-bordered VMEM
    scratch + tile-crossing slices (no scratch, no relayout copies).
    """
    H, W, C = x3.shape
    if dy:
        z = jnp.zeros((abs(dy), W, C), x3.dtype)
        x3 = (jnp.concatenate([x3[dy:], z], axis=0) if dy > 0
              else jnp.concatenate([z, x3[:H + dy]], axis=0))
    if dx:
        z = jnp.zeros((H, abs(dx), C), x3.dtype)
        x3 = (jnp.concatenate([x3[:, dx:], z], axis=1) if dx > 0
              else jnp.concatenate([z, x3[:, :W + dx]], axis=1))
    return x3


def _conv3x3(x2, w, H, W):
    """Full 3x3 conv (padding=1) as 9 shifted channel matmuls on the MXU.

    x2: (H*W, Cin) f32;  w: (9*Cin, Cout) bf16, tap-major (ky, kx)."""
    N, cin = x2.shape
    x3 = x2.reshape(H, W, cin)
    acc = None
    for t in range(9):
        dy, dx = t // 3 - 1, t % 3 - 1
        xt = _shift2d(x3, dy, dx).reshape(N, cin).astype(MXU_DTYPE)
        y = jnp.dot(xt, w[t * cin:(t + 1) * cin, :],
                    preferred_element_type=jnp.float32)
        acc = y if acc is None else acc + y
    return acc


def _dwconv3x3(x2, w9, H, W):
    """Depthwise (groups=C) 3x3 conv, padding=1 (pure VPU work).

    x2: (H*W, C) f32;  w9: (9, C) f32, tap-major."""
    N, c = x2.shape
    x3 = x2.reshape(H, W, c)
    acc = jnp.zeros((N, c), jnp.float32)
    for t in range(9):
        dy, dx = t // 3 - 1, t % 3 - 1
        acc = acc + _shift2d(x3, dy, dx).reshape(N, c) * w9[t:t + 1, :]
    return acc


def _resblock(x, w_ref, b_ref, H, W):
    """conv3x3 -> relu -> conv3x3 (+x) -> relu -> conv3x3 + bias."""
    y = jnp.maximum(_conv3x3(x, w_ref[0, 0], H, W), 0.0)
    y = jnp.maximum(_conv3x3(y, w_ref[0, 1], H, W) + x, 0.0)
    return _conv3x3(y, w_ref[0, 2], H, W) + b_ref[0]


def _msab(x2, wqkv, rescale, pw, pb, pe1, pe2, ln_g, ln_b, fw1, fdw, fw2, H, W):
    """MS-MSA (+residual), then PreNorm(LayerNorm) -> FeedForward (+residual)."""
    N, C = x2.shape
    # --- MS-MSA (heads=1): q/k/v projection as ONE [C, 3C] matmul -------------
    qkv = jnp.dot(x2.astype(MXU_DTYPE), wqkv, preferred_element_type=jnp.float32)
    q, k, v = qkv[:, :C], qkv[:, C:2 * C], qkv[:, 2 * C:]
    # F.normalize along the token axis (EUP rsqrt instead of VALU divide)
    eps2 = 1e-24                                   # (1e-12)**2
    qn = q * jax.lax.rsqrt(jnp.maximum(jnp.sum(q * q, axis=0, keepdims=True), eps2))
    kn = k * jax.lax.rsqrt(jnp.maximum(jnp.sum(k * k, axis=0, keepdims=True), eps2))
    # attn[i, j] = sum_n kn[n, i] * qn[n, j]  -> (C, C); tiny, kept f32
    attn = jax.lax.dot_general(kn, qn, (((0,), (0,)), ((), ())),
                               preferred_element_type=jnp.float32) * rescale
    attn = attn - jnp.max(attn, axis=-1, keepdims=True)
    e = jnp.exp(attn)
    prob = e * pl.reciprocal(jnp.sum(e, axis=-1, keepdims=True), approx=True)
    # res[n, i] = sum_j v[n, j] * prob[i, j]
    res = jax.lax.dot_general(v, prob, (((1,), (1,)), ((), ())),
                              preferred_element_type=jnp.float32)
    out_attn = jnp.dot(res.astype(MXU_DTYPE), pw,
                       preferred_element_type=jnp.float32) + pb
    # positional-embedding branch: dw3x3 -> gelu -> dw3x3 on v
    pe = _dwconv3x3(v, pe1, H, W)
    pe = _dwconv3x3(_gelu(pe), pe2, H, W)
    x_attn = x2 + out_attn + pe                    # MS-MSA output + residual
    # --- PreNorm: LayerNorm over channels, then FeedForward, + residual -------
    mu = jnp.mean(x_attn, axis=-1, keepdims=True)
    xc = x_attn - mu
    var = jnp.mean(xc * xc, axis=-1, keepdims=True)
    xn = xc * jax.lax.rsqrt(var + 1e-5) * ln_g + ln_b
    y = _gelu(jnp.dot(xn.astype(MXU_DTYPE), fw1,
                      preferred_element_type=jnp.float32))      # 1x1: C -> 4C
    y = _gelu(_dwconv3x3(y, fdw, H, W))                         # dw3x3 on 4C
    y = jnp.dot(y.astype(MXU_DTYPE), fw2,
                preferred_element_type=jnp.float32)             # 1x1: 4C -> C
    return x_attn + y


# ---------------------------------------------------------------------------
# the single fused kernel: one grid step == one full rt_block
# ---------------------------------------------------------------------------
def _mstnet_kernel(x0_ref, srcw_ref, rb0w_ref, rb0b_ref, r1w_ref, r1b_ref,
                   wqkv_ref, rescale_ref, pw_ref, pb_ref, pe1_ref, pe2_ref,
                   lng_ref, lnb_ref, fw1_ref, fdw_ref, fw2_ref,
                   r2w_ref, r2b_ref, rb3w_ref, rb3b_ref,
                   out_ref, rgb_ref, *, H, W):
    r = pl.program_id(1)                  # rt-block index (inner, "arbitrary")

    # The 31-channel running output stays resident in VMEM across the whole
    # rt-block axis.  Zeroing it at r == 0 makes prev == 0, so the bridge
    # degenerates to x0 and the tail residual add is a no-op — exactly the
    # reference behaviour for the first block.
    @pl.when(r == 0)
    def _():
        out_ref[...] = jnp.zeros_like(out_ref)

    prev = out_ref[0]                     # (N, 31) running output
    x0 = x0_ref[0]                        # (N, 3)  original RGB input

    # bridge / head: inp_i = x0 - SRC(prev);  h = conv1x1(inp_i) + bias
    inp = x0 - jnp.dot(prev.astype(MXU_DTYPE), srcw_ref[...],
                       preferred_element_type=jnp.float32)
    h = jnp.dot(inp.astype(MXU_DTYPE), rb0w_ref[0],
                preferred_element_type=jnp.float32) + rb0b_ref[0]

    h = _resblock(h, r1w_ref, r1b_ref, H, W)
    h = _msab(h, wqkv_ref[0], rescale_ref[r], pw_ref[0], pb_ref[0],
              pe1_ref[0], pe2_ref[0], lng_ref[0], lnb_ref[0],
              fw1_ref[0], fdw_ref[0], fw2_ref[0], H, W)
    h = _resblock(h, r2w_ref, r2b_ref, H, W)

    # tail: out = prev + conv1x1(h) + bias   (prev == 0 on the first rt-block)
    new_out = prev + jnp.dot(h.astype(MXU_DTYPE), rb3w_ref[0],
                             preferred_element_type=jnp.float32) + rb3b_ref[0]
    out_ref[0] = new_out

    # final SRC projection (31 -> 3) fused into the last rt-block step
    @pl.when(r == pl.num_programs(1) - 1)
    def _():
        rgb_ref[0] = jnp.dot(new_out.astype(MXU_DTYPE), srcw_ref[...],
                             preferred_element_type=jnp.float32)


# ---------------------------------------------------------------------------
# wrapper: NCHW in / NCHW out, ONE pallas_call for the entire forward
# ---------------------------------------------------------------------------
def modelnet_forward(x_nchw, p):
    """x_nchw: [B, 3, H, W] -> (out [B, 31, H, W], rgb [B, 3, H, W])."""
    B, _, H, W = x_nchw.shape
    N = H * W
    nb = p["wqkv"].shape[0]
    x0 = jnp.transpose(x_nchw, (0, 2, 3, 1)).reshape(B, N, 3).astype(F32)

    def blk(a):      # per-rt-block weight slab, streamed along grid axis 1
        return pl.BlockSpec((1,) + a.shape[1:],
                            lambda b, r, _n=a.ndim - 1: (r,) + (0,) * _n)

    def full(a):     # shared weight, resident for the whole grid
        return pl.BlockSpec(a.shape, lambda b, r, _n=a.ndim: (0,) * _n)

    x_spec = pl.BlockSpec((1, N, 3), lambda b, r: (b, 0, 0))
    out_spec = pl.BlockSpec((1, N, 31), lambda b, r: (b, 0, 0))   # resident over r
    rgb_spec = pl.BlockSpec((1, N, 3), lambda b, r: (b, 0, 0))

    in_specs = [
        x_spec, full(p["src_w"]),
        blk(p["rb0_w"]), blk(p["rb0_b"]),
        blk(p["res1_w"]), blk(p["res1_b"]),
        blk(p["wqkv"]),
        pl.BlockSpec(memory_space=pltpu.MemorySpace.SMEM),        # rescale (nb,)
        blk(p["pw"]), blk(p["pb"]), blk(p["pe_dw1"]), blk(p["pe_dw2"]),
        blk(p["ln_g"]), blk(p["ln_b"]),
        blk(p["fw1"]), blk(p["fdw"]), blk(p["fw2"]),
        blk(p["res2_w"]), blk(p["res2_b"]),
        blk(p["rb3_w"]), blk(p["rb3_b"]),
    ]

    out, rgb = pl.pallas_call(
        functools.partial(_mstnet_kernel, H=H, W=W),
        grid=(B, nb),
        out_shape=(jax.ShapeDtypeStruct((B, N, 31), F32),
                   jax.ShapeDtypeStruct((B, N, 3), F32)),
        in_specs=in_specs,
        out_specs=(out_spec, rgb_spec),
        compiler_params=pltpu.CompilerParams(
            dimension_semantics=("parallel", "arbitrary")),
    )(x0, p["src_w"], p["rb0_w"], p["rb0_b"], p["res1_w"], p["res1_b"],
      p["wqkv"], p["rescale"], p["pw"], p["pb"], p["pe_dw1"], p["pe_dw2"],
      p["ln_g"], p["ln_b"], p["fw1"], p["fdw"], p["fw2"],
      p["res2_w"], p["res2_b"], p["rb3_w"], p["rb3_b"])

    out = jnp.transpose(out.reshape(B, H, W, 31), (0, 3, 1, 2))
    rgb = jnp.transpose(rgb.reshape(B, H, W, 3), (0, 3, 1, 2))
    return out, rgb


# ---------------------------------------------------------------------------
# deterministic parameter construction
# ---------------------------------------------------------------------------
class ParamGen:
    def __init__(self, key):
        self._key = key

    def normal(self, shape, scale=0.05):
        self._key, sub = jax.random.split(self._key)
        return scale * jax.random.normal(sub, shape, dtype=F32)


def init_modelnet(pg, C, n_blocks=8):
    # NOTE: ResidualBlock.down_conv is never used on this forward path
    # (downsample=0), so its parameters are intentionally not materialized.
    # Conv3x3 weights are stored tap-major: rows = (ky, kx, cin), cols = cout.
    nb = n_blocks
    return dict(
        src_w=pg.normal((31, 3)),                         # shared SRC 31 -> 3
        rb0_w=pg.normal((nb, 3, C)), rb0_b=pg.normal((nb, 1, C)),
        res1_w=pg.normal((nb, 3, 9 * C, C)), res1_b=pg.normal((nb, 1, C)),
        wqkv=pg.normal((nb, C, 3 * C)),                   # concatenated wq|wk|wv
        rescale=jnp.ones((nb,), F32),
        pw=pg.normal((nb, C, C)), pb=pg.normal((nb, 1, C)),
        pe_dw1=pg.normal((nb, 9, C)), pe_dw2=pg.normal((nb, 9, C)),
        ln_g=jnp.ones((nb, 1, C), F32), ln_b=jnp.zeros((nb, 1, C), F32),
        fw1=pg.normal((nb, C, 4 * C)), fdw=pg.normal((nb, 9, 4 * C)),
        fw2=pg.normal((nb, 4 * C, C)),
        res2_w=pg.normal((nb, 3, 9 * C, C)), res2_b=pg.normal((nb, 1, C)),
        rb3_w=pg.normal((nb, C, 31)), rb3_b=pg.normal((nb, 1, 31)),
    )


_MXU_WEIGHTS = ("src_w", "rb0_w", "res1_w", "wqkv", "pw", "fw1", "fw2",
                "res2_w", "rb3_w")


def prepare_params(p):
    """Pre-cast every MXU weight to bf16 once; VPU/EUP data stays f32."""
    return {k: (v.astype(MXU_DTYPE) if k in _MXU_WEIGHTS else v.astype(F32))
            for k, v in p.items()}


if __name__ == "__main__":
    B, C, H, W = 2, 16, 8, 8          # small shapes: batch=2, channels=16, 8x8
    key = jax.random.PRNGKey(0)
    kx, kp = jax.random.split(key)
    x = jax.random.normal(kx, (B, 3, H, W), dtype=F32)    # NCHW like PyTorch
    params = prepare_params(init_modelnet(ParamGen(kp), C))

    fwd = jax.jit(modelnet_forward)
    out, rgb = fwd(x, params)
    jax.block_until_ready((out, rgb))
    assert out.shape == (B, 31, H, W), out.shape
    assert rgb.shape == (B, 3, H, W), rgb.shape
    assert bool(jnp.all(jnp.isfinite(out))) and bool(jnp.all(jnp.isfinite(rgb)))
    print("KERNEL_OK")
</pallas_src>

<mosaic_0001>
module attributes {stable_mosaic.version = 11 : i64} {
  func.func @_mstnet_kernel(%arg0: i32, %arg1: i32, %arg2: memref<1x64x3xf32, #tpu.memory_space<vmem>>, %arg3: memref<31x3xbf16, #tpu.memory_space<vmem>>, %arg4: memref<1x3x16xbf16, #tpu.memory_space<vmem>>, %arg5: memref<1x1x16xf32, #tpu.memory_space<vmem>>, %arg6: memref<1x3x144x16xbf16, #tpu.memory_space<vmem>>, %arg7: memref<1x1x16xf32, #tpu.memory_space<vmem>>, %arg8: memref<1x16x48xbf16, #tpu.memory_space<vmem>>, %arg9: memref<8xf32, #tpu.memory_space<smem>>, %arg10: memref<1x16x16xbf16, #tpu.memory_space<vmem>>, %arg11: memref<1x1x16xf32, #tpu.memory_space<vmem>>, %arg12: memref<1x9x16xf32, #tpu.memory_space<vmem>>, %arg13: memref<1x9x16xf32, #tpu.memory_space<vmem>>, %arg14: memref<1x1x16xf32, #tpu.memory_space<vmem>>, %arg15: memref<1x1x16xf32, #tpu.memory_space<vmem>>, %arg16: memref<1x16x64xbf16, #tpu.memory_space<vmem>>, %arg17: memref<1x9x64xf32, #tpu.memory_space<vmem>>, %arg18: memref<1x64x16xbf16, #tpu.memory_space<vmem>>, %arg19: memref<1x3x144x16xbf16, #tpu.memory_space<vmem>>, %arg20: memref<1x1x16xf32, #tpu.memory_space<vmem>>, %arg21: memref<1x16x31xbf16, #tpu.memory_space<vmem>>, %arg22: memref<1x1x31xf32, #tpu.memory_space<vmem>>, %arg23: memref<1x64x31xf32, #tpu.memory_space<vmem>>, %arg24: memref<1x64x3xf32, #tpu.memory_space<vmem>>) attributes {dimension_semantics = [#tpu.dimension_semantics<parallel>, #tpu.dimension_semantics<arbitrary>], iteration_bounds = array<i64: 2, 8>, scalar_prefetch = 0 : i64, scratch_operands = 0 : i64, tpu.core_type = #tpu.core_type<tc>, window_params = [{transform_indices = @transform_0, window_bounds = array<i64: 1, 64, 3>}, {pipeline_mode = #tpu.pipeline_mode<synchronous>, transform_indices = @transform_1, window_bounds = array<i64: 31, 3>}, {transform_indices = @transform_2, window_bounds = array<i64: 1, 3, 16>}, {transform_indices = @transform_3, window_bounds = array<i64: 1, 1, 16>}, {transform_indices = @transform_4, window_bounds = array<i64: 1, 3, 144, 16>}, {transform_indices = @transform_5, window_bounds = array<i64: 1, 1, 16>}, {transform_indices = @transform_6, window_bounds = array<i64: 1, 16, 48>}, {transform_indices = @transform_7, window_bounds = array<i64: 8>}, {transform_indices = @transform_8, window_bounds = array<i64: 1, 16, 16>}, {transform_indices = @transform_9, window_bounds = array<i64: 1, 1, 16>}, {transform_indices = @transform_10, window_bounds = array<i64: 1, 9, 16>}, {transform_indices = @transform_11, window_bounds = array<i64: 1, 9, 16>}, {transform_indices = @transform_12, window_bounds = array<i64: 1, 1, 16>}, {transform_indices = @transform_13, window_bounds = array<i64: 1, 1, 16>}, {transform_indices = @transform_14, window_bounds = array<i64: 1, 16, 64>}, {transform_indices = @transform_15, window_bounds = array<i64: 1, 9, 64>}, {transform_indices = @transform_16, window_bounds = array<i64: 1, 64, 16>}, {transform_indices = @transform_17, window_bounds = array<i64: 1, 3, 144, 16>}, {transform_indices = @transform_18, window_bounds = array<i64: 1, 1, 16>}, {transform_indices = @transform_19, window_bounds = array<i64: 1, 16, 31>}, {transform_indices = @transform_20, window_bounds = array<i64: 1, 1, 31>}, {transform_indices = @transform_21, window_bounds = array<i64: 1, 64, 31>}, {transform_indices = @transform_22, window_bounds = array<i64: 1, 64, 3>}]} {
    %c0_i32 = arith.constant 0 : i32
    %0 = arith.cmpi eq, %arg1, %c0_i32 : i32
    %1 = arith.extui %0 : i1 to i32
    %c0_i32_0 = arith.constant 0 : i32
    %2 = arith.cmpi ne, %1, %c0_i32_0 : i32
    scf.if %2 {
      %cst_282 = arith.constant 0.000000e+00 : f32
      %926 = vector.broadcast %cst_282 : f32 to vector<1x64x31xf32>
      %c0_283 = arith.constant 0 : index
      %c0_284 = arith.constant 0 : index
      %c0_285 = arith.constant 0 : index
      %927 = vector.load %arg23[%c0_283, %c0_284, %c0_285] : memref<1x64x31xf32, #tpu.memory_space<vmem>>, vector<1x64x31xf32>
      tpu.vector_store %arg23[%c0_283, %c0_284, %c0_285], %926 {strides = array<i32>} : memref<1x64x31xf32, #tpu.memory_space<vmem>>, vector<1x64x31xf32>,
    } else {
    }
    %c0 = arith.constant 0 : index
    %c0_1 = arith.constant 0 : index
    %c0_2 = arith.constant 0 : index
    %3 = vector.load %arg23[%c0, %c0_1, %c0_2] : memref<1x64x31xf32, #tpu.memory_space<vmem>>, vector<1x64x31xf32>
    %4 = vector.shape_cast %3 : vector<1x64x31xf32> to vector<64x31xf32>
    %c0_3 = arith.constant 0 : index
    %c0_4 = arith.constant 0 : index
    %c0_5 = arith.constant 0 : index
    %5 = vector.load %arg2[%c0_3, %c0_4, %c0_5] : memref<1x64x3xf32, #tpu.memory_space<vmem>>, vector<1x64x3xf32>
    %6 = vector.shape_cast %5 : vector<1x64x3xf32> to vector<64x3xf32>
    %7 = arith.truncf %4 : vector<64x31xf32> to vector<64x31xbf16>
    %c0_6 = arith.constant 0 : index
    %c0_7 = arith.constant 0 : index
    %8 = vector.load %arg3[%c0_6, %c0_7] : memref<31x3xbf16, #tpu.memory_space<vmem>>, vector<31x3xbf16>
    %cst = arith.constant dense<0.000000e+00> : vector<64x3xf32>
    %9 = tpu.matmul %7, %8, %cst {dimension_numbers = #tpu.dot_dimension_numbers<[1], [0], [0], [1], [0, 0, 1, 1], [], []>} : vector<64x31xbf16>, vector<31x3xbf16>, vector<64x3xf32> -> vector<64x3xf32>
    %10 = arith.subf %6, %9 : vector<64x3xf32>
    %11 = arith.truncf %10 : vector<64x3xf32> to vector<64x3xbf16>
    %c0_8 = arith.constant 0 : index
    %c0_9 = arith.constant 0 : index
    %c0_10 = arith.constant 0 : index
    %12 = vector.load %arg4[%c0_8, %c0_9, %c0_10] : memref<1x3x16xbf16, #tpu.memory_space<vmem>>, vector<1x3x16xbf16>
    %13 = vector.shape_cast %12 : vector<1x3x16xbf16> to vector<3x16xbf16>
    %cst_11 = arith.constant dense<0.000000e+00> : vector<64x16xf32>
    %14 = tpu.matmul %11, %13, %cst_11 {dimension_numbers = #tpu.dot_dimension_numbers<[1], [0], [0], [1], [0, 0, 1, 1], [], []>} : vector<64x3xbf16>, vector<3x16xbf16>, vector<64x16xf32> -> vector<64x16xf32>
    %c0_12 = arith.constant 0 : index
    %c0_13 = arith.constant 0 : index
    %c0_14 = arith.constant 0 : index
    %15 = vector.load %arg5[%c0_12, %c0_13, %c0_14] : memref<1x1x16xf32, #tpu.memory_space<vmem>>, vector<1x1x16xf32>
    %16 = vector.shape_cast %15 : vector<1x1x16xf32> to vector<1x16xf32>
    %17 = vector.broadcast %16 : vector<1x16xf32> to vector<64x16xf32>
    %18 = arith.addf %14, %17 : vector<64x16xf32>
    %c0_15 = arith.constant 0 : index
    %c0_16 = arith.constant 0 : index
    %c0_17 = arith.constant 0 : index
    %c0_18 = arith.constant 0 : index
    %19 = vector.load %arg6[%c0_15, %c0_16, %c0_17, %c0_18] : memref<1x3x144x16xbf16, #tpu.memory_space<vmem>>, vector<1x1x144x16xbf16>
    %20 = vector.shape_cast %19 : vector<1x1x144x16xbf16> to vector<144x16xbf16>
    %21 = vector.shape_cast %18 : vector<64x16xf32> to vector<8x8x16xf32>
    %cst_19 = arith.constant 0.000000e+00 : f32
    %22 = vector.broadcast %cst_19 : f32 to vector<1x8x16xf32>
    %23 = vector.extract_strided_slice %21 {offsets = [0, 0, 0], sizes = [7, 8, 16], strides = [1, 1, 1]} : vector<8x8x16xf32> to vector<7x8x16xf32>
    %24 = tpu.concatenate %22, %23 in 0 : vector<1x8x16xf32>, vector<7x8x16xf32> -> vector<8x8x16xf32>
    %cst_20 = arith.constant 0.000000e+00 : f32
    %25 = vector.broadcast %cst_20 : f32 to vector<8x1x16xf32>
    %26 = vector.extract_strided_slice %24 {offsets = [0, 0, 0], sizes = [8, 7, 16], strides = [1, 1, 1]} : vector<8x8x16xf32> to vector<8x7x16xf32>
    %27 = tpu.concatenate %25, %26 in 1 : vector<8x1x16xf32>, vector<8x7x16xf32> -> vector<8x8x16xf32>
    %28 = vector.shape_cast %27 : vector<8x8x16xf32> to vector<64x16xf32>
    %29 = arith.truncf %28 : vector<64x16xf32> to vector<64x16xbf16>
    %30 = vector.extract_strided_slice %20 {offsets = [0, 0], sizes = [16, 16], strides = [1, 1]} : vector<144x16xbf16> to vector<16x16xbf16>
    %cst_21 = arith.constant dense<0.000000e+00> : vector<64x16xf32>
    %31 = tpu.matmul %29, %30, %cst_21 {dimension_numbers = #tpu.dot_dimension_numbers<[1], [0], [0], [1], [0, 0, 1, 1], [], []>} : vector<64x16xbf16>, vector<16x16xbf16>, vector<64x16xf32> -> vector<64x16xf32>
    %cst_22 = arith.constant 0.000000e+00 : f32
    %32 = vector.broadcast %cst_22 : f32 to vector<1x8x16xf32>
    %33 = vector.extract_strided_slice %21 {offsets = [0, 0, 0], sizes = [7, 8, 16], strides = [1, 1, 1]} : vector<8x8x16xf32> to vector<7x8x16xf32>
    %34 = tpu.concatenate %32, %33 in 0 : vector<1x8x16xf32>, vector<7x8x16xf32> -> vector<8x8x16xf32>
    %35 = vector.shape_cast %34 : vector<8x8x16xf32> to vector<64x16xf32>
    %36 = arith.truncf %35 : vector<64x16xf32> to vector<64x16xbf16>
    %37 = vector.extract_strided_slice %20 {offsets = [16, 0], sizes = [16, 16], strides = [1, 1]} : vector<144x16xbf16> to vector<16x16xbf16>
    %cst_23 = arith.constant dense<0.000000e+00> : vector<64x16xf32>
    %38 = tpu.matmul %36, %37, %cst_23 {dimension_numbers = #tpu.dot_dimension_numbers<[1], [0], [0], [1], [0, 0, 1, 1], [], []>} : vector<64x16xbf16>, vector<16x16xbf16>, vector<64x16xf32> -> vector<64x16xf32>
    %39 = arith.addf %31, %38 : vector<64x16xf32>
    %cst_24 = arith.constant 0.000000e+00 : f32
    %40 = vector.broadcast %cst_24 : f32 to vector<1x8x16xf32>
    %41 = vector.extract_strided_slice %21 {offsets = [0, 0, 0], sizes = [7, 8, 16], strides = [1, 1, 1]} : vector<8x8x16xf32> to vector<7x8x16xf32>
    %42 = tpu.concatenate %40, %41 in 0 : vector<1x8x16xf32>, vector<7x8x16xf32> -> vector<8x8x16xf32>
    %cst_25 = arith.constant 0.000000e+00 : f32
    %43 = vector.broadcast %cst_25 : f32 to vector<8x1x16xf32>
    %44 = vector.extract_strided_slice %42 {offsets = [0, 1, 0], sizes = [8, 7, 16], strides = [1, 1, 1]} : vector<8x8x16xf32> to vector<8x7x16xf32>
    %45 = tpu.concatenate %44, %43 in 1 : vector<8x7x16xf32>, vector<8x1x16xf32> -> vector<8x8x16xf32>
    %46 = vector.shape_cast %45 : vector<8x8x16xf32> to vector<64x16xf32>
    %47 = arith.truncf %46 : vector<64x16xf32> to vector<64x16xbf16>
    %48 = vector.extract_strided_slice %20 {offsets = [32, 0], sizes = [16, 16], strides = [1, 1]} : vector<144x16xbf16> to vector<16x16xbf16>
    %cst_26 = arith.constant dense<0.000000e+00> : vector<64x16xf32>
    %49 = tpu.matmul %47, %48, %cst_26 {dimension_numbers = #tpu.dot_dimension_numbers<[1], [0], [0], [1], [0, 0, 1, 1], [], []>} : vector<64x16xbf16>, vector<16x16xbf16>, vector<64x16xf32> -> vector<64x16xf32>
    %50 = arith.addf %39, %49 : vector<64x16xf32>
    %cst_27 = arith.constant 0.000000e+00 : f32
    %51 = vector.broadcast %cst_27 : f32 to vector<8x1x16xf32>
    %52 = vector.extract_strided_slice %21 {offsets = [0, 0, 0], sizes = [8, 7, 16], strides = [1, 1, 1]} : vector<8x8x16xf32> to vector<8x7x16xf32>
    %53 = tpu.concatenate %51, %52 in 1 : vector<8x1x16xf32>, vector<8x7x16xf32> -> vector<8x8x16xf32>
    %54 = vector.shape_cast %53 : vector<8x8x16xf32> to vector<64x16xf32>
    %55 = arith.truncf %54 : vector<64x16xf32> to vector<64x16xbf16>
    %56 = vector.extract_strided_slice %20 {offsets = [48, 0], sizes = [16, 16], strides = [1, 1]} : vector<144x16xbf16> to vector<16x16xbf16>
    %cst_28 = arith.constant dense<0.000000e+00> : vector<64x16xf32>
    %57 = tpu.matmul %55, %56, %cst_28 {dimension_numbers = #tpu.dot_dimension_numbers<[1], [0], [0], [1], [0, 0, 1, 1], [], []>} : vector<64x16xbf16>, vector<16x16xbf16>, vector<64x16xf32> -> vector<64x16xf32>
    %58 = arith.addf %50, %57 : vector<64x16xf32>
    %59 = vector.shape_cast %21 : vector<8x8x16xf32> to vector<64x16xf32>
    %60 = arith.truncf %59 : vector<64x16xf32> to vector<64x16xbf16>
    %61 = vector.extract_strided_slice %20 {offsets = [64, 0], sizes = [16, 16], strides = [1, 1]} : vector<144x16xbf16> to vector<16x16xbf16>
    %cst_29 = arith.constant dense<0.000000e+00> : vector<64x16xf32>
    %62 = tpu.matmul %60, %61, %cst_29 {dimension_numbers = #tpu.dot_dimension_numbers<[1], [0], [0], [1], [0, 0, 1, 1], [], []>} : vector<64x16xbf16>, vector<16x16xbf16>, vector<64x16xf32> -> vector<64x16xf32>
    %63 = arith.addf %58, %62 : vector<64x16xf32>
    %cst_30 = arith.constant 0.000000e+00 : f32
    %64 = vector.broadcast %cst_30 : f32 to vector<8x1x16xf32>
    %65 = vector.extract_strided_slice %21 {offsets = [0, 1, 0], sizes = [8, 7, 16], strides = [1, 1, 1]} : vector<8x8x16xf32> to vector<8x7x16xf32>
    %66 = tpu.concatenate %65, %64 in 1 : vector<8x7x16xf32>, vector<8x1x16xf32> -> vector<8x8x16xf32>
    %67 = vector.shape_cast %66 : vector<8x8x16xf32> to vector<64x16xf32>
    %68 = arith.truncf %67 : vector<64x16xf32> to vector<64x16xbf16>
    %69 = vector.extract_strided_slice %20 {offsets = [80, 0], sizes = [16, 16], strides = [1, 1]} : vector<144x16xbf16> to vector<16x16xbf16>
    %cst_31 = arith.constant dense<0.000000e+00> : vector<64x16xf32>
    %70 = tpu.matmul %68, %69, %cst_31 {dimension_numbers = #tpu.dot_dimension_numbers<[1], [0], [0], [1], [0, 0, 1, 1], [], []>} : vector<64x16xbf16>, vector<16x16xbf16>, vector<64x16xf32> -> vector<64x16xf32>
    %71 = arith.addf %63, %70 : vector<64x16xf32>
    %cst_32 = arith.constant 0.000000e+00 : f32
    %72 = vector.broadcast %cst_32 : f32 to vector<1x8x16xf32>
    %73 = vector.extract_strided_slice %21 {offsets = [1, 0, 0], sizes = [7, 8, 16], strides = [1, 1, 1]} : vector<8x8x16xf32> to vector<7x8x16xf32>
    %74 = tpu.concatenate %73, %72 in 0 : vector<7x8x16xf32>, vector<1x8x16xf32> -> vector<8x8x16xf32>
    %cst_33 = arith.constant 0.000000e+00 : f32
    %75 = vector.broadcast %cst_33 : f32 to vector<8x1x16xf32>
    %76 = vector.extract_strided_slice %74 {offsets = [0, 0, 0], sizes = [8, 7, 16], strides = [1, 1, 1]} : vector<8x8x16xf32> to vector<8x7x16xf32>
    %77 = tpu.concatenate %75, %76 in 1 : vector<8x1x16xf32>, vector<8x7x16xf32> -> vector<8x8x16xf32>
    %78 = vector.shape_cast %77 : vector<8x8x16xf32> to vector<64x16xf32>
    %79 = arith.truncf %78 : vector<64x16xf32> to vector<64x16xbf16>
    %80 = vector.extract_strided_slice %20 {offsets = [96, 0], sizes = [16, 16], strides = [1, 1]} : vector<144x16xbf16> to vector<16x16xbf16>
    %cst_34 = arith.constant dense<0.000000e+00> : vector<64x16xf32>
    %81 = tpu.matmul %79, %80, %cst_34 {dimension_numbers = #tpu.dot_dimension_numbers<[1], [0], [0], [1], [0, 0, 1, 1], [], []>} : vector<64x16xbf16>, vector<16x16xbf16>, vector<64x16xf32> -> vector<64x16xf32>
    %82 = arith.addf %71, %81 : vector<64x16xf32>
    %cst_35 = arith.constant 0.000000e+00 : f32
    %83 = vector.broadcast %cst_35 : f32 to vector<1x8x16xf32>
    %84 = vector.extract_strided_slice %21 {offsets = [1, 0, 0], sizes = [7, 8, 16], strides = [1, 1, 1]} : vector<8x8x16xf32> to vector<7x8x16xf32>
    %85 = tpu.concatenate %84, %83 in 0 : vector<7x8x16xf32>, vector<1x8x16xf32> -> vector<8x8x16xf32>
    %86 = vector.shape_cast %85 : vector<8x8x16xf32> to vector<64x16xf32>
    %87 = arith.truncf %86 : vector<64x16xf32> to vector<64x16xbf16>
    %88 = vector.extract_strided_slice %20 {offsets = [112, 0], sizes = [16, 16], strides = [1, 1]} : vector<144x16xbf16> to vector<16x16xbf16>
    %cst_36 = arith.constant dense<0.000000e+00> : vector<64x16xf32>
    %89 = tpu.matmul %87, %88, %cst_36 {dimension_numbers = #tpu.dot_dimension_numbers<[1], [0], [0], [1], [0, 0, 1, 1], [], []>} : vector<64x16xbf16>, vector<16x16xbf16>, vector<64x16xf32> -> vector<64x16xf32>
    %90 = arith.addf %82, %89 : vector<64x16xf32>
    %cst_37 = arith.constant 0.000000e+00 : f32
    %91 = vector.broadcast %cst_37 : f32 to vector<1x8x16xf32>
    %92 = vector.extract_strided_slice %21 {offsets = [1, 0, 0], sizes = [7, 8, 16], strides = [1, 1, 1]} : vector<8x8x16xf32> to vector<7x8x16xf32>
    %93 = tpu.concatenate %92, %91 in 0 : vector<7x8x16xf32>, vector<1x8x16xf32> -> vector<8x8x16xf32>
    %cst_38 = arith.constant 0.000000e+00 : f32
    %94 = vector.broadcast %cst_38 : f32 to vector<8x1x16xf32>
    %95 = vector.extract_strided_slice %93 {offsets = [0, 1, 0], sizes = [8, 7, 16], strides = [1, 1, 1]} : vector<8x8x16xf32> to vector<8x7x16xf32>
    %96 = tpu.concatenate %95, %94 in 1 : vector<8x7x16xf32>, vector<8x1x16xf32> -> vector<8x8x16xf32>
    %97 = vector.shape_cast %96 : vector<8x8x16xf32> to vector<64x16xf32>
    %98 = arith.truncf %97 : vector<64x16xf32> to vector<64x16xbf16>
    %99 = vector.extract_strided_slice %20 {offsets = [128, 0], sizes = [16, 16], strides = [1, 1]} : vector<144x16xbf16> to vector<16x16xbf16>
    %cst_39 = arith.constant dense<0.000000e+00> : vector<64x16xf32>
    %100 = tpu.matmul %98, %99, %cst_39 {dimension_numbers = #tpu.dot_dimension_numbers<[1], [0], [0], [1], [0, 0, 1, 1], [], []>} : vector<64x16xbf16>, vector<16x16xbf16>, vector<64x16xf32> -> vector<64x16xf32>
    %101 = arith.addf %90, %100 : vector<64x16xf32>
    %cst_40 = arith.constant 0.000000e+00 : f32
    %102 = vector.broadcast %cst_40 : f32 to vector<64x16xf32>
    %103 = arith.maximumf %101, %102 : vector<64x16xf32>
    %c0_41 = arith.constant 0 : index
    %c1 = arith.constant 1 : index
    %c0_42 = arith.constant 0 : index
    %c0_43 = arith.constant 0 : index
    %104 = vector.load %arg6[%c0_41, %c1, %c0_42, %c0_43] : memref<1x3x144x16xbf16, #tpu.memory_space<vmem>>, vector<1x1x144x16xbf16>
    %105 = vector.shape_cast %104 : vector<1x1x144x16xbf16> to vector<144x16xbf16>
    %106 = vector.shape_cast %103 : vector<64x16xf32> to vector<8x8x16xf32>
    %cst_44 = arith.constant 0.000000e+00 : f32
    %107 = vector.broadcast %cst_44 : f32 to vector<1x8x16xf32>
    %108 = vector.extract_strided_slice %106 {offsets = [0, 0, 0], sizes = [7, 8, 16], strides = [1, 1, 1]} : vector<8x8x16xf32> to vector<7x8x16xf32>
    %109 = tpu.concatenate %107, %108 in 0 : vector<1x8x16xf32>, vector<7x8x16xf32> -> vector<8x8x16xf32>
    %cst_45 = arith.constant 0.000000e+00 : f32
    %110 = vector.broadcast %cst_45 : f32 to vector<8x1x16xf32>
    %111 = vector.extract_strided_slice %109 {offsets = [0, 0, 0], sizes = [8, 7, 16], strides = [1, 1, 1]} : vector<8x8x16xf32> to vector<8x7x16xf32>
    %112 = tpu.concatenate %110, %111 in 1 : vector<8x1x16xf32>, vector<8x7x16xf32> -> vector<8x8x16xf32>
    %113 = vector.shape_cast %112 : vector<8x8x16xf32> to vector<64x16xf32>
    %114 = arith.truncf %113 : vector<64x16xf32> to vector<64x16xbf16>
    %115 = vector.extract_strided_slice %105 {offsets = [0, 0], sizes = [16, 16], strides = [1, 1]} : vector<144x16xbf16> to vector<16x16xbf16>
    %cst_46 = arith.constant dense<0.000000e+00> : vector<64x16xf32>
    %116 = tpu.matmul %114, %115, %cst_46 {dimension_numbers = #tpu.dot_dimension_numbers<[1], [0], [0], [1], [0, 0, 1, 1], [], []>} : vector<64x16xbf16>, vector<16x16xbf16>, vector<64x16xf32> -> vector<64x16xf32>
    %cst_47 = arith.constant 0.000000e+00 : f32
    %117 = vector.broadcast %cst_47 : f32 to vector<1x8x16xf32>
    %118 = vector.extract_strided_slice %106 {offsets = [0, 0, 0], sizes = [7, 8, 16], strides = [1, 1, 1]} : vector<8x8x16xf32> to vector<7x8x16xf32>
    %119 = tpu.concatenate %117, %118 in 0 : vector<1x8x16xf32>, vector<7x8x16xf32> -> vector<8x8x16xf32>
    %120 = vector.shape_cast %119 : vector<8x8x16xf32> to vector<64x16xf32>
    %121 = arith.truncf %120 : vector<64x16xf32> to vector<64x16xbf16>
    %122 = vector.extract_strided_slice %105 {offsets = [16, 0], sizes = [16, 16], strides = [1, 1]} : vector<144x16xbf16> to vector<16x16xbf16>
    %cst_48 = arith.constant dense<0.000000e+00> : vector<64x16xf32>
    %123 = tpu.matmul %121, %122, %cst_48 {dimension_numbers = #tpu.dot_dimension_numbers<[1], [0], [0], [1], [0, 0, 1, 1], [], []>} : vector<64x16xbf16>, vector<16x16xbf16>, vector<64x16xf32> -> vector<64x16xf32>
    %124 = arith.addf %116, %123 : vector<64x16xf32>
    %cst_49 = arith.constant 0.000000e+00 : f32
    %125 = vector.broadcast %cst_49 : f32 to vector<1x8x16xf32>
    %126 = vector.extract_strided_slice %106 {offsets = [0, 0, 0], sizes = [7, 8, 16], strides = [1, 1, 1]} : vector<8x8x16xf32> to vector<7x8x16xf32>
    %127 = tpu.concatenate %125, %126 in 0 : vector<1x8x16xf32>, vector<7x8x16xf32> -> vector<8x8x16xf32>
    %cst_50 = arith.constant 0.000000e+00 : f32
    %128 = vector.broadcast %cst_50 : f32 to vector<8x1x16xf32>
    %129 = vector.extract_strided_slice %127 {offsets = [0, 1, 0], sizes = [8, 7, 16], strides = [1, 1, 1]} : vector<8x8x16xf32> to vector<8x7x16xf32>
    %130 = tpu.concatenate %129, %128 in 1 : vector<8x7x16xf32>, vector<8x1x16xf32> -> vector<8x8x16xf32>
    %131 = vector.shape_cast %130 : vector<8x8x16xf32> to vector<64x16xf32>
    %132 = arith.truncf %131 : vector<64x16xf32> to vector<64x16xbf16>
    %133 = vector.extract_strided_slice %105 {offsets = [32, 0], sizes = [16, 16], strides = [1, 1]} : vector<144x16xbf16> to vector<16x16xbf16>
    %cst_51 = arith.constant dense<0.000000e+00> : vector<64x16xf32>
    %134 = tpu.matmul %132, %133, %cst_51 {dimension_numbers = #tpu.dot_dimension_numbers<[1], [0], [0], [1], [0, 0, 1, 1], [], []>} : vector<64x16xbf16>, vector<16x16xbf16>, vector<64x16xf32> -> vector<64x16xf32>
    %135 = arith.addf %124, %134 : vector<64x16xf32>
    %cst_52 = arith.constant 0.000000e+00 : f32
    %136 = vector.broadcast %cst_52 : f32 to vector<8x1x16xf32>
    %137 = vector.extract_strided_slice %106 {offsets = [0, 0, 0], sizes = [8, 7, 16], strides = [1, 1, 1]} : vector<8x8x16xf32> to vector<8x7x16xf32>
    %138 = tpu.concatenate %136, %137 in 1 : vector<8x1x16xf32>, vector<8x7x16xf32> -> vector<8x8x16xf32>
    %139 = vector.shape_cast %138 : vector<8x8x16xf32> to vector<64x16xf32>
    %140 = arith.truncf %139 : vector<64x16xf32> to vector<64x16xbf16>
    %141 = vector.extract_strided_slice %105 {offsets = [48, 0], sizes = [16, 16], strides = [1, 1]} : vector<144x16xbf16> to vector<16x16xbf16>
    %cst_53 = arith.constant dense<0.000000e+00> : vector<64x16xf32>
    %142 = tpu.matmul %140, %141, %cst_53 {dimension_numbers = #tpu.dot_dimension_numbers<[1], [0], [0], [1], [0, 0, 1, 1], [], []>} : vector<64x16xbf16>, vector<16x16xbf16>, vector<64x16xf32> -> vector<64x16xf32>
    %143 = arith.addf %135, %142 : vector<64x16xf32>
    %144 = vector.shape_cast %106 : vector<8x8x16xf32> to vector<64x16xf32>
    %145 = arith.truncf %144 : vector<64x16xf32> to vector<64x16xbf16>
    %146 = vector.extract_strided_slice %105 {offsets = [64, 0], sizes = [16, 16], strides = [1, 1]} : vector<144x16xbf16> to vector<16x16xbf16>
    %cst_54 = arith.constant dense<0.000000e+00> : vector<64x16xf32>
    %147 = tpu.matmul %145, %146, %cst_54 {dimension_numbers = #tpu.dot_dimension_numbers<[1], [0], [0], [1], [0, 0, 1, 1], [], []>} : vector<64x16xbf16>, vector<16x16xbf16>, vector<64x16xf32> -> vector<64x16xf32>
    %148 = arith.addf %143, %147 : vector<64x16xf32>
    %cst_55 = arith.constant 0.000000e+00 : f32
    %149 = vector.broadcast %cst_55 : f32 to vector<8x1x16xf32>
    %150 = vector.extract_strided_slice %106 {offsets = [0, 1, 0], sizes = [8, 7, 16], strides = [1, 1, 1]} : vector<8x8x16xf32> to vector<8x7x16xf32>
    %151 = tpu.concatenate %150, %149 in 1 : vector<8x7x16xf32>, vector<8x1x16xf32> -> vector<8x8x16xf32>
    %152 = vector.shape_cast %151 : vector<8x8x16xf32> to vector<64x16xf32>
    %153 = arith.truncf %152 : vector<64x16xf32> to vector<64x16xbf16>
    %154 = vector.extract_strided_slice %105 {offsets = [80, 0], sizes = [16, 16], strides = [1, 1]} : vector<144x16xbf16> to vector<16x16xbf16>
    %cst_56 = arith.constant dense<0.000000e+00> : vector<64x16xf32>
    %155 = tpu.matmul %153, %154, %cst_56 {dimension_numbers = #tpu.dot_dimension_numbers<[1], [0], [0], [1], [0, 0, 1, 1], [], []>} : vector<64x16xbf16>, vector<16x16xbf16>, vector<64x16xf32> -> vector<64x16xf32>
    %156 = arith.addf %148, %155 : vector<64x16xf32>
    %cst_57 = arith.constant 0.000000e+00 : f32
    %157 = vector.broadcast %cst_57 : f32 to vector<1x8x16xf32>
    %158 = vector.extract_strided_slice %106 {offsets = [1, 0, 0], sizes = [7, 8, 16], strides = [1, 1, 1]} : vector<8x8x16xf32> to vector<7x8x16xf32>
    %159 = tpu.concatenate %158, %157 in 0 : vector<7x8x16xf32>, vector<1x8x16xf32> -> vector<8x8x16xf32>
    %cst_58 = arith.constant 0.000000e+00 : f32
    %160 = vector.broadcast %cst_58 : f32 to vector<8x1x16xf32>
    %161 = vector.extract_strided_slice %159 {offsets = [0, 0, 0], sizes = [8, 7, 16], strides = [1, 1, 1]} : vector<8x8x16xf32> to vector<8x7x16xf32>
    %162 = tpu.concatenate %160, %161 in 1 : vector<8x1x16xf32>, vector<8x7x16xf32> -> vector<8x8x16xf32>
    %163 = vector.shape_cast %162 : vector<8x8x16xf32> to vector<64x16xf32>
    %164 = arith.truncf %163 : vector<64x16xf32> to vector<64x16xbf16>
    %165 = vector.extract_strided_slice %105 {offsets = [96, 0], sizes = [16, 16], strides = [1, 1]} : vector<144x16xbf16> to vector<16x16xbf16>
    %cst_59 = arith.constant dense<0.000000e+00> : vector<64x16xf32>
    %166 = tpu.matmul %164, %165, %cst_59 {dimension_numbers = #tpu.dot_dimension_numbers<[1], [0], [0], [1], [0, 0, 1, 1], [], []>} : vector<64x16xbf16>, vector<16x16xbf16>, vector<64x16xf32> -> vector<64x16xf32>
    %167 = arith.addf %156, %166 : vector<64x16xf32>
    %cst_60 = arith.constant 0.000000e+00 : f32
    %168 = vector.broadcast %cst_60 : f32 to vector<1x8x16xf32>
    %169 = vector.extract_strided_slice %106 {offsets = [1, 0, 0], sizes = [7, 8, 16], strides = [1, 1, 1]} : vector<8x8x16xf32> to vector<7x8x16xf32>
    %170 = tpu.concatenate %169, %168 in 0 : vector<7x8x16xf32>, vector<1x8x16xf32> -> vector<8x8x16xf32>
    %171 = vector.shape_cast %170 : vector<8x8x16xf32> to vector<64x16xf32>
    %172 = arith.truncf %171 : vector<64x16xf32> to vector<64x16xbf16>
    %173 = vector.extract_strided_slice %105 {offsets = [112, 0], sizes = [16, 16], strides = [1, 1]} : vector<144x16xbf16> to vector<16x16xbf16>
    %cst_61 = arith.constant dense<0.000000e+00> : vector<64x16xf32>
    %174 = tpu.matmul %172, %173, %cst_61 {dimension_numbers = #tpu.dot_dimension_numbers<[1], [0], [0], [1], [0, 0, 1, 1], [], []>} : vector<64x16xbf16>, vector<16x16xbf16>, vector<64x16xf32> -> vector<64x16xf32>
    %175 = arith.addf %167, %174 : vector<64x16xf32>
    %cst_62 = arith.constant 0.000000e+00 : f32
    %176 = vector.broadcast %cst_62 : f32 to vector<1x8x16xf32>
    %177 = vector.extract_strided_slice %106 {offsets = [1, 0, 0], sizes = [7, 8, 16], strides = [1, 1, 1]} : vector<8x8x16xf32> to vector<7x8x16xf32>
    %178 = tpu.concatenate %177, %176 in 0 : vector<7x8x16xf32>, vector<1x8x16xf32> -> vector<8x8x16xf32>
    %cst_63 = arith.constant 0.000000e+00 : f32
    %179 = vector.broadcast %cst_63 : f32 to vector<8x1x16xf32>
    %180 = vector.extract_strided_slice %178 {offsets = [0, 1, 0], sizes = [8, 7, 16], strides = [1, 1, 1]} : vector<8x8x16xf32> to vector<8x7x16xf32>
    %181 = tpu.concatenate %180, %179 in 1 : vector<8x7x16xf32>, vector<8x1x16xf32> -> vector<8x8x16xf32>
    %182 = vector.shape_cast %181 : vector<8x8x16xf32> to vector<64x16xf32>
    %183 = arith.truncf %182 : vector<64x16xf32> to vector<64x16xbf16>
    %184 = vector.extract_strided_slice %105 {offsets = [128, 0], sizes = [16, 16], strides = [1, 1]} : vector<144x16xbf16> to vector<16x16xbf16>
    %cst_64 = arith.constant dense<0.000000e+00> : vector<64x16xf32>
    %185 = tpu.matmul %183, %184, %cst_64 {dimension_numbers = #tpu.dot_dimension_numbers<[1], [0], [0], [1], [0, 0, 1, 1], [], []>} : vector<64x16xbf16>, vector<16x16xbf16>, vector<64x16xf32> -> vector<64x16xf32>
    %186 = arith.addf %175, %185 : vector<64x16xf32>
    %187 = arith.addf %186, %18 : vector<64x16xf32>
    %cst_65 = arith.constant 0.000000e+00 : f32
    %188 = vector.broadcast %cst_65 : f32 to vector<64x16xf32>
    %189 = arith.maximumf %187, %188 : vector<64x16xf32>
    %c0_66 = arith.constant 0 : index
    %c2 = arith.constant 2 : index
    %c0_67 = arith.constant 0 : index
    %c0_68 = arith.constant 0 : index
    %190 = vector.load %arg6[%c0_66, %c2, %c0_67, %c0_68] : memref<1x3x144x16xbf16, #tpu.memory_space<vmem>>, vector<1x1x144x16xbf16>
    %191 = vector.shape_cast %190 : vector<1x1x144x16xbf16> to vector<144x16xbf16>
    %192 = vector.shape_cast %189 : vector<64x16xf32> to vector<8x8x16xf32>
    %cst_69 = arith.constant 0.000000e+00 : f32
    %193 = vector.broadcast %cst_69 : f32 to vector<1x8x16xf32>
    %194 = vector.extract_strided_slice %192 {offsets = [0, 0, 0], sizes = [7, 8, 16], strides = [1, 1, 1]} : vector<8x8x16xf32> to vector<7x8x16xf32>
    %195 = tpu.concatenate %193, %194 in 0 : vector<1x8x16xf32>, vector<7x8x16xf32> -> vector<8x8x16xf32>
    %cst_70 = arith.constant 0.000000e+00 : f32
    %196 = vector.broadcast %cst_70 : f32 to vector<8x1x16xf32>
    %197 = vector.extract_strided_slice %195 {offsets = [0, 0, 0], sizes = [8, 7, 16], strides = [1, 1, 1]} : vector<8x8x16xf32> to vector<8x7x16xf32>
    %198 = tpu.concatenate %196, %197 in 1 : vector<8x1x16xf32>, vector<8x7x16xf32> -> vector<8x8x16xf32>
    %199 = vector.shape_cast %198 : vector<8x8x16xf32> to vector<64x16xf32>
    %200 = arith.truncf %199 : vector<64x16xf32> to vector<64x16xbf16>
    %201 = vector.extract_strided_slice %191 {offsets = [0, 0], sizes = [16, 16], strides = [1, 1]} : vector<144x16xbf16> to vector<16x16xbf16>
    %cst_71 = arith.constant dense<0.000000e+00> : vector<64x16xf32>
    %202 = tpu.matmul %200, %201, %cst_71 {dimension_numbers = #tpu.dot_dimension_numbers<[1], [0], [0], [1], [0, 0, 1, 1], [], []>} : vector<64x16xbf16>, vector<16x16xbf16>, vector<64x16xf32> -> vector<64x16xf32>
    %cst_72 = arith.constant 0.000000e+00 : f32
    %203 = vector.broadcast %cst_72 : f32 to vector<1x8x16xf32>
    %204 = vector.extract_strided_slice %192 {offsets = [0, 0, 0], sizes = [7, 8, 16], strides = [1, 1, 1]} : vector<8x8x16xf32> to vector<7x8x16xf32>
    %205 = tpu.concatenate %203, %204 in 0 : vector<1x8x16xf32>, vector<7x8x16xf32> -> vector<8x8x16xf32>
    %206 = vector.shape_cast %205 : vector<8x8x16xf32> to vector<64x16xf32>
    %207 = arith.truncf %206 : vector<64x16xf32> to vector<64x16xbf16>
    %208 = vector.extract_strided_slice %191 {offsets = [16, 0], sizes = [16, 16], strides = [1, 1]} : vector<144x16xbf16> to vector<16x16xbf16>
    %cst_73 = arith.constant dense<0.000000e+00> : vector<64x16xf32>
    %209 = tpu.matmul %207, %208, %cst_73 {dimension_numbers = #tpu.dot_dimension_numbers<[1], [0], [0], [1], [0, 0, 1, 1], [], []>} : vector<64x16xbf16>, vector<16x16xbf16>, vector<64x16xf32> -> vector<64x16xf32>
    %210 = arith.addf %202, %209 : vector<64x16xf32>
    %cst_74 = arith.constant 0.000000e+00 : f32
    %211 = vector.broadcast %cst_74 : f32 to vector<1x8x16xf32>
    %212 = vector.extract_strided_slice %192 {offsets = [0, 0, 0], sizes = [7, 8, 16], strides = [1, 1, 1]} : vector<8x8x16xf32> to vector<7x8x16xf32>
    %213 = tpu.concatenate %211, %212 in 0 : vector<1x8x16xf32>, vector<7x8x16xf32> -> vector<8x8x16xf32>
    %cst_75 = arith.constant 0.000000e+00 : f32
    %214 = vector.broadcast %cst_75 : f32 to vector<8x1x16xf32>
    %215 = vector.extract_strided_slice %213 {offsets = [0, 1, 0], sizes = [8, 7, 16], strides = [1, 1, 1]} : vector<8x8x16xf32> to vector<8x7x16xf32>
    %216 = tpu.concatenate %215, %214 in 1 : vector<8x7x16xf32>, vector<8x1x16xf32> -> vector<8x8x16xf32>
    %217 = vector.shape_cast %216 : vector<8x8x16xf32> to vector<64x16xf32>
    %218 = arith.truncf %217 : vector<64x16xf32> to vector<64x16xbf16>
    %219 = vector.extract_strided_slice %191 {offsets = [32, 0], sizes = [16, 16], strides = [1, 1]} : vector<144x16xbf16> to vector<16x16xbf16>
    %cst_76 = arith.constant dense<0.000000e+00> : vector<64x16xf32>
    %220 = tpu.matmul %218, %219, %cst_76 {dimension_numbers = #tpu.dot_dimension_numbers<[1], [0], [0], [1], [0, 0, 1, 1], [], []>} : vector<64x16xbf16>, vector<16x16xbf16>, vector<64x16xf32> -> vector<64x16xf32>
    %221 = arith.addf %210, %220 : vector<64x16xf32>
    %cst_77 = arith.constant 0.000000e+00 : f32
    %222 = vector.broadcast %cst_77 : f32 to vector<8x1x16xf32>
    %223 = vector.extract_strided_slice %192 {offsets = [0, 0, 0], sizes = [8, 7, 16], strides = [1, 1, 1]} : vector<8x8x16xf32> to vector<8x7x16xf32>
    %224 = tpu.concatenate %222, %223 in 1 : vector<8x1x16xf32>, vector<8x7x16xf32> -> vector<8x8x16xf32>
    %225 = vector.shape_cast %224 : vector<8x8x16xf32> to vector<64x16xf32>
    %226 = arith.truncf %225 : vector<64x16xf32> to vector<64x16xbf16>
    %227 = vector.extract_strided_slice %191 {offsets = [48, 0], sizes = [16, 16], strides = [1, 1]} : vector<144x16xbf16> to vector<16x16xbf16>
    %cst_78 = arith.constant dense<0.000000e+00> : vector<64x16xf32>
    %228 = tpu.matmul %226, %227, %cst_78 {dimension_numbers = #tpu.dot_dimension_numbers<[1], [0], [0], [1], [0, 0, 1, 1], [], []>} : vector<64x16xbf16>, vector<16x16xbf16>, vector<64x16xf32> -> vector<64x16xf32>
    %229 = arith.addf %221, %228 : vector<64x16xf32>
    %230 = vector.shape_cast %192 : vector<8x8x16xf32> to vector<64x16xf32>
    %231 = arith.truncf %230 : vector<64x16xf32> to vector<64x16xbf16>
    %232 = vector.extract_strided_slice %191 {offsets = [64, 0], sizes = [16, 16], strides = [1, 1]} : vector<144x16xbf16> to vector<16x16xbf16>
    %cst_79 = arith.constant dense<0.000000e+00> : vector<64x16xf32>
    %233 = tpu.matmul %231, %232, %cst_79 {dimension_numbers = #tpu.dot_dimension_numbers<[1], [0], [0], [1], [0, 0, 1, 1], [], []>} : vector<64x16xbf16>, vector<16x16xbf16>, vector<64x16xf32> -> vector<64x16xf32>
    %234 = arith.addf %229, %233 : vector<64x16xf32>
    %cst_80 = arith.constant 0.000000e+00 : f32
    %235 = vector.broadcast %cst_80 : f32 to vector<8x1x16xf32>
    %236 = vector.extract_strided_slice %192 {offsets = [0, 1, 0], sizes = [8, 7, 16], strides = [1, 1, 1]} : vector<8x8x16xf32> to vector<8x7x16xf32>
    %237 = tpu.concatenate %236, %235 in 1 : vector<8x7x16xf32>, vector<8x1x16xf32> -> vector<8x8x16xf32>
    %238 = vector.shape_cast %237 : vector<8x8x16xf32> to vector<64x16xf32>
    %239 = arith.truncf %238 : vector<64x16xf32> to vector<64x16xbf16>
    %240 = vector.extract_strided_slice %191 {offsets = [80, 0], sizes = [16, 16], strides = [1, 1]} : vector<144x16xbf16> to vector<16x16xbf16>
    %cst_81 = arith.constant dense<0.000000e+00> : vector<64x16xf32>
    %241 = tpu.matmul %239, %240, %cst_81 {dimension_numbers = #tpu.dot_dimension_numbers<[1], [0], [0], [1], [0, 0, 1, 1], [], []>} : vector<64x16xbf16>, vector<16x16xbf16>, vector<64x16xf32> -> vector<64x16xf32>
    %242 = arith.addf %234, %241 : vector<64x16xf32>
    %cst_82 = arith.constant 0.000000e+00 : f32
    %243 = vector.broadcast %cst_82 : f32 to vector<1x8x16xf32>
    %244 = vector.extract_strided_slice %192 {offsets = [1, 0, 0], sizes = [7, 8, 16], strides = [1, 1, 1]} : vector<8x8x16xf32> to vector<7x8x16xf32>
    %245 = tpu.concatenate %244, %243 in 0 : vector<7x8x16xf32>, vector<1x8x16xf32> -> vector<8x8x16xf32>
    %cst_83 = arith.constant 0.000000e+00 : f32
    %246 = vector.broadcast %cst_83 : f32 to vector<8x1x16xf32>
    %247 = vector.extract_strided_slice %245 {offsets = [0, 0, 0], sizes = [8, 7, 16], strides = [1, 1, 1]} : vector<8x8x16xf32> to vector<8x7x16xf32>
    %248 = tpu.concatenate %246, %247 in 1 : vector<8x1x16xf32>, vector<8x7x16xf32> -> vector<8x8x16xf32>
    %249 = vector.shape_cast %248 : vector<8x8x16xf32> to vector<64x16xf32>
    %250 = arith.truncf %249 : vector<64x16xf32> to vector<64x16xbf16>
    %251 = vector.extract_strided_slice %191 {offsets = [96, 0], sizes = [16, 16], strides = [1, 1]} : vector<144x16xbf16> to vector<16x16xbf16>
    %cst_84 = arith.constant dense<0.000000e+00> : vector<64x16xf32>
    %252 = tpu.matmul %250, %251, %cst_84 {dimension_numbers = #tpu.dot_dimension_numbers<[1], [0], [0], [1], [0, 0, 1, 1], [], []>} : vector<64x16xbf16>, vector<16x16xbf16>, vector<64x16xf32> -> vector<64x16xf32>
    %253 = arith.addf %242, %252 : vector<64x16xf32>
    %cst_85 = arith.constant 0.000000e+00 : f32
    %254 = vector.broadcast %cst_85 : f32 to vector<1x8x16xf32>
    %255 = vector.extract_strided_slice %192 {offsets = [1, 0, 0], sizes = [7, 8, 16], strides = [1, 1, 1]} : vector<8x8x16xf32> to vector<7x8x16xf32>
    %256 = tpu.concatenate %255, %254 in 0 : vector<7x8x16xf32>, vector<1x8x16xf32> -> vector<8x8x16xf32>
    %257 = vector.shape_cast %256 : vector<8x8x16xf32> to vector<64x16xf32>
    %258 = arith.truncf %257 : vector<64x16xf32> to vector<64x16xbf16>
    %259 = vector.extract_strided_slice %191 {offsets = [112, 0], sizes = [16, 16], strides = [1, 1]} : vector<144x16xbf16> to vector<16x16xbf16>
    %cst_86 = arith.constant dense<0.000000e+00> : vector<64x16xf32>
    %260 = tpu.matmul %258, %259, %cst_86 {dimension_numbers = #tpu.dot_dimension_numbers<[1], [0], [0], [1], [0, 0, 1, 1], [], []>} : vector<64x16xbf16>, vector<16x16xbf16>, vector<64x16xf32> -> vector<64x16xf32>
    %261 = arith.addf %253, %260 : vector<64x16xf32>
    %cst_87 = arith.constant 0.000000e+00 : f32
    %262 = vector.broadcast %cst_87 : f32 to vector<1x8x16xf32>
    %263 = vector.extract_strided_slice %192 {offsets = [1, 0, 0], sizes = [7, 8, 16], strides = [1, 1, 1]} : vector<8x8x16xf32> to vector<7x8x16xf32>
    %264 = tpu.concatenate %263, %262 in 0 : vector<7x8x16xf32>, vector<1x8x16xf32> -> vector<8x8x16xf32>
    %cst_88 = arith.constant 0.000000e+00 : f32
    %265 = vector.broadcast %cst_88 : f32 to vector<8x1x16xf32>
    %266 = vector.extract_strided_slice %264 {offsets = [0, 1, 0], sizes = [8, 7, 16], strides = [1, 1, 1]} : vector<8x8x16xf32> to vector<8x7x16xf32>
    %267 = tpu.concatenate %266, %265 in 1 : vector<8x7x16xf32>, vector<8x1x16xf32> -> vector<8x8x16xf32>
    %268 = vector.shape_cast %267 : vector<8x8x16xf32> to vector<64x16xf32>
    %269 = arith.truncf %268 : vector<64x16xf32> to vector<64x16xbf16>
    %270 = vector.extract_strided_slice %191 {offsets = [128, 0], sizes = [16, 16], strides = [1, 1]} : vector<144x16xbf16> to vector<16x16xbf16>
    %cst_89 = arith.constant dense<0.000000e+00> : vector<64x16xf32>
    %271 = tpu.matmul %269, %270, %cst_89 {dimension_numbers = #tpu.dot_dimension_numbers<[1], [0], [0], [1], [0, 0, 1, 1], [], []>} : vector<64x16xbf16>, vector<16x16xbf16>, vector<64x16xf32> -> vector<64x16xf32>
    %272 = arith.addf %261, %271 : vector<64x16xf32>
    %c0_90 = arith.constant 0 : index
    %c0_91 = arith.constant 0 : index
    %c0_92 = arith.constant 0 : index
    %273 = vector.load %arg7[%c0_90, %c0_91, %c0_92] : memref<1x1x16xf32, #tpu.memory_space<vmem>>, vector<1x1x16xf32>
    %274 = vector.shape_cast %273 : vector<1x1x16xf32> to vector<1x16xf32>
    %275 = vector.broadcast %274 : vector<1x16xf32> to vector<64x16xf32>
    %276 = arith.addf %272, %275 : vector<64x16xf32>
    %c0_93 = arith.constant 0 : index
    %c0_94 = arith.constant 0 : index
    %c0_95 = arith.constant 0 : index
    %277 = vector.load %arg8[%c0_93, %c0_94, %c0_95] : memref<1x16x48xbf16, #tpu.memory_space<vmem>>, vector<1x16x48xbf16>
    %278 = vector.shape_cast %277 : vector<1x16x48xbf16> to vector<16x48xbf16>
    %279 = arith.index_cast %arg1 : i32 to index
    %280 = memref.load %arg9[%279] : memref<8xf32, #tpu.memory_space<smem>>
    %c0_96 = arith.constant 0 : index
    %c0_97 = arith.constant 0 : index
    %c0_98 = arith.constant 0 : index
    %281 = vector.load %arg10[%c0_96, %c0_97, %c0_98] : memref<1x16x16xbf16, #tpu.memory_space<vmem>>, vector<1x16x16xbf16>
    %282 = vector.shape_cast %281 : vector<1x16x16xbf16> to vector<16x16xbf16>
    %c0_99 = arith.constant 0 : index
    %c0_100 = arith.constant 0 : index
    %c0_101 = arith.constant 0 : index
    %283 = vector.load %arg11[%c0_99, %c0_100, %c0_101] : memref<1x1x16xf32, #tpu.memory_space<vmem>>, vector<1x1x16xf32>
    %284 = vector.shape_cast %283 : vector<1x1x16xf32> to vector<1x16xf32>
    %c0_102 = arith.constant 0 : index
    %c0_103 = arith.constant 0 : index
    %c0_104 = arith.constant 0 : index
    %285 = vector.load %arg12[%c0_102, %c0_103, %c0_104] : memref<1x9x16xf32, #tpu.memory_space<vmem>>, vector<1x9x16xf32>
    %286 = vector.shape_cast %285 : vector<1x9x16xf32> to vector<9x16xf32>
    %c0_105 = arith.constant 0 : index
    %c0_106 = arith.constant 0 : index
    %c0_107 = arith.constant 0 : index
    %287 = vector.load %arg13[%c0_105, %c0_106, %c0_107] : memref<1x9x16xf32, #tpu.memory_space<vmem>>, vector<1x9x16xf32>
    %288 = vector.shape_cast %287 : vector<1x9x16xf32> to vector<9x16xf32>
    %c0_108 = arith.constant 0 : index
    %c0_109 = arith.constant 0 : index
    %c0_110 = arith.constant 0 : index
    %289 = vector.load %arg14[%c0_108, %c0_109, %c0_110] : memref<1x1x16xf32, #tpu.memory_space<vmem>>, vector<1x1x16xf32>
    %290 = vector.shape_cast %289 : vector<1x1x16xf32> to vector<1x16xf32>
    %c0_111 = arith.constant 0 : index
    %c0_112 = arith.constant 0 : index
    %c0_113 = arith.constant 0 : index
    %291 = vector.load %arg15[%c0_111, %c0_112, %c0_113] : memref<1x1x16xf32, #tpu.memory_space<vmem>>, vector<1x1x16xf32>
    %292 = vector.shape_cast %291 : vector<1x1x16xf32> to vector<1x16xf32>
    %c0_114 = arith.constant 0 : index
    %c0_115 = arith.constant 0 : index
    %c0_116 = arith.constant 0 : index
    %293 = vector.load %arg16[%c0_114, %c0_115, %c0_116] : memref<1x16x64xbf16, #tpu.memory_space<vmem>>, vector<1x16x64xbf16>
    %294 = vector.shape_cast %293 : vector<1x16x64xbf16> to vector<16x64xbf16>
    %c0_117 = arith.constant 0 : index
    %c0_118 = arith.constant 0 : index
    %c0_119 = arith.constant 0 : index
    %295 = vector.load %arg17[%c0_117, %c0_118, %c0_119] : memref<1x9x64xf32, #tpu.memory_space<vmem>>, vector<1x9x64xf32>
    %296 = vector.shape_cast %295 : vector<1x9x64xf32> to vector<9x64xf32>
    %c0_120 = arith.constant 0 : index
    %c0_121 = arith.constant 0 : index
    %c0_122 = arith.constant 0 : index
    %297 = vector.load %arg18[%c0_120, %c0_121, %c0_122] : memref<1x64x16xbf16, #tpu.memory_space<vmem>>, vector<1x64x16xbf16>
    %298 = vector.shape_cast %297 : vector<1x64x16xbf16> to vector<64x16xbf16>
    %299 = arith.truncf %276 : vector<64x16xf32> to vector<64x16xbf16>
    %cst_123 = arith.constant dense<0.000000e+00> : vector<64x48xf32>
    %300 = tpu.matmul %299, %278, %cst_123 {dimension_numbers = #tpu.dot_dimension_numbers<[1], [0], [0], [1], [0, 0, 1, 1], [], []>} : vector<64x16xbf16>, vector<16x48xbf16>, vector<64x48xf32> -> vector<64x48xf32>
    %301 = vector.extract_strided_slice %300 {offsets = [0, 0], sizes = [64, 16], strides = [1, 1]} : vector<64x48xf32> to vector<64x16xf32>
    %302 = vector.extract_strided_slice %300 {offsets = [0, 16], sizes = [64, 16], strides = [1, 1]} : vector<64x48xf32> to vector<64x16xf32>
    %303 = vector.extract_strided_slice %300 {offsets = [0, 32], sizes = [64, 16], strides = [1, 1]} : vector<64x48xf32> to vector<64x16xf32>
    %304 = arith.mulf %301, %301 : vector<64x16xf32>
    %cst_124 = arith.constant dense<0.000000e+00> : vector<16xf32>
    %305 = vector.multi_reduction <add>, %304, %cst_124 [0] : vector<64x16xf32> to vector<16xf32>
    %306 = vector.shape_cast %305 : vector<16xf32> to vector<1x16xf32>
    %cst_125 = arith.constant 1.000000e-24 : f32
    %307 = vector.broadcast %cst_125 : f32 to vector<1x16xf32>
    %308 = arith.maximumf %306, %307 : vector<1x16xf32>
    %309 = math.rsqrt %308 : vector<1x16xf32>
    %310 = vector.broadcast %309 : vector<1x16xf32> to vector<64x16xf32>
    %311 = arith.mulf %301, %310 : vector<64x16xf32>
    %312 = arith.mulf %302, %302 : vector<64x16xf32>
    %cst_126 = arith.constant dense<0.000000e+00> : vector<16xf32>
    %313 = vector.multi_reduction <add>, %312, %cst_126 [0] : vector<64x16xf32> to vector<16xf32>
    %314 = vector.shape_cast %313 : vector<16xf32> to vector<1x16xf32>
    %cst_127 = arith.constant 1.000000e-24 : f32
    %315 = vector.broadcast %cst_127 : f32 to vector<1x16xf32>
    %316 = arith.maximumf %314, %315 : vector<1x16xf32>
    %317 = math.rsqrt %316 : vector<1x16xf32>
    %318 = vector.broadcast %317 : vector<1x16xf32> to vector<64x16xf32>
    %319 = arith.mulf %302, %318 : vector<64x16xf32>
    %cst_128 = arith.constant dense<0.000000e+00> : vector<16x16xf32>
    %320 = tpu.matmul %319, %311, %cst_128 {dimension_numbers = #tpu.dot_dimension_numbers<[0], [0], [1], [1], [0, 1, 1, 1], [], []>} : vector<64x16xf32>, vector<64x16xf32>, vector<16x16xf32> -> vector<16x16xf32>
    %321 = vector.broadcast %280 : f32 to vector<16x16xf32>
    %322 = arith.mulf %320, %321 : vector<16x16xf32>
    %cst_129 = arith.constant dense<0xFF800000> : vector<16xf32>
    %323 = vector.multi_reduction <maximumf>, %322, %cst_129 [1] : vector<16x16xf32> to vector<16xf32>
    %324 = vector.shape_cast %323 : vector<16xf32> to vector<16x1xf32>
    %325 = vector.broadcast %324 : vector<16x1xf32> to vector<16x16xf32>
    %326 = arith.subf %322, %325 : vector<16x16xf32>
    %327 = math.exp %326 : vector<16x16xf32>
    %cst_130 = arith.constant dense<0.000000e+00> : vector<16xf32>
    %328 = vector.multi_reduction <add>, %327, %cst_130 [1] : vector<16x16xf32> to vector<16xf32>
    %329 = vector.shape_cast %328 : vector<16xf32> to vector<16x1xf32>
    %330 = tpu.reciprocal %329 {approx = true} : vector<16x1xf32> -> vector<16x1xf32>
    %331 = vector.broadcast %330 : vector<16x1xf32> to vector<16x16xf32>
    %332 = arith.mulf %327, %331 : vector<16x16xf32>
    %cst_131 = arith.constant dense<0.000000e+00> : vector<64x16xf32>
    %333 = tpu.matmul %303, %332, %cst_131 {dimension_numbers = #tpu.dot_dimension_numbers<[1], [1], [0], [0], [0, 0, 1, 0], [], []>} : vector<64x16xf32>, vector<16x16xf32>, vector<64x16xf32> -> vector<64x16xf32>
    %334 = arith.truncf %333 : vector<64x16xf32> to vector<64x16xbf16>
    %cst_132 = arith.constant dense<0.000000e+00> : vector<64x16xf32>
    %335 = tpu.matmul %334, %282, %cst_132 {dimension_numbers = #tpu.dot_dimension_numbers<[1], [0], [0], [1], [0, 0, 1, 1], [], []>} : vector<64x16xbf16>, vector<16x16xbf16>, vector<64x16xf32> -> vector<64x16xf32>
    %336 = vector.broadcast %284 : vector<1x16xf32> to vector<64x16xf32>
    %337 = arith.addf %335, %336 : vector<64x16xf32>
    %338 = vector.shape_cast %303 : vector<64x16xf32> to vector<8x8x16xf32>
    %cst_133 = arith.constant 0.000000e+00 : f32
    %339 = vector.broadcast %cst_133 : f32 to vector<64x16xf32>
    %cst_134 = arith.constant 0.000000e+00 : f32
    %340 = vector.broadcast %cst_134 : f32 to vector<1x8x16xf32>
    %341 = vector.extract_strided_slice %338 {offsets = [0, 0, 0], sizes = [7, 8, 16], strides = [1, 1, 1]} : vector<8x8x16xf32> to vector<7x8x16xf32>
    %342 = tpu.concatenate %340, %341 in 0 : vector<1x8x16xf32>, vector<7x8x16xf32> -> vector<8x8x16xf32>
    %cst_135 = arith.constant 0.000000e+00 : f32
    %343 = vector.broadcast %cst_135 : f32 to vector<8x1x16xf32>
    %344 = vector.extract_strided_slice %342 {offsets = [0, 0, 0], sizes = [8, 7, 16], strides = [1, 1, 1]} : vector<8x8x16xf32> to vector<8x7x16xf32>
    %345 = tpu.concatenate %343, %344 in 1 : vector<8x1x16xf32>, vector<8x7x16xf32> -> vector<8x8x16xf32>
    %346 = vector.shape_cast %345 : vector<8x8x16xf32> to vector<64x16xf32>
    %347 = vector.extract_strided_slice %286 {offsets = [0, 0], sizes = [1, 16], strides = [1, 1]} : vector<9x16xf32> to vector<1x16xf32>
    %348 = vector.broadcast %347 : vector<1x16xf32> to vector<64x16xf32>
    %349 = arith.mulf %346, %348 : vector<64x16xf32>
    %350 = arith.addf %339, %349 : vector<64x16xf32>
    %cst_136 = arith.constant 0.000000e+00 : f32
    %351 = vector.broadcast %cst_136 : f32 to vector<1x8x16xf32>
    %352 = vector.extract_strided_slice %338 {offsets = [0, 0, 0], sizes = [7, 8, 16], strides = [1, 1, 1]} : vector<8x8x16xf32> to vector<7x8x16xf32>
    %353 = tpu.concatenate %351, %352 in 0 : vector<1x8x16xf32>, vector<7x8x16xf32> -> vector<8x8x16xf32>
    %354 = vector.shape_cast %353 : vector<8x8x16xf32> to vector<64x16xf32>
    %355 = vector.extract_strided_slice %286 {offsets = [1, 0], sizes = [1, 16], strides = [1, 1]} : vector<9x16xf32> to vector<1x16xf32>
    %356 = vector.broadcast %355 : vector<1x16xf32> to vector<64x16xf32>
    %357 = arith.mulf %354, %356 : vector<64x16xf32>
    %358 = arith.addf %350, %357 : vector<64x16xf32>
    %cst_137 = arith.constant 0.000000e+00 : f32
    %359 = vector.broadcast %cst_137 : f32 to vector<1x8x16xf32>
    %360 = vector.extract_strided_slice %338 {offsets = [0, 0, 0], sizes = [7, 8, 16], strides = [1, 1, 1]} : vector<8x8x16xf32> to vector<7x8x16xf32>
    %361 = tpu.concatenate %359, %360 in 0 : vector<1x8x16xf32>, vector<7x8x16xf32> -> vector<8x8x16xf32>
    %cst_138 = arith.constant 0.000000e+00 : f32
    %362 = vector.broadcast %cst_138 : f32 to vector<8x1x16xf32>
    %363 = vector.extract_strided_slice %361 {offsets = [0, 1, 0], sizes = [8, 7, 16], strides = [1, 1, 1]} : vector<8x8x16xf32> to vector<8x7x16xf32>
    %364 = tpu.concatenate %363, %362 in 1 : vector<8x7x16xf32>, vector<8x1x16xf32> -> vector<8x8x16xf32>
    %365 = vector.shape_cast %364 : vector<8x8x16xf32> to vector<64x16xf32>
    %366 = vector.extract_strided_slice %286 {offsets = [2, 0], sizes = [1, 16], strides = [1, 1]} : vector<9x16xf32> to vector<1x16xf32>
    %367 = vector.broadcast %366 : vector<1x16xf32> to vector<64x16xf32>
    %368 = arith.mulf %365, %367 : vector<64x16xf32>
    %369 = arith.addf %358, %368 : vector<64x16xf32>
    %cst_139 = arith.constant 0.000000e+00 : f32
    %370 = vector.broadcast %cst_139 : f32 to vector<8x1x16xf32>
    %371 = vector.extract_strided_slice %338 {offsets = [0, 0, 0], sizes = [8, 7, 16], strides = [1, 1, 1]} : vector<8x8x16xf32> to vector<8x7x16xf32>
    %372 = tpu.concatenate %370, %371 in 1 : vector<8x1x16xf32>, vector<8x7x16xf32> -> vector<8x8x16xf32>
    %373 = vector.shape_cast %372 : vector<8x8x16xf32> to vector<64x16xf32>
    %374 = vector.extract_strided_slice %286 {offsets = [3, 0], sizes = [1, 16], strides = [1, 1]} : vector<9x16xf32> to vector<1x16xf32>
    %375 = vector.broadcast %374 : vector<1x16xf32> to vector<64x16xf32>
    %376 = arith.mulf %373, %375 : vector<64x16xf32>
    %377 = arith.addf %369, %376 : vector<64x16xf32>
    %378 = vector.shape_cast %338 : vector<8x8x16xf32> to vector<64x16xf32>
    %379 = vector.extract_strided_slice %286 {offsets = [4, 0], sizes = [1, 16], strides = [1, 1]} : vector<9x16xf32> to vector<1x16xf32>
    %380 = vector.broadcast %379 : vector<1x16xf32> to vector<64x16xf32>
    %381 = arith.mulf %378, %380 : vector<64x16xf32>
    %382 = arith.addf %377, %381 : vector<64x16xf32>
    %cst_140 = arith.constant 0.000000e+00 : f32
    %383 = vector.broadcast %cst_140 : f32 to vector<8x1x16xf32>
    %384 = vector.extract_strided_slice %338 {offsets = [0, 1, 0], sizes = [8, 7, 16], strides = [1, 1, 1]} : vector<8x8x16xf32> to vector<8x7x16xf32>
    %385 = tpu.concatenate %384, %383 in 1 : vector<8x7x16xf32>, vector<8x1x16xf32> -> vector<8x8x16xf32>
    %386 = vector.shape_cast %385 : vector<8x8x16xf32> to vector<64x16xf32>
    %387 = vector.extract_strided_slice %286 {offsets = [5, 0], sizes = [1, 16], strides = [1, 1]} : vector<9x16xf32> to vector<1x16xf32>
    %388 = vector.broadcast %387 : vector<1x16xf32> to vector<64x16xf32>
    %389 = arith.mulf %386, %388 : vector<64x16xf32>
    %390 = arith.addf %382, %389 : vector<64x16xf32>
    %cst_141 = arith.constant 0.000000e+00 : f32
    %391 = vector.broadcast %cst_141 : f32 to vector<1x8x16xf32>
    %392 = vector.extract_strided_slice %338 {offsets = [1, 0, 0], sizes = [7, 8, 16], strides = [1, 1, 1]} : vector<8x8x16xf32> to vector<7x8x16xf32>
    %393 = tpu.concatenate %392, %391 in 0 : vector<7x8x16xf32>, vector<1x8x16xf32> -> vector<8x8x16xf32>
    %cst_142 = arith.constant 0.000000e+00 : f32
    %394 = vector.broadcast %cst_142 : f32 to vector<8x1x16xf32>
    %395 = vector.extract_strided_slice %393 {offsets = [0, 0, 0], sizes = [8, 7, 16], strides = [1, 1, 1]} : vector<8x8x16xf32> to vector<8x7x16xf32>
    %396 = tpu.concatenate %394, %395 in 1 : vector<8x1x16xf32>, vector<8x7x16xf32> -> vector<8x8x16xf32>
    %397 = vector.shape_cast %396 : vector<8x8x16xf32> to vector<64x16xf32>
    %398 = vector.extract_strided_slice %286 {offsets = [6, 0], sizes = [1, 16], strides = [1, 1]} : vector<9x16xf32> to vector<1x16xf32>
    %399 = vector.broadcast %398 : vector<1x16xf32> to vector<64x16xf32>
    %400 = arith.mulf %397, %399 : vector<64x16xf32>
    %401 = arith.addf %390, %400 : vector<64x16xf32>
    %cst_143 = arith.constant 0.000000e+00 : f32
    %402 = vector.broadcast %cst_143 : f32 to vector<1x8x16xf32>
    %403 = vector.extract_strided_slice %338 {offsets = [1, 0, 0], sizes = [7, 8, 16], strides = [1, 1, 1]} : vector<8x8x16xf32> to vector<7x8x16xf32>
    %404 = tpu.concatenate %403, %402 in 0 : vector<7x8x16xf32>, vector<1x8x16xf32> -> vector<8x8x16xf32>
    %405 = vector.shape_cast %404 : vector<8x8x16xf32> to vector<64x16xf32>
    %406 = vector.extract_strided_slice %286 {offsets = [7, 0], sizes = [1, 16], strides = [1, 1]} : vector<9x16xf32> to vector<1x16xf32>
    %407 = vector.broadcast %406 : vector<1x16xf32> to vector<64x16xf32>
    %408 = arith.mulf %405, %407 : vector<64x16xf32>
    %409 = arith.addf %401, %408 : vector<64x16xf32>
    %cst_144 = arith.constant 0.000000e+00 : f32
    %410 = vector.broadcast %cst_144 : f32 to vector<1x8x16xf32>
    %411 = vector.extract_strided_slice %338 {offsets = [1, 0, 0], sizes = [7, 8, 16], strides = [1, 1, 1]} : vector<8x8x16xf32> to vector<7x8x16xf32>
    %412 = tpu.concatenate %411, %410 in 0 : vector<7x8x16xf32>, vector<1x8x16xf32> -> vector<8x8x16xf32>
    %cst_145 = arith.constant 0.000000e+00 : f32
    %413 = vector.broadcast %cst_145 : f32 to vector<8x1x16xf32>
    %414 = vector.extract_strided_slice %412 {offsets = [0, 1, 0], sizes = [8, 7, 16], strides = [1, 1, 1]} : vector<8x8x16xf32> to vector<8x7x16xf32>
    %415 = tpu.concatenate %414, %413 in 1 : vector<8x7x16xf32>, vector<8x1x16xf32> -> vector<8x8x16xf32>
    %416 = vector.shape_cast %415 : vector<8x8x16xf32> to vector<64x16xf32>
    %417 = vector.extract_strided_slice %286 {offsets = [8, 0], sizes = [1, 16], strides = [1, 1]} : vector<9x16xf32> to vector<1x16xf32>
    %418 = vector.broadcast %417 : vector<1x16xf32> to vector<64x16xf32>
    %419 = arith.mulf %416, %418 : vector<64x16xf32>
    %420 = arith.addf %409, %419 : vector<64x16xf32>
    %cst_146 = arith.constant 5.000000e-01 : f32
    %421 = vector.broadcast %cst_146 : f32 to vector<64x16xf32>
    %422 = arith.mulf %421, %420 : vector<64x16xf32>
    %cst_147 = arith.constant 4.471500e-02 : f32
    %423 = vector.broadcast %cst_147 : f32 to vector<64x16xf32>
    %424 = arith.mulf %423, %420 : vector<64x16xf32>
    %425 = arith.mulf %424, %420 : vector<64x16xf32>
    %426 = arith.mulf %425, %420 : vector<64x16xf32>
    %427 = arith.addf %420, %426 : vector<64x16xf32>
    %cst_148 = arith.constant 0.797884583 : f32
    %428 = vector.broadcast %cst_148 : f32 to vector<64x16xf32>
    %429 = arith.mulf %428, %427 : vector<64x16xf32>
    %430 = math.tanh %429 : vector<64x16xf32>
    %cst_149 = arith.constant 1.000000e+00 : f32
    %431 = vector.broadcast %cst_149 : f32 to vector<64x16xf32>
    %432 = arith.addf %431, %430 : vector<64x16xf32>
    %433 = arith.mulf %422, %432 : vector<64x16xf32>
    %434 = vector.shape_cast %433 : vector<64x16xf32> to vector<8x8x16xf32>
    %cst_150 = arith.constant 0.000000e+00 : f32
    %435 = vector.broadcast %cst_150 : f32 to vector<64x16xf32>
    %cst_151 = arith.constant 0.000000e+00 : f32
    %436 = vector.broadcast %cst_151 : f32 to vector<1x8x16xf32>
    %437 = vector.extract_strided_slice %434 {offsets = [0, 0, 0], sizes = [7, 8, 16], strides = [1, 1, 1]} : vector<8x8x16xf32> to vector<7x8x16xf32>
    %438 = tpu.concatenate %436, %437 in 0 : vector<1x8x16xf32>, vector<7x8x16xf32> -> vector<8x8x16xf32>
    %cst_152 = arith.constant 0.000000e+00 : f32
    %439 = vector.broadcast %cst_152 : f32 to vector<8x1x16xf32>
    %440 = vector.extract_strided_slice %438 {offsets = [0, 0, 0], sizes = [8, 7, 16], strides = [1, 1, 1]} : vector<8x8x16xf32> to vector<8x7x16xf32>
    %441 = tpu.concatenate %439, %440 in 1 : vector<8x1x16xf32>, vector<8x7x16xf32> -> vector<8x8x16xf32>
    %442 = vector.shape_cast %441 : vector<8x8x16xf32> to vector<64x16xf32>
    %443 = vector.extract_strided_slice %288 {offsets = [0, 0], sizes = [1, 16], strides = [1, 1]} : vector<9x16xf32> to vector<1x16xf32>
    %444 = vector.broadcast %443 : vector<1x16xf32> to vector<64x16xf32>
    %445 = arith.mulf %442, %444 : vector<64x16xf32>
    %446 = arith.addf %435, %445 : vector<64x16xf32>
    %cst_153 = arith.constant 0.000000e+00 : f32
    %447 = vector.broadcast %cst_153 : f32 to vector<1x8x16xf32>
    %448 = vector.extract_strided_slice %434 {offsets = [0, 0, 0], sizes = [7, 8, 16], strides = [1, 1, 1]} : vector<8x8x16xf32> to vector<7x8x16xf32>
    %449 = tpu.concatenate %447, %448 in 0 : vector<1x8x16xf32>, vector<7x8x16xf32> -> vector<8x8x16xf32>
    %450 = vector.shape_cast %449 : vector<8x8x16xf32> to vector<64x16xf32>
    %451 = vector.extract_strided_slice %288 {offsets = [1, 0], sizes = [1, 16], strides = [1, 1]} : vector<9x16xf32> to vector<1x16xf32>
    %452 = vector.broadcast %451 : vector<1x16xf32> to vector<64x16xf32>
    %453 = arith.mulf %450, %452 : vector<64x16xf32>
    %454 = arith.addf %446, %453 : vector<64x16xf32>
    %cst_154 = arith.constant 0.000000e+00 : f32
    %455 = vector.broadcast %cst_154 : f32 to vector<1x8x16xf32>
    %456 = vector.extract_strided_slice %434 {offsets = [0, 0, 0], sizes = [7, 8, 16], strides = [1, 1, 1]} : vector<8x8x16xf32> to vector<7x8x16xf32>
    %457 = tpu.concatenate %455, %456 in 0 : vector<1x8x16xf32>, vector<7x8x16xf32> -> vector<8x8x16xf32>
    %cst_155 = arith.constant 0.000000e+00 : f32
    %458 = vector.broadcast %cst_155 : f32 to vector<8x1x16xf32>
    %459 = vector.extract_strided_slice %457 {offsets = [0, 1, 0], sizes = [8, 7, 16], strides = [1, 1, 1]} : vector<8x8x16xf32> to vector<8x7x16xf32>
    %460 = tpu.concatenate %459, %458 in 1 : vector<8x7x16xf32>, vector<8x1x16xf32> -> vector<8x8x16xf32>
    %461 = vector.shape_cast %460 : vector<8x8x16xf32> to vector<64x16xf32>
    %462 = vector.extract_strided_slice %288 {offsets = [2, 0], sizes = [1, 16], strides = [1, 1]} : vector<9x16xf32> to vector<1x16xf32>
    %463 = vector.broadcast %462 : vector<1x16xf32> to vector<64x16xf32>
    %464 = arith.mulf %461, %463 : vector<64x16xf32>
    %465 = arith.addf %454, %464 : vector<64x16xf32>
    %cst_156 = arith.constant 0.000000e+00 : f32
    %466 = vector.broadcast %cst_156 : f32 to vector<8x1x16xf32>
    %467 = vector.extract_strided_slice %434 {offsets = [0, 0, 0], sizes = [8, 7, 16], strides = [1, 1, 1]} : vector<8x8x16xf32> to vector<8x7x16xf32>
    %468 = tpu.concatenate %466, %467 in 1 : vector<8x1x16xf32>, vector<8x7x16xf32> -> vector<8x8x16xf32>
    %469 = vector.shape_cast %468 : vector<8x8x16xf32> to vector<64x16xf32>
    %470 = vector.extract_strided_slice %288 {offsets = [3, 0], sizes = [1, 16], strides = [1, 1]} : vector<9x16xf32> to vector<1x16xf32>
    %471 = vector.broadcast %470 : vector<1x16xf32> to vector<64x16xf32>
    %472 = arith.mulf %469, %471 : vector<64x16xf32>
    %473 = arith.addf %465, %472 : vector<64x16xf32>
    %474 = vector.shape_cast %434 : vector<8x8x16xf32> to vector<64x16xf32>
    %475 = vector.extract_strided_slice %288 {offsets = [4, 0], sizes = [1, 16], strides = [1, 1]} : vector<9x16xf32> to vector<1x16xf32>
    %476 = vector.broadcast %475 : vector<1x16xf32> to vector<64x16xf32>
    %477 = arith.mulf %474, %476 : vector<64x16xf32>
    %478 = arith.addf %473, %477 : vector<64x16xf32>
    %cst_157 = arith.constant 0.000000e+00 : f32
    %479 = vector.broadcast %cst_157 : f32 to vector<8x1x16xf32>
    %480 = vector.extract_strided_slice %434 {offsets = [0, 1, 0], sizes = [8, 7, 16], strides = [1, 1, 1]} : vector<8x8x16xf32> to vector<8x7x16xf32>
    %481 = tpu.concatenate %480, %479 in 1 : vector<8x7x16xf32>, vector<8x1x16xf32> -> vector<8x8x16xf32>
    %482 = vector.shape_cast %481 : vector<8x8x16xf32> to vector<64x16xf32>
    %483 = vector.extract_strided_slice %288 {offsets = [5, 0], sizes = [1, 16], strides = [1, 1]} : vector<9x16xf32> to vector<1x16xf32>
    %484 = vector.broadcast %483 : vector<1x16xf32> to vector<64x16xf32>
    %485 = arith.mulf %482, %484 : vector<64x16xf32>
    %486 = arith.addf %478, %485 : vector<64x16xf32>
    %cst_158 = arith.constant 0.000000e+00 : f32
    %487 = vector.broadcast %cst_158 : f32 to vector<1x8x16xf32>
    %488 = vector.extract_strided_slice %434 {offsets = [1, 0, 0], sizes = [7, 8, 16], strides = [1, 1, 1]} : vector<8x8x16xf32> to vector<7x8x16xf32>
    %489 = tpu.concatenate %488, %487 in 0 : vector<7x8x16xf32>, vector<1x8x16xf32> -> vector<8x8x16xf32>
    %cst_159 = arith.constant 0.000000e+00 : f32
    %490 = vector.broadcast %cst_159 : f32 to vector<8x1x16xf32>
    %491 = vector.extract_strided_slice %489 {offsets = [0, 0, 0], sizes = [8, 7, 16], strides = [1, 1, 1]} : vector<8x8x16xf32> to vector<8x7x16xf32>
    %492 = tpu.concatenate %490, %491 in 1 : vector<8x1x16xf32>, vector<8x7x16xf32> -> vector<8x8x16xf32>
    %493 = vector.shape_cast %492 : vector<8x8x16xf32> to vector<64x16xf32>
    %494 = vector.extract_strided_slice %288 {offsets = [6, 0], sizes = [1, 16], strides = [1, 1]} : vector<9x16xf32> to vector<1x16xf32>
    %495 = vector.broadcast %494 : vector<1x16xf32> to vector<64x16xf32>
    %496 = arith.mulf %493, %495 : vector<64x16xf32>
    %497 = arith.addf %486, %496 : vector<64x16xf32>
    %cst_160 = arith.constant 0.000000e+00 : f32
    %498 = vector.broadcast %cst_160 : f32 to vector<1x8x16xf32>
    %499 = vector.extract_strided_slice %434 {offsets = [1, 0, 0], sizes = [7, 8, 16], strides = [1, 1, 1]} : vector<8x8x16xf32> to vector<7x8x16xf32>
    %500 = tpu.concatenate %499, %498 in 0 : vector<7x8x16xf32>, vector<1x8x16xf32> -> vector<8x8x16xf32>
    %501 = vector.shape_cast %500 : vector<8x8x16xf32> to vector<64x16xf32>
    %502 = vector.extract_strided_slice %288 {offsets = [7, 0], sizes = [1, 16], strides = [1, 1]} : vector<9x16xf32> to vector<1x16xf32>
    %503 = vector.broadcast %502 : vector<1x16xf32> to vector<64x16xf32>
    %504 = arith.mulf %501, %503 : vector<64x16xf32>
    %505 = arith.addf %497, %504 : vector<64x16xf32>
    %cst_161 = arith.constant 0.000000e+00 : f32
    %506 = vector.broadcast %cst_161 : f32 to vector<1x8x16xf32>
    %507 = vector.extract_strided_slice %434 {offsets = [1, 0, 0], sizes = [7, 8, 16], strides = [1, 1, 1]} : vector<8x8x16xf32> to vector<7x8x16xf32>
    %508 = tpu.concatenate %507, %506 in 0 : vector<7x8x16xf32>, vector<1x8x16xf32> -> vector<8x8x16xf32>
    %cst_162 = arith.constant 0.000000e+00 : f32
    %509 = vector.broadcast %cst_162 : f32 to vector<8x1x16xf32>
    %510 = vector.extract_strided_slice %508 {offsets = [0, 1, 0], sizes = [8, 7, 16], strides = [1, 1, 1]} : vector<8x8x16xf32> to vector<8x7x16xf32>
    %511 = tpu.concatenate %510, %509 in 1 : vector<8x7x16xf32>, vector<8x1x16xf32> -> vector<8x8x16xf32>
    %512 = vector.shape_cast %511 : vector<8x8x16xf32> to vector<64x16xf32>
    %513 = vector.extract_strided_slice %288 {offsets = [8, 0], sizes = [1, 16], strides = [1, 1]} : vector<9x16xf32> to vector<1x16xf32>
    %514 = vector.broadcast %513 : vector<1x16xf32> to vector<64x16xf32>
    %515 = arith.mulf %512, %514 : vector<64x16xf32>
    %516 = arith.addf %505, %515 : vector<64x16xf32>
    %517 = arith.addf %276, %337 : vector<64x16xf32>
    %518 = arith.addf %517, %516 : vector<64x16xf32>
    %cst_163 = arith.constant dense<0.000000e+00> : vector<64xf32>
    %519 = vector.multi_reduction <add>, %518, %cst_163 [1] : vector<64x16xf32> to vector<64xf32>
    %520 = vector.shape_cast %519 : vector<64xf32> to vector<64x1xf32>
    %cst_164 = arith.constant 1.600000e+01 : f32
    %521 = vector.broadcast %cst_164 : f32 to vector<64x1xf32>
    %522 = arith.divf %520, %521 : vector<64x1xf32>
    %523 = vector.broadcast %522 : vector<64x1xf32> to vector<64x16xf32>
    %524 = arith.subf %518, %523 : vector<64x16xf32>
    %525 = arith.mulf %524, %524 : vector<64x16xf32>
    %cst_165 = arith.constant dense<0.000000e+00> : vector<64xf32>
    %526 = vector.multi_reduction <add>, %525, %cst_165 [1] : vector<64x16xf32> to vector<64xf32>
    %527 = vector.shape_cast %526 : vector<64xf32> to vector<64x1xf32>
    %cst_166 = arith.constant 1.600000e+01 : f32
    %528 = vector.broadcast %cst_166 : f32 to vector<64x1xf32>
    %529 = arith.divf %527, %528 : vector<64x1xf32>
    %cst_167 = arith.constant 9.99999974E-6 : f32
    %530 = vector.broadcast %cst_167 : f32 to vector<64x1xf32>
    %531 = arith.addf %529, %530 : vector<64x1xf32>
    %532 = math.rsqrt %531 : vector<64x1xf32>
    %533 = vector.broadcast %532 : vector<64x1xf32> to vector<64x16xf32>
    %534 = arith.mulf %524, %533 : vector<64x16xf32>
    %535 = vector.broadcast %290 : vector<1x16xf32> to vector<64x16xf32>
    %536 = arith.mulf %534, %535 : vector<64x16xf32>
    %537 = vector.broadcast %292 : vector<1x16xf32> to vector<64x16xf32>
    %538 = arith.addf %536, %537 : vector<64x16xf32>
    %539 = arith.truncf %538 : vector<64x16xf32> to vector<64x16xbf16>
    %cst_168 = arith.constant dense<0.000000e+00> : vector<64x64xf32>
    %540 = tpu.matmul %539, %294, %cst_168 {dimension_numbers = #tpu.dot_dimension_numbers<[1], [0], [0], [1], [0, 0, 1, 1], [], []>} : vector<64x16xbf16>, vector<16x64xbf16>, vector<64x64xf32> -> vector<64x64xf32>
    %cst_169 = arith.constant 5.000000e-01 : f32
    %541 = vector.broadcast %cst_169 : f32 to vector<64x64xf32>
    %542 = arith.mulf %541, %540 : vector<64x64xf32>
    %cst_170 = arith.constant 4.471500e-02 : f32
    %543 = vector.broadcast %cst_170 : f32 to vector<64x64xf32>
    %544 = arith.mulf %543, %540 : vector<64x64xf32>
    %545 = arith.mulf %544, %540 : vector<64x64xf32>
    %546 = arith.mulf %545, %540 : vector<64x64xf32>
    %547 = arith.addf %540, %546 : vector<64x64xf32>
    %cst_171 = arith.constant 0.797884583 : f32
    %548 = vector.broadcast %cst_171 : f32 to vector<64x64xf32>
    %549 = arith.mulf %548, %547 : vector<64x64xf32>
    %550 = math.tanh %549 : vector<64x64xf32>
    %cst_172 = arith.constant 1.000000e+00 : f32
    %551 = vector.broadcast %cst_172 : f32 to vector<64x64xf32>
    %552 = arith.addf %551, %550 : vector<64x64xf32>
    %553 = arith.mulf %542, %552 : vector<64x64xf32>
    %554 = vector.shape_cast %553 : vector<64x64xf32> to vector<8x8x64xf32>
    %cst_173 = arith.constant 0.000000e+00 : f32
    %555 = vector.broadcast %cst_173 : f32 to vector<64x64xf32>
    %cst_174 = arith.constant 0.000000e+00 : f32
    %556 = vector.broadcast %cst_174 : f32 to vector<1x8x64xf32>
    %557 = vector.extract_strided_slice %554 {offsets = [0, 0, 0], sizes = [7, 8, 64], strides = [1, 1, 1]} : vector<8x8x64xf32> to vector<7x8x64xf32>
    %558 = tpu.concatenate %556, %557 in 0 : vector<1x8x64xf32>, vector<7x8x64xf32> -> vector<8x8x64xf32>
    %cst_175 = arith.constant 0.000000e+00 : f32
    %559 = vector.broadcast %cst_175 : f32 to vector<8x1x64xf32>
    %560 = vector.extract_strided_slice %558 {offsets = [0, 0, 0], sizes = [8, 7, 64], strides = [1, 1, 1]} : vector<8x8x64xf32> to vector<8x7x64xf32>
    %561 = tpu.concatenate %559, %560 in 1 : vector<8x1x64xf32>, vector<8x7x64xf32> -> vector<8x8x64xf32>
    %562 = vector.shape_cast %561 : vector<8x8x64xf32> to vector<64x64xf32>
    %563 = vector.extract_strided_slice %296 {offsets = [0, 0], sizes = [1, 64], strides = [1, 1]} : vector<9x64xf32> to vector<1x64xf32>
    %564 = vector.broadcast %563 : vector<1x64xf32> to vector<64x64xf32>
    %565 = arith.mulf %562, %564 : vector<64x64xf32>
    %566 = arith.addf %555, %565 : vector<64x64xf32>
    %cst_176 = arith.constant 0.000000e+00 : f32
    %567 = vector.broadcast %cst_176 : f32 to vector<1x8x64xf32>
    %568 = vector.extract_strided_slice %554 {offsets = [0, 0, 0], sizes = [7, 8, 64], strides = [1, 1, 1]} : vector<8x8x64xf32> to vector<7x8x64xf32>
    %569 = tpu.concatenate %567, %568 in 0 : vector<1x8x64xf32>, vector<7x8x64xf32> -> vector<8x8x64xf32>
    %570 = vector.shape_cast %569 : vector<8x8x64xf32> to vector<64x64xf32>
    %571 = vector.extract_strided_slice %296 {offsets = [1, 0], sizes = [1, 64], strides = [1, 1]} : vector<9x64xf32> to vector<1x64xf32>
    %572 = vector.broadcast %571 : vector<1x64xf32> to vector<64x64xf32>
    %573 = arith.mulf %570, %572 : vector<64x64xf32>
    %574 = arith.addf %566, %573 : vector<64x64xf32>
    %cst_177 = arith.constant 0.000000e+00 : f32
    %575 = vector.broadcast %cst_177 : f32 to vector<1x8x64xf32>
    %576 = vector.extract_strided_slice %554 {offsets = [0, 0, 0], sizes = [7, 8, 64], strides = [1, 1, 1]} : vector<8x8x64xf32> to vector<7x8x64xf32>
    %577 = tpu.concatenate %575, %576 in 0 : vector<1x8x64xf32>, vector<7x8x64xf32> -> vector<8x8x64xf32>
    %cst_178 = arith.constant 0.000000e+00 : f32
    %578 = vector.broadcast %cst_178 : f32 to vector<8x1x64xf32>
    %579 = vector.extract_strided_slice %577 {offsets = [0, 1, 0], sizes = [8, 7, 64], strides = [1, 1, 1]} : vector<8x8x64xf32> to vector<8x7x64xf32>
    %580 = tpu.concatenate %579, %578 in 1 : vector<8x7x64xf32>, vector<8x1x64xf32> -> vector<8x8x64xf32>
    %581 = vector.shape_cast %580 : vector<8x8x64xf32> to vector<64x64xf32>
    %582 = vector.extract_strided_slice %296 {offsets = [2, 0], sizes = [1, 64], strides = [1, 1]} : vector<9x64xf32> to vector<1x64xf32>
    %583 = vector.broadcast %582 : vector<1x64xf32> to vector<64x64xf32>
    %584 = arith.mulf %581, %583 : vector<64x64xf32>
    %585 = arith.addf %574, %584 : vector<64x64xf32>
    %cst_179 = arith.constant 0.000000e+00 : f32
    %586 = vector.broadcast %cst_179 : f32 to vector<8x1x64xf32>
    %587 = vector.extract_strided_slice %554 {offsets = [0, 0, 0], sizes = [8, 7, 64], strides = [1, 1, 1]} : vector<8x8x64xf32> to vector<8x7x64xf32>
    %588 = tpu.concatenate %586, %587 in 1 : vector<8x1x64xf32>, vector<8x7x64xf32> -> vector<8x8x64xf32>
    %589 = vector.shape_cast %588 : vector<8x8x64xf32> to vector<64x64xf32>
    %590 = vector.extract_strided_slice %296 {offsets = [3, 0], sizes = [1, 64], strides = [1, 1]} : vector<9x64xf32> to vector<1x64xf32>
    %591 = vector.broadcast %590 : vector<1x64xf32> to vector<64x64xf32>
    %592 = arith.mulf %589, %591 : vector<64x64xf32>
    %593 = arith.addf %585, %592 : vector<64x64xf32>
    %594 = vector.shape_cast %554 : vector<8x8x64xf32> to vector<64x64xf32>
    %595 = vector.extract_strided_slice %296 {offsets = [4, 0], sizes = [1, 64], strides = [1, 1]} : vector<9x64xf32> to vector<1x64xf32>
    %596 = vector.broadcast %595 : vector<1x64xf32> to vector<64x64xf32>
    %597 = arith.mulf %594, %596 : vector<64x64xf32>
    %598 = arith.addf %593, %597 : vector<64x64xf32>
    %cst_180 = arith.constant 0.000000e+00 : f32
    %599 = vector.broadcast %cst_180 : f32 to vector<8x1x64xf32>
    %600 = vector.extract_strided_slice %554 {offsets = [0, 1, 0], sizes = [8, 7, 64], strides = [1, 1, 1]} : vector<8x8x64xf32> to vector<8x7x64xf32>
    %601 = tpu.concatenate %600, %599 in 1 : vector<8x7x64xf32>, vector<8x1x64xf32> -> vector<8x8x64xf32>
    %602 = vector.shape_cast %601 : vector<8x8x64xf32> to vector<64x64xf32>
    %603 = vector.extract_strided_slice %296 {offsets = [5, 0], sizes = [1, 64], strides = [1, 1]} : vector<9x64xf32> to vector<1x64xf32>
    %604 = vector.broadcast %603 : vector<1x64xf32> to vector<64x64xf32>
    %605 = arith.mulf %602, %604 : vector<64x64xf32>
    %606 = arith.addf %598, %605 : vector<64x64xf32>
    %cst_181 = arith.constant 0.000000e+00 : f32
    %607 = vector.broadcast %cst_181 : f32 to vector<1x8x64xf32>
    %608 = vector.extract_strided_slice %554 {offsets = [1, 0, 0], sizes = [7, 8, 64], strides = [1, 1, 1]} : vector<8x8x64xf32> to vector<7x8x64xf32>
    %609 = tpu.concatenate %608, %607 in 0 : vector<7x8x64xf32>, vector<1x8x64xf32> -> vector<8x8x64xf32>
    %cst_182 = arith.constant 0.000000e+00 : f32
    %610 = vector.broadcast %cst_182 : f32 to vector<8x1x64xf32>
    %611 = vector.extract_strided_slice %609 {offsets = [0, 0, 0], sizes = [8, 7, 64], strides = [1, 1, 1]} : vector<8x8x64xf32> to vector<8x7x64xf32>
    %612 = tpu.concatenate %610, %611 in 1 : vector<8x1x64xf32>, vector<8x7x64xf32> -> vector<8x8x64xf32>
    %613 = vector.shape_cast %612 : vector<8x8x64xf32> to vector<64x64xf32>
    %614 = vector.extract_strided_slice %296 {offsets = [6, 0], sizes = [1, 64], strides = [1, 1]} : vector<9x64xf32> to vector<1x64xf32>
    %615 = vector.broadcast %614 : vector<1x64xf32> to vector<64x64xf32>
    %616 = arith.mulf %613, %615 : vector<64x64xf32>
    %617 = arith.addf %606, %616 : vector<64x64xf32>
    %cst_183 = arith.constant 0.000000e+00 : f32
    %618 = vector.broadcast %cst_183 : f32 to vector<1x8x64xf32>
    %619 = vector.extract_strided_slice %554 {offsets = [1, 0, 0], sizes = [7, 8, 64], strides = [1, 1, 1]} : vector<8x8x64xf32> to vector<7x8x64xf32>
    %620 = tpu.concatenate %619, %618 in 0 : vector<7x8x64xf32>, vector<1x8x64xf32> -> vector<8x8x64xf32>
    %621 = vector.shape_cast %620 : vector<8x8x64xf32> to vector<64x64xf32>
    %622 = vector.extract_strided_slice %296 {offsets = [7, 0], sizes = [1, 64], strides = [1, 1]} : vector<9x64xf32> to vector<1x64xf32>
    %623 = vector.broadcast %622 : vector<1x64xf32> to vector<64x64xf32>
    %624 = arith.mulf %621, %623 : vector<64x64xf32>
    %625 = arith.addf %617, %624 : vector<64x64xf32>
    %cst_184 = arith.constant 0.000000e+00 : f32
    %626 = vector.broadcast %cst_184 : f32 to vector<1x8x64xf32>
    %627 = vector.extract_strided_slice %554 {offsets = [1, 0, 0], sizes = [7, 8, 64], strides = [1, 1, 1]} : vector<8x8x64xf32> to vector<7x8x64xf32>
    %628 = tpu.concatenate %627, %626 in 0 : vector<7x8x64xf32>, vector<1x8x64xf32> -> vector<8x8x64xf32>
    %cst_185 = arith.constant 0.000000e+00 : f32
    %629 = vector.broadcast %cst_185 : f32 to vector<8x1x64xf32>
    %630 = vector.extract_strided_slice %628 {offsets = [0, 1, 0], sizes = [8, 7, 64], strides = [1, 1, 1]} : vector<8x8x64xf32> to vector<8x7x64xf32>
    %631 = tpu.concatenate %630, %629 in 1 : vector<8x7x64xf32>, vector<8x1x64xf32> -> vector<8x8x64xf32>
    %632 = vector.shape_cast %631 : vector<8x8x64xf32> to vector<64x64xf32>
    %633 = vector.extract_strided_slice %296 {offsets = [8, 0], sizes = [1, 64], strides = [1, 1]} : vector<9x64xf32> to vector<1x64xf32>
    %634 = vector.broadcast %633 : vector<1x64xf32> to vector<64x64xf32>
    %635 = arith.mulf %632, %634 : vector<64x64xf32>
    %636 = arith.addf %625, %635 : vector<64x64xf32>
    %cst_186 = arith.constant 5.000000e-01 : f32
    %637 = vector.broadcast %cst_186 : f32 to vector<64x64xf32>
    %638 = arith.mulf %637, %636 : vector<64x64xf32>
    %cst_187 = arith.constant 4.471500e-02 : f32
    %639 = vector.broadcast %cst_187 : f32 to vector<64x64xf32>
    %640 = arith.mulf %639, %636 : vector<64x64xf32>
    %641 = arith.mulf %640, %636 : vector<64x64xf32>
    %642 = arith.mulf %641, %636 : vector<64x64xf32>
    %643 = arith.addf %636, %642 : vector<64x64xf32>
    %cst_188 = arith.constant 0.797884583 : f32
    %644 = vector.broadcast %cst_188 : f32 to vector<64x64xf32>
    %645 = arith.mulf %644, %643 : vector<64x64xf32>
    %646 = math.tanh %645 : vector<64x64xf32>
    %cst_189 = arith.constant 1.000000e+00 : f32
    %647 = vector.broadcast %cst_189 : f32 to vector<64x64xf32>
    %648 = arith.addf %647, %646 : vector<64x64xf32>
    %649 = arith.mulf %638, %648 : vector<64x64xf32>
    %650 = arith.truncf %649 : vector<64x64xf32> to vector<64x64xbf16>
    %cst_190 = arith.constant dense<0.000000e+00> : vector<64x16xf32>
    %651 = tpu.matmul %650, %298, %cst_190 {dimension_numbers = #tpu.dot_dimension_numbers<[1], [0], [0], [1], [0, 0, 1, 1], [], []>} : vector<64x64xbf16>, vector<64x16xbf16>, vector<64x16xf32> -> vector<64x16xf32>
    %652 = arith.addf %518, %651 : vector<64x16xf32>
    %c0_191 = arith.constant 0 : index
    %c0_192 = arith.constant 0 : index
    %c0_193 = arith.constant 0 : index
    %c0_194 = arith.constant 0 : index
    %653 = vector.load %arg19[%c0_191, %c0_192, %c0_193, %c0_194] : memref<1x3x144x16xbf16, #tpu.memory_space<vmem>>, vector<1x1x144x16xbf16>
    %654 = vector.shape_cast %653 : vector<1x1x144x16xbf16> to vector<144x16xbf16>
    %655 = vector.shape_cast %652 : vector<64x16xf32> to vector<8x8x16xf32>
    %cst_195 = arith.constant 0.000000e+00 : f32
    %656 = vector.broadcast %cst_195 : f32 to vector<1x8x16xf32>
    %657 = vector.extract_strided_slice %655 {offsets = [0, 0, 0], sizes = [7, 8, 16], strides = [1, 1, 1]} : vector<8x8x16xf32> to vector<7x8x16xf32>
    %658 = tpu.concatenate %656, %657 in 0 : vector<1x8x16xf32>, vector<7x8x16xf32> -> vector<8x8x16xf32>
    %cst_196 = arith.constant 0.000000e+00 : f32
    %659 = vector.broadcast %cst_196 : f32 to vector<8x1x16xf32>
    %660 = vector.extract_strided_slice %658 {offsets = [0, 0, 0], sizes = [8, 7, 16], strides = [1, 1, 1]} : vector<8x8x16xf32> to vector<8x7x16xf32>
    %661 = tpu.concatenate %659, %660 in 1 : vector<8x1x16xf32>, vector<8x7x16xf32> -> vector<8x8x16xf32>
    %662 = vector.shape_cast %661 : vector<8x8x16xf32> to vector<64x16xf32>
    %663 = arith.truncf %662 : vector<64x16xf32> to vector<64x16xbf16>
    %664 = vector.extract_strided_slice %654 {offsets = [0, 0], sizes = [16, 16], strides = [1, 1]} : vector<144x16xbf16> to vector<16x16xbf16>
    %cst_197 = arith.constant dense<0.000000e+00> : vector<64x16xf32>
    %665 = tpu.matmul %663, %664, %cst_197 {dimension_numbers = #tpu.dot_dimension_numbers<[1], [0], [0], [1], [0, 0, 1, 1], [], []>} : vector<64x16xbf16>, vector<16x16xbf16>, vector<64x16xf32> -> vector<64x16xf32>
    %cst_198 = arith.constant 0.000000e+00 : f32
    %666 = vector.broadcast %cst_198 : f32 to vector<1x8x16xf32>
    %667 = vector.extract_strided_slice %655 {offsets = [0, 0, 0], sizes = [7, 8, 16], strides = [1, 1, 1]} : vector<8x8x16xf32> to vector<7x8x16xf32>
    %668 = tpu.concatenate %666, %667 in 0 : vector<1x8x16xf32>, vector<7x8x16xf32> -> vector<8x8x16xf32>
    %669 = vector.shape_cast %668 : vector<8x8x16xf32> to vector<64x16xf32>
    %670 = arith.truncf %669 : vector<64x16xf32> to vector<64x16xbf16>
    %671 = vector.extract_strided_slice %654 {offsets = [16, 0], sizes = [16, 16], strides = [1, 1]} : vector<144x16xbf16> to vector<16x16xbf16>
    %cst_199 = arith.constant dense<0.000000e+00> : vector<64x16xf32>
    %672 = tpu.matmul %670, %671, %cst_199 {dimension_numbers = #tpu.dot_dimension_numbers<[1], [0], [0], [1], [0, 0, 1, 1], [], []>} : vector<64x16xbf16>, vector<16x16xbf16>, vector<64x16xf32> -> vector<64x16xf32>
    %673 = arith.addf %665, %672 : vector<64x16xf32>
    %cst_200 = arith.constant 0.000000e+00 : f32
    %674 = vector.broadcast %cst_200 : f32 to vector<1x8x16xf32>
    %675 = vector.extract_strided_slice %655 {offsets = [0, 0, 0], sizes = [7, 8, 16], strides = [1, 1, 1]} : vector<8x8x16xf32> to vector<7x8x16xf32>
    %676 = tpu.concatenate %674, %675 in 0 : vector<1x8x16xf32>, vector<7x8x16xf32> -> vector<8x8x16xf32>
    %cst_201 = arith.constant 0.000000e+00 : f32
    %677 = vector.broadcast %cst_201 : f32 to vector<8x1x16xf32>
    %678 = vector.extract_strided_slice %676 {offsets = [0, 1, 0], sizes = [8, 7, 16], strides = [1, 1, 1]} : vector<8x8x16xf32> to vector<8x7x16xf32>
    %679 = tpu.concatenate %678, %677 in 1 : vector<8x7x16xf32>, vector<8x1x16xf32> -> vector<8x8x16xf32>
    %680 = vector.shape_cast %679 : vector<8x8x16xf32> to vector<64x16xf32>
    %681 = arith.truncf %680 : vector<64x16xf32> to vector<64x16xbf16>
    %682 = vector.extract_strided_slice %654 {offsets = [32, 0], sizes = [16, 16], strides = [1, 1]} : vector<144x16xbf16> to vector<16x16xbf16>
    %cst_202 = arith.constant dense<0.000000e+00> : vector<64x16xf32>
    %683 = tpu.matmul %681, %682, %cst_202 {dimension_numbers = #tpu.dot_dimension_numbers<[1], [0], [0], [1], [0, 0, 1, 1], [], []>} : vector<64x16xbf16>, vector<16x16xbf16>, vector<64x16xf32> -> vector<64x16xf32>
    %684 = arith.addf %673, %683 : vector<64x16xf32>
    %cst_203 = arith.constant 0.000000e+00 : f32
    %685 = vector.broadcast %cst_203 : f32 to vector<8x1x16xf32>
    %686 = vector.extract_strided_slice %655 {offsets = [0, 0, 0], sizes = [8, 7, 16], strides = [1, 1, 1]} : vector<8x8x16xf32> to vector<8x7x16xf32>
    %687 = tpu.concatenate %685, %686 in 1 : vector<8x1x16xf32>, vector<8x7x16xf32> -> vector<8x8x16xf32>
    %688 = vector.shape_cast %687 : vector<8x8x16xf32> to vector<64x16xf32>
    %689 = arith.truncf %688 : vector<64x16xf32> to vector<64x16xbf16>
    %690 = vector.extract_strided_slice %654 {offsets = [48, 0], sizes = [16, 16], strides = [1, 1]} : vector<144x16xbf16> to vector<16x16xbf16>
    %cst_204 = arith.constant dense<0.000000e+00> : vector<64x16xf32>
    %691 = tpu.matmul %689, %690, %cst_204 {dimension_numbers = #tpu.dot_dimension_numbers<[1], [0], [0], [1], [0, 0, 1, 1], [], []>} : vector<64x16xbf16>, vector<16x16xbf16>, vector<64x16xf32> -> vector<64x16xf32>
    %692 = arith.addf %684, %691 : vector<64x16xf32>
    %693 = vector.shape_cast %655 : vector<8x8x16xf32> to vector<64x16xf32>
    %694 = arith.truncf %693 : vector<64x16xf32> to vector<64x16xbf16>
    %695 = vector.extract_strided_slice %654 {offsets = [64, 0], sizes = [16, 16], strides = [1, 1]} : vector<144x16xbf16> to vector<16x16xbf16>
    %cst_205 = arith.constant dense<0.000000e+00> : vector<64x16xf32>
    %696 = tpu.matmul %694, %695, %cst_205 {dimension_numbers = #tpu.dot_dimension_numbers<[1], [0], [0], [1], [0, 0, 1, 1], [], []>} : vector<64x16xbf16>, vector<16x16xbf16>, vector<64x16xf32> -> vector<64x16xf32>
    %697 = arith.addf %692, %696 : vector<64x16xf32>
    %cst_206 = arith.constant 0.000000e+00 : f32
    %698 = vector.broadcast %cst_206 : f32 to vector<8x1x16xf32>
    %699 = vector.extract_strided_slice %655 {offsets = [0, 1, 0], sizes = [8, 7, 16], strides = [1, 1, 1]} : vector<8x8x16xf32> to vector<8x7x16xf32>
    %700 = tpu.concatenate %699, %698 in 1 : vector<8x7x16xf32>, vector<8x1x16xf32> -> vector<8x8x16xf32>
    %701 = vector.shape_cast %700 : vector<8x8x16xf32> to vector<64x16xf32>
    %702 = arith.truncf %701 : vector<64x16xf32> to vector<64x16xbf16>
    %703 = vector.extract_strided_slice %654 {offsets = [80, 0], sizes = [16, 16], strides = [1, 1]} : vector<144x16xbf16> to vector<16x16xbf16>
    %cst_207 = arith.constant dense<0.000000e+00> : vector<64x16xf32>
    %704 = tpu.matmul %702, %703, %cst_207 {dimension_numbers = #tpu.dot_dimension_numbers<[1], [0], [0], [1], [0, 0, 1, 1], [], []>} : vector<64x16xbf16>, vector<16x16xbf16>, vector<64x16xf32> -> vector<64x16xf32>
    %705 = arith.addf %697, %704 : vector<64x16xf32>
    %cst_208 = arith.constant 0.000000e+00 : f32
    %706 = vector.broadcast %cst_208 : f32 to vector<1x8x16xf32>
    %707 = vector.extract_strided_slice %655 {offsets = [1, 0, 0], sizes = [7, 8, 16], strides = [1, 1, 1]} : vector<8x8x16xf32> to vector<7x8x16xf32>
    %708 = tpu.concatenate %707, %706 in 0 : vector<7x8x16xf32>, vector<1x8x16xf32> -> vector<8x8x16xf32>
    %cst_209 = arith.constant 0.000000e+00 : f32
    %709 = vector.broadcast %cst_209 : f32 to vector<8x1x16xf32>
    %710 = vector.extract_strided_slice %708 {offsets = [0, 0, 0], sizes = [8, 7, 16], strides = [1, 1, 1]} : vector<8x8x16xf32> to vector<8x7x16xf32>
    %711 = tpu.concatenate %709, %710 in 1 : vector<8x1x16xf32>, vector<8x7x16xf32> -> vector<8x8x16xf32>
    %712 = vector.shape_cast %711 : vector<8x8x16xf32> to vector<64x16xf32>
    %713 = arith.truncf %712 : vector<64x16xf32> to vector<64x16xbf16>
    %714 = vector.extract_strided_slice %654 {offsets = [96, 0], sizes = [16, 16], strides = [1, 1]} : vector<144x16xbf16> to vector<16x16xbf16>
    %cst_210 = arith.constant dense<0.000000e+00> : vector<64x16xf32>
    %715 = tpu.matmul %713, %714, %cst_210 {dimension_numbers = #tpu.dot_dimension_numbers<[1], [0], [0], [1], [0, 0, 1, 1], [], []>} : vector<64x16xbf16>, vector<16x16xbf16>, vector<64x16xf32> -> vector<64x16xf32>
    %716 = arith.addf %705, %715 : vector<64x16xf32>
    %cst_211 = arith.constant 0.000000e+00 : f32
    %717 = vector.broadcast %cst_211 : f32 to vector<1x8x16xf32>
    %718 = vector.extract_strided_slice %655 {offsets = [1, 0, 0], sizes = [7, 8, 16], strides = [1, 1, 1]} : vector<8x8x16xf32> to vector<7x8x16xf32>
    %719 = tpu.concatenate %718, %717 in 0 : vector<7x8x16xf32>, vector<1x8x16xf32> -> vector<8x8x16xf32>
    %720 = vector.shape_cast %719 : vector<8x8x16xf32> to vector<64x16xf32>
    %721 = arith.truncf %720 : vector<64x16xf32> to vector<64x16xbf16>
    %722 = vector.extract_strided_slice %654 {offsets = [112, 0], sizes = [16, 16], strides = [1, 1]} : vector<144x16xbf16> to vector<16x16xbf16>
    %cst_212 = arith.constant dense<0.000000e+00> : vector<64x16xf32>
    %723 = tpu.matmul %721, %722, %cst_212 {dimension_numbers = #tpu.dot_dimension_numbers<[1], [0], [0], [1], [0, 0, 1, 1], [], []>} : vector<64x16xbf16>, vector<16x16xbf16>, vector<64x16xf32> -> vector<64x16xf32>
    %724 = arith.addf %716, %723 : vector<64x16xf32>
    %cst_213 = arith.constant 0.000000e+00 : f32
    %725 = vector.broadcast %cst_213 : f32 to vector<1x8x16xf32>
    %726 = vector.extract_strided_slice %655 {offsets = [1, 0, 0], sizes = [7, 8, 16], strides = [1, 1, 1]} : vector<8x8x16xf32> to vector<7x8x16xf32>
    %727 = tpu.concatenate %726, %725 in 0 : vector<7x8x16xf32>, vector<1x8x16xf32> -> vector<8x8x16xf32>
    %cst_214 = arith.constant 0.000000e+00 : f32
    %728 = vector.broadcast %cst_214 : f32 to vector<8x1x16xf32>
    %729 = vector.extract_strided_slice %727 {offsets = [0, 1, 0], sizes = [8, 7, 16], strides = [1, 1, 1]} : vector<8x8x16xf32> to vector<8x7x16xf32>
    %730 = tpu.concatenate %729, %728 in 1 : vector<8x7x16xf32>, vector<8x1x16xf32> -> vector<8x8x16xf32>
    %731 = vector.shape_cast %730 : vector<8x8x16xf32> to vector<64x16xf32>
    %732 = arith.truncf %731 : vector<64x16xf32> to vector<64x16xbf16>
    %733 = vector.extract_strided_slice %654 {offsets = [128, 0], sizes = [16, 16], strides = [1, 1]} : vector<144x16xbf16> to vector<16x16xbf16>
    %cst_215 = arith.constant dense<0.000000e+00> : vector<64x16xf32>
    %734 = tpu.matmul %732, %733, %cst_215 {dimension_numbers = #tpu.dot_dimension_numbers<[1], [0], [0], [1], [0, 0, 1, 1], [], []>} : vector<64x16xbf16>, vector<16x16xbf16>, vector<64x16xf32> -> vector<64x16xf32>
    %735 = arith.addf %724, %734 : vector<64x16xf32>
    %cst_216 = arith.constant 0.000000e+00 : f32
    %736 = vector.broadcast %cst_216 : f32 to vector<64x16xf32>
    %737 = arith.maximumf %735, %736 : vector<64x16xf32>
    %c0_217 = arith.constant 0 : index
    %c1_218 = arith.constant 1 : index
    %c0_219 = arith.constant 0 : index
    %c0_220 = arith.constant 0 : index
    %738 = vector.load %arg19[%c0_217, %c1_218, %c0_219, %c0_220] : memref<1x3x144x16xbf16, #tpu.memory_space<vmem>>, vector<1x1x144x16xbf16>
    %739 = vector.shape_cast %738 : vector<1x1x144x16xbf16> to vector<144x16xbf16>
    %740 = vector.shape_cast %737 : vector<64x16xf32> to vector<8x8x16xf32>
    %cst_221 = arith.constant 0.000000e+00 : f32
    %741 = vector.broadcast %cst_221 : f32 to vector<1x8x16xf32>
    %742 = vector.extract_strided_slice %740 {offsets = [0, 0, 0], sizes = [7, 8, 16], strides = [1, 1, 1]} : vector<8x8x16xf32> to vector<7x8x16xf32>
    %743 = tpu.concatenate %741, %742 in 0 : vector<1x8x16xf32>, vector<7x8x16xf32> -> vector<8x8x16xf32>
    %cst_222 = arith.constant 0.000000e+00 : f32
    %744 = vector.broadcast %cst_222 : f32 to vector<8x1x16xf32>
    %745 = vector.extract_strided_slice %743 {offsets = [0, 0, 0], sizes = [8, 7, 16], strides = [1, 1, 1]} : vector<8x8x16xf32> to vector<8x7x16xf32>
    %746 = tpu.concatenate %744, %745 in 1 : vector<8x1x16xf32>, vector<8x7x16xf32> -> vector<8x8x16xf32>
    %747 = vector.shape_cast %746 : vector<8x8x16xf32> to vector<64x16xf32>
    %748 = arith.truncf %747 : vector<64x16xf32> to vector<64x16xbf16>
    %749 = vector.extract_strided_slice %739 {offsets = [0, 0], sizes = [16, 16], strides = [1, 1]} : vector<144x16xbf16> to vector<16x16xbf16>
    %cst_223 = arith.constant dense<0.000000e+00> : vector<64x16xf32>
    %750 = tpu.matmul %748, %749, %cst_223 {dimension_numbers = #tpu.dot_dimension_numbers<[1], [0], [0], [1], [0, 0, 1, 1], [], []>} : vector<64x16xbf16>, vector<16x16xbf16>, vector<64x16xf32> -> vector<64x16xf32>
    %cst_224 = arith.constant 0.000000e+00 : f32
    %751 = vector.broadcast %cst_224 : f32 to vector<1x8x16xf32>
    %752 = vector.extract_strided_slice %740 {offsets = [0, 0, 0], sizes = [7, 8, 16], strides = [1, 1, 1]} : vector<8x8x16xf32> to vector<7x8x16xf32>
    %753 = tpu.concatenate %751, %752 in 0 : vector<1x8x16xf32>, vector<7x8x16xf32> -> vector<8x8x16xf32>
    %754 = vector.shape_cast %753 : vector<8x8x16xf32> to vector<64x16xf32>
    %755 = arith.truncf %754 : vector<64x16xf32> to vector<64x16xbf16>
    %756 = vector.extract_strided_slice %739 {offsets = [16, 0], sizes = [16, 16], strides = [1, 1]} : vector<144x16xbf16> to vector<16x16xbf16>
    %cst_225 = arith.constant dense<0.000000e+00> : vector<64x16xf32>
    %757 = tpu.matmul %755, %756, %cst_225 {dimension_numbers = #tpu.dot_dimension_numbers<[1], [0], [0], [1], [0, 0, 1, 1], [], []>} : vector<64x16xbf16>, vector<16x16xbf16>, vector<64x16xf32> -> vector<64x16xf32>
    %758 = arith.addf %750, %757 : vector<64x16xf32>
    %cst_226 = arith.constant 0.000000e+00 : f32
    %759 = vector.broadcast %cst_226 : f32 to vector<1x8x16xf32>
    %760 = vector.extract_strided_slice %740 {offsets = [0, 0, 0], sizes = [7, 8, 16], strides = [1, 1, 1]} : vector<8x8x16xf32> to vector<7x8x16xf32>
    %761 = tpu.concatenate %759, %760 in 0 : vector<1x8x16xf32>, vector<7x8x16xf32> -> vector<8x8x16xf32>
    %cst_227 = arith.constant 0.000000e+00 : f32
    %762 = vector.broadcast %cst_227 : f32 to vector<8x1x16xf32>
    %763 = vector.extract_strided_slice %761 {offsets = [0, 1, 0], sizes = [8, 7, 16], strides = [1, 1, 1]} : vector<8x8x16xf32> to vector<8x7x16xf32>
    %764 = tpu.concatenate %763, %762 in 1 : vector<8x7x16xf32>, vector<8x1x16xf32> -> vector<8x8x16xf32>
    %765 = vector.shape_cast %764 : vector<8x8x16xf32> to vector<64x16xf32>
    %766 = arith.truncf %765 : vector<64x16xf32> to vector<64x16xbf16>
    %767 = vector.extract_strided_slice %739 {offsets = [32, 0], sizes = [16, 16], strides = [1, 1]} : vector<144x16xbf16> to vector<16x16xbf16>
    %cst_228 = arith.constant dense<0.000000e+00> : vector<64x16xf32>
    %768 = tpu.matmul %766, %767, %cst_228 {dimension_numbers = #tpu.dot_dimension_numbers<[1], [0], [0], [1], [0, 0, 1, 1], [], []>} : vector<64x16xbf16>, vector<16x16xbf16>, vector<64x16xf32> -> vector<64x16xf32>
    %769 = arith.addf %758, %768 : vector<64x16xf32>
    %cst_229 = arith.constant 0.000000e+00 : f32
    %770 = vector.broadcast %cst_229 : f32 to vector<8x1x16xf32>
    %771 = vector.extract_strided_slice %740 {offsets = [0, 0, 0], sizes = [8, 7, 16], strides = [1, 1, 1]} : vector<8x8x16xf32> to vector<8x7x16xf32>
    %772 = tpu.concatenate %770, %771 in 1 : vector<8x1x16xf32>, vector<8x7x16xf32> -> vector<8x8x16xf32>
    %773 = vector.shape_cast %772 : vector<8x8x16xf32> to vector<64x16xf32>
    %774 = arith.truncf %773 : vector<64x16xf32> to vector<64x16xbf16>
    %775 = vector.extract_strided_slice %739 {offsets = [48, 0], sizes = [16, 16], strides = [1, 1]} : vector<144x16xbf16> to vector<16x16xbf16>
    %cst_230 = arith.constant dense<0.000000e+00> : vector<64x16xf32>
    %776 = tpu.matmul %774, %775, %cst_230 {dimension_numbers = #tpu.dot_dimension_numbers<[1], [0], [0], [1], [0, 0, 1, 1], [], []>} : vector<64x16xbf16>, vector<16x16xbf16>, vector<64x16xf32> -> vector<64x16xf32>
    %777 = arith.addf %769, %776 : vector<64x16xf32>
    %778 = vector.shape_cast %740 : vector<8x8x16xf32> to vector<64x16xf32>
    %779 = arith.truncf %778 : vector<64x16xf32> to vector<64x16xbf16>
    %780 = vector.extract_strided_slice %739 {offsets = [64, 0], sizes = [16, 16], strides = [1, 1]} : vector<144x16xbf16> to vector<16x16xbf16>
    %cst_231 = arith.constant dense<0.000000e+00> : vector<64x16xf32>
    %781 = tpu.matmul %779, %780, %cst_231 {dimension_numbers = #tpu.dot_dimension_numbers<[1], [0], [0], [1], [0, 0, 1, 1], [], []>} : vector<64x16xbf16>, vector<16x16xbf16>, vector<64x16xf32> -> vector<64x16xf32>
    %782 = arith.addf %777, %781 : vector<64x16xf32>
    %cst_232 = arith.constant 0.000000e+00 : f32
    %783 = vector.broadcast %cst_232 : f32 to vector<8x1x16xf32>
    %784 = vector.extract_strided_slice %740 {offsets = [0, 1, 0], sizes = [8, 7, 16], strides = [1, 1, 1]} : vector<8x8x16xf32> to vector<8x7x16xf32>
    %785 = tpu.concatenate %784, %783 in 1 : vector<8x7x16xf32>, vector<8x1x16xf32> -> vector<8x8x16xf32>
    %786 = vector.shape_cast %785 : vector<8x8x16xf32> to vector<64x16xf32>
    %787 = arith.truncf %786 : vector<64x16xf32> to vector<64x16xbf16>
    %788 = vector.extract_strided_slice %739 {offsets = [80, 0], sizes = [16, 16], strides = [1, 1]} : vector<144x16xbf16> to vector<16x16xbf16>
    %cst_233 = arith.constant dense<0.000000e+00> : vector<64x16xf32>
    %789 = tpu.matmul %787, %788, %cst_233 {dimension_numbers = #tpu.dot_dimension_numbers<[1], [0], [0], [1], [0, 0, 1, 1], [], []>} : vector<64x16xbf16>, vector<16x16xbf16>, vector<64x16xf32> -> vector<64x16xf32>
    %790 = arith.addf %782, %789 : vector<64x16xf32>
    %cst_234 = arith.constant 0.000000e+00 : f32
    %791 = vector.broadcast %cst_234 : f32 to vector<1x8x16xf32>
    %792 = vector.extract_strided_slice %740 {offsets = [1, 0, 0], sizes = [7, 8, 16], strides = [1, 1, 1]} : vector<8x8x16xf32> to vector<7x8x16xf32>
    %793 = tpu.concatenate %792, %791 in 0 : vector<7x8x16xf32>, vector<1x8x16xf32> -> vector<8x8x16xf32>
    %cst_235 = arith.constant 0.000000e+00 : f32
    %794 = vector.broadcast %cst_235 : f32 to vector<8x1x16xf32>
    %795 = vector.extract_strided_slice %793 {offsets = [0, 0, 0], sizes = [8, 7, 16], strides = [1, 1, 1]} : vector<8x8x16xf32> to vector<8x7x16xf32>
    %796 = tpu.concatenate %794, %795 in 1 : vector<8x1x16xf32>, vector<8x7x16xf32> -> vector<8x8x16xf32>
    %797 = vector.shape_cast %796 : vector<8x8x16xf32> to vector<64x16xf32>
    %798 = arith.truncf %797 : vector<64x16xf32> to vector<64x16xbf16>
    %799 = vector.extract_strided_slice %739 {offsets = [96, 0], sizes = [16, 16], strides = [1, 1]} : vector<144x16xbf16> to vector<16x16xbf16>
    %cst_236 = arith.constant dense<0.000000e+00> : vector<64x16xf32>
    %800 = tpu.matmul %798, %799, %cst_236 {dimension_numbers = #tpu.dot_dimension_numbers<[1], [0], [0], [1], [0, 0, 1, 1], [], []>} : vector<64x16xbf16>, vector<16x16xbf16>, vector<64x16xf32> -> vector<64x16xf32>
    %801 = arith.addf %790, %800 : vector<64x16xf32>
    %cst_237 = arith.constant 0.000000e+00 : f32
    %802 = vector.broadcast %cst_237 : f32 to vector<1x8x16xf32>
    %803 = vector.extract_strided_slice %740 {offsets = [1, 0, 0], sizes = [7, 8, 16], strides = [1, 1, 1]} : vector<8x8x16xf32> to vector<7x8x16xf32>
    %804 = tpu.concatenate %803, %802 in 0 : vector<7x8x16xf32>, vector<1x8x16xf32> -> vector<8x8x16xf32>
    %805 = vector.shape_cast %804 : vector<8x8x16xf32> to vector<64x16xf32>
    %806 = arith.truncf %805 : vector<64x16xf32> to vector<64x16xbf16>
    %807 = vector.extract_strided_slice %739 {offsets = [112, 0], sizes = [16, 16], strides = [1, 1]} : vector<144x16xbf16> to vector<16x16xbf16>
    %cst_238 = arith.constant dense<0.000000e+00> : vector<64x16xf32>
    %808 = tpu.matmul %806, %807, %cst_238 {dimension_numbers = #tpu.dot_dimension_numbers<[1], [0], [0], [1], [0, 0, 1, 1], [], []>} : vector<64x16xbf16>, vector<16x16xbf16>, vector<64x16xf32> -> vector<64x16xf32>
    %809 = arith.addf %801, %808 : vector<64x16xf32>
    %cst_239 = arith.constant 0.000000e+00 : f32
    %810 = vector.broadcast %cst_239 : f32 to vector<1x8x16xf32>
    %811 = vector.extract_strided_slice %740 {offsets = [1, 0, 0], sizes = [7, 8, 16], strides = [1, 1, 1]} : vector<8x8x16xf32> to vector<7x8x16xf32>
    %812 = tpu.concatenate %811, %810 in 0 : vector<7x8x16xf32>, vector<1x8x16xf32> -> vector<8x8x16xf32>
    %cst_240 = arith.constant 0.000000e+00 : f32
    %813 = vector.broadcast %cst_240 : f32 to vector<8x1x16xf32>
    %814 = vector.extract_strided_slice %812 {offsets = [0, 1, 0], sizes = [8, 7, 16], strides = [1, 1, 1]} : vector<8x8x16xf32> to vector<8x7x16xf32>
    %815 = tpu.concatenate %814, %813 in 1 : vector<8x7x16xf32>, vector<8x1x16xf32> -> vector<8x8x16xf32>
    %816 = vector.shape_cast %815 : vector<8x8x16xf32> to vector<64x16xf32>
    %817 = arith.truncf %816 : vector<64x16xf32> to vector<64x16xbf16>
    %818 = vector.extract_strided_slice %739 {offsets = [128, 0], sizes = [16, 16], strides = [1, 1]} : vector<144x16xbf16> to vector<16x16xbf16>
    %cst_241 = arith.constant dense<0.000000e+00> : vector<64x16xf32>
    %819 = tpu.matmul %817, %818, %cst_241 {dimension_numbers = #tpu.dot_dimension_numbers<[1], [0], [0], [1], [0, 0, 1, 1], [], []>} : vector<64x16xbf16>, vector<16x16xbf16>, vector<64x16xf32> -> vector<64x16xf32>
    %820 = arith.addf %809, %819 : vector<64x16xf32>
    %821 = arith.addf %820, %652 : vector<64x16xf32>
    %cst_242 = arith.constant 0.000000e+00 : f32
    %822 = vector.broadcast %cst_242 : f32 to vector<64x16xf32>
    %823 = arith.maximumf %821, %822 : vector<64x16xf32>
    %c0_243 = arith.constant 0 : index
    %c2_244 = arith.constant 2 : index
    %c0_245 = arith.constant 0 : index
    %c0_246 = arith.constant 0 : index
    %824 = vector.load %arg19[%c0_243, %c2_244, %c0_245, %c0_246] : memref<1x3x144x16xbf16, #tpu.memory_space<vmem>>, vector<1x1x144x16xbf16>
    %825 = vector.shape_cast %824 : vector<1x1x144x16xbf16> to vector<144x16xbf16>
    %826 = vector.shape_cast %823 : vector<64x16xf32> to vector<8x8x16xf32>
    %cst_247 = arith.constant 0.000000e+00 : f32
    %827 = vector.broadcast %cst_247 : f32 to vector<1x8x16xf32>
    %828 = vector.extract_strided_slice %826 {offsets = [0, 0, 0], sizes = [7, 8, 16], strides = [1, 1, 1]} : vector<8x8x16xf32> to vector<7x8x16xf32>
    %829 = tpu.concatenate %827, %828 in 0 : vector<1x8x16xf32>, vector<7x8x16xf32> -> vector<8x8x16xf32>
    %cst_248 = arith.constant 0.000000e+00 : f32
    %830 = vector.broadcast %cst_248 : f32 to vector<8x1x16xf32>
    %831 = vector.extract_strided_slice %829 {offsets = [0, 0, 0], sizes = [8, 7, 16], strides = [1, 1, 1]} : vector<8x8x16xf32> to vector<8x7x16xf32>
    %832 = tpu.concatenate %830, %831 in 1 : vector<8x1x16xf32>, vector<8x7x16xf32> -> vector<8x8x16xf32>
    %833 = vector.shape_cast %832 : vector<8x8x16xf32> to vector<64x16xf32>
    %834 = arith.truncf %833 : vector<64x16xf32> to vector<64x16xbf16>
    %835 = vector.extract_strided_slice %825 {offsets = [0, 0], sizes = [16, 16], strides = [1, 1]} : vector<144x16xbf16> to vector<16x16xbf16>
    %cst_249 = arith.constant dense<0.000000e+00> : vector<64x16xf32>
    %836 = tpu.matmul %834, %835, %cst_249 {dimension_numbers = #tpu.dot_dimension_numbers<[1], [0], [0], [1], [0, 0, 1, 1], [], []>} : vector<64x16xbf16>, vector<16x16xbf16>, vector<64x16xf32> -> vector<64x16xf32>
    %cst_250 = arith.constant 0.000000e+00 : f32
    %837 = vector.broadcast %cst_250 : f32 to vector<1x8x16xf32>
    %838 = vector.extract_strided_slice %826 {offsets = [0, 0, 0], sizes = [7, 8, 16], strides = [1, 1, 1]} : vector<8x8x16xf32> to vector<7x8x16xf32>
    %839 = tpu.concatenate %837, %838 in 0 : vector<1x8x16xf32>, vector<7x8x16xf32> -> vector<8x8x16xf32>
    %840 = vector.shape_cast %839 : vector<8x8x16xf32> to vector<64x16xf32>
    %841 = arith.truncf %840 : vector<64x16xf32> to vector<64x16xbf16>
    %842 = vector.extract_strided_slice %825 {offsets = [16, 0], sizes = [16, 16], strides = [1, 1]} : vector<144x16xbf16> to vector<16x16xbf16>
    %cst_251 = arith.constant dense<0.000000e+00> : vector<64x16xf32>
    %843 = tpu.matmul %841, %842, %cst_251 {dimension_numbers = #tpu.dot_dimension_numbers<[1], [0], [0], [1], [0, 0, 1, 1], [], []>} : vector<64x16xbf16>, vector<16x16xbf16>, vector<64x16xf32> -> vector<64x16xf32>
    %844 = arith.addf %836, %843 : vector<64x16xf32>
    %cst_252 = arith.constant 0.000000e+00 : f32
    %845 = vector.broadcast %cst_252 : f32 to vector<1x8x16xf32>
    %846 = vector.extract_strided_slice %826 {offsets = [0, 0, 0], sizes = [7, 8, 16], strides = [1, 1, 1]} : vector<8x8x16xf32> to vector<7x8x16xf32>
    %847 = tpu.concatenate %845, %846 in 0 : vector<1x8x16xf32>, vector<7x8x16xf32> -> vector<8x8x16xf32>
    %cst_253 = arith.constant 0.000000e+00 : f32
    %848 = vector.broadcast %cst_253 : f32 to vector<8x1x16xf32>
    %849 = vector.extract_strided_slice %847 {offsets = [0, 1, 0], sizes = [8, 7, 16], strides = [1, 1, 1]} : vector<8x8x16xf32> to vector<8x7x16xf32>
    %850 = tpu.concatenate %849, %848 in 1 : vector<8x7x16xf32>, vector<8x1x16xf32> -> vector<8x8x16xf32>
    %851 = vector.shape_cast %850 : vector<8x8x16xf32> to vector<64x16xf32>
    %852 = arith.truncf %851 : vector<64x16xf32> to vector<64x16xbf16>
    %853 = vector.extract_strided_slice %825 {offsets = [32, 0], sizes = [16, 16], strides = [1, 1]} : vector<144x16xbf16> to vector<16x16xbf16>
    %cst_254 = arith.constant dense<0.000000e+00> : vector<64x16xf32>
    %854 = tpu.matmul %852, %853, %cst_254 {dimension_numbers = #tpu.dot_dimension_numbers<[1], [0], [0], [1], [0, 0, 1, 1], [], []>} : vector<64x16xbf16>, vector<16x16xbf16>, vector<64x16xf32> -> vector<64x16xf32>
    %855 = arith.addf %844, %854 : vector<64x16xf32>
    %cst_255 = arith.constant 0.000000e+00 : f32
    %856 = vector.broadcast %cst_255 : f32 to vector<8x1x16xf32>
    %857 = vector.extract_strided_slice %826 {offsets = [0, 0, 0], sizes = [8, 7, 16], strides = [1, 1, 1]} : vector<8x8x16xf32> to vector<8x7x16xf32>
    %858 = tpu.concatenate %856, %857 in 1 : vector<8x1x16xf32>, vector<8x7x16xf32> -> vector<8x8x16xf32>
    %859 = vector.shape_cast %858 : vector<8x8x16xf32> to vector<64x16xf32>
    %860 = arith.truncf %859 : vector<64x16xf32> to vector<64x16xbf16>
    %861 = vector.extract_strided_slice %825 {offsets = [48, 0], sizes = [16, 16], strides = [1, 1]} : vector<144x16xbf16> to vector<16x16xbf16>
    %cst_256 = arith.constant dense<0.000000e+00> : vector<64x16xf32>
    %862 = tpu.matmul %860, %861, %cst_256 {dimension_numbers = #tpu.dot_dimension_numbers<[1], [0], [0], [1], [0, 0, 1, 1], [], []>} : vector<64x16xbf16>, vector<16x16xbf16>, vector<64x16xf32> -> vector<64x16xf32>
    %863 = arith.addf %855, %862 : vector<64x16xf32>
    %864 = vector.shape_cast %826 : vector<8x8x16xf32> to vector<64x16xf32>
    %865 = arith.truncf %864 : vector<64x16xf32> to vector<64x16xbf16>
    %866 = vector.extract_strided_slice %825 {offsets = [64, 0], sizes = [16, 16], strides = [1, 1]} : vector<144x16xbf16> to vector<16x16xbf16>
    %cst_257 = arith.constant dense<0.000000e+00> : vector<64x16xf32>
    %867 = tpu.matmul %865, %866, %cst_257 {dimension_numbers = #tpu.dot_dimension_numbers<[1], [0], [0], [1], [0, 0, 1, 1], [], []>} : vector<64x16xbf16>, vector<16x16xbf16>, vector<64x16xf32> -> vector<64x16xf32>
    %868 = arith.addf %863, %867 : vector<64x16xf32>
    %cst_258 = arith.constant 0.000000e+00 : f32
    %869 = vector.broadcast %cst_258 : f32 to vector<8x1x16xf32>
    %870 = vector.extract_strided_slice %826 {offsets = [0, 1, 0], sizes = [8, 7, 16], strides = [1, 1, 1]} : vector<8x8x16xf32> to vector<8x7x16xf32>
    %871 = tpu.concatenate %870, %869 in 1 : vector<8x7x16xf32>, vector<8x1x16xf32> -> vector<8x8x16xf32>
    %872 = vector.shape_cast %871 : vector<8x8x16xf32> to vector<64x16xf32>
    %873 = arith.truncf %872 : vector<64x16xf32> to vector<64x16xbf16>
    %874 = vector.extract_strided_slice %825 {offsets = [80, 0], sizes = [16, 16], strides = [1, 1]} : vector<144x16xbf16> to vector<16x16xbf16>
    %cst_259 = arith.constant dense<0.000000e+00> : vector<64x16xf32>
    %875 = tpu.matmul %873, %874, %cst_259 {dimension_numbers = #tpu.dot_dimension_numbers<[1], [0], [0], [1], [0, 0, 1, 1], [], []>} : vector<64x16xbf16>, vector<16x16xbf16>, vector<64x16xf32> -> vector<64x16xf32>
    %876 = arith.addf %868, %875 : vector<64x16xf32>
    %cst_260 = arith.constant 0.000000e+00 : f32
    %877 = vector.broadcast %cst_260 : f32 to vector<1x8x16xf32>
    %878 = vector.extract_strided_slice %826 {offsets = [1, 0, 0], sizes = [7, 8, 16], strides = [1, 1, 1]} : vector<8x8x16xf32> to vector<7x8x16xf32>
    %879 = tpu.concatenate %878, %877 in 0 : vector<7x8x16xf32>, vector<1x8x16xf32> -> vector<8x8x16xf32>
    %cst_261 = arith.constant 0.000000e+00 : f32
    %880 = vector.broadcast %cst_261 : f32 to vector<8x1x16xf32>
    %881 = vector.extract_strided_slice %879 {offsets = [0, 0, 0], sizes = [8, 7, 16], strides = [1, 1, 1]} : vector<8x8x16xf32> to vector<8x7x16xf32>
    %882 = tpu.concatenate %880, %881 in 1 : vector<8x1x16xf32>, vector<8x7x16xf32> -> vector<8x8x16xf32>
    %883 = vector.shape_cast %882 : vector<8x8x16xf32> to vector<64x16xf32>
    %884 = arith.truncf %883 : vector<64x16xf32> to vector<64x16xbf16>
    %885 = vector.extract_strided_slice %825 {offsets = [96, 0], sizes = [16, 16], strides = [1, 1]} : vector<144x16xbf16> to vector<16x16xbf16>
    %cst_262 = arith.constant dense<0.000000e+00> : vector<64x16xf32>
    %886 = tpu.matmul %884, %885, %cst_262 {dimension_numbers = #tpu.dot_dimension_numbers<[1], [0], [0], [1], [0, 0, 1, 1], [], []>} : vector<64x16xbf16>, vector<16x16xbf16>, vector<64x16xf32> -> vector<64x16xf32>
    %887 = arith.addf %876, %886 : vector<64x16xf32>
    %cst_263 = arith.constant 0.000000e+00 : f32
    %888 = vector.broadcast %cst_263 : f32 to vector<1x8x16xf32>
    %889 = vector.extract_strided_slice %826 {offsets = [1, 0, 0], sizes = [7, 8, 16], strides = [1, 1, 1]} : vector<8x8x16xf32> to vector<7x8x16xf32>
    %890 = tpu.concatenate %889, %888 in 0 : vector<7x8x16xf32>, vector<1x8x16xf32> -> vector<8x8x16xf32>
    %891 = vector.shape_cast %890 : vector<8x8x16xf32> to vector<64x16xf32>
    %892 = arith.truncf %891 : vector<64x16xf32> to vector<64x16xbf16>
    %893 = vector.extract_strided_slice %825 {offsets = [112, 0], sizes = [16, 16], strides = [1, 1]} : vector<144x16xbf16> to vector<16x16xbf16>
    %cst_264 = arith.constant dense<0.000000e+00> : vector<64x16xf32>
    %894 = tpu.matmul %892, %893, %cst_264 {dimension_numbers = #tpu.dot_dimension_numbers<[1], [0], [0], [1], [0, 0, 1, 1], [], []>} : vector<64x16xbf16>, vector<16x16xbf16>, vector<64x16xf32> -> vector<64x16xf32>
    %895 = arith.addf %887, %894 : vector<64x16xf32>
    %cst_265 = arith.constant 0.000000e+00 : f32
    %896 = vector.broadcast %cst_265 : f32 to vector<1x8x16xf32>
    %897 = vector.extract_strided_slice %826 {offsets = [1, 0, 0], sizes = [7, 8, 16], strides = [1, 1, 1]} : vector<8x8x16xf32> to vector<7x8x16xf32>
    %898 = tpu.concatenate %897, %896 in 0 : vector<7x8x16xf32>, vector<1x8x16xf32> -> vector<8x8x16xf32>
    %cst_266 = arith.constant 0.000000e+00 : f32
    %899 = vector.broadcast %cst_266 : f32 to vector<8x1x16xf32>
    %900 = vector.extract_strided_slice %898 {offsets = [0, 1, 0], sizes = [8, 7, 16], strides = [1, 1, 1]} : vector<8x8x16xf32> to vector<8x7x16xf32>
    %901 = tpu.concatenate %900, %899 in 1 : vector<8x7x16xf32>, vector<8x1x16xf32> -> vector<8x8x16xf32>
    %902 = vector.shape_cast %901 : vector<8x8x16xf32> to vector<64x16xf32>
    %903 = arith.truncf %902 : vector<64x16xf32> to vector<64x16xbf16>
    %904 = vector.extract_strided_slice %825 {offsets = [128, 0], sizes = [16, 16], strides = [1, 1]} : vector<144x16xbf16> to vector<16x16xbf16>
    %cst_267 = arith.constant dense<0.000000e+00> : vector<64x16xf32>
    %905 = tpu.matmul %903, %904, %cst_267 {dimension_numbers = #tpu.dot_dimension_numbers<[1], [0], [0], [1], [0, 0, 1, 1], [], []>} : vector<64x16xbf16>, vector<16x16xbf16>, vector<64x16xf32> -> vector<64x16xf32>
    %906 = arith.addf %895, %905 : vector<64x16xf32>
    %c0_268 = arith.constant 0 : index
    %c0_269 = arith.constant 0 : index
    %c0_270 = arith.constant 0 : index
    %907 = vector.load %arg20[%c0_268, %c0_269, %c0_270] : memref<1x1x16xf32, #tpu.memory_space<vmem>>, vector<1x1x16xf32>
    %908 = vector.shape_cast %907 : vector<1x1x16xf32> to vector<1x16xf32>
    %909 = vector.broadcast %908 : vector<1x16xf32> to vector<64x16xf32>
    %910 = arith.addf %906, %909 : vector<64x16xf32>
    %911 = arith.truncf %910 : vector<64x16xf32> to vector<64x16xbf16>
    %c0_271 = arith.constant 0 : index
    %c0_272 = arith.constant 0 : index
    %c0_273 = arith.constant 0 : index
    %912 = vector.load %arg21[%c0_271, %c0_272, %c0_273] : memref<1x16x31xbf16, #tpu.memory_space<vmem>>, vector<1x16x31xbf16>
    %913 = vector.shape_cast %912 : vector<1x16x31xbf16> to vector<16x31xbf16>
    %cst_274 = arith.constant dense<0.000000e+00> : vector<64x31xf32>
    %914 = tpu.matmul %911, %913, %cst_274 {dimension_numbers = #tpu.dot_dimension_numbers<[1], [0], [0], [1], [0, 0, 1, 1], [], []>} : vector<64x16xbf16>, vector<16x31xbf16>, vector<64x31xf32> -> vector<64x31xf32>
    %915 = arith.addf %4, %914 : vector<64x31xf32>
    %c0_275 = arith.constant 0 : index
    %c0_276 = arith.constant 0 : index
    %c0_277 = arith.constant 0 : index
    %916 = vector.load %arg22[%c0_275, %c0_276, %c0_277] : memref<1x1x31xf32, #tpu.memory_space<vmem>>, vector<1x1x31xf32>
    %917 = vector.shape_cast %916 : vector<1x1x31xf32> to vector<1x31xf32>
    %918 = vector.broadcast %917 : vector<1x31xf32> to vector<64x31xf32>
    %919 = arith.addf %915, %918 : vector<64x31xf32>
    %c0_278 = arith.constant 0 : index
    %c0_279 = arith.constant 0 : index
    %c0_280 = arith.constant 0 : index
    %920 = vector.load %arg23[%c0_278, %c0_279, %c0_280] : memref<1x64x31xf32, #tpu.memory_space<vmem>>, vector<1x64x31xf32>
    %921 = vector.shape_cast %920 : vector<1x64x31xf32> to vector<64x31xf32>
    %922 = vector.shape_cast %919 : vector<64x31xf32> to vector<1x64x31xf32>
    tpu.vector_store %arg23[%c0_278, %c0_279, %c0_280], %922 {strides = array<i32>} : memref<1x64x31xf32, #tpu.memory_space<vmem>>, vector<1x64x31xf32>,
    %c7_i32 = arith.constant 7 : i32
    %923 = arith.cmpi eq, %arg1, %c7_i32 : i32
    %924 = arith.extui %923 : i1 to i32
    %c0_i32_281 = arith.constant 0 : i32
    %925 = arith.cmpi ne, %924, %c0_i32_281 : i32
    scf.if %925 {
      %926 = arith.truncf %919 : vector<64x31xf32> to vector<64x31xbf16>
      %c0_282 = arith.constant 0 : index
      %c0_283 = arith.constant 0 : index
      %927 = vector.load %arg3[%c0_282, %c0_283] : memref<31x3xbf16, #tpu.memory_space<vmem>>, vector<31x3xbf16>
      %cst_284 = arith.constant dense<0.000000e+00> : vector<64x3xf32>
      %928 = tpu.matmul %926, %927, %cst_284 {dimension_numbers = #tpu.dot_dimension_numbers<[1], [0], [0], [1], [0, 0, 1, 1], [], []>} : vector<64x31xbf16>, vector<31x3xbf16>, vector<64x3xf32> -> vector<64x3xf32>
      %c0_285 = arith.constant 0 : index
      %c0_286 = arith.constant 0 : index
      %c0_287 = arith.constant 0 : index
      %929 = vector.load %arg24[%c0_285, %c0_286, %c0_287] : memref<1x64x3xf32, #tpu.memory_space<vmem>>, vector<1x64x3xf32>
      %930 = vector.shape_cast %929 : vector<1x64x3xf32> to vector<64x3xf32>
      %931 = vector.shape_cast %928 : vector<64x3xf32> to vector<1x64x3xf32>
      tpu.vector_store %arg24[%c0_285, %c0_286, %c0_287], %931 {strides = array<i32>} : memref<1x64x3xf32, #tpu.memory_space<vmem>>, vector<1x64x3xf32>,
    } else {
    }
    return
  }
  func.func @transform_0(%arg0: i32, %arg1: i32) -> (i32, i32, i32) {
    %c0_i32 = arith.constant 0 : i32
    %c0_i32_0 = arith.constant 0 : i32
    %c0_i32_1 = arith.constant 0 : i32
    return %arg0, %c0_i32, %c0_i32_0 : i32, i32, i32
  }
  func.func @transform_1(%arg0: i32, %arg1: i32) -> (i32, i32) {
    %c0_i32 = arith.constant 0 : i32
    %c0_i32_0 = arith.constant 0 : i32
    %c0_i32_1 = arith.constant 0 : i32
    return %c0_i32, %c0_i32_0 : i32, i32
  }
  func.func @transform_2(%arg0: i32, %arg1: i32) -> (i32, i32, i32) {
    %c0_i32 = arith.constant 0 : i32
    %c0_i32_0 = arith.constant 0 : i32
    %c0_i32_1 = arith.constant 0 : i32
    return %arg1, %c0_i32, %c0_i32_0 : i32, i32, i32
  }
  func.func @transform_3(%arg0: i32, %arg1: i32) -> (i32, i32, i32) {
    %c0_i32 = arith.constant 0 : i32
    %c0_i32_0 = arith.constant 0 : i32
    %c0_i32_1 = arith.constant 0 : i32
    return %arg1, %c0_i32, %c0_i32_0 : i32, i32, i32
  }
  func.func @transform_4(%arg0: i32, %arg1: i32) -> (i32, i32, i32, i32) {
    %c0_i32 = arith.constant 0 : i32
    %c0_i32_0 = arith.constant 0 : i32
    %c0_i32_1 = arith.constant 0 : i32
    %c0_i32_2 = arith.constant 0 : i32
    return %arg1, %c0_i32, %c0_i32_0, %c0_i32_1 : i32, i32, i32, i32
  }
  func.func @transform_5(%arg0: i32, %arg1: i32) -> (i32, i32, i32) {
    %c0_i32 = arith.constant 0 : i32
    %c0_i32_0 = arith.constant 0 : i32
    %c0_i32_1 = arith.constant 0 : i32
    return %arg1, %c0_i32, %c0_i32_0 : i32, i32, i32
  }
  func.func @transform_6(%arg0: i32, %arg1: i32) -> (i32, i32, i32) {
    %c0_i32 = arith.constant 0 : i32
    %c0_i32_0 = arith.constant 0 : i32
    %c0_i32_1 = arith.constant 0 : i32
    return %arg1, %c0_i32, %c0_i32_0 : i32, i32, i32
  }
  func.func @transform_7(%arg0: i32, %arg1: i32) -> i32 {
    %c0_i32 = arith.constant 0 : i32
    %c0_i32_0 = arith.constant 0 : i32
    return %c0_i32 : i32
  }
  func.func @transform_8(%arg0: i32, %arg1: i32) -> (i32, i32, i32) {
    %c0_i32 = arith.constant 0 : i32
    %c0_i32_0 = arith.constant 0 : i32
    %c0_i32_1 = arith.constant 0 : i32
    return %arg1, %c0_i32, %c0_i32_0 : i32, i32, i32
  }
  func.func @transform_9(%arg0: i32, %arg1: i32) -> (i32, i32, i32) {
    %c0_i32 = arith.constant 0 : i32
    %c0_i32_0 = arith.constant 0 : i32
    %c0_i32_1 = arith.constant 0 : i32
    return %arg1, %c0_i32, %c0_i32_0 : i32, i32, i32
  }
  func.func @transform_10(%arg0: i32, %arg1: i32) -> (i32, i32, i32) {
    %c0_i32 = arith.constant 0 : i32
    %c0_i32_0 = arith.constant 0 : i32
    %c0_i32_1 = arith.constant 0 : i32
    return %arg1, %c0_i32, %c0_i32_0 : i32, i32, i32
  }
  func.func @transform_11(%arg0: i32, %arg1: i32) -> (i32, i32, i32) {
    %c0_i32 = arith.constant 0 : i32
    %c0_i32_0 = arith.constant 0 : i32
    %c0_i32_1 = arith.constant 0 : i32
    return %arg1, %c0_i32, %c0_i32_0 : i32, i32, i32
  }
  func.func @transform_12(%arg0: i32, %arg1: i32) -> (i32, i32, i32) {
    %c0_i32 = arith.constant 0 : i32
    %c0_i32_0 = arith.constant 0 : i32
    %c0_i32_1 = arith.constant 0 : i32
    return %arg1, %c0_i32, %c0_i32_0 : i32, i32, i32
  }
  func.func @transform_13(%arg0: i32, %arg1: i32) -> (i32, i32, i32) {
    %c0_i32 = arith.constant 0 : i32
    %c0_i32_0 = arith.constant 0 : i32
    %c0_i32_1 = arith.constant 0 : i32
    return %arg1, %c0_i32, %c0_i32_0 : i32, i32, i32
  }
  func.func @transform_14(%arg0: i32, %arg1: i32) -> (i32, i32, i32) {
    %c0_i32 = arith.constant 0 : i32
    %c0_i32_0 = arith.constant 0 : i32
    %c0_i32_1 = arith.constant 0 : i32
    return %arg1, %c0_i32, %c0_i32_0 : i32, i32, i32
  }
  func.func @transform_15(%arg0: i32, %arg1: i32) -> (i32, i32, i32) {
    %c0_i32 = arith.constant 0 : i32
    %c0_i32_0 = arith.constant 0 : i32
    %c0_i32_1 = arith.constant 0 : i32
    return %arg1, %c0_i32, %c0_i32_0 : i32, i32, i32
  }
  func.func @transform_16(%arg0: i32, %arg1: i32) -> (i32, i32, i32) {
    %c0_i32 = arith.constant 0 : i32
    %c0_i32_0 = arith.constant 0 : i32
    %c0_i32_1 = arith.constant 0 : i32
    return %arg1, %c0_i32, %c0_i32_0 : i32, i32, i32
  }
  func.func @transform_17(%arg0: i32, %arg1: i32) -> (i32, i32, i32, i32) {
    %c0_i32 = arith.constant 0 : i32
    %c0_i32_0 = arith.constant 0 : i32
    %c0_i32_1 = arith.constant 0 : i32
    %c0_i32_2 = arith.constant 0 : i32
    return %arg1, %c0_i32, %c0_i32_0, %c0_i32_1 : i32, i32, i32, i32
  }
  func.func @transform_18(%arg0: i32, %arg1: i32) -> (i32, i32, i32) {
    %c0_i32 = arith.constant 0 : i32
    %c0_i32_0 = arith.constant 0 : i32
    %c0_i32_1 = arith.constant 0 : i32
    return %arg1, %c0_i32, %c0_i32_0 : i32, i32, i32
  }
  func.func @transform_19(%arg0: i32, %arg1: i32) -> (i32, i32, i32) {
    %c0_i32 = arith.constant 0 : i32
    %c0_i32_0 = arith.constant 0 : i32
    %c0_i32_1 = arith.constant 0 : i32
    return %arg1, %c0_i32, %c0_i32_0 : i32, i32, i32
  }
  func.func @transform_20(%arg0: i32, %arg1: i32) -> (i32, i32, i32) {
    %c0_i32 = arith.constant 0 : i32
    %c0_i32_0 = arith.constant 0 : i32
    %c0_i32_1 = arith.constant 0 : i32
    return %arg1, %c0_i32, %c0_i32_0 : i32, i32, i32
  }
  func.func @transform_21(%arg0: i32, %arg1: i32) -> (i32, i32, i32) {
    %c0_i32 = arith.constant 0 : i32
    %c0_i32_0 = arith.constant 0 : i32
    %c0_i32_1 = arith.constant 0 : i32
    return %arg0, %c0_i32, %c0_i32_0 : i32, i32, i32
  }
  func.func @transform_22(%arg0: i32, %arg1: i32) -> (i32, i32, i32) {
    %c0_i32 = arith.constant 0 : i32
    %c0_i32_0 = arith.constant 0 : i32
    %c0_i32_1 = arith.constant 0 : i32
    return %arg0, %c0_i32, %c0_i32_0 : i32, i32, i32
  }
}

</mosaic_0001>

<llo_original>
// kernel: modelnet_forward.1
$region0: #{modelnet_forward.1}
  #allocation0 [shape = 'u32[]', space=smem, size = 0x4, offset = 0x4, fixed_abs, tag = 'smem constant byte address 0x4 - core index']
  #allocation1 [shape = 'u32[72,128]{1,0:T(1,128)}', space=vmem, size = 0x9000, scoped, tag = 'internal scratch']
  %s0 = inlined_call_operand.vmem [shape: f32[2,64,3], index: 0, kind: input, shape index: {}]
  %s1 = inlined_call_operand.vmem [shape: bf16[31,3], index: 1, kind: input, shape index: {}]
  %s2 = inlined_call_operand.vmem [shape: bf16[8,3,16], index: 2, kind: input, shape index: {}]
  %s3 = inlined_call_operand.vmem [shape: f32[8,1,16], index: 3, kind: input, shape index: {}]
  %s4 = inlined_call_operand.vmem [shape: bf16[8,3,144,16], index: 4, kind: input, shape index: {}]
  %s5 = inlined_call_operand.vmem [shape: f32[8,1,16], index: 5, kind: input, shape index: {}]
  %s6 = inlined_call_operand.vmem [shape: bf16[8,16,48], index: 6, kind: input, shape index: {}]
  %s7 = inlined_call_operand.vmem [shape: f32[8], index: 7, kind: input, shape index: {}]
  %s8 = inlined_call_operand.vmem [shape: bf16[8,16,16], index: 8, kind: input, shape index: {}]
  %s9 = inlined_call_operand.vmem [shape: f32[8,1,16], index: 9, kind: input, shape index: {}]
  %s10 = inlined_call_operand.vmem [shape: f32[8,9,16], index: 10, kind: input, shape index: {}]
  %s11 = inlined_call_operand.vmem [shape: f32[8,9,16], index: 11, kind: input, shape index: {}]
  %s12 = inlined_call_operand.vmem [shape: f32[8,1,16], index: 12, kind: input, shape index: {}]
  %s13 = inlined_call_operand.vmem [shape: f32[8,1,16], index: 13, kind: input, shape index: {}]
  %s14 = inlined_call_operand.vmem [shape: bf16[8,16,64], index: 14, kind: input, shape index: {}]
  %s15 = inlined_call_operand.vmem [shape: f32[8,9,64], index: 15, kind: input, shape index: {}]
  %s16 = inlined_call_operand.vmem [shape: bf16[8,64,16], index: 16, kind: input, shape index: {}]
  %s17 = inlined_call_operand.vmem [shape: bf16[8,3,144,16], index: 17, kind: input, shape index: {}]
  %s18 = inlined_call_operand.vmem [shape: f32[8,1,16], index: 18, kind: input, shape index: {}]
  %s19 = inlined_call_operand.vmem [shape: bf16[8,16,31], index: 19, kind: input, shape index: {}]
  %s20 = inlined_call_operand.vmem [shape: f32[8,1,31], index: 20, kind: input, shape index: {}]
  %s21 = inlined_call_operand.hbm [shape: f32[2,64,31], index: 21, kind: output, shape index: {0}]
  %s22 = inlined_call_operand.vmem [shape: f32[2,64,3], index: 22, kind: output, shape index: {1}]
  %23 = xla_tuple %s21, %s22
  %s24 = sld [smem:[#allocation0]]
  $region137: #{modelnet_forward.1} parent=0
    _
  %s26 = ssub.s32 1, %s24
  %s27 = scalar_select 0, %s26, %s24
  $region1: #{modelnet_forward.1} parent=0
    #allocation2 [shape = 'u8[512]{0}', space=smem, size = 0x200, scoped, tag = 'input window, operand 7, single buffered']
    #allocation3 [shape = 's32[2]{0}', space=sflag, size = 0x8, scoped, tag = 'scoped memory for modelnet_forward.1']
    #allocation4 [shape = 's32[2]{0}', space=sflag, size = 0x8, scoped, tag = 'scoped memory for modelnet_forward.1']
    #allocation5 [shape = 'u8[65536]{0}', space=vmem, size = 0x10000, scoped, tag = 'output window, operand 0']
    %28 = vsyncpa [#allocation4], 0
    %29 = vsyncpa [#allocation3], 0
    %s30 = scalar_lea.sflag [#allocation3], 1
    %31 = vsyncpa %s30, 0
    loop: start=0, step=1, limit=18
    $region2: #{modelnet_forward.1} parent=1 // loop_pre_header
      _
    $region3: #{modelnet_forward.1} parent=1 // loop_header
      %s33 = sphi 0, %s37
      %p34 = scmp.ge.s32.totalorder %s33, 18
      %s40 = sphi 0, %s52
      %s41 = sphi 0, %s48
      %s42 = sphi 0, %s40
      %s43 = sphi 0, %s41
      %s44 = sphi 0, %s42
      %s45 = sphi 0, %s43
      %s55 = sphi 0, %s57
      %s58 = sphi 0, %s55
      %s59 = sphi 0, %s58
      %s75 = sphi 0, %s59
      %s79 = sphi 0, %s79
      %s81 = sphi 0, %s79
      %s82 = sphi 0, %s81
      %s96 = sphi 0, %s82
      %s102 = sphi 0, %s104
      %s105 = sphi 0, %s102
      %s106 = sphi 0, %s105
      %s122 = sphi 0, %s106
      %s128 = sphi 0, %s130
      %s131 = sphi 0, %s128
      %s132 = sphi 0, %s131
      %s148 = sphi 0, %s132
      %s154 = sphi 0, %s156
      %s157 = sphi 0, %s154
      %s158 = sphi 0, %s157
      %s174 = sphi 0, %s158
      %s180 = sphi 0, %s182
      %s183 = sphi 0, %s180
      %s184 = sphi 0, %s183
      %s200 = sphi 0, %s184
      %s206 = sphi 0, %s208
      %s209 = sphi 0, %s206
      %s210 = sphi 0, %s209
      %s226 = sphi 0, %s210
      %s230 = sphi 0, %s230
      %s232 = sphi 0, %s230
      %s233 = sphi 0, %s232
      %s247 = sphi 0, %s233
      %s253 = sphi 0, %s255
      %s256 = sphi 0, %s253
      %s257 = sphi 0, %s256
      %s273 = sphi 0, %s257
      %s279 = sphi 0, %s281
      %s282 = sphi 0, %s279
      %s283 = sphi 0, %s282
      %s299 = sphi 0, %s283
      %s305 = sphi 0, %s307
      %s308 = sphi 0, %s305
      %s309 = sphi 0, %s308
      %s325 = sphi 0, %s309
      %s331 = sphi 0, %s333
      %s334 = sphi 0, %s331
      %s335 = sphi 0, %s334
      %s351 = sphi 0, %s335
      %s357 = sphi 0, %s359
      %s360 = sphi 0, %s357
      %s361 = sphi 0, %s360
      %s377 = sphi 0, %s361
      %s383 = sphi 0, %s385
      %s386 = sphi 0, %s383
      %s387 = sphi 0, %s386
      %s403 = sphi 0, %s387
      %s409 = sphi 0, %s411
      %s412 = sphi 0, %s409
      %s413 = sphi 0, %s412
      %s429 = sphi 0, %s413
      %s435 = sphi 0, %s437
      %s438 = sphi 0, %s435
      %s439 = sphi 0, %s438
      %s455 = sphi 0, %s439
      %s461 = sphi 0, %s463
      %s464 = sphi 0, %s461
      %s465 = sphi 0, %s464
      %s481 = sphi 0, %s465
      %s487 = sphi 0, %s489
      %s490 = sphi 0, %s487
      %s491 = sphi 0, %s490
      %s507 = sphi 0, %s491
      %s513 = sphi 0, %s515
      %s516 = sphi 0, %s513
      %s517 = sphi 0, %s516
      %s533 = sphi 0, %s517
      %s539 = sphi 0, %s541
      %s542 = sphi 0, %s539
      %s543 = sphi 0, %s542
      %s559 = sphi 0, %s543
      %s565 = sphi 0, %s567
      %s568 = sphi 0, %s565
      %s569 = sphi 0, %s568
      %s585 = sphi 0, %s569
      %s591 = sphi 0, %s593
      %s594 = sphi 0, %s591
      %s595 = sphi 0, %s594
      %s611 = sphi 0, %s595
      %s617 = sphi 0, %s619
      %s620 = sphi 0, %s617
      %s621 = sphi 0, %s620
      %s637 = sphi 0, %s621
    $region4: #{modelnet_forward.1} parent=1 // loop_header_branch
      %36 = sbr.rel (%p34) target = $region8
    $region5: #{modelnet_forward.1} parent=1 // loop_body
      %s38 = ssub.s32 %s33, 1
      %s39 = ssub.s32 %s33, 2
      %s46 = sadd.s32 1, %s41
      %p47 = scmp.ge.s32.totalorder %s46, 8
      %s48 = scalar_select %p47, 0, %s46
      %s49 = sadd.s32 1, %s40
      %s50 = scalar_select %p47, %s49, %s40
      %p51 = scmp.ge.s32.totalorder %s50, 2
      %s52 = scalar_select %p51, 0, %s50
      %s53 = ssub.s32 %s40, %s52
      %p54 = scmp.eq.s32.totalorder %s53, 0
      %s56 = sadd.s32 %s55, 1
      %s57 = scalar_select %p54, %s55, %s56
      %p60 = pneg %p54
      %p61 = scmp.eq.s32.totalorder %s33, 15
      %p62 = por %p60, %p61
      %p63 = scmp.ne.s32.totalorder %s55, %s58
      %p64 = scmp.eq.s32.totalorder %s33, 0
      %p65 = por %p63, %p64
      %p66 = scmp.ne.s32.totalorder %s55, %s58
      %p67 = scmp.eq.s32.totalorder %s38, 15
      %p68 = por %p66, %p67
      %p69 = scmp.ne.s32.totalorder %s58, %s59
      %p70 = scmp.eq.s32.totalorder %s38, 0
      %p71 = por %p69, %p70
      %p72 = scmp.ne.s32.totalorder %s58, %s59
      %p73 = scmp.eq.s32.totalorder %s39, 15
      %p74 = por %p72, %p73
      %p76 = scmp.ne.s32.totalorder %s59, %s75
      %p77 = scmp.eq.s32.totalorder %s39, 0
      %p78 = por %p76, %p77
      %s80 = sadd.s32 %s79, 1
      %p83 = scmp.eq.s32.totalorder %s33, 15
      %p84 = scmp.ne.s32.totalorder %s79, %s81
      %p85 = scmp.eq.s32.totalorder %s33, 0
      %p86 = por %p84, %p85
      %p87 = scmp.ne.s32.totalorder %s79, %s81
      %p88 = scmp.eq.s32.totalorder %s38, 15
      %p89 = por %p87, %p88
      %p90 = scmp.ne.s32.totalorder %s81, %s82
      %p91 = scmp.eq.s32.totalorder %s38, 0
      %p92 = por %p90, %p91
      %p93 = scmp.ne.s32.totalorder %s81, %s82
      %p94 = scmp.eq.s32.totalorder %s39, 15
      %p95 = por %p93, %p94
      %p97 = scmp.ne.s32.totalorder %s82, %s96
      %p98 = scmp.eq.s32.totalorder %s39, 0
      %p99 = por %p97, %p98
      %s100 = ssub.s32 %s41, %s48
      %p101 = scmp.eq.s32.totalorder %s100, 0
      %s103 = sadd.s32 %s102, 1
      %s104 = scalar_select %p101, %s102, %s103
      %p107 = pneg %p101
      %p108 = scmp.eq.s32.totalorder %s33, 15
      %p109 = por %p107, %p108
      %p110 = scmp.ne.s32.totalorder %s102, %s105
      %p111 = scmp.eq.s32.totalorder %s33, 0
      %p112 = por %p110, %p111
      %p113 = scmp.ne.s32.totalorder %s102, %s105
      %p114 = scmp.eq.s32.totalorder %s38, 15
      %p115 = por %p113, %p114
      %p116 = scmp.ne.s32.totalorder %s105, %s106
      %p117 = scmp.eq.s32.totalorder %s38, 0
      %p118 = por %p116, %p117
      %p119 = scmp.ne.s32.totalorder %s105, %s106
      %p120 = scmp.eq.s32.totalorder %s39, 15
      %p121 = por %p119, %p120
      %p123 = scmp.ne.s32.totalorder %s106, %s122
      %p124 = scmp.eq.s32.totalorder %s39, 0
      %p125 = por %p123, %p124
      %s126 = ssub.s32 %s41, %s48
      %p127 = scmp.eq.s32.totalorder %s126, 0
      %s129 = sadd.s32 %s128, 1
      %s130 = scalar_select %p127, %s128, %s129
      %p133 = pneg %p127
      %p134 = scmp.eq.s32.totalorder %s33, 15
      %p135 = por %p133, %p134
      %p136 = scmp.ne.s32.totalorder %s128, %s131
      %p137 = scmp.eq.s32.totalorder %s33, 0
      %p138 = por %p136, %p137
      %p139 = scmp.ne.s32.totalorder %s128, %s131
      %p140 = scmp.eq.s32.totalorder %s38, 15
      %p141 = por %p139, %p140
      %p142 = scmp.ne.s32.totalorder %s131, %s132
      %p143 = scmp.eq.s32.totalorder %s38, 0
      %p144 = por %p142, %p143
      %p145 = scmp.ne.s32.totalorder %s131, %s132
      %p146 = scmp.eq.s32.totalorder %s39, 15
      %p147 = por %p145, %p146
      %p149 = scmp.ne.s32.totalorder %s132, %s148
      %p150 = scmp.eq.s32.totalorder %s39, 0
      %p151 = por %p149, %p150
      %s152 = ssub.s32 %s41, %s48
      %p153 = scmp.eq.s32.totalorder %s152, 0
      %s155 = sadd.s32 %s154, 1
      %s156 = scalar_select %p153, %s154, %s155
      %p159 = pneg %p153
      %p160 = scmp.eq.s32.totalorder %s33, 15
      %p161 = por %p159, %p160
      %p162 = scmp.ne.s32.totalorder %s154, %s157
      %p163 = scmp.eq.s32.totalorder %s33, 0
      %p164 = por %p162, %p163
      %p165 = scmp.ne.s32.totalorder %s154, %s157
      %p166 = scmp.eq.s32.totalorder %s38, 15
      %p167 = por %p165, %p166
      %p168 = scmp.ne.s32.totalorder %s157, %s158
      %p169 = scmp.eq.s32.totalorder %s38, 0
      %p170 = por %p168, %p169
      %p171 = scmp.ne.s32.totalorder %s157, %s158
      %p172 = scmp.eq.s32.totalorder %s39, 15
      %p173 = por %p171, %p172
      %p175 = scmp.ne.s32.totalorder %s158, %s174
      %p176 = scmp.eq.s32.totalorder %s39, 0
      %p177 = por %p175, %p176
      %s178 = ssub.s32 %s41, %s48
      %p179 = scmp.eq.s32.totalorder %s178, 0
      %s181 = sadd.s32 %s180, 1
      %s182 = scalar_select %p179, %s180, %s181
      %p185 = pneg %p179
      %p186 = scmp.eq.s32.totalorder %s33, 15
      %p187 = por %p185, %p186
      %p188 = scmp.ne.s32.totalorder %s180, %s183
      %p189 = scmp.eq.s32.totalorder %s33, 0
      %p190 = por %p188, %p189
      %p191 = scmp.ne.s32.totalorder %s180, %s183
      %p192 = scmp.eq.s32.totalorder %s38, 15
      %p193 = por %p191, %p192
      %p194 = scmp.ne.s32.totalorder %s183, %s184
      %p195 = scmp.eq.s32.totalorder %s38, 0
      %p196 = por %p194, %p195
      %p197 = scmp.ne.s32.totalorder %s183, %s184
      %p198 = scmp.eq.s32.totalorder %s39, 15
      %p199 = por %p197, %p198
      %p201 = scmp.ne.s32.totalorder %s184, %s200
      %p202 = scmp.eq.s32.totalorder %s39, 0
      %p203 = por %p201, %p202
      %s204 = ssub.s32 %s41, %s48
      %p205 = scmp.eq.s32.totalorder %s204, 0
      %s207 = sadd.s32 %s206, 1
      %s208 = scalar_select %p205, %s206, %s207
      %p211 = pneg %p205
      %p212 = scmp.eq.s32.totalorder %s33, 15
      %p213 = por %p211, %p212
      %p214 = scmp.ne.s32.totalorder %s206, %s209
      %p215 = scmp.eq.s32.totalorder %s33, 0
      %p216 = por %p214, %p215
      %p217 = scmp.ne.s32.totalorder %s206, %s209
      %p218 = scmp.eq.s32.totalorder %s38, 15
      %p219 = por %p217, %p218
      %p220 = scmp.ne.s32.totalorder %s209, %s210
      %p221 = scmp.eq.s32.totalorder %s38, 0
      %p222 = por %p220, %p221
      %p223 = scmp.ne.s32.totalorder %s209, %s210
      %p224 = scmp.eq.s32.totalorder %s39, 15
      %p225 = por %p223, %p224
      %p227 = scmp.ne.s32.totalorder %s210, %s226
      %p228 = scmp.eq.s32.totalorder %s39, 0
      %p229 = por %p227, %p228
      %s231 = sadd.s32 %s230, 1
      %p234 = scmp.eq.s32.totalorder %s33, 15
      %p235 = scmp.ne.s32.totalorder %s230, %s232
      %p236 = scmp.eq.s32.totalorder %s33, 0
      %p237 = por %p235, %p236
      %p238 = scmp.ne.s32.totalorder %s230, %s232
      %p239 = scmp.eq.s32.totalorder %s38, 15
      %p240 = por %p238, %p239
      %p241 = scmp.ne.s32.totalorder %s232, %s233
      %p242 = scmp.eq.s32.totalorder %s38, 0
      %p243 = por %p241, %p242
      %p244 = scmp.ne.s32.totalorder %s232, %s233
      %p245 = scmp.eq.s32.totalorder %s39, 15
      %p246 = por %p244, %p245
      %p248 = scmp.ne.s32.totalorder %s233, %s247
      %p249 = scmp.eq.s32.totalorder %s39, 0
      %p250 = por %p248, %p249
      %s251 = ssub.s32 %s41, %s48
      %p252 = scmp.eq.s32.totalorder %s251, 0
      %s254 = sadd.s32 %s253, 1
      %s255 = scalar_select %p252, %s253, %s254
      %p258 = pneg %p252
      %p259 = scmp.eq.s32.totalorder %s33, 15
      %p260 = por %p258, %p259
      %p261 = scmp.ne.s32.totalorder %s253, %s256
      %p262 = scmp.eq.s32.totalorder %s33, 0
      %p263 = por %p261, %p262
      %p264 = scmp.ne.s32.totalorder %s253, %s256
      %p265 = scmp.eq.s32.totalorder %s38, 15
      %p266 = por %p264, %p265
      %p267 = scmp.ne.s32.totalorder %s256, %s257
      %p268 = scmp.eq.s32.totalorder %s38, 0
      %p269 = por %p267, %p268
      %p270 = scmp.ne.s32.totalorder %s256, %s257
      %p271 = scmp.eq.s32.totalorder %s39, 15
      %p272 = por %p270, %p271
      %p274 = scmp.ne.s32.totalorder %s257, %s273
      %p275 = scmp.eq.s32.totalorder %s39, 0
      %p276 = por %p274, %p275
      %s277 = ssub.s32 %s41, %s48
      %p278 = scmp.eq.s32.totalorder %s277, 0
      %s280 = sadd.s32 %s279, 1
      %s281 = scalar_select %p278, %s279, %s280
      %p284 = pneg %p278
      %p285 = scmp.eq.s32.totalorder %s33, 15
      %p286 = por %p284, %p285
      %p287 = scmp.ne.s32.totalorder %s279, %s282
      %p288 = scmp.eq.s32.totalorder %s33, 0
      %p289 = por %p287, %p288
      %p290 = scmp.ne.s32.totalorder %s279, %s282
      %p291 = scmp.eq.s32.totalorder %s38, 15
      %p292 = por %p290, %p291
      %p293 = scmp.ne.s32.totalorder %s282, %s283
      %p294 = scmp.eq.s32.totalorder %s38, 0
      %p295 = por %p293, %p294
      %p296 = scmp.ne.s32.totalorder %s282, %s283
      %p297 = scmp.eq.s32.totalorder %s39, 15
      %p298 = por %p296, %p297
      %p300 = scmp.ne.s32.totalorder %s283, %s299
      %p301 = scmp.eq.s32.totalorder %s39, 0
      %p302 = por %p300, %p301
      %s303 = ssub.s32 %s41, %s48
      %p304 = scmp.eq.s32.totalorder %s303, 0
      %s306 = sadd.s32 %s305, 1
      %s307 = scalar_select %p304, %s305, %s306
      %p310 = pneg %p304
      %p311 = scmp.eq.s32.totalorder %s33, 15
      %p312 = por %p310, %p311
      %p313 = scmp.ne.s32.totalorder %s305, %s308
      %p314 = scmp.eq.s32.totalorder %s33, 0
      %p315 = por %p313, %p314
      %p316 = scmp.ne.s32.totalorder %s305, %s308
      %p317 = scmp.eq.s32.totalorder %s38, 15
      %p318 = por %p316, %p317
      %p319 = scmp.ne.s32.totalorder %s308, %s309
      %p320 = scmp.eq.s32.totalorder %s38, 0
      %p321 = por %p319, %p320
      %p322 = scmp.ne.s32.totalorder %s308, %s309
      %p323 = scmp.eq.s32.totalorder %s39, 15
      %p324 = por %p322, %p323
      %p326 = scmp.ne.s32.totalorder %s309, %s325
      %p327 = scmp.eq.s32.totalorder %s39, 0
      %p328 = por %p326, %p327
      %s329 = ssub.s32 %s41, %s48
      %p330 = scmp.eq.s32.totalorder %s329, 0
      %s332 = sadd.s32 %s331, 1
      %s333 = scalar_select %p330, %s331, %s332
      %p336 = pneg %p330
      %p337 = scmp.eq.s32.totalorder %s33, 15
      %p338 = por %p336, %p337
      %p339 = scmp.ne.s32.totalorder %s331, %s334
      %p340 = scmp.eq.s32.totalorder %s33, 0
      %p341 = por %p339, %p340
      %p342 = scmp.ne.s32.totalorder %s331, %s334
      %p343 = scmp.eq.s32.totalorder %s38, 15
      %p344 = por %p342, %p343
      %p345 = scmp.ne.s32.totalorder %s334, %s335
      %p346 = scmp.eq.s32.totalorder %s38, 0
      %p347 = por %p345, %p346
      %p348 = scmp.ne.s32.totalorder %s334, %s335
      %p349 = scmp.eq.s32.totalorder %s39, 15
      %p350 = por %p348, %p349
      %p352 = scmp.ne.s32.totalorder %s335, %s351
      %p353 = scmp.eq.s32.totalorder %s39, 0
      %p354 = por %p352, %p353
      %s355 = ssub.s32 %s41, %s48
      %p356 = scmp.eq.s32.totalorder %s355, 0
      %s358 = sadd.s32 %s357, 1
      %s359 = scalar_select %p356, %s357, %s358
      %p362 = pneg %p356
      %p363 = scmp.eq.s32.totalorder %s33, 15
      %p364 = por %p362, %p363
      %p365 = scmp.ne.s32.totalorder %s357, %s360
      %p366 = scmp.eq.s32.totalorder %s33, 0
      %p367 = por %p365, %p366
      %p368 = scmp.ne.s32.totalorder %s357, %s360
      %p369 = scmp.eq.s32.totalorder %s38, 15
      %p370 = por %p368, %p369
      %p371 = scmp.ne.s32.totalorder %s360, %s361
      %p372 = scmp.eq.s32.totalorder %s38, 0
      %p373 = por %p371, %p372
      %p374 = scmp.ne.s32.totalorder %s360, %s361
      %p375 = scmp.eq.s32.totalorder %s39, 15
      %p376 = por %p374, %p375
      %p378 = scmp.ne.s32.totalorder %s361, %s377
      %p379 = scmp.eq.s32.totalorder %s39, 0
      %p380 = por %p378, %p379
      %s381 = ssub.s32 %s41, %s48
      %p382 = scmp.eq.s32.totalorder %s381, 0
      %s384 = sadd.s32 %s383, 1
      %s385 = scalar_select %p382, %s383, %s384
      %p388 = pneg %p382
      %p389 = scmp.eq.s32.totalorder %s33, 15
      %p390 = por %p388, %p389
      %p391 = scmp.ne.s32.totalorder %s383, %s386
      %p392 = scmp.eq.s32.totalorder %s33, 0
      %p393 = por %p391, %p392
      %p394 = scmp.ne.s32.totalorder %s383, %s386
      %p395 = scmp.eq.s32.totalorder %s38, 15
      %p396 = por %p394, %p395
      %p397 = scmp.ne.s32.totalorder %s386, %s387
      %p398 = scmp.eq.s32.totalorder %s38, 0
      %p399 = por %p397, %p398
      %p400 = scmp.ne.s32.totalorder %s386, %s387
      %p401 = scmp.eq.s32.totalorder %s39, 15
      %p402 = por %p400, %p401
      %p404 = scmp.ne.s32.totalorder %s387, %s403
      %p405 = scmp.eq.s32.totalorder %s39, 0
      %p406 = por %p404, %p405
      %s407 = ssub.s32 %s41, %s48
      %p408 = scmp.eq.s32.totalorder %s407, 0
      %s410 = sadd.s32 %s409, 1
      %s411 = scalar_select %p408, %s409, %s410
      %p414 = pneg %p408
      %p415 = scmp.eq.s32.totalorder %s33, 15
      %p416 = por %p414, %p415
      %p417 = scmp.ne.s32.totalorder %s409, %s412
      %p418 = scmp.eq.s32.totalorder %s33, 0
      %p419 = por %p417, %p418
      %p420 = scmp.ne.s32.totalorder %s409, %s412
      %p421 = scmp.eq.s32.totalorder %s38, 15
      %p422 = por %p420, %p421
      %p423 = scmp.ne.s32.totalorder %s412, %s413
      %p424 = scmp.eq.s32.totalorder %s38, 0
      %p425 = por %p423, %p424
      %p426 = scmp.ne.s32.totalorder %s412, %s413
      %p427 = scmp.eq.s32.totalorder %s39, 15
      %p428 = por %p426, %p427
      %p430 = scmp.ne.s32.totalorder %s413, %s429
      %p431 = scmp.eq.s32.totalorder %s39, 0
      %p432 = por %p430, %p431
      %s433 = ssub.s32 %s41, %s48
      %p434 = scmp.eq.s32.totalorder %s433, 0
      %s436 = sadd.s32 %s435, 1
      %s437 = scalar_select %p434, %s435, %s436
      %p440 = pneg %p434
      %p441 = scmp.eq.s32.totalorder %s33, 15
      %p442 = por %p440, %p441
      %p443 = scmp.ne.s32.totalorder %s435, %s438
      %p444 = scmp.eq.s32.totalorder %s33, 0
      %p445 = por %p443, %p444
      %p446 = scmp.ne.s32.totalorder %s435, %s438
      %p447 = scmp.eq.s32.totalorder %s38, 15
      %p448 = por %p446, %p447
      %p449 = scmp.ne.s32.totalorder %s438, %s439
      %p450 = scmp.eq.s32.totalorder %s38, 0
      %p451 = por %p449, %p450
      %p452 = scmp.ne.s32.totalorder %s438, %s439
      %p453 = scmp.eq.s32.totalorder %s39, 15
      %p454 = por %p452, %p453
      %p456 = scmp.ne.s32.totalorder %s439, %s455
      %p457 = scmp.eq.s32.totalorder %s39, 0
      %p458 = por %p456, %p457
      %s459 = ssub.s32 %s41, %s48
      %p460 = scmp.eq.s32.totalorder %s459, 0
      %s462 = sadd.s32 %s461, 1
      %s463 = scalar_select %p460, %s461, %s462
      %p466 = pneg %p460
      %p467 = scmp.eq.s32.totalorder %s33, 15
      %p468 = por %p466, %p467
      %p469 = scmp.ne.s32.totalorder %s461, %s464
      %p470 = scmp.eq.s32.totalorder %s33, 0
      %p471 = por %p469, %p470
      %p472 = scmp.ne.s32.totalorder %s461, %s464
      %p473 = scmp.eq.s32.totalorder %s38, 15
      %p474 = por %p472, %p473
      %p475 = scmp.ne.s32.totalorder %s464, %s465
      %p476 = scmp.eq.s32.totalorder %s38, 0
      %p477 = por %p475, %p476
      %p478 = scmp.ne.s32.totalorder %s464, %s465
      %p479 = scmp.eq.s32.totalorder %s39, 15
      %p480 = por %p478, %p479
      %p482 = scmp.ne.s32.totalorder %s465, %s481
      %p483 = scmp.eq.s32.totalorder %s39, 0
      %p484 = por %p482, %p483
      %s485 = ssub.s32 %s41, %s48
      %p486 = scmp.eq.s32.totalorder %s485, 0
      %s488 = sadd.s32 %s487, 1
      %s489 = scalar_select %p486, %s487, %s488
      %p492 = pneg %p486
      %p493 = scmp.eq.s32.totalorder %s33, 15
      %p494 = por %p492, %p493
      %p495 = scmp.ne.s32.totalorder %s487, %s490
      %p496 = scmp.eq.s32.totalorder %s33, 0
      %p497 = por %p495, %p496
      %p498 = scmp.ne.s32.totalorder %s487, %s490
      %p499 = scmp.eq.s32.totalorder %s38, 15
      %p500 = por %p498, %p499
      %p501 = scmp.ne.s32.totalorder %s490, %s491
      %p502 = scmp.eq.s32.totalorder %s38, 0
      %p503 = por %p501, %p502
      %p504 = scmp.ne.s32.totalorder %s490, %s491
      %p505 = scmp.eq.s32.totalorder %s39, 15
      %p506 = por %p504, %p505
      %p508 = scmp.ne.s32.totalorder %s491, %s507
      %p509 = scmp.eq.s32.totalorder %s39, 0
      %p510 = por %p508, %p509
      %s511 = ssub.s32 %s41, %s48
      %p512 = scmp.eq.s32.totalorder %s511, 0
      %s514 = sadd.s32 %s513, 1
      %s515 = scalar_select %p512, %s513, %s514
      %p518 = pneg %p512
      %p519 = scmp.eq.s32.totalorder %s33, 15
      %p520 = por %p518, %p519
      %p521 = scmp.ne.s32.totalorder %s513, %s516
      %p522 = scmp.eq.s32.totalorder %s33, 0
      %p523 = por %p521, %p522
      %p524 = scmp.ne.s32.totalorder %s513, %s516
      %p525 = scmp.eq.s32.totalorder %s38, 15
      %p526 = por %p524, %p525
      %p527 = scmp.ne.s32.totalorder %s516, %s517
      %p528 = scmp.eq.s32.totalorder %s38, 0
      %p529 = por %p527, %p528
      %p530 = scmp.ne.s32.totalorder %s516, %s517
      %p531 = scmp.eq.s32.totalorder %s39, 15
      %p532 = por %p530, %p531
      %p534 = scmp.ne.s32.totalorder %s517, %s533
      %p535 = scmp.eq.s32.totalorder %s39, 0
      %p536 = por %p534, %p535
      %s537 = ssub.s32 %s41, %s48
      %p538 = scmp.eq.s32.totalorder %s537, 0
      %s540 = sadd.s32 %s539, 1
      %s541 = scalar_select %p538, %s539, %s540
      %p544 = pneg %p538
      %p545 = scmp.eq.s32.totalorder %s33, 15
      %p546 = por %p544, %p545
      %p547 = scmp.ne.s32.totalorder %s539, %s542
      %p548 = scmp.eq.s32.totalorder %s33, 0
      %p549 = por %p547, %p548
      %p550 = scmp.ne.s32.totalorder %s539, %s542
      %p551 = scmp.eq.s32.totalorder %s38, 15
      %p552 = por %p550, %p551
      %p553 = scmp.ne.s32.totalorder %s542, %s543
      %p554 = scmp.eq.s32.totalorder %s38, 0
      %p555 = por %p553, %p554
      %p556 = scmp.ne.s32.totalorder %s542, %s543
      %p557 = scmp.eq.s32.totalorder %s39, 15
      %p558 = por %p556, %p557
      %p560 = scmp.ne.s32.totalorder %s543, %s559
      %p561 = scmp.eq.s32.totalorder %s39, 0
      %p562 = por %p560, %p561
      %s563 = ssub.s32 %s41, %s48
      %p564 = scmp.eq.s32.totalorder %s563, 0
      %s566 = sadd.s32 %s565, 1
      %s567 = scalar_select %p564, %s565, %s566
      %p570 = pneg %p564
      %p571 = scmp.eq.s32.totalorder %s33, 15
      %p572 = por %p570, %p571
      %p573 = scmp.ne.s32.totalorder %s565, %s568
      %p574 = scmp.eq.s32.totalorder %s33, 0
      %p575 = por %p573, %p574
      %p576 = scmp.ne.s32.totalorder %s565, %s568
      %p577 = scmp.eq.s32.totalorder %s38, 15
      %p578 = por %p576, %p577
      %p579 = scmp.ne.s32.totalorder %s568, %s569
      %p580 = scmp.eq.s32.totalorder %s38, 0
      %p581 = por %p579, %p580
      %p582 = scmp.ne.s32.totalorder %s568, %s569
      %p583 = scmp.eq.s32.totalorder %s39, 15
      %p584 = por %p582, %p583
      %p586 = scmp.ne.s32.totalorder %s569, %s585
      %p587 = scmp.eq.s32.totalorder %s39, 0
      %p588 = por %p586, %p587
      %s589 = ssub.s32 %s40, %s52
      %p590 = scmp.eq.s32.totalorder %s589, 0
      %s592 = sadd.s32 %s591, 1
      %s593 = scalar_select %p590, %s591, %s592
      %p596 = pneg %p590
      %p597 = scmp.eq.s32.totalorder %s33, 15
      %p598 = por %p596, %p597
      %p599 = scmp.ne.s32.totalorder %s591, %s594
      %p600 = scmp.eq.s32.totalorder %s33, 0
      %p601 = por %p599, %p600
      %p602 = scmp.ne.s32.totalorder %s591, %s594
      %p603 = scmp.eq.s32.totalorder %s38, 15
      %p604 = por %p602, %p603
      %p605 = scmp.ne.s32.totalorder %s594, %s595
      %p606 = scmp.eq.s32.totalorder %s38, 0
      %p607 = por %p605, %p606
      %p608 = scmp.ne.s32.totalorder %s594, %s595
      %p609 = scmp.eq.s32.totalorder %s39, 15
      %p610 = por %p608, %p609
      %p612 = scmp.ne.s32.totalorder %s595, %s611
      %p613 = scmp.eq.s32.totalorder %s39, 0
      %p614 = por %p612, %p613
      %s615 = ssub.s32 %s40, %s52
      %p616 = scmp.eq.s32.totalorder %s615, 0
      %s618 = sadd.s32 %s617, 1
      %s619 = scalar_select %p616, %s617, %s618
      %p622 = pneg %p616
      %p623 = scmp.eq.s32.totalorder %s33, 15
      %p624 = por %p622, %p623
      %p625 = scmp.ne.s32.totalorder %s617, %s620
      %p626 = scmp.eq.s32.totalorder %s33, 0
      %p627 = por %p625, %p626
      %p628 = scmp.ne.s32.totalorder %s617, %s620
      %p629 = scmp.eq.s32.totalorder %s38, 15
      %p630 = por %p628, %p629
      %p631 = scmp.ne.s32.totalorder %s620, %s621
      %p632 = scmp.eq.s32.totalorder %s38, 0
      %p633 = por %p631, %p632
      %p634 = scmp.ne.s32.totalorder %s620, %s621
      %p635 = scmp.eq.s32.totalorder %s39, 15
      %p636 = por %p634, %p635
      %p638 = scmp.ne.s32.totalorder %s621, %s637
      %p639 = scmp.eq.s32.totalorder %s39, 0
      %p640 = por %p638, %p639
      %p641 = scmp.le.s32.totalorder 1, %s33
      %p642 = scmp.lt.s32.totalorder %s33, 17
      %p643 = pnand %p641, %p642
      %p644 = pneg %p643
      // Predicated region
      $region9: #{modelnet_forward.1} parent=5 // pred_check
        _
      $region10: #{modelnet_forward.1} parent=5 // pred_check_branch
        %646 = sbr.rel (%p643) target = $region12
      $region11: #{modelnet_forward.1} parent=5 // pred_region
        %s647 = ssub.s32 %s33, 1
        // Predicated region
        $region13: #{modelnet_forward.1} parent=11 // pred_check
          %p648 = pneg %p92
        $region14: #{modelnet_forward.1} parent=11 // pred_check_branch
          %650 = sbr.rel (%p648) target = $region16
        $region15: #{modelnet_forward.1} parent=11 // pred_region
          _
        $region16: #{modelnet_forward.1} parent=11 // pred_fallthru
          _
        // Predicated region
        $region17: #{modelnet_forward.1} parent=11 // pred_check
          %p651 = pneg %p243
        $region18: #{modelnet_forward.1} parent=11 // pred_check_branch
          %653 = sbr.rel (%p651) target = $region20
        $region19: #{modelnet_forward.1} parent=11 // pred_region
          %655 = vsyncadd [#allocation4], 0
          %s657 = sshll.u32 %s7, 4
          %s658 = int_to_ptr.vmem [resolvable:$true] %s657
          %660 = dma.vmem_to_smem %s658, 16, [#allocation2], [#allocation4]
        $region20: #{modelnet_forward.1} parent=11 // pred_fallthru
          _
      $region12: #{modelnet_forward.1} parent=5 // pred_fallthru
        _
      %p661 = scmp.lt.s32.totalorder %s33, 16
      // Predicated region
      $region21: #{modelnet_forward.1} parent=5 // pred_check
        %p662 = pneg %p661
      $region22: #{modelnet_forward.1} parent=5 // pred_check_branch
        %664 = sbr.rel (%p662) target = $region24
      $region23: #{modelnet_forward.1} parent=5 // pred_region
        // Predicated region
        $region25: #{modelnet_forward.1} parent=23 // pred_check
          %p665 = pneg %p65
        $region26: #{modelnet_forward.1} parent=23 // pred_check_branch
          %667 = sbr.rel (%p665) target = $region28
        $region27: #{modelnet_forward.1} parent=23 // pred_region
          %p668 = scmp.lt.s32.totalorder %s40, 1
          %s669 = scalar_select %p668, %s40, 1
          %s670 = smul.addr %s669, 8
          %s671 = smul.addr %s670, 8
          %s672 = scalar_lea.vmem %s0, %s671
        $region28: #{modelnet_forward.1} parent=23 // pred_fallthru
          _
        // Predicated region
        $region29: #{modelnet_forward.1} parent=23 // pred_check
          %p673 = pneg %p112
        $region30: #{modelnet_forward.1} parent=23 // pred_check_branch
          %675 = sbr.rel (%p673) target = $region32
        $region31: #{modelnet_forward.1} parent=23 // pred_region
          %p676 = scmp.lt.s32.totalorder %s41, 7
          %s677 = scalar_select %p676, %s41, 7
          %s678 = smul.addr %s677, 2
          %s679 = scalar_lea.vmem %s2, %s678
        $region32: #{modelnet_forward.1} parent=23 // pred_fallthru
          _
        // Predicated region
        $region33: #{modelnet_forward.1} parent=23 // pred_check
          %p680 = pneg %p138
        $region34: #{modelnet_forward.1} parent=23 // pred_check_branch
          %682 = sbr.rel (%p680) target = $region36
        $region35: #{modelnet_forward.1} parent=23 // pred_region
          %p683 = scmp.lt.s32.totalorder %s41, 7
          %s684 = scalar_select %p683, %s41, 7
          %s685 = scalar_lea.vmem %s3, %s684
        $region36: #{modelnet_forward.1} parent=23 // pred_fallthru
          _
        // Predicated region
        $region37: #{modelnet_forward.1} parent=23 // pred_check
          %p686 = pneg %p164
        $region38: #{modelnet_forward.1} parent=23 // pred_check_branch
          %688 = sbr.rel (%p686) target = $region40
        $region39: #{modelnet_forward.1} parent=23 // pred_region
          %p689 = scmp.lt.s32.totalorder %s41, 7
          %s690 = scalar_select %p689, %s41, 7
          %s691 = smul.addr %s690, 54
          %s692 = smul.addr %s691, 4
          %s693 = scalar_lea.vmem %s4, %s692
        $region40: #{modelnet_forward.1} parent=23 // pred_fallthru
          _
        // Predicated region
        $region41: #{modelnet_forward.1} parent=23 // pred_check
          %p694 = pneg %p190
        $region42: #{modelnet_forward.1} parent=23 // pred_check_branch
          %696 = sbr.rel (%p694) target = $region44
        $region43: #{modelnet_forward.1} parent=23 // pred_region
          %p697 = scmp.lt.s32.totalorder %s41, 7
          %s698 = scalar_select %p697, %s41, 7
          %s699 = scalar_lea.vmem %s5, %s698
        $region44: #{modelnet_forward.1} parent=23 // pred_fallthru
          _
        // Predicated region
        $region45: #{modelnet_forward.1} parent=23 // pred_check
          %p700 = pneg %p216
        $region46: #{modelnet_forward.1} parent=23 // pred_check_branch
          %702 = sbr.rel (%p700) target = $region48
        $region47: #{modelnet_forward.1} parent=23 // pred_region
          %p703 = scmp.lt.s32.totalorder %s41, 7
          %s704 = scalar_select %p703, %s41, 7
          %s705 = smul.addr %s704, 2
          %s706 = smul.addr %s705, 4
          %s707 = scalar_lea.vmem %s6, %s706
        $region48: #{modelnet_forward.1} parent=23 // pred_fallthru
          _
        // Predicated region
        $region49: #{modelnet_forward.1} parent=23 // pred_check
          %p708 = pneg %p263
        $region50: #{modelnet_forward.1} parent=23 // pred_check_branch
          %710 = sbr.rel (%p708) target = $region52
        $region51: #{modelnet_forward.1} parent=23 // pred_region
          %p711 = scmp.lt.s32.totalorder %s41, 7
          %s712 = scalar_select %p711, %s41, 7
          %s713 = smul.addr %s712, 2
          %s714 = smul.addr %s713, 4
          %s715 = scalar_lea.vmem %s8, %s714
        $region52: #{modelnet_forward.1} parent=23 // pred_fallthru
          _
        // Predicated region
        $region53: #{modelnet_forward.1} parent=23 // pred_check
          %p716 = pneg %p289
        $region54: #{modelnet_forward.1} parent=23 // pred_check_branch
          %718 = sbr.rel (%p716) target = $region56
        $region55: #{modelnet_forward.1} parent=23 // pred_region
          %p719 = scmp.lt.s32.totalorder %s41, 7
          %s720 = scalar_select %p719, %s41, 7
          %s721 = scalar_lea.vmem %s9, %s720
        $region56: #{modelnet_forward.1} parent=23 // pred_fallthru
          _
        // Predicated region
        $region57: #{modelnet_forward.1} parent=23 // pred_check
          %p722 = pneg %p315
        $region58: #{modelnet_forward.1} parent=23 // pred_check_branch
          %724 = sbr.rel (%p722) target = $region60
        $region59: #{modelnet_forward.1} parent=23 // pred_region
          %p725 = scmp.lt.s32.totalorder %s41, 7
          %s726 = scalar_select %p725, %s41, 7
          %s727 = smul.addr %s726, 2
          %s728 = smul.addr %s727, 8
          %s729 = scalar_lea.vmem %s10, %s728
        $region60: #{modelnet_forward.1} parent=23 // pred_fallthru
          _
        // Predicated region
        $region61: #{modelnet_forward.1} parent=23 // pred_check
          %p730 = pneg %p341
        $region62: #{modelnet_forward.1} parent=23 // pred_check_branch
          %732 = sbr.rel (%p730) target = $region64
        $region63: #{modelnet_forward.1} parent=23 // pred_region
          %p733 = scmp.lt.s32.totalorder %s41, 7
          %s734 = scalar_select %p733, %s41, 7
          %s735 = smul.addr %s734, 2
          %s736 = smul.addr %s735, 8
          %s737 = scalar_lea.vmem %s11, %s736
        $region64: #{modelnet_forward.1} parent=23 // pred_fallthru
          _
        // Predicated region
        $region65: #{modelnet_forward.1} parent=23 // pred_check
          %p738 = pneg %p367
        $region66: #{modelnet_forward.1} parent=23 // pred_check_branch
          %740 = sbr.rel (%p738) target = $region68
        $region67: #{modelnet_forward.1} parent=23 // pred_region
          %p741 = scmp.lt.s32.totalorder %s41, 7
          %s742 = scalar_select %p741, %s41, 7
          %s743 = scalar_lea.vmem %s12, %s742
        $region68: #{modelnet_forward.1} parent=23 // pred_fallthru
          _
        // Predicated region
        $region69: #{modelnet_forward.1} parent=23 // pred_check
          %p744 = pneg %p393
        $region70: #{modelnet_forward.1} parent=23 // pred_check_branch
          %746 = sbr.rel (%p744) target = $region72
        $region71: #{modelnet_forward.1} parent=23 // pred_region
          %p747 = scmp.lt.s32.totalorder %s41, 7
          %s748 = scalar_select %p747, %s41, 7
          %s749 = scalar_lea.vmem %s13, %s748
        $region72: #{modelnet_forward.1} parent=23 // pred_fallthru
          _
        // Predicated region
        $region73: #{modelnet_forward.1} parent=23 // pred_check
          %p750 = pneg %p419
        $region74: #{modelnet_forward.1} parent=23 // pred_check_branch
          %752 = sbr.rel (%p750) target = $region76
        $region75: #{modelnet_forward.1} parent=23 // pred_region
          %p753 = scmp.lt.s32.totalorder %s41, 7
          %s754 = scalar_select %p753, %s41, 7
          %s755 = smul.addr %s754, 2
          %s756 = smul.addr %s755, 4
          %s757 = scalar_lea.vmem %s14, %s756
        $region76: #{modelnet_forward.1} parent=23 // pred_fallthru
          _
        // Predicated region
        $region77: #{modelnet_forward.1} parent=23 // pred_check
          %p758 = pneg %p445
        $region78: #{modelnet_forward.1} parent=23 // pred_check_branch
          %760 = sbr.rel (%p758) target = $region80
        $region79: #{modelnet_forward.1} parent=23 // pred_region
          %p761 = scmp.lt.s32.totalorder %s41, 7
          %s762 = scalar_select %p761, %s41, 7
          %s763 = smul.addr %s762, 2
          %s764 = smul.addr %s763, 8
          %s765 = scalar_lea.vmem %s15, %s764
        $region80: #{modelnet_forward.1} parent=23 // pred_fallthru
          _
        // Predicated region
        $region81: #{modelnet_forward.1} parent=23 // pred_check
          %p766 = pneg %p471
        $region82: #{modelnet_forward.1} parent=23 // pred_check_branch
          %768 = sbr.rel (%p766) target = $region84
        $region83: #{modelnet_forward.1} parent=23 // pred_region
          %p769 = scmp.lt.s32.totalorder %s41, 7
          %s770 = scalar_select %p769, %s41, 7
          %s771 = smul.addr %s770, 8
          %s772 = smul.addr %s771, 4
          %s773 = scalar_lea.vmem %s16, %s772
        $region84: #{modelnet_forward.1} parent=23 // pred_fallthru
          _
        // Predicated region
        $region85: #{modelnet_forward.1} parent=23 // pred_check
          %p774 = pneg %p497
        $region86: #{modelnet_forward.1} parent=23 // pred_check_branch
          %776 = sbr.rel (%p774) target = $region88
        $region87: #{modelnet_forward.1} parent=23 // pred_region
          %p777 = scmp.lt.s32.totalorder %s41, 7
          %s778 = scalar_select %p777, %s41, 7
          %s779 = smul.addr %s778, 54
          %s780 = smul.addr %s779, 4
          %s781 = scalar_lea.vmem %s17, %s780
        $region88: #{modelnet_forward.1} parent=23 // pred_fallthru
          _
        // Predicated region
        $region89: #{modelnet_forward.1} parent=23 // pred_check
          %p782 = pneg %p523
        $region90: #{modelnet_forward.1} parent=23 // pred_check_branch
          %784 = sbr.rel (%p782) target = $region92
        $region91: #{modelnet_forward.1} parent=23 // pred_region
          %p785 = scmp.lt.s32.totalorder %s41, 7
          %s786 = scalar_select %p785, %s41, 7
          %s787 = scalar_lea.vmem %s18, %s786
        $region92: #{modelnet_forward.1} parent=23 // pred_fallthru
          _
        // Predicated region
        $region93: #{modelnet_forward.1} parent=23 // pred_check
          %p788 = pneg %p549
        $region94: #{modelnet_forward.1} parent=23 // pred_check_branch
          %790 = sbr.rel (%p788) target = $region96
        $region95: #{modelnet_forward.1} parent=23 // pred_region
          %p791 = scmp.lt.s32.totalorder %s41, 7
          %s792 = scalar_select %p791, %s41, 7
          %s793 = smul.addr %s792, 2
          %s794 = smul.addr %s793, 4
          %s795 = scalar_lea.vmem %s19, %s794
        $region96: #{modelnet_forward.1} parent=23 // pred_fallthru
          _
        // Predicated region
        $region97: #{modelnet_forward.1} parent=23 // pred_check
          %p796 = pneg %p575
        $region98: #{modelnet_forward.1} parent=23 // pred_check_branch
          %798 = sbr.rel (%p796) target = $region100
        $region99: #{modelnet_forward.1} parent=23 // pred_region
          %p799 = scmp.lt.s32.totalorder %s41, 7
          %s800 = scalar_select %p799, %s41, 7
          %s801 = scalar_lea.vmem %s20, %s800
        $region100: #{modelnet_forward.1} parent=23 // pred_fallthru
          _
      $region24: #{modelnet_forward.1} parent=5 // pred_fallthru
        _
      %p802 = scmp.le.s32.totalorder 1, %s33
      %p803 = scmp.lt.s32.totalorder %s33, 17
      %p804 = pnand %p802, %p803
      %p805 = pneg %p804
      // Predicated region
      $region101: #{modelnet_forward.1} parent=5 // pred_check
        _
      $region102: #{modelnet_forward.1} parent=5 // pred_check_branch
        %807 = sbr.rel (%p804) target = $region104
      $region103: #{modelnet_forward.1} parent=5 // pred_region
        %s808 = ssub.s32 %s33, 1
        // Predicated region
        $region105: #{modelnet_forward.1} parent=103 // pred_check
          %p809 = pneg %p243
        $region106: #{modelnet_forward.1} parent=103 // pred_check_branch
          %811 = sbr.rel (%p809) target = $region108
        $region107: #{modelnet_forward.1} parent=103 // pred_region
          %813 = dma.done [#allocation4], 16
        $region108: #{modelnet_forward.1} parent=103 // pred_fallthru
          _
        %814 = sfence
        %p815 = scmp.lt.s32.totalorder %s42, 1
        %s816 = scalar_select %p815, %s42, 1
        %s817 = smul.addr %s816, 8
        %s818 = smul.addr %s817, 8
        %s819 = scalar_lea.vmem %s0, %s818
        %p820 = pneg %p71
        %p821 = pneg %p68
        %p822 = pneg %p92
        %p823 = pneg %p89
        %p824 = scmp.lt.s32.totalorder %s43, 7
        %s825 = scalar_select %p824, %s43, 7
        %s826 = smul.addr %s825, 2
        %s827 = scalar_lea.vmem %s2, %s826
        %p828 = pneg %p118
        %p829 = pneg %p115
        %p830 = scmp.lt.s32.totalorder %s43, 7
        %s831 = scalar_select %p830, %s43, 7
        %s832 = scalar_lea.vmem %s3, %s831
        %p833 = pneg %p144
        %p834 = pneg %p141
        %p835 = scmp.lt.s32.totalorder %s43, 7
        %s836 = scalar_select %p835, %s43, 7
        %s837 = smul.addr %s836, 54
        %s838 = smul.addr %s837, 4
        %s839 = scalar_lea.vmem %s4, %s838
        %p840 = pneg %p170
        %p841 = pneg %p167
        %p842 = scmp.lt.s32.totalorder %s43, 7
        %s843 = scalar_select %p842, %s43, 7
        %s844 = scalar_lea.vmem %s5, %s843
        %p845 = pneg %p196
        %p846 = pneg %p193
        %p847 = scmp.lt.s32.totalorder %s43, 7
        %s848 = scalar_select %p847, %s43, 7
        %s849 = smul.addr %s848, 2
        %s850 = smul.addr %s849, 4
        %s851 = scalar_lea.vmem %s6, %s850
        %p852 = pneg %p222
        %p853 = pneg %p219
        %p854 = pneg %p243
        %p855 = pneg %p240
        %p856 = scmp.lt.s32.totalorder %s43, 7
        %s857 = scalar_select %p856, %s43, 7
        %s858 = smul.addr %s857, 2
        %s859 = smul.addr %s858, 4
        %s860 = scalar_lea.vmem %s8, %s859
        %p861 = pneg %p269
        %p862 = pneg %p266
        %p863 = scmp.lt.s32.totalorder %s43, 7
        %s864 = scalar_select %p863, %s43, 7
        %s865 = scalar_lea.vmem %s9, %s864
        %p866 = pneg %p295
        %p867 = pneg %p292
        %p868 = scmp.lt.s32.totalorder %s43, 7
        %s869 = scalar_select %p868, %s43, 7
        %s870 = smul.addr %s869, 2
        %s871 = smul.addr %s870, 8
        %s872 = scalar_lea.vmem %s10, %s871
        %p873 = pneg %p321
        %p874 = pneg %p318
        %p875 = scmp.lt.s32.totalorder %s43, 7
        %s876 = scalar_select %p875, %s43, 7
        %s877 = smul.addr %s876, 2
        %s878 = smul.addr %s877, 8
        %s879 = scalar_lea.vmem %s11, %s878
        %p880 = pneg %p347
        %p881 = pneg %p344
        %p882 = scmp.lt.s32.totalorder %s43, 7
        %s883 = scalar_select %p882, %s43, 7
        %s884 = scalar_lea.vmem %s12, %s883
        %p885 = pneg %p373
        %p886 = pneg %p370
        %p887 = scmp.lt.s32.totalorder %s43, 7
        %s888 = scalar_select %p887, %s43, 7
        %s889 = scalar_lea.vmem %s13, %s888
        %p890 = pneg %p399
        %p891 = pneg %p396
        %p892 = scmp.lt.s32.totalorder %s43, 7
        %s893 = scalar_select %p892, %s43, 7
        %s894 = smul.addr %s893, 2
        %s895 = smul.addr %s894, 4
        %s896 = scalar_lea.vmem %s14, %s895
        %p897 = pneg %p425
        %p898 = pneg %p422
        %p899 = scmp.lt.s32.totalorder %s43, 7
        %s900 = scalar_select %p899, %s43, 7
        %s901 = smul.addr %s900, 2
        %s902 = smul.addr %s901, 8
        %s903 = scalar_lea.vmem %s15, %s902
        %p904 = pneg %p451
        %p905 = pneg %p448
        %p906 = scmp.lt.s32.totalorder %s43, 7
        %s907 = scalar_select %p906, %s43, 7
        %s908 = smul.addr %s907, 8
        %s909 = smul.addr %s908, 4
        %s910 = scalar_lea.vmem %s16, %s909
        %p911 = pneg %p477
        %p912 = pneg %p474
        %p913 = scmp.lt.s32.totalorder %s43, 7
        %s914 = scalar_select %p913, %s43, 7
        %s915 = smul.addr %s914, 54
        %s916 = smul.addr %s915, 4
        %s917 = scalar_lea.vmem %s17, %s916
        %p918 = pneg %p503
        %p919 = pneg %p500
        %p920 = scmp.lt.s32.totalorder %s43, 7
        %s921 = scalar_select %p920, %s43, 7
        %s922 = scalar_lea.vmem %s18, %s921
        %p923 = pneg %p529
        %p924 = pneg %p526
        %p925 = scmp.lt.s32.totalorder %s43, 7
        %s926 = scalar_select %p925, %s43, 7
        %s927 = smul.addr %s926, 2
        %s928 = smul.addr %s927, 4
        %s929 = scalar_lea.vmem %s19, %s928
        %p930 = pneg %p555
        %p931 = pneg %p552
        %p932 = scmp.lt.s32.totalorder %s43, 7
        %s933 = scalar_select %p932, %s43, 7
        %s934 = scalar_lea.vmem %s20, %s933
        %p935 = pneg %p581
        %p936 = pneg %p578
        %p937 = pneg %p607
        %p938 = pneg %p604
        %s939 = sand.u32 %s594, 1
        %s940 = scalar_lea.sflag [#allocation3], %s939
        %s941 = sand.u32 %s594, 1
        %s942 = smul.addr %s941, 64
        %s943 = scalar_lea.vmem [#allocation5], %s942
        %p944 = pneg %p633
        %p945 = pneg %p630
        %p946 = scmp.lt.s32.totalorder %s42, 1
        %s947 = scalar_select %p946, %s42, 1
        %s948 = smul.addr %s947, 8
        %s949 = smul.addr %s948, 8
        %s950 = scalar_lea.vmem %s22, %s949
        %p951 = scmp.lt.s32.totalorder %s42, 1
        %s952 = scalar_select %p951, %s42, 1
        %s953 = smul.addr %s952, 8
        %s954 = smul.addr %s953, 8
        %s955 = scalar_lea.vmem %s0, %s954
        %p956 = scmp.lt.s32.totalorder %s43, 7
        %s957 = scalar_select %p956, %s43, 7
        %s958 = smul.addr %s957, 2
        %s959 = scalar_lea.vmem %s2, %s958
        %p960 = scmp.lt.s32.totalorder %s43, 7
        %s961 = scalar_select %p960, %s43, 7
        %s962 = scalar_lea.vmem %s3, %s961
        %p963 = scmp.lt.s32.totalorder %s43, 7
        %s964 = scalar_select %p963, %s43, 7
        %s965 = smul.addr %s964, 54
        %s966 = smul.addr %s965, 4
        %s967 = scalar_lea.vmem %s4, %s966
        %p968 = scmp.lt.s32.totalorder %s43, 7
        %s969 = scalar_select %p968, %s43, 7
        %s970 = scalar_lea.vmem %s5, %s969
        %p971 = scmp.lt.s32.totalorder %s43, 7
        %s972 = scalar_select %p971, %s43, 7
        %s973 = smul.addr %s972, 2
        %s974 = smul.addr %s973, 4
        %s975 = scalar_lea.vmem %s6, %s974
        %p976 = scmp.lt.s32.totalorder %s43, 7
        %s977 = scalar_select %p976, %s43, 7
        %s978 = smul.addr %s977, 2
        %s979 = smul.addr %s978, 4
        %s980 = scalar_lea.vmem %s8, %s979
        %p981 = scmp.lt.s32.totalorder %s43, 7
        %s982 = scalar_select %p981, %s43, 7
        %s983 = scalar_lea.vmem %s9, %s982
        %p984 = scmp.lt.s32.totalorder %s43, 7
        %s985 = scalar_select %p984, %s43, 7
        %s986 = smul.addr %s985, 2
        %s987 = smul.addr %s986, 8
        %s988 = scalar_lea.vmem %s10, %s987
        %p989 = scmp.lt.s32.totalorder %s43, 7
        %s990 = scalar_select %p989, %s43, 7
        %s991 = smul.addr %s990, 2
        %s992 = smul.addr %s991, 8
        %s993 = scalar_lea.vmem %s11, %s992
        %p994 = scmp.lt.s32.totalorder %s43, 7
        %s995 = scalar_select %p994, %s43, 7
        %s996 = scalar_lea.vmem %s12, %s995
        %p997 = scmp.lt.s32.totalorder %s43, 7
        %s998 = scalar_select %p997, %s43, 7
        %s999 = scalar_lea.vmem %s13, %s998
        %p1000 = scmp.lt.s32.totalorder %s43, 7
        %s1001 = scalar_select %p1000, %s43, 7
        %s1002 = smul.addr %s1001, 2
        %s1003 = smul.addr %s1002, 4
        %s1004 = scalar_lea.vmem %s14, %s1003
        %p1005 = scmp.lt.s32.totalorder %s43, 7
        %s1006 = scalar_select %p1005, %s43, 7
        %s1007 = smul.addr %s1006, 2
        %s1008 = smul.addr %s1007, 8
        %s1009 = scalar_lea.vmem %s15, %s1008
        %p1010 = scmp.lt.s32.totalorder %s43, 7
        %s1011 = scalar_select %p1010, %s43, 7
        %s1012 = smul.addr %s1011, 8
        %s1013 = smul.addr %s1012, 4
        %s1014 = scalar_lea.vmem %s16, %s1013
        %p1015 = scmp.lt.s32.totalorder %s43, 7
        %s1016 = scalar_select %p1015, %s43, 7
        %s1017 = smul.addr %s1016, 54
        %s1018 = smul.addr %s1017, 4
        %s1019 = scalar_lea.vmem %s17, %s1018
        %p1020 = scmp.lt.s32.totalorder %s43, 7
        %s1021 = scalar_select %p1020, %s43, 7
        %s1022 = scalar_lea.vmem %s18, %s1021
        %p1023 = scmp.lt.s32.totalorder %s43, 7
        %s1024 = scalar_select %p1023, %s43, 7
        %s1025 = smul.addr %s1024, 2
        %s1026 = smul.addr %s1025, 4
        %s1027 = scalar_lea.vmem %s19, %s1026
        %p1028 = scmp.lt.s32.totalorder %s43, 7
        %s1029 = scalar_select %p1028, %s43, 7
        %s1030 = scalar_lea.vmem %s20, %s1029
        %p1031 = scmp.lt.s32.totalorder %s42, 1
        %s1032 = scalar_select %p1031, %s42, 1
        %s1033 = smul.addr %s1032, 8
        %s1034 = smul.addr %s1033, 8
        %s1035 = scalar_lea.vmem %s22, %s1034
        %p1037 = scmp.eq.s32.totalorder %s43, 0
        // Predicated region
        $region109: #{modelnet_forward.1} parent=103 // pred_check
          %p1038 = pneg %p1037
        $region110: #{modelnet_forward.1} parent=103 // pred_check_branch
          %1040 = sbr.rel (%p1038) target = $region112
        $region111: #{modelnet_forward.1} parent=103 // pred_region
          %vm1041 = vcmask 252928
          %1042 = vst.msk [vmem:[%s943] sm:$0xff] %vm1041, 0.0
          %1043 = vst.msk [vmem:[%s943 + $0x8] sm:$0xff] %vm1041, 0.0
          %1044 = vst.msk [vmem:[%s943 + $0x10] sm:$0xff] %vm1041, 0.0
          %1045 = vst.msk [vmem:[%s943 + $0x18] sm:$0xff] %vm1041, 0.0
          %1046 = vst.msk [vmem:[%s943 + $0x20] sm:$0xff] %vm1041, 0.0
          %1047 = vst.msk [vmem:[%s943 + $0x28] sm:$0xff] %vm1041, 0.0
          %1048 = vst.msk [vmem:[%s943 + $0x30] sm:$0xff] %vm1041, 0.0
          %1049 = vst.msk [vmem:[%s943 + $0x38] sm:$0xff] %vm1041, 0.0
        $region112: #{modelnet_forward.1} parent=103 // pred_fallthru
          _
        %v1050 = vld [vmem:[%s943] sm:$0xff]
        %v1051 = vld [vmem:[%s943 + $0x8] sm:$0xff]
        %v1052 = vld [vmem:[%s943 + $0x10] sm:$0xff]
        %v1053 = vld [vmem:[%s943 + $0x18] sm:$0xff]
        %v1054 = vld [vmem:[%s943 + $0x20] sm:$0xff]
        %v1055 = vld [vmem:[%s943 + $0x28] sm:$0xff]
        %v1056 = vld [vmem:[%s943 + $0x30] sm:$0xff]
        %v1057 = vld [vmem:[%s943 + $0x38] sm:$0xff]
        %v1058 = vld [vmem:[%s955] sm:$0xff]
        %v1059 = vld [vmem:[%s955 + $0x8] sm:$0xff]
        %v1060 = vld [vmem:[%s955 + $0x10] sm:$0xff]
        %v1061 = vld [vmem:[%s955 + $0x18] sm:$0xff]
        %v1062 = vld [vmem:[%s955 + $0x20] sm:$0xff]
        %v1063 = vld [vmem:[%s955 + $0x28] sm:$0xff]
        %v1064 = vld [vmem:[%s955 + $0x30] sm:$0xff]
        %v1065 = vld [vmem:[%s955 + $0x38] sm:$0xff]
        %v1066 = vpack.c.bf16 %v1051, %v1050
        %v1067 = vpack.c.bf16 %v1053, %v1052
        %v1068 = vpack.c.bf16 %v1055, %v1054
        %v1069 = vpack.c.bf16 %v1057, %v1056
        %v1070 = vld [vmem:[%s1] sm:$0xf]
        %v1071 = vld [vmem:[%s1 + $0x4] sm:$0xf]
        %v1072 = vld [vmem:[%s1 + $0x8] sm:$0xf]
        %v1073 = vld [vmem:[%s1 + $0xc] sm:$0xf]
        %v1078 = vunpack.c.l.b16 %v1070
        %v1079 = vunpack.c.l.b16 %v1071
        %v1080 = vunpack.c.l.b16 %v1072
        %v1081 = vunpack.c.l.b16 %v1073
        %v1082 = vpack.c.b16 %v1079, %v1078
        %v1083 = vpack.c.b16 %v1081, %v1080
        %vm1085 = vcmask 252928
        %v1087 = vsel %vm1085, %v1066, 0
        %v1090 = vsel %vm1085, %v1067, 0
        %v1093 = vsel %vm1085, %v1068, 0
        %v1096 = vsel %vm1085, %v1069, 0
        %vm1098 = vcmask 1046528
        %vm1099 = vcmask 1047552
        %v1100 = vsel %vm1098, 4294967295, 65535
        %v1101 = vsel %vm1099, %v1100, 0
        %v1103 = vand.u32 %v1083, %v1101
        %1105 = vmatpush.bf16.msra.mxu0 0
        %1106 = vmatpush.bf16.msra.mxu0 0
        %1107 = vmatpush.bf16.msra.mxu0 0
        %1108 = vmatpush.bf16.msra.mxu0 0
        %1109 = vmatpush.bf16.msra.mxu0 0
        %1110 = vmatpush.bf16.msra.mxu0 0
        %1111 = vmatpush.bf16.msra.mxu0 %v1103
        %1112 = vmatpush.bf16.msra.mxu0 %v1082
        %1113 = vmatmul.bf16.gmra.mxu0 %v1087
        %v1114 = vpop.f32.mrf.mxu0
        %v1115 = vadd.f32 0.0, %v1114
        %v1116 = vpop.f32.mrf.mxu0
        %v1117 = vadd.f32 0.0, %v1116
        %1118 = vmatmul.bf16.gmra.mxu0 %v1090
        %v1119 = vpop.f32.mrf.mxu0
        %v1120 = vadd.f32 0.0, %v1119
        %v1121 = vpop.f32.mrf.mxu0
        %v1122 = vadd.f32 0.0, %v1121
        %1123 = vmatmul.bf16.gmra.mxu0 %v1093
        %v1124 = vpop.f32.mrf.mxu0
        %v1125 = vadd.f32 0.0, %v1124
        %v1126 = vpop.f32.mrf.mxu0
        %v1127 = vadd.f32 0.0, %v1126
        %1128 = vmatmul.bf16.gmra.mxu0 %v1096
        %v1129 = vpop.f32.mrf.mxu0
        %v1130 = vadd.f32 0.0, %v1129
        %v1131 = vpop.f32.mrf.mxu0
        %v1132 = vadd.f32 0.0, %v1131
        %1133 = vdwg.mxu0
        %v1134 = vsub.f32 %v1058, %v1115
        %v1135 = vsub.f32 %v1059, %v1117
        %v1136 = vsub.f32 %v1060, %v1120
        %v1137 = vsub.f32 %v1061, %v1122
        %v1138 = vsub.f32 %v1062, %v1125
        %v1139 = vsub.f32 %v1063, %v1127
        %v1140 = vsub.f32 %v1064, %v1130
        %v1141 = vsub.f32 %v1065, %v1132
        %v1142 = vpack.c.bf16 %v1135, %v1134
        %v1143 = vpack.c.bf16 %v1137, %v1136
        %v1144 = vpack.c.bf16 %v1139, %v1138
        %v1145 = vpack.c.bf16 %v1141, %v1140
        %v1146 = vld [vmem:[%s959] sm:$0x3]
        %v1147 = vld [vmem:[%s962] sm:$0x1]
        %v1149 = vperm.slane %v1147, 0
        %vm1151 = vcmask 23552
        %v1153 = vsel %vm1151, %v1142, 0
        %v1156 = vsel %vm1151, %v1143, 0
        %v1159 = vsel %vm1151, %v1144, 0
        %v1162 = vsel %vm1151, %v1145, 0
        %vm1164 = vcmask 1040384
        %vm1165 = vcmask 1041408
        %v1166 = vsel %vm1164, 4294967295, 65535
        %v1167 = vsel %vm1165, %v1166, 0
        %v1169 = vand.u32 %v1146, %v1167
        %1171 = vmatpush.bf16.msra.mxu0 0
        %1172 = vmatpush.bf16.msra.mxu0 0
        %1173 = vmatpush.bf16.msra.mxu0 0
        %1174 = vmatpush.bf16.msra.mxu0 0
        %1175 = vmatpush.bf16.msra.mxu0 0
        %1176 = vmatpush.bf16.msra.mxu0 0
        %1177 = vmatpush.bf16.msra.mxu0 0
        %1178 = vmatpush.bf16.msra.mxu0 %v1169
        %1179 = vmatmul.bf16.gmra.mxu0 %v1153
        %v1180 = vpop.f32.mrf.mxu0
        %v1181 = vadd.f32 %v1149, %v1180
        %v1182 = vpop.f32.mrf.mxu0
        %v1183 = vadd.f32 %v1149, %v1182
        %1184 = vmatmul.bf16.gmra.mxu0 %v1156
        %v1185 = vpop.f32.mrf.mxu0
        %v1186 = vadd.f32 %v1149, %v1185
        %v1187 = vpop.f32.mrf.mxu0
        %v1188 = vadd.f32 %v1149, %v1187
        %1189 = vmatmul.bf16.gmra.mxu0 %v1159
        %v1190 = vpop.f32.mrf.mxu0
        %v1191 = vadd.f32 %v1149, %v1190
        %v1192 = vpop.f32.mrf.mxu0
        %v1193 = vadd.f32 %v1149, %v1192
        %1194 = vmatmul.bf16.gmra.mxu0 %v1162
        %v1195 = vpop.f32.mrf.mxu0
        %v1196 = vadd.f32 %v1149, %v1195
        %v1197 = vpop.f32.mrf.mxu0
        %v1198 = vadd.f32 %v1149, %v1197
        %1199 = vdwg.mxu0
        %v1200 = vld [vmem:[%s967] sm:$0xf]
        %v1201 = vld [vmem:[%s967 + $0x4] sm:$0xf]
        %v1202 = vld [vmem:[%s967 + $0x8] sm:$0xf]
        %v1203 = vld [vmem:[%s967 + $0xc] sm:$0xf]
        %v1204 = vld [vmem:[%s967 + $0x10] sm:$0xf]
        %v1205 = vld [vmem:[%s967 + $0x14] sm:$0xf]
        %v1206 = vld [vmem:[%s967 + $0x18] sm:$0xf]
        %v1207 = vld [vmem:[%s967 + $0x1c] sm:$0xf]
        %v1208 = vld [vmem:[%s967 + $0x20] sm:$0xf]
        %v1209 = vld [vmem:[%s967 + $0x24] sm:$0xf]
        %v1210 = vld [vmem:[%s967 + $0x28] sm:$0xf]
        %v1211 = vld [vmem:[%s967 + $0x2c] sm:$0xf]
        %v1212 = vld [vmem:[%s967 + $0x30] sm:$0xf]
        %v1213 = vld [vmem:[%s967 + $0x34] sm:$0xf]
        %v1214 = vld [vmem:[%s967 + $0x38] sm:$0xf]
        %v1215 = vld [vmem:[%s967 + $0x3c] sm:$0xf]
        %v1216 = vld [vmem:[%s967 + $0x40] sm:$0xf]
        %v1217 = vld [vmem:[%s967 + $0x44] sm:$0xf]
        %v1226 = vrot.slane 0.0, 7
        %v1227 = vrot.slane %v1181, 7
        %v1228 = vrot.slane %v1183, 7
        %v1229 = vrot.slane %v1186, 7
        %v1230 = vrot.slane %v1188, 7
        %v1231 = vrot.slane %v1191, 7
        %v1232 = vrot.slane %v1193, 7
        %v1233 = vrot.slane %v1196, 7
        %v1242 = vsel %vm1164, 0.0, %v1226
        %v1243 = vsel %vm1164, 0.0, %v1227
        %v1244 = vsel %vm1164, 0.0, %v1228
        %v1245 = vsel %vm1164, 0.0, %v1229
        %v1246 = vsel %vm1164, 0.0, %v1230
        %v1247 = vsel %vm1164, 0.0, %v1231
        %v1248 = vsel %vm1164, 0.0, %v1232
        %v1249 = vsel %vm1164, 0.0, %v1233
        %v1250 = vpack.c.bf16 %v1243, %v1242
        %v1251 = vpack.c.bf16 %v1245, %v1244
        %v1252 = vpack.c.bf16 %v1247, %v1246
        %v1253 = vpack.c.bf16 %v1249, %v1248
        %v1254 = vpack.c.bf16 %v1181, 0.0
        %v1255 = vpack.c.bf16 %v1186, %v1183
        %v1256 = vpack.c.bf16 %v1191, %v1188
        %v1257 = vpack.c.bf16 %v1196, %v1193
        %v1260 = vunpack.c.l.b16 %v1202
        %v1261 = vunpack.c.l.b16 %v1203
        %v1262 = vpack.c.b16 %v1261, %v1260
        %vm1264 = vcmask 130048
        %v1266 = vsel %vm1264, %v1254, 0
        %v1269 = vsel %vm1264, %v1255, 0
        %v1272 = vsel %vm1264, %v1256, 0
        %v1275 = vsel %vm1264, %v1257, 0
        %1277 = vmatpush.bf16.msra.mxu0 0
        %1278 = vmatpush.bf16.msra.mxu0 0
        %1279 = vmatpush.bf16.msra.mxu0 0
        %1280 = vmatpush.bf16.msra.mxu0 0
        %1281 = vmatpush.bf16.msra.mxu0 0
        %1282 = vmatpush.bf16.msra.mxu0 0
        %1283 = vmatpush.bf16.msra.mxu0 0
        %1284 = vmatpush.bf16.msra.mxu0 %v1262
        %1285 = vmatmul.bf16.gmra.mxu0 %v1266
        %v1286 = vpop.f32.mrf.mxu0
        %v1287 = vadd.f32 0.0, %v1286
        %v1288 = vpop.f32.mrf.mxu0
        %v1289 = vadd.f32 0.0, %v1288
        %1290 = vmatmul.bf16.gmra.mxu0 %v1269
        %v1291 = vpop.f32.mrf.mxu0
        %v1292 = vadd.f32 0.0, %v1291
        %v1293 = vpop.f32.mrf.mxu0
        %v1294 = vadd.f32 0.0, %v1293
        %1295 = vmatmul.bf16.gmra.mxu0 %v1272
        %v1296 = vpop.f32.mrf.mxu0
        %v1297 = vadd.f32 0.0, %v1296
        %v1298 = vpop.f32.mrf.mxu0
        %v1299 = vadd.f32 0.0, %v1298
        %1300 = vmatmul.bf16.gmra.mxu0 %v1275
        %v1301 = vpop.f32.mrf.mxu0
        %v1302 = vadd.f32 0.0, %v1301
        %v1303 = vpop.f32.mrf.mxu0
        %v1304 = vadd.f32 0.0, %v1303
        %1305 = vdwg.mxu0
        %v1308 = vunpack.c.l.b16 %v1200
        %v1309 = vunpack.c.l.b16 %v1201
        %v1310 = vpack.c.b16 %v1309, %v1308
        %v1313 = vsel %vm1264, %v1250, 0
        %v1316 = vsel %vm1264, %v1251, 0
        %v1319 = vsel %vm1264, %v1252, 0
        %v1322 = vsel %vm1264, %v1253, 0
        %1324 = vmatpush.bf16.msra.mxu0 0
        %1325 = vmatpush.bf16.msra.mxu0 0
        %1326 = vmatpush.bf16.msra.mxu0 0
        %1327 = vmatpush.bf16.msra.mxu0 0
        %1328 = vmatpush.bf16.msra.mxu0 0
        %1329 = vmatpush.bf16.msra.mxu0 0
        %1330 = vmatpush.bf16.msra.mxu0 0
        %1331 = vmatpush.bf16.msra.mxu0 %v1310
        %1332 = vmatmul.bf16.gmra.mxu0 %v1313
        %v1333 = vpop.f32.mrf.mxu0
        %v1334 = vadd.f32 %v1287, %v1333
        %v1335 = vpop.f32.mrf.mxu0
        %v1336 = vadd.f32 %v1289, %v1335
        %1337 = vmatmul.bf16.gmra.mxu0 %v1316
        %v1338 = vpop.f32.mrf.mxu0
        %v1339 = vadd.f32 %v1292, %v1338
        %v1340 = vpop.f32.mrf.mxu0
        %v1341 = vadd.f32 %v1294, %v1340
        %1342 = vmatmul.bf16.gmra.mxu0 %v1319
        %v1343 = vpop.f32.mrf.mxu0
        %v1344 = vadd.f32 %v1297, %v1343
        %v1345 = vpop.f32.mrf.mxu0
        %v1346 = vadd.f32 %v1299, %v1345
        %1347 = vmatmul.bf16.gmra.mxu0 %v1322
        %v1348 = vpop.f32.mrf.mxu0
        %v1349 = vadd.f32 %v1302, %v1348
        %v1350 = vpop.f32.mrf.mxu0
        %v1351 = vadd.f32 %v1304, %v1350
        %1352 = vdwg.mxu0
        %v1353 = vrot.slane 0.0, 1
        %v1354 = vrot.slane %v1181, 1
        %v1355 = vrot.slane %v1183, 1
        %v1356 = vrot.slane %v1186, 1
        %v1357 = vrot.slane %v1188, 1
        %v1358 = vrot.slane %v1191, 1
        %v1359 = vrot.slane %v1193, 1
        %v1360 = vrot.slane %v1196, 1
        %v1369 = vsel %vm1098, %v1353, 0.0
        %v1370 = vsel %vm1098, %v1354, 0.0
        %v1371 = vsel %vm1098, %v1355, 0.0
        %v1372 = vsel %vm1098, %v1356, 0.0
        %v1373 = vsel %vm1098, %v1357, 0.0
        %v1374 = vsel %vm1098, %v1358, 0.0
        %v1375 = vsel %vm1098, %v1359, 0.0
        %v1376 = vsel %vm1098, %v1360, 0.0
        %v1377 = vpack.c.bf16 %v1370, %v1369
        %v1378 = vpack.c.bf16 %v1372, %v1371
        %v1379 = vpack.c.bf16 %v1374, %v1373
        %v1380 = vpack.c.bf16 %v1376, %v1375
        %v1383 = vunpack.c.l.b16 %v1204
        %v1384 = vunpack.c.l.b16 %v1205
        %v1385 = vpack.c.b16 %v1384, %v1383
        %v1388 = vsel %vm1264, %v1377, 0
        %v1391 = vsel %vm1264, %v1378, 0
        %v1394 = vsel %vm1264, %v1379, 0
        %v1397 = vsel %vm1264, %v1380, 0
        %1399 = vmatpush.bf16.msra.mxu0 0
        %1400 = vmatpush.bf16.msra.mxu0 0
        %1401 = vmatpush.bf16.msra.mxu0 0
        %1402 = vmatpush.bf16.msra.mxu0 0
        %1403 = vmatpush.bf16.msra.mxu0 0
        %1404 = vmatpush.bf16.msra.mxu0 0
        %1405 = vmatpush.bf16.msra.mxu0 0
        %1406 = vmatpush.bf16.msra.mxu0 %v1385
        %1407 = vmatmul.bf16.gmra.mxu0 %v1388
        %v1408 = vpop.f32.mrf.mxu0
        %v1409 = vadd.f32 0.0, %v1408
        %v1410 = vpop.f32.mrf.mxu0
        %v1411 = vadd.f32 0.0, %v1410
        %1412 = vmatmul.bf16.gmra.mxu0 %v1391
        %v1413 = vpop.f32.mrf.mxu0
        %v1414 = vadd.f32 0.0, %v1413
        %v1415 = vpop.f32.mrf.mxu0
        %v1416 = vadd.f32 0.0, %v1415
        %1417 = vmatmul.bf16.gmra.mxu0 %v1394
        %v1418 = vpop.f32.mrf.mxu0
        %v1419 = vadd.f32 0.0, %v1418
        %v1420 = vpop.f32.mrf.mxu0
        %v1421 = vadd.f32 0.0, %v1420
        %1422 = vmatmul.bf16.gmra.mxu0 %v1397
        %v1423 = vpop.f32.mrf.mxu0
        %v1424 = vadd.f32 0.0, %v1423
        %v1425 = vpop.f32.mrf.mxu0
        %v1426 = vadd.f32 0.0, %v1425
        %1427 = vdwg.mxu0
        %v1428 = vadd.f32 %v1334, %v1409
        %v1429 = vadd.f32 %v1336, %v1411
        %v1430 = vadd.f32 %v1339, %v1414
        %v1431 = vadd.f32 %v1341, %v1416
        %v1432 = vadd.f32 %v1344, %v1419
        %v1433 = vadd.f32 %v1346, %v1421
        %v1434 = vadd.f32 %v1349, %v1424
        %v1435 = vadd.f32 %v1351, %v1426
        %v1437 = vrot.slane %v1198, 7
        %v1439 = vsel %vm1164, 0.0, %v1437
        %v1440 = vpack.c.bf16 %v1244, %v1243
        %v1441 = vpack.c.bf16 %v1246, %v1245
        %v1442 = vpack.c.bf16 %v1248, %v1247
        %v1443 = vpack.c.bf16 %v1439, %v1249
        %v1446 = vunpack.c.l.b16 %v1206
        %v1447 = vunpack.c.l.b16 %v1207
        %v1448 = vpack.c.b16 %v1447, %v1446
        %v1451 = vsel %vm1264, %v1440, 0
        %v1454 = vsel %vm1264, %v1441, 0
        %v1457 = vsel %vm1264, %v1442, 0
        %v1460 = vsel %vm1264, %v1443, 0
        %1462 = vmatpush.bf16.msra.mxu0 0
        %1463 = vmatpush.bf16.msra.mxu0 0
        %1464 = vmatpush.bf16.msra.mxu0 0
        %1465 = vmatpush.bf16.msra.mxu0 0
        %1466 = vmatpush.bf16.msra.mxu0 0
        %1467 = vmatpush.bf16.msra.mxu0 0
        %1468 = vmatpush.bf16.msra.mxu0 0
        %1469 = vmatpush.bf16.msra.mxu0 %v1448
        %1470 = vmatmul.bf16.gmra.mxu0 %v1451
        %v1471 = vpop.f32.mrf.mxu0
        %v1472 = vadd.f32 0.0, %v1471
        %v1473 = vpop.f32.mrf.mxu0
        %v1474 = vadd.f32 0.0, %v1473
        %1475 = vmatmul.bf16.gmra.mxu0 %v1454
        %v1476 = vpop.f32.mrf.mxu0
        %v1477 = vadd.f32 0.0, %v1476
        %v1478 = vpop.f32.mrf.mxu0
        %v1479 = vadd.f32 0.0, %v1478
        %1480 = vmatmul.bf16.gmra.mxu0 %v1457
        %v1481 = vpop.f32.mrf.mxu0
        %v1482 = vadd.f32 0.0, %v1481
        %v1483 = vpop.f32.mrf.mxu0
        %v1484 = vadd.f32 0.0, %v1483
        %1485 = vmatmul.bf16.gmra.mxu0 %v1460
        %v1486 = vpop.f32.mrf.mxu0
        %v1487 = vadd.f32 0.0, %v1486
        %v1488 = vpop.f32.mrf.mxu0
        %v1489 = vadd.f32 0.0, %v1488
        %1490 = vdwg.mxu0
        %v1491 = vadd.f32 %v1428, %v1472
        %v1492 = vadd.f32 %v1429, %v1474
        %v1493 = vadd.f32 %v1430, %v1477
        %v1494 = vadd.f32 %v1431, %v1479
        %v1495 = vadd.f32 %v1432, %v1482
        %v1496 = vadd.f32 %v1433, %v1484
        %v1497 = vadd.f32 %v1434, %v1487
        %v1498 = vadd.f32 %v1435, %v1489
        %v1499 = vpack.c.bf16 %v1183, %v1181
        %v1500 = vpack.c.bf16 %v1188, %v1186
        %v1501 = vpack.c.bf16 %v1193, %v1191
        %v1502 = vpack.c.bf16 %v1198, %v1196
        %v1505 = vunpack.c.l.b16 %v1208
        %v1506 = vunpack.c.l.b16 %v1209
        %v1507 = vpack.c.b16 %v1506, %v1505
        %v1510 = vsel %vm1264, %v1499, 0
        %v1513 = vsel %vm1264, %v1500, 0
        %v1516 = vsel %vm1264, %v1501, 0
        %v1519 = vsel %vm1264, %v1502, 0
        %1521 = vmatpush.bf16.msra.mxu0 0
        %1522 = vmatpush.bf16.msra.mxu0 0
        %1523 = vmatpush.bf16.msra.mxu0 0
        %1524 = vmatpush.bf16.msra.mxu0 0
        %1525 = vmatpush.bf16.msra.mxu0 0
        %1526 = vmatpush.bf16.msra.mxu0 0
        %1527 = vmatpush.bf16.msra.mxu0 0
        %1528 = vmatpush.bf16.msra.mxu0 %v1507
        %1529 = vmatmul.bf16.gmra.mxu0 %v1510
        %v1530 = vpop.f32.mrf.mxu0
        %v1531 = vadd.f32 0.0, %v1530
        %v1532 = vpop.f32.mrf.mxu0
        %v1533 = vadd.f32 0.0, %v1532
        %1534 = vmatmul.bf16.gmra.mxu0 %v1513
        %v1535 = vpop.f32.mrf.mxu0
        %v1536 = vadd.f32 0.0, %v1535
        %v1537 = vpop.f32.mrf.mxu0
        %v1538 = vadd.f32 0.0, %v1537
        %1539 = vmatmul.bf16.gmra.mxu0 %v1516
        %v1540 = vpop.f32.mrf.mxu0
        %v1541 = vadd.f32 0.0, %v1540
        %v1542 = vpop.f32.mrf.mxu0
        %v1543 = vadd.f32 0.0, %v1542
        %1544 = vmatmul.bf16.gmra.mxu0 %v1519
        %v1545 = vpop.f32.mrf.mxu0
        %v1546 = vadd.f32 0.0, %v1545
        %v1547 = vpop.f32.mrf.mxu0
        %v1548 = vadd.f32 0.0, %v1547
        %1549 = vdwg.mxu0
        %v1550 = vadd.f32 %v1491, %v1531
        %v1551 = vadd.f32 %v1492, %v1533
        %v1552 = vadd.f32 %v1493, %v1536
        %v1553 = vadd.f32 %v1494, %v1538
        %v1554 = vadd.f32 %v1495, %v1541
        %v1555 = vadd.f32 %v1496, %v1543
        %v1556 = vadd.f32 %v1497, %v1546
        %v1557 = vadd.f32 %v1498, %v1548
        %v1558 = vrot.slane %v1198, 1
        %v1560 = vsel %vm1098, %v1558, 0.0
        %v1561 = vpack.c.bf16 %v1371, %v1370
        %v1562 = vpack.c.bf16 %v1373, %v1372
        %v1563 = vpack.c.bf16 %v1375, %v1374
        %v1564 = vpack.c.bf16 %v1560, %v1376
        %v1567 = vunpack.c.l.b16 %v1210
        %v1568 = vunpack.c.l.b16 %v1211
        %v1569 = vpack.c.b16 %v1568, %v1567
        %v1572 = vsel %vm1264, %v1561, 0
        %v1575 = vsel %vm1264, %v1562, 0
        %v1578 = vsel %vm1264, %v1563, 0
        %v1581 = vsel %vm1264, %v1564, 0
        %1583 = vmatpush.bf16.msra.mxu0 0
        %1584 = vmatpush.bf16.msra.mxu0 0
        %1585 = vmatpush.bf16.msra.mxu0 0
        %1586 = vmatpush.bf16.msra.mxu0 0
        %1587 = vmatpush.bf16.msra.mxu0 0
        %1588 = vmatpush.bf16.msra.mxu0 0
        %1589 = vmatpush.bf16.msra.mxu0 0
        %1590 = vmatpush.bf16.msra.mxu0 %v1569
        %1591 = vmatmul.bf16.gmra.mxu0 %v1572
        %v1592 = vpop.f32.mrf.mxu0
        %v1593 = vadd.f32 0.0, %v1592
        %v1594 = vpop.f32.mrf.mxu0
        %v1595 = vadd.f32 0.0, %v1594
        %1596 = vmatmul.bf16.gmra.mxu0 %v1575
        %v1597 = vpop.f32.mrf.mxu0
        %v1598 = vadd.f32 0.0, %v1597
        %v1599 = vpop.f32.mrf.mxu0
        %v1600 = vadd.f32 0.0, %v1599
        %1601 = vmatmul.bf16.gmra.mxu0 %v1578
        %v1602 = vpop.f32.mrf.mxu0
        %v1603 = vadd.f32 0.0, %v1602
        %v1604 = vpop.f32.mrf.mxu0
        %v1605 = vadd.f32 0.0, %v1604
        %1606 = vmatmul.bf16.gmra.mxu0 %v1581
        %v1607 = vpop.f32.mrf.mxu0
        %v1608 = vadd.f32 0.0, %v1607
        %v1609 = vpop.f32.mrf.mxu0
        %v1610 = vadd.f32 0.0, %v1609
        %1611 = vdwg.mxu0
        %v1612 = vadd.f32 %v1550, %v1593
        %v1613 = vadd.f32 %v1551, %v1595
        %v1614 = vadd.f32 %v1552, %v1598
        %v1615 = vadd.f32 %v1553, %v1600
        %v1616 = vadd.f32 %v1554, %v1603
        %v1617 = vadd.f32 %v1555, %v1605
        %v1618 = vadd.f32 %v1556, %v1608
        %v1619 = vadd.f32 %v1557, %v1610
        %v1620 = vpack.c.bf16 %v1242, %v1439
        %v1623 = vunpack.c.l.b16 %v1212
        %v1624 = vunpack.c.l.b16 %v1213
        %v1625 = vpack.c.b16 %v1624, %v1623
        %v1628 = vsel %vm1264, %v1620, 0
        %1630 = vmatpush.bf16.msra.mxu0 0
        %1631 = vmatpush.bf16.msra.mxu0 0
        %1632 = vmatpush.bf16.msra.mxu0 0
        %1633 = vmatpush.bf16.msra.mxu0 0
        %1634 = vmatpush.bf16.msra.mxu0 0
        %1635 = vmatpush.bf16.msra.mxu0 0
        %1636 = vmatpush.bf16.msra.mxu0 0
        %1637 = vmatpush.bf16.msra.mxu0 %v1625
        %1638 = vmatmul.bf16.gmra.mxu0 %v1316
        %v1639 = vpop.f32.mrf.mxu0
        %v1640 = vadd.f32 0.0, %v1639
        %v1641 = vpop.f32.mrf.mxu0
        %v1642 = vadd.f32 0.0, %v1641
        %1643 = vmatmul.bf16.gmra.mxu0 %v1319
        %v1644 = vpop.f32.mrf.mxu0
        %v1645 = vadd.f32 0.0, %v1644
        %v1646 = vpop.f32.mrf.mxu0
        %v1647 = vadd.f32 0.0, %v1646
        %1648 = vmatmul.bf16.gmra.mxu0 %v1322
        %v1649 = vpop.f32.mrf.mxu0
        %v1650 = vadd.f32 0.0, %v1649
        %v1651 = vpop.f32.mrf.mxu0
        %v1652 = vadd.f32 0.0, %v1651
        %1653 = vmatmul.bf16.gmra.mxu0 %v1628
        %v1654 = vpop.f32.mrf.mxu0
        %v1655 = vadd.f32 0.0, %v1654
        %v1656 = vpop.f32.mrf.mxu0
        %v1657 = vadd.f32 0.0, %v1656
        %1658 = vdwg.mxu0
        %v1659 = vadd.f32 %v1612, %v1640
        %v1660 = vadd.f32 %v1613, %v1642
        %v1661 = vadd.f32 %v1614, %v1645
        %v1662 = vadd.f32 %v1615, %v1647
        %v1663 = vadd.f32 %v1616, %v1650
        %v1664 = vadd.f32 %v1617, %v1652
        %v1665 = vadd.f32 %v1618, %v1655
        %v1666 = vadd.f32 %v1619, %v1657
        %v1667 = vpack.c.bf16 0.0, %v1198
        %v1670 = vunpack.c.l.b16 %v1214
        %v1671 = vunpack.c.l.b16 %v1215
        %v1672 = vpack.c.b16 %v1671, %v1670
        %v1675 = vsel %vm1264, %v1667, 0
        %1677 = vmatpush.bf16.msra.mxu0 0
        %1678 = vmatpush.bf16.msra.mxu0 0
        %1679 = vmatpush.bf16.msra.mxu0 0
        %1680 = vmatpush.bf16.msra.mxu0 0
        %1681 = vmatpush.bf16.msra.mxu0 0
        %1682 = vmatpush.bf16.msra.mxu0 0
        %1683 = vmatpush.bf16.msra.mxu0 0
        %1684 = vmatpush.bf16.msra.mxu0 %v1672
        %1685 = vmatmul.bf16.gmra.mxu0 %v1269
        %v1686 = vpop.f32.mrf.mxu0
        %v1687 = vadd.f32 0.0, %v1686
        %v1688 = vpop.f32.mrf.mxu0
        %v1689 = vadd.f32 0.0, %v1688
        %1690 = vmatmul.bf16.gmra.mxu0 %v1272
        %v1691 = vpop.f32.mrf.mxu0
        %v1692 = vadd.f32 0.0, %v1691
        %v1693 = vpop.f32.mrf.mxu0
        %v1694 = vadd.f32 0.0, %v1693
        %1695 = vmatmul.bf16.gmra.mxu0 %v1275
        %v1696 = vpop.f32.mrf.mxu0
        %v1697 = vadd.f32 0.0, %v1696
        %v1698 = vpop.f32.mrf.mxu0
        %v1699 = vadd.f32 0.0, %v1698
        %1700 = vmatmul.bf16.gmra.mxu0 %v1675
        %v1701 = vpop.f32.mrf.mxu0
        %v1702 = vadd.f32 0.0, %v1701
        %v1703 = vpop.f32.mrf.mxu0
        %v1704 = vadd.f32 0.0, %v1703
        %1705 = vdwg.mxu0
        %v1706 = vadd.f32 %v1659, %v1687
        %v1707 = vadd.f32 %v1660, %v1689
        %v1708 = vadd.f32 %v1661, %v1692
        %v1709 = vadd.f32 %v1662, %v1694
        %v1710 = vadd.f32 %v1663, %v1697
        %v1711 = vadd.f32 %v1664, %v1699
        %v1712 = vadd.f32 %v1665, %v1702
        %v1713 = vadd.f32 %v1666, %v1704
        %v1714 = vpack.c.bf16 %v1369, %v1560
        %v1717 = vunpack.c.l.b16 %v1216
        %v1718 = vunpack.c.l.b16 %v1217
        %v1719 = vpack.c.b16 %v1718, %v1717
        %v1722 = vsel %vm1264, %v1714, 0
        %1724 = vmatpush.bf16.msra.mxu0 0
        %1725 = vmatpush.bf16.msra.mxu0 0
        %1726 = vmatpush.bf16.msra.mxu0 0
        %1727 = vmatpush.bf16.msra.mxu0 0
        %1728 = vmatpush.bf16.msra.mxu0 0
        %1729 = vmatpush.bf16.msra.mxu0 0
        %1730 = vmatpush.bf16.msra.mxu0 0
        %1731 = vmatpush.bf16.msra.mxu0 %v1719
        %1732 = vmatmul.bf16.gmra.mxu0 %v1391
        %v1733 = vpop.f32.mrf.mxu0
        %v1734 = vadd.f32 0.0, %v1733
        %v1735 = vpop.f32.mrf.mxu0
        %v1736 = vadd.f32 0.0, %v1735
        %1737 = vmatmul.bf16.gmra.mxu0 %v1394
        %v1738 = vpop.f32.mrf.mxu0
        %v1739 = vadd.f32 0.0, %v1738
        %v1740 = vpop.f32.mrf.mxu0
        %v1741 = vadd.f32 0.0, %v1740
        %1742 = vmatmul.bf16.gmra.mxu0 %v1397
        %v1743 = vpop.f32.mrf.mxu0
        %v1744 = vadd.f32 0.0, %v1743
        %v1745 = vpop.f32.mrf.mxu0
        %v1746 = vadd.f32 0.0, %v1745
        %1747 = vmatmul.bf16.gmra.mxu0 %v1722
        %v1748 = vpop.f32.mrf.mxu0
        %v1749 = vadd.f32 0.0, %v1748
        %v1750 = vpop.f32.mrf.mxu0
        %v1751 = vadd.f32 0.0, %v1750
        %1752 = vdwg.mxu0
        %v1753 = vadd.f32 %v1706, %v1734
        %v1754 = vadd.f32 %v1707, %v1736
        %v1755 = vadd.f32 %v1708, %v1739
        %v1756 = vadd.f32 %v1709, %v1741
        %v1757 = vadd.f32 %v1710, %v1744
        %v1758 = vadd.f32 %v1711, %v1746
        %v1759 = vadd.f32 %v1712, %v1749
        %v1760 = vadd.f32 %v1713, %v1751
        %v1761 = vmax.f32 %v1753, 0.0
        %v1762 = vmax.f32 %v1754, 0.0
        %v1763 = vmax.f32 %v1755, 0.0
        %v1764 = vmax.f32 %v1756, 0.0
        %v1765 = vmax.f32 %v1757, 0.0
        %v1766 = vmax.f32 %v1758, 0.0
        %v1767 = vmax.f32 %v1759, 0.0
        %v1768 = vmax.f32 %v1760, 0.0
        %s1769 = scalar_lea.vmem %s967, 72
        %v1770 = vld [vmem:[%s1769] sm:$0xf]
        %v1771 = vld [vmem:[%s1769 + $0x4] sm:$0xf]
        %v1772 = vld [vmem:[%s1769 + $0x8] sm:$0xf]
        %v1773 = vld [vmem:[%s1769 + $0xc] sm:$0xf]
        %v1774 = vld [vmem:[%s1769 + $0x10] sm:$0xf]
        %v1775 = vld [vmem:[%s1769 + $0x14] sm:$0xf]
        %v1776 = vld [vmem:[%s1769 + $0x18] sm:$0xf]
        %v1777 = vld [vmem:[%s1769 + $0x1c] sm:$0xf]
        %v1778 = vld [vmem:[%s1769 + $0x20] sm:$0xf]
        %v1779 = vld [vmem:[%s1769 + $0x24] sm:$0xf]
        %v1780 = vld [vmem:[%s1769 + $0x28] sm:$0xf]
        %v1781 = vld [vmem:[%s1769 + $0x2c] sm:$0xf]
        %v1782 = vld [vmem:[%s1769 + $0x30] sm:$0xf]
        %v1783 = vld [vmem:[%s1769 + $0x34] sm:$0xf]
        %v1784 = vld [vmem:[%s1769 + $0x38] sm:$0xf]
        %v1785 = vld [vmem:[%s1769 + $0x3c] sm:$0xf]
        %v1786 = vld [vmem:[%s1769 + $0x40] sm:$0xf]
        %v1787 = vld [vmem:[%s1769 + $0x44] sm:$0xf]
        %v1795 = vrot.slane %v1761, 7
        %v1796 = vrot.slane %v1762, 7
        %v1797 = vrot.slane %v1763, 7
        %v1798 = vrot.slane %v1764, 7
        %v1799 = vrot.slane %v1765, 7
        %v1800 = vrot.slane %v1766, 7
        %v1801 = vrot.slane %v1767, 7
        %v1809 = vsel %vm1164, 0.0, %v1795
        %v1810 = vsel %vm1164, 0.0, %v1796
        %v1811 = vsel %vm1164, 0.0, %v1797
        %v1812 = vsel %vm1164, 0.0, %v1798
        %v1813 = vsel %vm1164, 0.0, %v1799
        %v1814 = vsel %vm1164, 0.0, %v1800
        %v1815 = vsel %vm1164, 0.0, %v1801
        %v1816 = vpack.c.bf16 %v1809, %v1242
        %v1817 = vpack.c.bf16 %v1811, %v1810
        %v1818 = vpack.c.bf16 %v1813, %v1812
        %v1819 = vpack.c.bf16 %v1815, %v1814
        %v1820 = vpack.c.bf16 %v1761, 0.0
        %v1821 = vpack.c.bf16 %v1763, %v1762
        %v1822 = vpack.c.bf16 %v1765, %v1764
        %v1823 = vpack.c.bf16 %v1767, %v1766
        %v1826 = vunpack.c.l.b16 %v1772
        %v1827 = vunpack.c.l.b16 %v1773
        %v1828 = vpack.c.b16 %v1827, %v1826
        %v1831 = vsel %vm1264, %v1820, 0
        %v1834 = vsel %vm1264, %v1821, 0
        %v1837 = vsel %vm1264, %v1822, 0
        %v1840 = vsel %vm1264, %v1823, 0
        %1842 = vmatpush.bf16.msra.mxu0 0
        %1843 = vmatpush.bf16.msra.mxu0 0
        %1844 = vmatpush.bf16.msra.mxu0 0
        %1845 = vmatpush.bf16.msra.mxu0 0
        %1846 = vmatpush.bf16.msra.mxu0 0
        %1847 = vmatpush.bf16.msra.mxu0 0
        %1848 = vmatpush.bf16.msra.mxu0 0
        %1849 = vmatpush.bf16.msra.mxu0 %v1828
        %1850 = vmatmul.bf16.gmra.mxu0 %v1831
        %v1851 = vpop.f32.mrf.mxu0
        %v1852 = vadd.f32 0.0, %v1851
        %v1853 = vpop.f32.mrf.mxu0
        %v1854 = vadd.f32 0.0, %v1853
        %1855 = vmatmul.bf16.gmra.mxu0 %v1834
        %v1856 = vpop.f32.mrf.mxu0
        %v1857 = vadd.f32 0.0, %v1856
        %v1858 = vpop.f32.mrf.mxu0
        %v1859 = vadd.f32 0.0, %v1858
        %1860 = vmatmul.bf16.gmra.mxu0 %v1837
        %v1861 = vpop.f32.mrf.mxu0
        %v1862 = vadd.f32 0.0, %v1861
        %v1863 = vpop.f32.mrf.mxu0
        %v1864 = vadd.f32 0.0, %v1863
        %1865 = vmatmul.bf16.gmra.mxu0 %v1840
        %v1866 = vpop.f32.mrf.mxu0
        %v1867 = vadd.f32 0.0, %v1866
        %v1868 = vpop.f32.mrf.mxu0
        %v1869 = vadd.f32 0.0, %v1868
        %1870 = vdwg.mxu0
        %v1873 = vunpack.c.l.b16 %v1770
        %v1874 = vunpack.c.l.b16 %v1771
        %v1875 = vpack.c.b16 %v1874, %v1873
        %v1878 = vsel %vm1264, %v1816, 0
        %v1881 = vsel %vm1264, %v1817, 0
        %v1884 = vsel %vm1264, %v1818, 0
        %v1887 = vsel %vm1264, %v1819, 0
        %1889 = vmatpush.bf16.msra.mxu0 0
        %1890 = vmatpush.bf16.msra.mxu0 0
        %1891 = vmatpush.bf16.msra.mxu0 0
        %1892 = vmatpush.bf16.msra.mxu0 0
        %1893 = vmatpush.bf16.msra.mxu0 0
        %1894 = vmatpush.bf16.msra.mxu0 0
        %1895 = vmatpush.bf16.msra.mxu0 0
        %1896 = vmatpush.bf16.msra.mxu0 %v1875
        %1897 = vmatmul.bf16.gmra.mxu0 %v1878
        %v1898 = vpop.f32.mrf.mxu0
        %v1899 = vadd.f32 %v1852, %v1898
        %v1900 = vpop.f32.mrf.mxu0
        %v1901 = vadd.f32 %v1854, %v1900
        %1902 = vmatmul.bf16.gmra.mxu0 %v1881
        %v1903 = vpop.f32.mrf.mxu0
        %v1904 = vadd.f32 %v1857, %v1903
        %v1905 = vpop.f32.mrf.mxu0
        %v1906 = vadd.f32 %v1859, %v1905
        %1907 = vmatmul.bf16.gmra.mxu0 %v1884
        %v1908 = vpop.f32.mrf.mxu0
        %v1909 = vadd.f32 %v1862, %v1908
        %v1910 = vpop.f32.mrf.mxu0
        %v1911 = vadd.f32 %v1864, %v1910
        %1912 = vmatmul.bf16.gmra.mxu0 %v1887
        %v1913 = vpop.f32.mrf.mxu0
        %v1914 = vadd.f32 %v1867, %v1913
        %v1915 = vpop.f32.mrf.mxu0
        %v1916 = vadd.f32 %v1869, %v1915
        %1917 = vdwg.mxu0
        %v1918 = vrot.slane %v1761, 1
        %v1919 = vrot.slane %v1762, 1
        %v1920 = vrot.slane %v1763, 1
        %v1921 = vrot.slane %v1764, 1
        %v1922 = vrot.slane %v1765, 1
        %v1923 = vrot.slane %v1766, 1
        %v1924 = vrot.slane %v1767, 1
        %v1932 = vsel %vm1098, %v1918, 0.0
        %v1933 = vsel %vm1098, %v1919, 0.0
        %v1934 = vsel %vm1098, %v1920, 0.0
        %v1935 = vsel %vm1098, %v1921, 0.0
        %v1936 = vsel %vm1098, %v1922, 0.0
        %v1937 = vsel %vm1098, %v1923, 0.0
        %v1938 = vsel %vm1098, %v1924, 0.0
        %v1939 = vpack.c.bf16 %v1932, %v1369
        %v1940 = vpack.c.bf16 %v1934, %v1933
        %v1941 = vpack.c.bf16 %v1936, %v1935
        %v1942 = vpack.c.bf16 %v1938, %v1937
        %v1945 = vunpack.c.l.b16 %v1774
        %v1946 = vunpack.c.l.b16 %v1775
        %v1947 = vpack.c.b16 %v1946, %v1945
        %v1950 = vsel %vm1264, %v1939, 0
        %v1953 = vsel %vm1264, %v1940, 0
        %v1956 = vsel %vm1264, %v1941, 0
        %v1959 = vsel %vm1264, %v1942, 0
        %1961 = vmatpush.bf16.msra.mxu0 0
        %1962 = vmatpush.bf16.msra.mxu0 0
        %1963 = vmatpush.bf16.msra.mxu0 0
        %1964 = vmatpush.bf16.msra.mxu0 0
        %1965 = vmatpush.bf16.msra.mxu0 0
        %1966 = vmatpush.bf16.msra.mxu0 0
        %1967 = vmatpush.bf16.msra.mxu0 0
        %1968 = vmatpush.bf16.msra.mxu0 %v1947
        %1969 = vmatmul.bf16.gmra.mxu0 %v1950
        %v1970 = vpop.f32.mrf.mxu0
        %v1971 = vadd.f32 0.0, %v1970
        %v1972 = vpop.f32.mrf.mxu0
        %v1973 = vadd.f32 0.0, %v1972
        %1974 = vmatmul.bf16.gmra.mxu0 %v1953
        %v1975 = vpop.f32.mrf.mxu0
        %v1976 = vadd.f32 0.0, %v1975
        %v1977 = vpop.f32.mrf.mxu0
        %v1978 = vadd.f32 0.0, %v1977
        %1979 = vmatmul.bf16.gmra.mxu0 %v1956
        %v1980 = vpop.f32.mrf.mxu0
        %v1981 = vadd.f32 0.0, %v1980
        %v1982 = vpop.f32.mrf.mxu0
        %v1983 = vadd.f32 0.0, %v1982
        %1984 = vmatmul.bf16.gmra.mxu0 %v1959
        %v1985 = vpop.f32.mrf.mxu0
        %v1986 = vadd.f32 0.0, %v1985
        %v1987 = vpop.f32.mrf.mxu0
        %v1988 = vadd.f32 0.0, %v1987
        %1989 = vdwg.mxu0
        %v1990 = vadd.f32 %v1899, %v1971
        %v1991 = vadd.f32 %v1901, %v1973
        %v1992 = vadd.f32 %v1904, %v1976
        %v1993 = vadd.f32 %v1906, %v1978
        %v1994 = vadd.f32 %v1909, %v1981
        %v1995 = vadd.f32 %v1911, %v1983
        %v1996 = vadd.f32 %v1914, %v1986
        %v1997 = vadd.f32 %v1916, %v1988
        %v1999 = vrot.slane %v1768, 7
        %v2001 = vsel %vm1164, 0.0, %v1999
        %v2002 = vpack.c.bf16 %v1810, %v1809
        %v2003 = vpack.c.bf16 %v1812, %v1811
        %v2004 = vpack.c.bf16 %v1814, %v1813
        %v2005 = vpack.c.bf16 %v2001, %v1815
        %v2008 = vunpack.c.l.b16 %v1776
        %v2009 = vunpack.c.l.b16 %v1777
        %v2010 = vpack.c.b16 %v2009, %v2008
        %v2013 = vsel %vm1264, %v2002, 0
        %v2016 = vsel %vm1264, %v2003, 0
        %v2019 = vsel %vm1264, %v2004, 0
        %v2022 = vsel %vm1264, %v2005, 0
        %2024 = vmatpush.bf16.msra.mxu0 0
        %2025 = vmatpush.bf16.msra.mxu0 0
        %2026 = vmatpush.bf16.msra.mxu0 0
        %2027 = vmatpush.bf16.msra.mxu0 0
        %2028 = vmatpush.bf16.msra.mxu0 0
        %2029 = vmatpush.bf16.msra.mxu0 0
        %2030 = vmatpush.bf16.msra.mxu0 0
        %2031 = vmatpush.bf16.msra.mxu0 %v2010
        %2032 = vmatmul.bf16.gmra.mxu0 %v2013
        %v2033 = vpop.f32.mrf.mxu0
        %v2034 = vadd.f32 0.0, %v2033
        %v2035 = vpop.f32.mrf.mxu0
        %v2036 = vadd.f32 0.0, %v2035
        %2037 = vmatmul.bf16.gmra.mxu0 %v2016
        %v2038 = vpop.f32.mrf.mxu0
        %v2039 = vadd.f32 0.0, %v2038
        %v2040 = vpop.f32.mrf.mxu0
        %v2041 = vadd.f32 0.0, %v2040
        %2042 = vmatmul.bf16.gmra.mxu0 %v2019
        %v2043 = vpop.f32.mrf.mxu0
        %v2044 = vadd.f32 0.0, %v2043
        %v2045 = vpop.f32.mrf.mxu0
        %v2046 = vadd.f32 0.0, %v2045
        %2047 = vmatmul.bf16.gmra.mxu0 %v2022
        %v2048 = vpop.f32.mrf.mxu0
        %v2049 = vadd.f32 0.0, %v2048
        %v2050 = vpop.f32.mrf.mxu0
        %v2051 = vadd.f32 0.0, %v2050
        %2052 = vdwg.mxu0
        %v2053 = vadd.f32 %v1990, %v2034
        %v2054 = vadd.f32 %v1991, %v2036
        %v2055 = vadd.f32 %v1992, %v2039
        %v2056 = vadd.f32 %v1993, %v2041
        %v2057 = vadd.f32 %v1994, %v2044
        %v2058 = vadd.f32 %v1995, %v2046
        %v2059 = vadd.f32 %v1996, %v2049
        %v2060 = vadd.f32 %v1997, %v2051
        %v2061 = vpack.c.bf16 %v1762, %v1761
        %v2062 = vpack.c.bf16 %v1764, %v1763
        %v2063 = vpack.c.bf16 %v1766, %v1765
        %v2064 = vpack.c.bf16 %v1768, %v1767
        %v2067 = vunpack.c.l.b16 %v1778
        %v2068 = vunpack.c.l.b16 %v1779
        %v2069 = vpack.c.b16 %v2068, %v2067
        %v2072 = vsel %vm1264, %v2061, 0
        %v2075 = vsel %vm1264, %v2062, 0
        %v2078 = vsel %vm1264, %v2063, 0
        %v2081 = vsel %vm1264, %v2064, 0
        %2083 = vmatpush.bf16.msra.mxu0 0
        %2084 = vmatpush.bf16.msra.mxu0 0
        %2085 = vmatpush.bf16.msra.mxu0 0
        %2086 = vmatpush.bf16.msra.mxu0 0
        %2087 = vmatpush.bf16.msra.mxu0 0
        %2088 = vmatpush.bf16.msra.mxu0 0
        %2089 = vmatpush.bf16.msra.mxu0 0
        %2090 = vmatpush.bf16.msra.mxu0 %v2069
        %2091 = vmatmul.bf16.gmra.mxu0 %v2072
        %v2092 = vpop.f32.mrf.mxu0
        %v2093 = vadd.f32 0.0, %v2092
        %v2094 = vpop.f32.mrf.mxu0
        %v2095 = vadd.f32 0.0, %v2094
        %2096 = vmatmul.bf16.gmra.mxu0 %v2075
        %v2097 = vpop.f32.mrf.mxu0
        %v2098 = vadd.f32 0.0, %v2097
        %v2099 = vpop.f32.mrf.mxu0
        %v2100 = vadd.f32 0.0, %v2099
        %2101 = vmatmul.bf16.gmra.mxu0 %v2078
        %v2102 = vpop.f32.mrf.mxu0
        %v2103 = vadd.f32 0.0, %v2102
        %v2104 = vpop.f32.mrf.mxu0
        %v2105 = vadd.f32 0.0, %v2104
        %2106 = vmatmul.bf16.gmra.mxu0 %v2081
        %v2107 = vpop.f32.mrf.mxu0
        %v2108 = vadd.f32 0.0, %v2107
        %v2109 = vpop.f32.mrf.mxu0
        %v2110 = vadd.f32 0.0, %v2109
        %2111 = vdwg.mxu0
        %v2112 = vadd.f32 %v2053, %v2093
        %v2113 = vadd.f32 %v2054, %v2095
        %v2114 = vadd.f32 %v2055, %v2098
        %v2115 = vadd.f32 %v2056, %v2100
        %v2116 = vadd.f32 %v2057, %v2103
        %v2117 = vadd.f32 %v2058, %v2105
        %v2118 = vadd.f32 %v2059, %v2108
        %v2119 = vadd.f32 %v2060, %v2110
        %v2120 = vrot.slane %v1768, 1
        %v2122 = vsel %vm1098, %v2120, 0.0
        %v2123 = vpack.c.bf16 %v1933, %v1932
        %v2124 = vpack.c.bf16 %v1935, %v1934
        %v2125 = vpack.c.bf16 %v1937, %v1936
        %v2126 = vpack.c.bf16 %v2122, %v1938
        %v2129 = vunpack.c.l.b16 %v1780
        %v2130 = vunpack.c.l.b16 %v1781
        %v2131 = vpack.c.b16 %v2130, %v2129
        %v2134 = vsel %vm1264, %v2123, 0
        %v2137 = vsel %vm1264, %v2124, 0
        %v2140 = vsel %vm1264, %v2125, 0
        %v2143 = vsel %vm1264, %v2126, 0
        %2145 = vmatpush.bf16.msra.mxu0 0
        %2146 = vmatpush.bf16.msra.mxu0 0
        %2147 = vmatpush.bf16.msra.mxu0 0
        %2148 = vmatpush.bf16.msra.mxu0 0
        %2149 = vmatpush.bf16.msra.mxu0 0
        %2150 = vmatpush.bf16.msra.mxu0 0
        %2151 = vmatpush.bf16.msra.mxu0 0
        %2152 = vmatpush.bf16.msra.mxu0 %v2131
        %2153 = vmatmul.bf16.gmra.mxu0 %v2134
        %v2154 = vpop.f32.mrf.mxu0
        %v2155 = vadd.f32 0.0, %v2154
        %v2156 = vpop.f32.mrf.mxu0
        %v2157 = vadd.f32 0.0, %v2156
        %2158 = vmatmul.bf16.gmra.mxu0 %v2137
        %v2159 = vpop.f32.mrf.mxu0
        %v2160 = vadd.f32 0.0, %v2159
        %v2161 = vpop.f32.mrf.mxu0
        %v2162 = vadd.f32 0.0, %v2161
        %2163 = vmatmul.bf16.gmra.mxu0 %v2140
        %v2164 = vpop.f32.mrf.mxu0
        %v2165 = vadd.f32 0.0, %v2164
        %v2166 = vpop.f32.mrf.mxu0
        %v2167 = vadd.f32 0.0, %v2166
        %2168 = vmatmul.bf16.gmra.mxu0 %v2143
        %v2169 = vpop.f32.mrf.mxu0
        %v2170 = vadd.f32 0.0, %v2169
        %v2171 = vpop.f32.mrf.mxu0
        %v2172 = vadd.f32 0.0, %v2171
        %2173 = vdwg.mxu0
        %v2174 = vadd.f32 %v2112, %v2155
        %v2175 = vadd.f32 %v2113, %v2157
        %v2176 = vadd.f32 %v2114, %v2160
        %v2177 = vadd.f32 %v2115, %v2162
        %v2178 = vadd.f32 %v2116, %v2165
        %v2179 = vadd.f32 %v2117, %v2167
        %v2180 = vadd.f32 %v2118, %v2170
        %v2181 = vadd.f32 %v2119, %v2172
        %v2182 = vpack.c.bf16 %v1242, %v2001
        %v2185 = vunpack.c.l.b16 %v1782
        %v2186 = vunpack.c.l.b16 %v1783
        %v2187 = vpack.c.b16 %v2186, %v2185
        %v2190 = vsel %vm1264, %v2182, 0
        %2192 = vmatpush.bf16.msra.mxu0 0
        %2193 = vmatpush.bf16.msra.mxu0 0
        %2194 = vmatpush.bf16.msra.mxu0 0
        %2195 = vmatpush.bf16.msra.mxu0 0
        %2196 = vmatpush.bf16.msra.mxu0 0
        %2197 = vmatpush.bf16.msra.mxu0 0
        %2198 = vmatpush.bf16.msra.mxu0 0
        %2199 = vmatpush.bf16.msra.mxu0 %v2187
        %2200 = vmatmul.bf16.gmra.mxu0 %v1881
        %v2201 = vpop.f32.mrf.mxu0
        %v2202 = vadd.f32 0.0, %v2201
        %v2203 = vpop.f32.mrf.mxu0
        %v2204 = vadd.f32 0.0, %v2203
        %2205 = vmatmul.bf16.gmra.mxu0 %v1884
        %v2206 = vpop.f32.mrf.mxu0
        %v2207 = vadd.f32 0.0, %v2206
        %v2208 = vpop.f32.mrf.mxu0
        %v2209 = vadd.f32 0.0, %v2208
        %2210 = vmatmul.bf16.gmra.mxu0 %v1887
        %v2211 = vpop.f32.mrf.mxu0
        %v2212 = vadd.f32 0.0, %v2211
        %v2213 = vpop.f32.mrf.mxu0
        %v2214 = vadd.f32 0.0, %v2213
        %2215 = vmatmul.bf16.gmra.mxu0 %v2190
        %v2216 = vpop.f32.mrf.mxu0
        %v2217 = vadd.f32 0.0, %v2216
        %v2218 = vpop.f32.mrf.mxu0
        %v2219 = vadd.f32 0.0, %v2218
        %2220 = vdwg.mxu0
        %v2221 = vadd.f32 %v2174, %v2202
        %v2222 = vadd.f32 %v2175, %v2204
        %v2223 = vadd.f32 %v2176, %v2207
        %v2224 = vadd.f32 %v2177, %v2209
        %v2225 = vadd.f32 %v2178, %v2212
        %v2226 = vadd.f32 %v2179, %v2214
        %v2227 = vadd.f32 %v2180, %v2217
        %v2228 = vadd.f32 %v2181, %v2219
        %v2229 = vpack.c.bf16 0.0, %v1768
        %v2232 = vunpack.c.l.b16 %v1784
        %v2233 = vunpack.c.l.b16 %v1785
        %v2234 = vpack.c.b16 %v2233, %v2232
        %v2237 = vsel %vm1264, %v2229, 0
        %2239 = vmatpush.bf16.msra.mxu0 0
        %2240 = vmatpush.bf16.msra.mxu0 0
        %2241 = vmatpush.bf16.msra.mxu0 0
        %2242 = vmatpush.bf16.msra.mxu0 0
        %2243 = vmatpush.bf16.msra.mxu0 0
        %2244 = vmatpush.bf16.msra.mxu0 0
        %2245 = vmatpush.bf16.msra.mxu0 0
        %2246 = vmatpush.bf16.msra.mxu0 %v2234
        %2247 = vmatmul.bf16.gmra.mxu0 %v1834
        %v2248 = vpop.f32.mrf.mxu0
        %v2249 = vadd.f32 0.0, %v2248
        %v2250 = vpop.f32.mrf.mxu0
        %v2251 = vadd.f32 0.0, %v2250
        %2252 = vmatmul.bf16.gmra.mxu0 %v1837
        %v2253 = vpop.f32.mrf.mxu0
        %v2254 = vadd.f32 0.0, %v2253
        %v2255 = vpop.f32.mrf.mxu0
        %v2256 = vadd.f32 0.0, %v2255
        %2257 = vmatmul.bf16.gmra.mxu0 %v1840
        %v2258 = vpop.f32.mrf.mxu0
        %v2259 = vadd.f32 0.0, %v2258
        %v2260 = vpop.f32.mrf.mxu0
        %v2261 = vadd.f32 0.0, %v2260
        %2262 = vmatmul.bf16.gmra.mxu0 %v2237
        %v2263 = vpop.f32.mrf.mxu0
        %v2264 = vadd.f32 0.0, %v2263
        %v2265 = vpop.f32.mrf.mxu0
        %v2266 = vadd.f32 0.0, %v2265
        %2267 = vdwg.mxu0
        %v2268 = vadd.f32 %v2221, %v2249
        %v2269 = vadd.f32 %v2222, %v2251
        %v2270 = vadd.f32 %v2223, %v2254
        %v2271 = vadd.f32 %v2224, %v2256
        %v2272 = vadd.f32 %v2225, %v2259
        %v2273 = vadd.f32 %v2226, %v2261
        %v2274 = vadd.f32 %v2227, %v2264
        %v2275 = vadd.f32 %v2228, %v2266
        %v2276 = vpack.c.bf16 %v1369, %v2122
        %v2279 = vunpack.c.l.b16 %v1786
        %v2280 = vunpack.c.l.b16 %v1787
        %v2281 = vpack.c.b16 %v2280, %v2279
        %v2284 = vsel %vm1264, %v2276, 0
        %2286 = vmatpush.bf16.msra.mxu0 0
        %2287 = vmatpush.bf16.msra.mxu0 0
        %2288 = vmatpush.bf16.msra.mxu0 0
        %2289 = vmatpush.bf16.msra.mxu0 0
        %2290 = vmatpush.bf16.msra.mxu0 0
        %2291 = vmatpush.bf16.msra.mxu0 0
        %2292 = vmatpush.bf16.msra.mxu0 0
        %2293 = vmatpush.bf16.msra.mxu0 %v2281
        %2294 = vmatmul.bf16.gmra.mxu0 %v1953
        %v2295 = vpop.f32.mrf.mxu0
        %v2296 = vadd.f32 0.0, %v2295
        %v2297 = vpop.f32.mrf.mxu0
        %v2298 = vadd.f32 0.0, %v2297
        %2299 = vmatmul.bf16.gmra.mxu0 %v1956
        %v2300 = vpop.f32.mrf.mxu0
        %v2301 = vadd.f32 0.0, %v2300
        %v2302 = vpop.f32.mrf.mxu0
        %v2303 = vadd.f32 0.0, %v2302
        %2304 = vmatmul.bf16.gmra.mxu0 %v1959
        %v2305 = vpop.f32.mrf.mxu0
        %v2306 = vadd.f32 0.0, %v2305
        %v2307 = vpop.f32.mrf.mxu0
        %v2308 = vadd.f32 0.0, %v2307
        %2309 = vmatmul.bf16.gmra.mxu0 %v2284
        %v2310 = vpop.f32.mrf.mxu0
        %v2311 = vadd.f32 0.0, %v2310
        %v2312 = vpop.f32.mrf.mxu0
        %v2313 = vadd.f32 0.0, %v2312
        %2314 = vdwg.mxu0
        %v2315 = vadd.f32 %v2268, %v2296
        %v2316 = vadd.f32 %v2269, %v2298
        %v2317 = vadd.f32 %v2270, %v2301
        %v2318 = vadd.f32 %v2271, %v2303
        %v2319 = vadd.f32 %v2272, %v2306
        %v2320 = vadd.f32 %v2273, %v2308
        %v2321 = vadd.f32 %v2274, %v2311
        %v2322 = vadd.f32 %v2275, %v2313
        %v2323 = vadd.f32 %v2315, %v1181
        %v2324 = vadd.f32 %v2316, %v1183
        %v2325 = vadd.f32 %v2317, %v1186
        %v2326 = vadd.f32 %v2318, %v1188
        %v2327 = vadd.f32 %v2319, %v1191
        %v2328 = vadd.f32 %v2320, %v1193
        %v2329 = vadd.f32 %v2321, %v1196
        %v2330 = vadd.f32 %v2322, %v1198
        %v2331 = vmax.f32 %v2323, 0.0
        %v2332 = vmax.f32 %v2324, 0.0
        %v2333 = vmax.f32 %v2325, 0.0
        %v2334 = vmax.f32 %v2326, 0.0
        %v2335 = vmax.f32 %v2327, 0.0
        %v2336 = vmax.f32 %v2328, 0.0
        %v2337 = vmax.f32 %v2329, 0.0
        %v2338 = vmax.f32 %v2330, 0.0
        %s2339 = scalar_lea.vmem %s967, 144
        %v2340 = vld [vmem:[%s2339] sm:$0xf]
        %v2341 = vld [vmem:[%s2339 + $0x4] sm:$0xf]
        %v2342 = vld [vmem:[%s2339 + $0x8] sm:$0xf]
        %v2343 = vld [vmem:[%s2339 + $0xc] sm:$0xf]
        %v2344 = vld [vmem:[%s2339 + $0x10] sm:$0xf]
        %v2345 = vld [vmem:[%s2339 + $0x14] sm:$0xf]
        %v2346 = vld [vmem:[%s2339 + $0x18] sm:$0xf]
        %v2347 = vld [vmem:[%s2339 + $0x1c] sm:$0xf]
        %v2348 = vld [vmem:[%s2339 + $0x20] sm:$0xf]
        %v2349 = vld [vmem:[%s2339 + $0x24] sm:$0xf]
        %v2350 = vld [vmem:[%s2339 + $0x28] sm:$0xf]
        %v2351 = vld [vmem:[%s2339 + $0x2c] sm:$0xf]
        %v2352 = vld [vmem:[%s2339 + $0x30] sm:$0xf]
        %v2353 = vld [vmem:[%s2339 + $0x34] sm:$0xf]
        %v2354 = vld [vmem:[%s2339 + $0x38] sm:$0xf]
        %v2355 = vld [vmem:[%s2339 + $0x3c] sm:$0xf]
        %v2356 = vld [vmem:[%s2339 + $0x40] sm:$0xf]
        %v2357 = vld [vmem:[%s2339 + $0x44] sm:$0xf]
        %v2365 = vrot.slane %v2331, 7
        %v2366 = vrot.slane %v2332, 7
        %v2367 = vrot.slane %v2333, 7
        %v2368 = vrot.slane %v2334, 7
        %v2369 = vrot.slane %v2335, 7
        %v2370 = vrot.slane %v2336, 7
        %v2371 = vrot.slane %v2337, 7
        %v2379 = vsel %vm1164, 0.0, %v2365
        %v2380 = vsel %vm1164, 0.0, %v2366
        %v2381 = vsel %vm1164, 0.0, %v2367
        %v2382 = vsel %vm1164, 0.0, %v2368
        %v2383 = vsel %vm1164, 0.0, %v2369
        %v2384 = vsel %vm1164, 0.0, %v2370
        %v2385 = vsel %vm1164, 0.0, %v2371
        %v2386 = vpack.c.bf16 %v2379, %v1242
        %v2387 = vpack.c.bf16 %v2381, %v2380
        %v2388 = vpack.c.bf16 %v2383, %v2382
        %v2389 = vpack.c.bf16 %v2385, %v2384
        %v2390 = vpack.c.bf16 %v2331, 0.0
        %v2391 = vpack.c.bf16 %v2333, %v2332
        %v2392 = vpack.c.bf16 %v2335, %v2334
        %v2393 = vpack.c.bf16 %v2337, %v2336
        %v2396 = vunpack.c.l.b16 %v2342
        %v2397 = vunpack.c.l.b16 %v2343
        %v2398 = vpack.c.b16 %v2397, %v2396
        %v2401 = vsel %vm1264, %v2390, 0
        %v2404 = vsel %vm1264, %v2391, 0
        %v2407 = vsel %vm1264, %v2392, 0
        %v2410 = vsel %vm1264, %v2393, 0
        %2412 = vmatpush.bf16.msra.mxu0 0
        %2413 = vmatpush.bf16.msra.mxu0 0
        %2414 = vmatpush.bf16.msra.mxu0 0
        %2415 = vmatpush.bf16.msra.mxu0 0
        %2416 = vmatpush.bf16.msra.mxu0 0
        %2417 = vmatpush.bf16.msra.mxu0 0
        %2418 = vmatpush.bf16.msra.mxu0 0
        %2419 = vmatpush.bf16.msra.mxu0 %v2398
        %2420 = vmatmul.bf16.gmra.mxu0 %v2401
        %v2421 = vpop.f32.mrf.mxu0
        %v2422 = vadd.f32 0.0, %v2421
        %v2423 = vpop.f32.mrf.mxu0
        %v2424 = vadd.f32 0.0, %v2423
        %2425 = vmatmul.bf16.gmra.mxu0 %v2404
        %v2426 = vpop.f32.mrf.mxu0
        %v2427 = vadd.f32 0.0, %v2426
        %v2428 = vpop.f32.mrf.mxu0
        %v2429 = vadd.f32 0.0, %v2428
        %2430 = vmatmul.bf16.gmra.mxu0 %v2407
        %v2431 = vpop.f32.mrf.mxu0
        %v2432 = vadd.f32 0.0, %v2431
        %v2433 = vpop.f32.mrf.mxu0
        %v2434 = vadd.f32 0.0, %v2433
        %2435 = vmatmul.bf16.gmra.mxu0 %v2410
        %v2436 = vpop.f32.mrf.mxu0
        %v2437 = vadd.f32 0.0, %v2436
        %v2438 = vpop.f32.mrf.mxu0
        %v2439 = vadd.f32 0.0, %v2438
        %2440 = vdwg.mxu0
        %v2443 = vunpack.c.l.b16 %v2340
        %v2444 = vunpack.c.l.b16 %v2341
        %v2445 = vpack.c.b16 %v2444, %v2443
        %v2448 = vsel %vm1264, %v2386, 0
        %v2451 = vsel %vm1264, %v2387, 0
        %v2454 = vsel %vm1264, %v2388, 0
        %v2457 = vsel %vm1264, %v2389, 0
        %2459 = vmatpush.bf16.msra.mxu0 0
        %2460 = vmatpush.bf16.msra.mxu0 0
        %2461 = vmatpush.bf16.msra.mxu0 0
        %2462 = vmatpush.bf16.msra.mxu0 0
        %2463 = vmatpush.bf16.msra.mxu0 0
        %2464 = vmatpush.bf16.msra.mxu0 0
        %2465 = vmatpush.bf16.msra.mxu0 0
        %2466 = vmatpush.bf16.msra.mxu0 %v2445
        %2467 = vmatmul.bf16.gmra.mxu0 %v2448
        %v2468 = vpop.f32.mrf.mxu0
        %v2469 = vadd.f32 %v2422, %v2468
        %v2470 = vpop.f32.mrf.mxu0
        %v2471 = vadd.f32 %v2424, %v2470
        %2472 = vmatmul.bf16.gmra.mxu0 %v2451
        %v2473 = vpop.f32.mrf.mxu0
        %v2474 = vadd.f32 %v2427, %v2473
        %v2475 = vpop.f32.mrf.mxu0
        %v2476 = vadd.f32 %v2429, %v2475
        %2477 = vmatmul.bf16.gmra.mxu0 %v2454
        %v2478 = vpop.f32.mrf.mxu0
        %v2479 = vadd.f32 %v2432, %v2478
        %v2480 = vpop.f32.mrf.mxu0
        %v2481 = vadd.f32 %v2434, %v2480
        %2482 = vmatmul.bf16.gmra.mxu0 %v2457
        %v2483 = vpop.f32.mrf.mxu0
        %v2484 = vadd.f32 %v2437, %v2483
        %v2485 = vpop.f32.mrf.mxu0
        %v2486 = vadd.f32 %v2439, %v2485
        %2487 = vdwg.mxu0
        %v2488 = vrot.slane %v2331, 1
        %v2489 = vrot.slane %v2332, 1
        %v2490 = vrot.slane %v2333, 1
        %v2491 = vrot.slane %v2334, 1
        %v2492 = vrot.slane %v2335, 1
        %v2493 = vrot.slane %v2336, 1
        %v2494 = vrot.slane %v2337, 1
        %v2502 = vsel %vm1098, %v2488, 0.0
        %v2503 = vsel %vm1098, %v2489, 0.0
        %v2504 = vsel %vm1098, %v2490, 0.0
        %v2505 = vsel %vm1098, %v2491, 0.0
        %v2506 = vsel %vm1098, %v2492, 0.0
        %v2507 = vsel %vm1098, %v2493, 0.0
        %v2508 = vsel %vm1098, %v2494, 0.0
        %v2509 = vpack.c.bf16 %v2502, %v1369
        %v2510 = vpack.c.bf16 %v2504, %v2503
        %v2511 = vpack.c.bf16 %v2506, %v2505
        %v2512 = vpack.c.bf16 %v2508, %v2507
        %v2515 = vunpack.c.l.b16 %v2344
        %v2516 = vunpack.c.l.b16 %v2345
        %v2517 = vpack.c.b16 %v2516, %v2515
        %v2520 = vsel %vm1264, %v2509, 0
        %v2523 = vsel %vm1264, %v2510, 0
        %v2526 = vsel %vm1264, %v2511, 0
        %v2529 = vsel %vm1264, %v2512, 0
        %2531 = vmatpush.bf16.msra.mxu0 0
        %2532 = vmatpush.bf16.msra.mxu0 0
        %2533 = vmatpush.bf16.msra.mxu0 0
        %2534 = vmatpush.bf16.msra.mxu0 0
        %2535 = vmatpush.bf16.msra.mxu0 0
        %2536 = vmatpush.bf16.msra.mxu0 0
        %2537 = vmatpush.bf16.msra.mxu0 0
        %2538 = vmatpush.bf16.msra.mxu0 %v2517
        %2539 = vmatmul.bf16.gmra.mxu0 %v2520
        %v2540 = vpop.f32.mrf.mxu0
        %v2541 = vadd.f32 0.0, %v2540
        %v2542 = vpop.f32.mrf.mxu0
        %v2543 = vadd.f32 0.0, %v2542
        %2544 = vmatmul.bf16.gmra.mxu0 %v2523
        %v2545 = vpop.f32.mrf.mxu0
        %v2546 = vadd.f32 0.0, %v2545
        %v2547 = vpop.f32.mrf.mxu0
        %v2548 = vadd.f32 0.0, %v2547
        %2549 = vmatmul.bf16.gmra.mxu0 %v2526
        %v2550 = vpop.f32.mrf.mxu0
        %v2551 = vadd.f32 0.0, %v2550
        %v2552 = vpop.f32.mrf.mxu0
        %v2553 = vadd.f32 0.0, %v2552
        %2554 = vmatmul.bf16.gmra.mxu0 %v2529
        %v2555 = vpop.f32.mrf.mxu0
        %v2556 = vadd.f32 0.0, %v2555
        %v2557 = vpop.f32.mrf.mxu0
        %v2558 = vadd.f32 0.0, %v2557
        %2559 = vdwg.mxu0
        %v2560 = vadd.f32 %v2469, %v2541
        %v2561 = vadd.f32 %v2471, %v2543
        %v2562 = vadd.f32 %v2474, %v2546
        %v2563 = vadd.f32 %v2476, %v2548
        %v2564 = vadd.f32 %v2479, %v2551
        %v2565 = vadd.f32 %v2481, %v2553
        %v2566 = vadd.f32 %v2484, %v2556
        %v2567 = vadd.f32 %v2486, %v2558
        %v2569 = vrot.slane %v2338, 7
        %v2571 = vsel %vm1164, 0.0, %v2569
        %v2572 = vpack.c.bf16 %v2380, %v2379
        %v2573 = vpack.c.bf16 %v2382, %v2381
        %v2574 = vpack.c.bf16 %v2384, %v2383
        %v2575 = vpack.c.bf16 %v2571, %v2385
        %v2578 = vunpack.c.l.b16 %v2346
        %v2579 = vunpack.c.l.b16 %v2347
        %v2580 = vpack.c.b16 %v2579, %v2578
        %v2583 = vsel %vm1264, %v2572, 0
        %v2586 = vsel %vm1264, %v2573, 0
        %v2589 = vsel %vm1264, %v2574, 0
        %v2592 = vsel %vm1264, %v2575, 0
        %2594 = vmatpush.bf16.msra.mxu0 0
        %2595 = vmatpush.bf16.msra.mxu0 0
        %2596 = vmatpush.bf16.msra.mxu0 0
        %2597 = vmatpush.bf16.msra.mxu0 0
        %2598 = vmatpush.bf16.msra.mxu0 0
        %2599 = vmatpush.bf16.msra.mxu0 0
        %2600 = vmatpush.bf16.msra.mxu0 0
        %2601 = vmatpush.bf16.msra.mxu0 %v2580
        %2602 = vmatmul.bf16.gmra.mxu0 %v2583
        %v2603 = vpop.f32.mrf.mxu0
        %v2604 = vadd.f32 0.0, %v2603
        %v2605 = vpop.f32.mrf.mxu0
        %v2606 = vadd.f32 0.0, %v2605
        %2607 = vmatmul.bf16.gmra.mxu0 %v2586
        %v2608 = vpop.f32.mrf.mxu0
        %v2609 = vadd.f32 0.0, %v2608
        %v2610 = vpop.f32.mrf.mxu0
        %v2611 = vadd.f32 0.0, %v2610
        %2612 = vmatmul.bf16.gmra.mxu0 %v2589
        %v2613 = vpop.f32.mrf.mxu0
        %v2614 = vadd.f32 0.0, %v2613
        %v2615 = vpop.f32.mrf.mxu0
        %v2616 = vadd.f32 0.0, %v2615
        %2617 = vmatmul.bf16.gmra.mxu0 %v2592
        %v2618 = vpop.f32.mrf.mxu0
        %v2619 = vadd.f32 0.0, %v2618
        %v2620 = vpop.f32.mrf.mxu0
        %v2621 = vadd.f32 0.0, %v2620
        %2622 = vdwg.mxu0
        %v2623 = vadd.f32 %v2560, %v2604
        %v2624 = vadd.f32 %v2561, %v2606
        %v2625 = vadd.f32 %v2562, %v2609
        %v2626 = vadd.f32 %v2563, %v2611
        %v2627 = vadd.f32 %v2564, %v2614
        %v2628 = vadd.f32 %v2565, %v2616
        %v2629 = vadd.f32 %v2566, %v2619
        %v2630 = vadd.f32 %v2567, %v2621
        %v2631 = vpack.c.bf16 %v2332, %v2331
        %v2632 = vpack.c.bf16 %v2334, %v2333
        %v2633 = vpack.c.bf16 %v2336, %v2335
        %v2634 = vpack.c.bf16 %v2338, %v2337
        %v2637 = vunpack.c.l.b16 %v2348
        %v2638 = vunpack.c.l.b16 %v2349
        %v2639 = vpack.c.b16 %v2638, %v2637
        %v2642 = vsel %vm1264, %v2631, 0
        %v2645 = vsel %vm1264, %v2632, 0
        %v2648 = vsel %vm1264, %v2633, 0
        %v2651 = vsel %vm1264, %v2634, 0
        %2653 = vmatpush.bf16.msra.mxu0 0
        %2654 = vmatpush.bf16.msra.mxu0 0
        %2655 = vmatpush.bf16.msra.mxu0 0
        %2656 = vmatpush.bf16.msra.mxu0 0
        %2657 = vmatpush.bf16.msra.mxu0 0
        %2658 = vmatpush.bf16.msra.mxu0 0
        %2659 = vmatpush.bf16.msra.mxu0 0
        %2660 = vmatpush.bf16.msra.mxu0 %v2639
        %2661 = vmatmul.bf16.gmra.mxu0 %v2642
        %v2662 = vpop.f32.mrf.mxu0
        %v2663 = vadd.f32 0.0, %v2662
        %v2664 = vpop.f32.mrf.mxu0
        %v2665 = vadd.f32 0.0, %v2664
        %2666 = vmatmul.bf16.gmra.mxu0 %v2645
        %v2667 = vpop.f32.mrf.mxu0
        %v2668 = vadd.f32 0.0, %v2667
        %v2669 = vpop.f32.mrf.mxu0
        %v2670 = vadd.f32 0.0, %v2669
        %2671 = vmatmul.bf16.gmra.mxu0 %v2648
        %v2672 = vpop.f32.mrf.mxu0
        %v2673 = vadd.f32 0.0, %v2672
        %v2674 = vpop.f32.mrf.mxu0
        %v2675 = vadd.f32 0.0, %v2674
        %2676 = vmatmul.bf16.gmra.mxu0 %v2651
        %v2677 = vpop.f32.mrf.mxu0
        %v2678 = vadd.f32 0.0, %v2677
        %v2679 = vpop.f32.mrf.mxu0
        %v2680 = vadd.f32 0.0, %v2679
        %2681 = vdwg.mxu0
        %v2682 = vadd.f32 %v2623, %v2663
        %v2683 = vadd.f32 %v2624, %v2665
        %v2684 = vadd.f32 %v2625, %v2668
        %v2685 = vadd.f32 %v2626, %v2670
        %v2686 = vadd.f32 %v2627, %v2673
        %v2687 = vadd.f32 %v2628, %v2675
        %v2688 = vadd.f32 %v2629, %v2678
        %v2689 = vadd.f32 %v2630, %v2680
        %v2690 = vrot.slane %v2338, 1
        %v2692 = vsel %vm1098, %v2690, 0.0
        %v2693 = vpack.c.bf16 %v2503, %v2502
        %v2694 = vpack.c.bf16 %v2505, %v2504
        %v2695 = vpack.c.bf16 %v2507, %v2506
        %v2696 = vpack.c.bf16 %v2692, %v2508
        %v2699 = vunpack.c.l.b16 %v2350
        %v2700 = vunpack.c.l.b16 %v2351
        %v2701 = vpack.c.b16 %v2700, %v2699
        %v2704 = vsel %vm1264, %v2693, 0
        %v2707 = vsel %vm1264, %v2694, 0
        %v2710 = vsel %vm1264, %v2695, 0
        %v2713 = vsel %vm1264, %v2696, 0
        %2715 = vmatpush.bf16.msra.mxu0 0
        %2716 = vmatpush.bf16.msra.mxu0 0
        %2717 = vmatpush.bf16.msra.mxu0 0
        %2718 = vmatpush.bf16.msra.mxu0 0
        %2719 = vmatpush.bf16.msra.mxu0 0
        %2720 = vmatpush.bf16.msra.mxu0 0
        %2721 = vmatpush.bf16.msra.mxu0 0
        %2722 = vmatpush.bf16.msra.mxu0 %v2701
        %2723 = vmatmul.bf16.gmra.mxu0 %v2704
        %v2724 = vpop.f32.mrf.mxu0
        %v2725 = vadd.f32 0.0, %v2724
        %v2726 = vpop.f32.mrf.mxu0
        %v2727 = vadd.f32 0.0, %v2726
        %2728 = vmatmul.bf16.gmra.mxu0 %v2707
        %v2729 = vpop.f32.mrf.mxu0
        %v2730 = vadd.f32 0.0, %v2729
        %v2731 = vpop.f32.mrf.mxu0
        %v2732 = vadd.f32 0.0, %v2731
        %2733 = vmatmul.bf16.gmra.mxu0 %v2710
        %v2734 = vpop.f32.mrf.mxu0
        %v2735 = vadd.f32 0.0, %v2734
        %v2736 = vpop.f32.mrf.mxu0
        %v2737 = vadd.f32 0.0, %v2736
        %2738 = vmatmul.bf16.gmra.mxu0 %v2713
        %v2739 = vpop.f32.mrf.mxu0
        %v2740 = vadd.f32 0.0, %v2739
        %v2741 = vpop.f32.mrf.mxu0
        %v2742 = vadd.f32 0.0, %v2741
        %2743 = vdwg.mxu0
        %v2744 = vadd.f32 %v2682, %v2725
        %v2745 = vadd.f32 %v2683, %v2727
        %v2746 = vadd.f32 %v2684, %v2730
        %v2747 = vadd.f32 %v2685, %v2732
        %v2748 = vadd.f32 %v2686, %v2735
        %v2749 = vadd.f32 %v2687, %v2737
        %v2750 = vadd.f32 %v2688, %v2740
        %v2751 = vadd.f32 %v2689, %v2742
        %v2752 = vpack.c.bf16 %v1242, %v2571
        %v2755 = vunpack.c.l.b16 %v2352
        %v2756 = vunpack.c.l.b16 %v2353
        %v2757 = vpack.c.b16 %v2756, %v2755
        %v2760 = vsel %vm1264, %v2752, 0
        %2762 = vmatpush.bf16.msra.mxu0 0
        %2763 = vmatpush.bf16.msra.mxu0 0
        %2764 = vmatpush.bf16.msra.mxu0 0
        %2765 = vmatpush.bf16.msra.mxu0 0
        %2766 = vmatpush.bf16.msra.mxu0 0
        %2767 = vmatpush.bf16.msra.mxu0 0
        %2768 = vmatpush.bf16.msra.mxu0 0
        %2769 = vmatpush.bf16.msra.mxu0 %v2757
        %2770 = vmatmul.bf16.gmra.mxu0 %v2451
        %v2771 = vpop.f32.mrf.mxu0
        %v2772 = vadd.f32 0.0, %v2771
        %v2773 = vpop.f32.mrf.mxu0
        %v2774 = vadd.f32 0.0, %v2773
        %2775 = vmatmul.bf16.gmra.mxu0 %v2454
        %v2776 = vpop.f32.mrf.mxu0
        %v2777 = vadd.f32 0.0, %v2776
        %v2778 = vpop.f32.mrf.mxu0
        %v2779 = vadd.f32 0.0, %v2778
        %2780 = vmatmul.bf16.gmra.mxu0 %v2457
        %v2781 = vpop.f32.mrf.mxu0
        %v2782 = vadd.f32 0.0, %v2781
        %v2783 = vpop.f32.mrf.mxu0
        %v2784 = vadd.f32 0.0, %v2783
        %2785 = vmatmul.bf16.gmra.mxu0 %v2760
        %v2786 = vpop.f32.mrf.mxu0
        %v2787 = vadd.f32 0.0, %v2786
        %v2788 = vpop.f32.mrf.mxu0
        %v2789 = vadd.f32 0.0, %v2788
        %2790 = vdwg.mxu0
        %v2791 = vadd.f32 %v2744, %v2772
        %v2792 = vadd.f32 %v2745, %v2774
        %v2793 = vadd.f32 %v2746, %v2777
        %v2794 = vadd.f32 %v2747, %v2779
        %v2795 = vadd.f32 %v2748, %v2782
        %v2796 = vadd.f32 %v2749, %v2784
        %v2797 = vadd.f32 %v2750, %v2787
        %v2798 = vadd.f32 %v2751, %v2789
        %v2799 = vpack.c.bf16 0.0, %v2338
        %v2802 = vunpack.c.l.b16 %v2354
        %v2803 = vunpack.c.l.b16 %v2355
        %v2804 = vpack.c.b16 %v2803, %v2802
        %v2807 = vsel %vm1264, %v2799, 0
        %2809 = vmatpush.bf16.msra.mxu0 0
        %2810 = vmatpush.bf16.msra.mxu0 0
        %2811 = vmatpush.bf16.msra.mxu0 0
        %2812 = vmatpush.bf16.msra.mxu0 0
        %2813 = vmatpush.bf16.msra.mxu0 0
        %2814 = vmatpush.bf16.msra.mxu0 0
        %2815 = vmatpush.bf16.msra.mxu0 0
        %2816 = vmatpush.bf16.msra.mxu0 %v2804
        %2817 = vmatmul.bf16.gmra.mxu0 %v2404
        %v2818 = vpop.f32.mrf.mxu0
        %v2819 = vadd.f32 0.0, %v2818
        %v2820 = vpop.f32.mrf.mxu0
        %v2821 = vadd.f32 0.0, %v2820
        %2822 = vmatmul.bf16.gmra.mxu0 %v2407
        %v2823 = vpop.f32.mrf.mxu0
        %v2824 = vadd.f32 0.0, %v2823
        %v2825 = vpop.f32.mrf.mxu0
        %v2826 = vadd.f32 0.0, %v2825
        %2827 = vmatmul.bf16.gmra.mxu0 %v2410
        %v2828 = vpop.f32.mrf.mxu0
        %v2829 = vadd.f32 0.0, %v2828
        %v2830 = vpop.f32.mrf.mxu0
        %v2831 = vadd.f32 0.0, %v2830
        %2832 = vmatmul.bf16.gmra.mxu0 %v2807
        %v2833 = vpop.f32.mrf.mxu0
        %v2834 = vadd.f32 0.0, %v2833
        %v2835 = vpop.f32.mrf.mxu0
        %v2836 = vadd.f32 0.0, %v2835
        %2837 = vdwg.mxu0
        %v2838 = vadd.f32 %v2791, %v2819
        %v2839 = vadd.f32 %v2792, %v2821
        %v2840 = vadd.f32 %v2793, %v2824
        %v2841 = vadd.f32 %v2794, %v2826
        %v2842 = vadd.f32 %v2795, %v2829
        %v2843 = vadd.f32 %v2796, %v2831
        %v2844 = vadd.f32 %v2797, %v2834
        %v2845 = vadd.f32 %v2798, %v2836
        %v2846 = vpack.c.bf16 %v1369, %v2692
        %v2849 = vunpack.c.l.b16 %v2356
        %v2850 = vunpack.c.l.b16 %v2357
        %v2851 = vpack.c.b16 %v2850, %v2849
        %v2854 = vsel %vm1264, %v2846, 0
        %2856 = vmatpush.bf16.msra.mxu0 0
        %2857 = vmatpush.bf16.msra.mxu0 0
        %2858 = vmatpush.bf16.msra.mxu0 0
        %2859 = vmatpush.bf16.msra.mxu0 0
        %2860 = vmatpush.bf16.msra.mxu0 0
        %2861 = vmatpush.bf16.msra.mxu0 0
        %2862 = vmatpush.bf16.msra.mxu0 0
        %2863 = vmatpush.bf16.msra.mxu0 %v2851
        %2864 = vmatmul.bf16.gmra.mxu0 %v2523
        %v2865 = vpop.f32.mrf.mxu0
        %v2866 = vadd.f32 0.0, %v2865
        %v2867 = vpop.f32.mrf.mxu0
        %v2868 = vadd.f32 0.0, %v2867
        %2869 = vmatmul.bf16.gmra.mxu0 %v2526
        %v2870 = vpop.f32.mrf.mxu0
        %v2871 = vadd.f32 0.0, %v2870
        %v2872 = vpop.f32.mrf.mxu0
        %v2873 = vadd.f32 0.0, %v2872
        %2874 = vmatmul.bf16.gmra.mxu0 %v2529
        %v2875 = vpop.f32.mrf.mxu0
        %v2876 = vadd.f32 0.0, %v2875
        %v2877 = vpop.f32.mrf.mxu0
        %v2878 = vadd.f32 0.0, %v2877
        %2879 = vmatmul.bf16.gmra.mxu0 %v2854
        %v2880 = vpop.f32.mrf.mxu0
        %v2881 = vadd.f32 0.0, %v2880
        %v2882 = vpop.f32.mrf.mxu0
        %v2883 = vadd.f32 0.0, %v2882
        %2884 = vdwg.mxu0
        %v2885 = vadd.f32 %v2838, %v2866
        %v2886 = vadd.f32 %v2839, %v2868
        %v2887 = vadd.f32 %v2840, %v2871
        %v2888 = vadd.f32 %v2841, %v2873
        %v2889 = vadd.f32 %v2842, %v2876
        %v2890 = vadd.f32 %v2843, %v2878
        %v2891 = vadd.f32 %v2844, %v2881
        %v2892 = vadd.f32 %v2845, %v2883
        %v2893 = vld [vmem:[%s970] sm:$0x1]
        %v2895 = vperm.slane %v2893, 0
        %v2897 = vadd.f32 %v2885, %v2895
        %v2898 = vadd.f32 %v2886, %v2895
        %v2899 = vadd.f32 %v2887, %v2895
        %v2900 = vadd.f32 %v2888, %v2895
        %v2901 = vadd.f32 %v2889, %v2895
        %v2902 = vadd.f32 %v2890, %v2895
        %v2903 = vadd.f32 %v2891, %v2895
        %v2904 = vadd.f32 %v2892, %v2895
        %v2905 = vld [vmem:[%s975] sm:$0xf]
        %v2906 = vld [vmem:[%s975 + $0x4] sm:$0xf]
        %s2907 = sld [smem:[#allocation2 + %s43]]
        %v2908 = vld [vmem:[%s980] sm:$0xf]
        %v2909 = vld [vmem:[%s980 + $0x4] sm:$0xf]
        %v2910 = vld [vmem:[%s983] sm:$0x1]
        %v2911 = vld [vmem:[%s988] sm:$0xff]
        %v2912 = vld [vmem:[%s988 + $0x8] sm:$0x1]
        %v2913 = vld [vmem:[%s993] sm:$0xff]
        %v2914 = vld [vmem:[%s993 + $0x8] sm:$0x1]
        %v2915 = vld [vmem:[%s996] sm:$0x1]
        %v2916 = vld [vmem:[%s999] sm:$0x1]
        %v2917 = vld [vmem:[%s1004] sm:$0xf]
        %v2918 = vld [vmem:[%s1004 + $0x4] sm:$0xf]
        %v2919 = vld [vmem:[%s1009] sm:$0xff]
        %v2920 = vld [vmem:[%s1009 + $0x8] sm:$0x1]
        %v2921 = vld [vmem:[%s1014] sm:$0xf]
        %v2922 = vld [vmem:[%s1014 + $0x4] sm:$0xf]
        %v2923 = vld [vmem:[%s1014 + $0x8] sm:$0xf]
        %v2924 = vld [vmem:[%s1014 + $0xc] sm:$0xf]
        %v2925 = vld [vmem:[%s1014 + $0x10] sm:$0xf]
        %v2926 = vld [vmem:[%s1014 + $0x14] sm:$0xf]
        %v2927 = vld [vmem:[%s1014 + $0x18] sm:$0xf]
        %v2928 = vld [vmem:[%s1014 + $0x1c] sm:$0xf]
        %v2929 = vpack.c.bf16 %v2898, %v2897
        %v2930 = vpack.c.bf16 %v2900, %v2899
        %v2931 = vpack.c.bf16 %v2902, %v2901
        %v2932 = vpack.c.bf16 %v2904, %v2903
        %v2935 = vunpack.c.l.b16 %v2905
        %v2936 = vunpack.c.l.b16 %v2906
        %v2937 = vpack.c.b16 %v2936, %v2935
        %v2940 = vsel %vm1264, %v2929, 0
        %v2943 = vsel %vm1264, %v2930, 0
        %v2946 = vsel %vm1264, %v2931, 0
        %v2949 = vsel %vm1264, %v2932, 0
        %2951 = vmatpush.bf16.msra.mxu0 0
        %2952 = vmatpush.bf16.msra.mxu0 0
        %2953 = vmatpush.bf16.msra.mxu0 0
        %2954 = vmatpush.bf16.msra.mxu0 0
        %2955 = vmatpush.bf16.msra.mxu0 0
        %2956 = vmatpush.bf16.msra.mxu0 0
        %2957 = vmatpush.bf16.msra.mxu0 0
        %2958 = vmatpush.bf16.msra.mxu0 %v2937
        %2959 = vmatmul.bf16.gmra.mxu0 %v2940
        %v2960 = vpop.f32.mrf.mxu0
        %v2961 = vadd.f32 0.0, %v2960
        %v2962 = vpop.f32.mrf.mxu0
        %v2963 = vadd.f32 0.0, %v2962
        %2964 = vmatmul.bf16.gmra.mxu0 %v2943
        %v2965 = vpop.f32.mrf.mxu0
        %v2966 = vadd.f32 0.0, %v2965
        %v2967 = vpop.f32.mrf.mxu0
        %v2968 = vadd.f32 0.0, %v2967
        %2969 = vmatmul.bf16.gmra.mxu0 %v2946
        %v2970 = vpop.f32.mrf.mxu0
        %v2971 = vadd.f32 0.0, %v2970
        %v2972 = vpop.f32.mrf.mxu0
        %v2973 = vadd.f32 0.0, %v2972
        %2974 = vmatmul.bf16.gmra.mxu0 %v2949
        %v2975 = vpop.f32.mrf.mxu0
        %v2976 = vadd.f32 0.0, %v2975
        %v2977 = vpop.f32.mrf.mxu0
        %v2978 = vadd.f32 0.0, %v2977
        %2979 = vdwg.mxu0
        %v2980 = vmul.f32 %v2961, %v2961
        %v2981 = vmul.f32 %v2963, %v2963
        %v2982 = vmul.f32 %v2966, %v2966
        %v2983 = vmul.f32 %v2968, %v2968
        %v2984 = vmul.f32 %v2971, %v2971
        %v2985 = vmul.f32 %v2973, %v2973
        %v2986 = vmul.f32 %v2976, %v2976
        %v2987 = vmul.f32 %v2978, %v2978
        %v2988 = vsel %vm1264, %v2980, 0.0
        %v2989 = vsel %vm1264, %v2981, 0.0
        %v2990 = vadd.f32 %v2988, %v2989
        %v2991 = vsel %vm1264, %v2982, 0.0
        %v2992 = vadd.f32 %v2990, %v2991
        %v2993 = vsel %vm1264, %v2983, 0.0
        %v2994 = vadd.f32 %v2992, %v2993
        %v2995 = vsel %vm1264, %v2984, 0.0
        %v2996 = vadd.f32 %v2994, %v2995
        %v2997 = vsel %vm1264, %v2985, 0.0
        %v2998 = vadd.f32 %v2996, %v2997
        %v2999 = vsel %vm1264, %v2986, 0.0
        %v3000 = vadd.f32 %v2998, %v2999
        %v3001 = vsel %vm1264, %v2987, 0.0
        %v3002 = vadd.f32 %v3000, %v3001
        %v3003 = vrot.slane %v3002, 4
        %v3004 = vadd.f32 %v3002, %v3003
        %v3005 = vrot.slane %v3004, 2
        %v3006 = vadd.f32 %v3004, %v3005
        %v3007 = vrot.slane %v3006, 1
        %v3008 = vadd.f32 %v3006, %v3007
        %v3009 = vmax.f32 %v3008, 1e-24
        %v3010 = vrsqrt.pop %v3009
        %v3011 = vmul.f32 %v3010, %v3009
        %v3012 = vmul.f32 %v3011, %v3010
        %v3013 = vmul.f32 0.5, %v3012
        %v3014 = vsub.f32 1.5, %v3013
        %v3015 = vmul.f32 %v3010, %v3014
        %vm3016 = vweird.f32 %v3009
        %vm3017 = vweird.f32 %v3010
        %vm3018 = vmor %vm3016, %vm3017
        %v3019 = vsel %vm3018, %v3010, %v3015
        %v3020 = vmul.f32 %v2961, %v3019
        %v3021 = vmul.f32 %v2963, %v3019
        %v3022 = vmul.f32 %v2966, %v3019
        %v3023 = vmul.f32 %v2968, %v3019
        %v3024 = vmul.f32 %v2971, %v3019
        %v3025 = vmul.f32 %v2973, %v3019
        %v3026 = vmul.f32 %v2976, %v3019
        %v3027 = vmul.f32 %v2978, %v3019
        %vm3028 = vcmask 261248
        %v3029 = vsel %vm3028, %v2980, 0.0
        %v3030 = vsel %vm3028, %v2981, 0.0
        %v3031 = vadd.f32 %v3029, %v3030
        %v3032 = vsel %vm3028, %v2982, 0.0
        %v3033 = vadd.f32 %v3031, %v3032
        %v3034 = vsel %vm3028, %v2983, 0.0
        %v3035 = vadd.f32 %v3033, %v3034
        %v3036 = vsel %vm3028, %v2984, 0.0
        %v3037 = vadd.f32 %v3035, %v3036
        %v3038 = vsel %vm3028, %v2985, 0.0
        %v3039 = vadd.f32 %v3037, %v3038
        %v3040 = vsel %vm3028, %v2986, 0.0
        %v3041 = vadd.f32 %v3039, %v3040
        %v3042 = vsel %vm3028, %v2987, 0.0
        %v3043 = vadd.f32 %v3041, %v3042
        %v3044 = vrot.slane %v3043, 4
        %v3045 = vadd.f32 %v3043, %v3044
        %v3046 = vrot.slane %v3045, 2
        %v3047 = vadd.f32 %v3045, %v3046
        %v3048 = vrot.slane %v3047, 1
        %v3049 = vadd.f32 %v3047, %v3048
        %v3050 = vmax.f32 %v3049, 1e-24
        %v3051 = vrsqrt.pop %v3050
        %v3052 = vmul.f32 %v3051, %v3050
        %v3053 = vmul.f32 %v3052, %v3051
        %v3054 = vmul.f32 0.5, %v3053
        %v3055 = vsub.f32 1.5, %v3054
        %v3056 = vmul.f32 %v3051, %v3055
        %vm3057 = vweird.f32 %v3050
        %vm3058 = vweird.f32 %v3051
        %vm3059 = vmor %vm3057, %vm3058
        %v3060 = vsel %vm3059, %v3051, %v3056
        %v3061 = vmul.f32 %v2961, %v3060
        %v3062 = vmul.f32 %v2963, %v3060
        %v3063 = vmul.f32 %v2966, %v3060
        %v3064 = vmul.f32 %v2968, %v3060
        %v3065 = vmul.f32 %v2971, %v3060
        %v3066 = vmul.f32 %v2973, %v3060
        %v3067 = vmul.f32 %v2976, %v3060
        %v3068 = vmul.f32 %v2978, %v3060
        %3077 = vrot.lane.b32.xlu0 %v3061, 112
        %v3078 = vpop.permute.xlu0 %3077
        %3079 = vrot.lane.b32.xlu0 %v3062, 112
        %v3080 = vpop.permute.xlu0 %3079
        %3081 = vrot.lane.b32.xlu0 %v3063, 112
        %v3082 = vpop.permute.xlu0 %3081
        %3083 = vrot.lane.b32.xlu0 %v3064, 112
        %v3084 = vpop.permute.xlu0 %3083
        %3085 = vrot.lane.b32.xlu0 %v3065, 112
        %v3086 = vpop.permute.xlu0 %3085
        %3087 = vrot.lane.b32.xlu0 %v3066, 112
        %v3088 = vpop.permute.xlu0 %3087
        %3089 = vrot.lane.b32.xlu0 %v3067, 112
        %v3090 = vpop.permute.xlu0 %3089
        %3091 = vrot.lane.b32.xlu0 %v3068, 112
        %v3092 = vpop.permute.xlu0 %3091
        %3101 = vxpose.xlu0.b32.start [1/16] %v3078, 128
        %3102 = vxpose.xlu0.b32.cont [2/16] %v3080, 128
        %3103 = vxpose.xlu0.b32.cont [3/16] %v3082, 128
        %3104 = vxpose.xlu0.b32.cont [4/16] %v3084, 128
        %3105 = vxpose.xlu0.b32.cont [5/16] %v3086, 128
        %3106 = vxpose.xlu0.b32.cont [6/16] %v3088, 128
        %3107 = vxpose.xlu0.b32.cont [7/16] %v3090, 128
        %3108 = vxpose.xlu0.b32.cont [8/16] %v3092, 128
        %3109 = vxpose.xlu0.b32.cont [9/16] 0.0, 128
        %3110 = vxpose.xlu0.b32.cont [10/16] 0.0, 128
        %3111 = vxpose.xlu0.b32.cont [11/16] 0.0, 128
        %3112 = vxpose.xlu0.b32.cont [12/16] 0.0, 128
        %3113 = vxpose.xlu0.b32.cont [13/16] 0.0, 128
        %3114 = vxpose.xlu0.b32.cont [14/16] 0.0, 128
        %3115 = vxpose.xlu0.b32.cont [15/16] 0.0, 128
        %3116 = vxpose.xlu0.b32.end [16/16] 0.0, 128
        %v3117 = vpop.trf.xlu0
        %v3118 = vpop.trf.xlu0
        %v3119 = vpop.trf.xlu0
        %v3120 = vpop.trf.xlu0
        %v3121 = vpop.trf.xlu0
        %v3122 = vpop.trf.xlu0
        %v3123 = vpop.trf.xlu0
        %v3124 = vpop.trf.xlu0
        %v3125 = vpop.trf.xlu0
        %v3126 = vpop.trf.xlu0
        %v3127 = vpop.trf.xlu0
        %v3128 = vpop.trf.xlu0
        %v3129 = vpop.trf.xlu0
        %v3130 = vpop.trf.xlu0
        %v3131 = vpop.trf.xlu0
        %v3132 = vpop.trf.xlu0
        %vm3133 = vcmask 523264
        %v3135 = vsel %vm3133, %v3117, 0
        %v3138 = vsel %vm3133, %v3118, 0
        %3140 = vmatpush.msra.mxu0 0.0
        %3141 = vmatpush.msra.mxu0 0.0
        %3142 = vmatpush.msra.mxu0 0.0
        %3143 = vmatpush.msra.mxu0 0.0
        %3144 = vmatpush.msra.mxu0 0.0
        %3145 = vmatpush.msra.mxu0 0.0
        %3146 = vmatpush.msra.mxu0 0.0
        %3147 = vmatpush.msra.mxu0 0.0
        %3148 = vmatpush.msra.mxu0 %v3027
        %3149 = vmatpush.msra.mxu0 %v3026
        %3150 = vmatpush.msra.mxu0 %v3025
        %3151 = vmatpush.msra.mxu0 %v3024
        %3152 = vmatpush.msra.mxu0 %v3023
        %3153 = vmatpush.msra.mxu0 %v3022
        %3154 = vmatpush.msra.mxu0 %v3021
        %3155 = vmatpush.msra.mxu0 %v3020
        %3156 = vmatmul.f32.gmra.mxu0 %v3135
        %v3157 = vpop.f32.mrf.mxu0
        %v3158 = vadd.f32 0.0, %v3157
        %3159 = vmatmul.f32.gmra.mxu0 %v3138
        %v3160 = vpop.f32.mrf.mxu0
        %v3161 = vadd.f32 0.0, %v3160
        %3162 = vdwg.mxu0
        %v3163 = vstv %s2907
        %v3164 = vmul.f32 %v3158, %v3163
        %v3165 = vmul.f32 %v3161, %v3163
        %v3166 = vsel %vm1264, %v3164, -inf
        %3167 = vmax.xlane.f32.xlu0 %v3166
        %v3168 = vpop.xlane.xlu0 %3167
        %v3169 = vsel %vm1264, %v3165, -inf
        %3170 = vmax.xlane.f32.xlu0 %v3169
        %v3171 = vpop.xlane.xlu0 %3170
        %v3172 = vsub.f32 %v3164, %v3168
        %v3173 = vsub.f32 %v3165, %v3171
        %v3174 = vmul.f32 %v3172, 1.442695
        %v3175 = vpow.pop %v3174
        %v3176 = vmul.f32 %v3173, 1.442695
        %v3177 = vpow.pop %v3176
        %v3178 = vsel %vm1264, %v3175, 0.0
        %3179 = vadd.xlane.f32.xlu0 %v3178
        %v3180 = vpop.xlane.xlu0 %3179
        %v3181 = vsel %vm1264, %v3177, 0.0
        %3182 = vadd.xlane.f32.xlu0 %v3181
        %v3183 = vpop.xlane.xlu0 %3182
        %v3184 = vrcp.pop %v3180
        %v3185 = vrcp.pop %v3183
        %v3186 = vmul.f32 %v3175, %v3184
        %v3187 = vmul.f32 %v3177, %v3185
        %3196 = vrot.lane.b32.xlu0 %v2961, 96
        %v3197 = vpop.permute.xlu0 %3196
        %3198 = vrot.lane.b32.xlu0 %v2963, 96
        %v3199 = vpop.permute.xlu0 %3198
        %3200 = vrot.lane.b32.xlu0 %v2966, 96
        %v3201 = vpop.permute.xlu0 %3200
        %3202 = vrot.lane.b32.xlu0 %v2968, 96
        %v3203 = vpop.permute.xlu0 %3202
        %3204 = vrot.lane.b32.xlu0 %v2971, 96
        %v3205 = vpop.permute.xlu0 %3204
        %3206 = vrot.lane.b32.xlu0 %v2973, 96
        %v3207 = vpop.permute.xlu0 %3206
        %3208 = vrot.lane.b32.xlu0 %v2976, 96
        %v3209 = vpop.permute.xlu0 %3208
        %3210 = vrot.lane.b32.xlu0 %v2978, 96
        %v3211 = vpop.permute.xlu0 %3210
        %v3212 = vsel %vm1264, %v3197, 0
        %v3214 = vsel %vm1264, %v3199, 0
        %v3216 = vsel %vm1264, %v3201, 0
        %v3218 = vsel %vm1264, %v3203, 0
        %v3220 = vsel %vm1264, %v3205, 0
        %v3222 = vsel %vm1264, %v3207, 0
        %v3224 = vsel %vm1264, %v3209, 0
        %v3226 = vsel %vm1264, %v3211, 0
        %v3229 = vsel %vm1264, %v3186, 0
        %v3232 = vsel %vm1264, %v3187, 0
        %3234 = vmatpush.xpose.msra.mxu0 0.0
        %3235 = vmatpush.xpose.msra.mxu0 0.0
        %3236 = vmatpush.xpose.msra.mxu0 0.0
        %3237 = vmatpush.xpose.msra.mxu0 0.0
        %3238 = vmatpush.xpose.msra.mxu0 0.0
        %3239 = vmatpush.xpose.msra.mxu0 0.0
        %3240 = vmatpush.xpose.msra.mxu0 0.0
        %3241 = vmatpush.xpose.msra.mxu0 0.0
        %3242 = vmatpush.xpose.msra.mxu0 0.0
        %3243 = vmatpush.xpose.msra.mxu0 0.0
        %3244 = vmatpush.xpose.msra.mxu0 0.0
        %3245 = vmatpush.xpose.msra.mxu0 0.0
        %3246 = vmatpush.xpose.msra.mxu0 0.0
        %3247 = vmatpush.xpose.msra.mxu0 0.0
        %3248 = vmatpush.xpose.msra.mxu0 %v3232
        %3249 = vmatpush.xpose.msra.mxu0 %v3229
        %3250 = vmatmul.f32.gmra.mxu0 %v3212
        %v3251 = vpop.f32.mrf.mxu0
        %v3252 = vadd.f32 0.0, %v3251
        %3253 = vmatmul.f32.gmra.mxu0 %v3214
        %v3254 = vpop.f32.mrf.mxu0
        %v3255 = vadd.f32 0.0, %v3254
        %3256 = vmatmul.f32.gmra.mxu0 %v3216
        %v3257 = vpop.f32.mrf.mxu0
        %v3258 = vadd.f32 0.0, %v3257
        %3259 = vmatmul.f32.gmra.mxu0 %v3218
        %v3260 = vpop.f32.mrf.mxu0
        %v3261 = vadd.f32 0.0, %v3260
        %3262 = vmatmul.f32.gmra.mxu0 %v3220
        %v3263 = vpop.f32.mrf.mxu0
        %v3264 = vadd.f32 0.0, %v3263
        %3265 = vmatmul.f32.gmra.mxu0 %v3222
        %v3266 = vpop.f32.mrf.mxu0
        %v3267 = vadd.f32 0.0, %v3266
        %3268 = vmatmul.f32.gmra.mxu0 %v3224
        %v3269 = vpop.f32.mrf.mxu0
        %v3270 = vadd.f32 0.0, %v3269
        %3271 = vmatmul.f32.gmra.mxu0 %v3226
        %v3272 = vpop.f32.mrf.mxu0
        %v3273 = vadd.f32 0.0, %v3272
        %3274 = vdwg.mxu0
        %v3275 = vpack.c.bf16 %v3255, %v3252
        %v3276 = vpack.c.bf16 %v3261, %v3258
        %v3277 = vpack.c.bf16 %v3267, %v3264
        %v3278 = vpack.c.bf16 %v3273, %v3270
        %v3280 = vperm.slane %v2910, 0
        %v3284 = vunpack.c.l.b16 %v2908
        %v3285 = vunpack.c.l.b16 %v2909
        %v3286 = vpack.c.b16 %v3285, %v3284
        %v3289 = vsel %vm1264, %v3275, 0
        %v3292 = vsel %vm1264, %v3276, 0
        %v3295 = vsel %vm1264, %v3277, 0
        %v3298 = vsel %vm1264, %v3278, 0
        %3300 = vmatpush.bf16.msra.mxu0 0
        %3301 = vmatpush.bf16.msra.mxu0 0
        %3302 = vmatpush.bf16.msra.mxu0 0
        %3303 = vmatpush.bf16.msra.mxu0 0
        %3304 = vmatpush.bf16.msra.mxu0 0
        %3305 = vmatpush.bf16.msra.mxu0 0
        %3306 = vmatpush.bf16.msra.mxu0 0
        %3307 = vmatpush.bf16.msra.mxu0 %v3286
        %3308 = vmatmul.bf16.gmra.mxu0 %v3289
        %v3309 = vpop.f32.mrf.mxu0
        %v3310 = vadd.f32 %v3280, %v3309
        %v3311 = vpop.f32.mrf.mxu0
        %v3312 = vadd.f32 %v3280, %v3311
        %3313 = vmatmul.bf16.gmra.mxu0 %v3292
        %v3314 = vpop.f32.mrf.mxu0
        %v3315 = vadd.f32 %v3280, %v3314
        %v3316 = vpop.f32.mrf.mxu0
        %v3317 = vadd.f32 %v3280, %v3316
        %3318 = vmatmul.bf16.gmra.mxu0 %v3295
        %v3319 = vpop.f32.mrf.mxu0
        %v3320 = vadd.f32 %v3280, %v3319
        %v3321 = vpop.f32.mrf.mxu0
        %v3322 = vadd.f32 %v3280, %v3321
        %3323 = vmatmul.bf16.gmra.mxu0 %v3298
        %v3324 = vpop.f32.mrf.mxu0
        %v3325 = vadd.f32 %v3280, %v3324
        %v3326 = vpop.f32.mrf.mxu0
        %v3327 = vadd.f32 %v3280, %v3326
        %3328 = vdwg.mxu0
        %v3336 = vrot.slane %v3197, 7
        %v3337 = vrot.slane %v3199, 7
        %v3338 = vrot.slane %v3201, 7
        %v3339 = vrot.slane %v3203, 7
        %v3340 = vrot.slane %v3205, 7
        %v3341 = vrot.slane %v3207, 7
        %v3342 = vrot.slane %v3209, 7
        %v3350 = vsel %vm1164, 0.0, %v3336
        %v3351 = vsel %vm1164, 0.0, %v3337
        %v3352 = vsel %vm1164, 0.0, %v3338
        %v3353 = vsel %vm1164, 0.0, %v3339
        %v3354 = vsel %vm1164, 0.0, %v3340
        %v3355 = vsel %vm1164, 0.0, %v3341
        %v3356 = vsel %vm1164, 0.0, %v3342
        %v3357 = vperm.slane %v2911, 0
        %v3358 = vmul.f32 %v1242, %v3357
        %v3359 = vmul.f32 %v3350, %v3357
        %v3360 = vmul.f32 %v3351, %v3357
        %v3361 = vmul.f32 %v3352, %v3357
        %v3362 = vmul.f32 %v3353, %v3357
        %v3363 = vmul.f32 %v3354, %v3357
        %v3364 = vmul.f32 %v3355, %v3357
        %v3365 = vmul.f32 %v3356, %v3357
        %v3366 = vadd.f32 %v3358, 0.0
        %v3367 = vadd.f32 %v3359, 0.0
        %v3368 = vadd.f32 %v3360, 0.0
        %v3369 = vadd.f32 %v3361, 0.0
        %v3370 = vadd.f32 %v3362, 0.0
        %v3371 = vadd.f32 %v3363, 0.0
        %v3372 = vadd.f32 %v3364, 0.0
        %v3373 = vadd.f32 %v3365, 0.0
        %v3374 = vperm.slane %v2911, 1
        %v3375 = vmul.f32 %v3374, 0.0
        %v3376 = vmul.f32 %v3197, %v3374
        %v3377 = vmul.f32 %v3199, %v3374
        %v3378 = vmul.f32 %v3201, %v3374
        %v3379 = vmul.f32 %v3203, %v3374
        %v3380 = vmul.f32 %v3205, %v3374
        %v3381 = vmul.f32 %v3207, %v3374
        %v3382 = vmul.f32 %v3209, %v3374
        %v3383 = vadd.f32 %v3366, %v3375
        %v3384 = vadd.f32 %v3367, %v3376
        %v3385 = vadd.f32 %v3368, %v3377
        %v3386 = vadd.f32 %v3369, %v3378
        %v3387 = vadd.f32 %v3370, %v3379
        %v3388 = vadd.f32 %v3371, %v3380
        %v3389 = vadd.f32 %v3372, %v3381
        %v3390 = vadd.f32 %v3373, %v3382
        %v3391 = vrot.slane %v3197, 1
        %v3392 = vrot.slane %v3199, 1
        %v3393 = vrot.slane %v3201, 1
        %v3394 = vrot.slane %v3203, 1
        %v3395 = vrot.slane %v3205, 1
        %v3396 = vrot.slane %v3207, 1
        %v3397 = vrot.slane %v3209, 1
        %v3405 = vsel %vm1098, %v3391, 0.0
        %v3406 = vsel %vm1098, %v3392, 0.0
        %v3407 = vsel %vm1098, %v3393, 0.0
        %v3408 = vsel %vm1098, %v3394, 0.0
        %v3409 = vsel %vm1098, %v3395, 0.0
        %v3410 = vsel %vm1098, %v3396, 0.0
        %v3411 = vsel %vm1098, %v3397, 0.0
        %v3412 = vperm.slane %v2911, 2
        %v3413 = vmul.f32 %v1369, %v3412
        %v3414 = vmul.f32 %v3405, %v3412
        %v3415 = vmul.f32 %v3406, %v3412
        %v3416 = vmul.f32 %v3407, %v3412
        %v3417 = vmul.f32 %v3408, %v3412
        %v3418 = vmul.f32 %v3409, %v3412
        %v3419 = vmul.f32 %v3410, %v3412
        %v3420 = vmul.f32 %v3411, %v3412
        %v3421 = vadd.f32 %v3383, %v3413
        %v3422 = vadd.f32 %v3384, %v3414
        %v3423 = vadd.f32 %v3385, %v3415
        %v3424 = vadd.f32 %v3386, %v3416
        %v3425 = vadd.f32 %v3387, %v3417
        %v3426 = vadd.f32 %v3388, %v3418
        %v3427 = vadd.f32 %v3389, %v3419
        %v3428 = vadd.f32 %v3390, %v3420
        %v3429 = vrot.slane %v2961, 7
        %v3430 = vrot.slane %v2963, 7
        %v3431 = vrot.slane %v2966, 7
        %v3432 = vrot.slane %v2968, 7
        %v3433 = vrot.slane %v2971, 7
        %v3434 = vrot.slane %v2973, 7
        %v3435 = vrot.slane %v2976, 7
        %v3436 = vrot.slane %v2978, 7
        %3437 = vrot.lane.b32.xlu0 %v3429, 96
        %v3438 = vpop.permute.xlu0 %3437
        %3439 = vrot.lane.b32.xlu0 %v3430, 96
        %v3440 = vpop.permute.xlu0 %3439
        %3441 = vrot.lane.b32.xlu0 %v3431, 96
        %v3442 = vpop.permute.xlu0 %3441
        %3443 = vrot.lane.b32.xlu0 %v3432, 96
        %v3444 = vpop.permute.xlu0 %3443
        %3445 = vrot.lane.b32.xlu0 %v3433, 96
        %v3446 = vpop.permute.xlu0 %3445
        %3447 = vrot.lane.b32.xlu0 %v3434, 96
        %v3448 = vpop.permute.xlu0 %3447
        %3449 = vrot.lane.b32.xlu0 %v3435, 96
        %v3450 = vpop.permute.xlu0 %3449
        %3451 = vrot.lane.b32.xlu0 %v3436, 96
        %v3452 = vpop.permute.xlu0 %3451
        %v3461 = vsel %vm1164, 0.0, %v3438
        %v3462 = vsel %vm1164, 0.0, %v3440
        %v3463 = vsel %vm1164, 0.0, %v3442
        %v3464 = vsel %vm1164, 0.0, %v3444
        %v3465 = vsel %vm1164, 0.0, %v3446
        %v3466 = vsel %vm1164, 0.0, %v3448
        %v3467 = vsel %vm1164, 0.0, %v3450
        %v3468 = vsel %vm1164, 0.0, %v3452
        %v3469 = vperm.slane %v2911, 3
        %v3470 = vmul.f32 %v3461, %v3469
        %v3471 = vmul.f32 %v3462, %v3469
        %v3472 = vmul.f32 %v3463, %v3469
        %v3473 = vmul.f32 %v3464, %v3469
        %v3474 = vmul.f32 %v3465, %v3469
        %v3475 = vmul.f32 %v3466, %v3469
        %v3476 = vmul.f32 %v3467, %v3469
        %v3477 = vmul.f32 %v3468, %v3469
        %v3478 = vadd.f32 %v3421, %v3470
        %v3479 = vadd.f32 %v3422, %v3471
        %v3480 = vadd.f32 %v3423, %v3472
        %v3481 = vadd.f32 %v3424, %v3473
        %v3482 = vadd.f32 %v3425, %v3474
        %v3483 = vadd.f32 %v3426, %v3475
        %v3484 = vadd.f32 %v3427, %v3476
        %v3485 = vadd.f32 %v3428, %v3477
        %v3486 = vperm.slane %v2911, 4
        %3488 = vrot.lane.b32.xlu0 %v3486, 32
        %v3489 = vpop.permute.xlu0 %3488
        %v3491 = vmul.f32 %v2961, %v3489
        %v3492 = vmul.f32 %v2963, %v3489
        %v3493 = vmul.f32 %v2966, %v3489
        %v3494 = vmul.f32 %v2968, %v3489
        %v3495 = vmul.f32 %v2971, %v3489
        %v3496 = vmul.f32 %v2973, %v3489
        %v3497 = vmul.f32 %v2976, %v3489
        %v3498 = vmul.f32 %v2978, %v3489
        %3507 = vrot.lane.b32.xlu0 %v3491, 96
        %v3508 = vpop.permute.xlu0 %3507
        %3509 = vrot.lane.b32.xlu0 %v3492, 96
        %v3510 = vpop.permute.xlu0 %3509
        %3511 = vrot.lane.b32.xlu0 %v3493, 96
        %v3512 = vpop.permute.xlu0 %3511
        %3513 = vrot.lane.b32.xlu0 %v3494, 96
        %v3514 = vpop.permute.xlu0 %3513
        %3515 = vrot.lane.b32.xlu0 %v3495, 96
        %v3516 = vpop.permute.xlu0 %3515
        %3517 = vrot.lane.b32.xlu0 %v3496, 96
        %v3518 = vpop.permute.xlu0 %3517
        %3519 = vrot.lane.b32.xlu0 %v3497, 96
        %v3520 = vpop.permute.xlu0 %3519
        %3521 = vrot.lane.b32.xlu0 %v3498, 96
        %v3522 = vpop.permute.xlu0 %3521
        %v3531 = vadd.f32 %v3478, %v3508
        %v3532 = vadd.f32 %v3479, %v3510
        %v3533 = vadd.f32 %v3480, %v3512
        %v3534 = vadd.f32 %v3481, %v3514
        %v3535 = vadd.f32 %v3482, %v3516
        %v3536 = vadd.f32 %v3483, %v3518
        %v3537 = vadd.f32 %v3484, %v3520
        %v3538 = vadd.f32 %v3485, %v3522
        %v3539 = vrot.slane %v2961, 1
        %v3540 = vrot.slane %v2963, 1
        %v3541 = vrot.slane %v2966, 1
        %v3542 = vrot.slane %v2968, 1
        %v3543 = vrot.slane %v2971, 1
        %v3544 = vrot.slane %v2973, 1
        %v3545 = vrot.slane %v2976, 1
        %v3546 = vrot.slane %v2978, 1
        %v3555 = vsel %vm1098, %v3539, 0.0
        %v3556 = vsel %vm1098, %v3540, 0.0
        %v3557 = vsel %vm1098, %v3541, 0.0
        %v3558 = vsel %vm1098, %v3542, 0.0
        %v3559 = vsel %vm1098, %v3543, 0.0
        %v3560 = vsel %vm1098, %v3544, 0.0
        %v3561 = vsel %vm1098, %v3545, 0.0
        %v3562 = vsel %vm1098, %v3546, 0.0
        %v3563 = vperm.slane %v2911, 5
        %3565 = vrot.lane.b32.xlu0 %v3563, 32
        %v3566 = vpop.permute.xlu0 %3565
        %v3568 = vmul.f32 %v3555, %v3566
        %v3569 = vmul.f32 %v3556, %v3566
        %v3570 = vmul.f32 %v3557, %v3566
        %v3571 = vmul.f32 %v3558, %v3566
        %v3572 = vmul.f32 %v3559, %v3566
        %v3573 = vmul.f32 %v3560, %v3566
        %v3574 = vmul.f32 %v3561, %v3566
        %v3575 = vmul.f32 %v3562, %v3566
        %3584 = vrot.lane.b32.xlu0 %v3568, 96
        %v3585 = vpop.permute.xlu0 %3584
        %3586 = vrot.lane.b32.xlu0 %v3569, 96
        %v3587 = vpop.permute.xlu0 %3586
        %3588 = vrot.lane.b32.xlu0 %v3570, 96
        %v3589 = vpop.permute.xlu0 %3588
        %3590 = vrot.lane.b32.xlu0 %v3571, 96
        %v3591 = vpop.permute.xlu0 %3590
        %3592 = vrot.lane.b32.xlu0 %v3572, 96
        %v3593 = vpop.permute.xlu0 %3592
        %3594 = vrot.lane.b32.xlu0 %v3573, 96
        %v3595 = vpop.permute.xlu0 %3594
        %3596 = vrot.lane.b32.xlu0 %v3574, 96
        %v3597 = vpop.permute.xlu0 %3596
        %3598 = vrot.lane.b32.xlu0 %v3575, 96
        %v3599 = vpop.permute.xlu0 %3598
        %v3608 = vadd.f32 %v3531, %v3585
        %v3609 = vadd.f32 %v3532, %v3587
        %v3610 = vadd.f32 %v3533, %v3589
        %v3611 = vadd.f32 %v3534, %v3591
        %v3612 = vadd.f32 %v3535, %v3593
        %v3613 = vadd.f32 %v3536, %v3595
        %v3614 = vadd.f32 %v3537, %v3597
        %v3615 = vadd.f32 %v3538, %v3599
        %3616 = vrot.lane.b32.xlu0 %v1226, 96
        %v3617 = vpop.permute.xlu0 %3616
        %v3619 = vsel %vm1164, 0.0, %v3617
        %v3620 = vperm.slane %v2911, 6
        %v3621 = vmul.f32 %v3462, %v3620
        %v3622 = vmul.f32 %v3463, %v3620
        %v3623 = vmul.f32 %v3464, %v3620
        %v3624 = vmul.f32 %v3465, %v3620
        %v3625 = vmul.f32 %v3466, %v3620
        %v3626 = vmul.f32 %v3467, %v3620
        %v3627 = vmul.f32 %v3468, %v3620
        %v3628 = vmul.f32 %v3619, %v3620
        %v3629 = vadd.f32 %v3608, %v3621
        %v3630 = vadd.f32 %v3609, %v3622
        %v3631 = vadd.f32 %v3610, %v3623
        %v3632 = vadd.f32 %v3611, %v3624
        %v3633 = vadd.f32 %v3612, %v3625
        %v3634 = vadd.f32 %v3613, %v3626
        %v3635 = vadd.f32 %v3614, %v3627
        %v3636 = vadd.f32 %v3615, %v3628
        %v3637 = vperm.slane %v2911, 7
        %3639 = vrot.lane.b32.xlu0 %v3637, 32
        %v3640 = vpop.permute.xlu0 %3639
        %v3642 = vmul.f32 %v2963, %v3640
        %v3643 = vmul.f32 %v2966, %v3640
        %v3644 = vmul.f32 %v2968, %v3640
        %v3645 = vmul.f32 %v2971, %v3640
        %v3646 = vmul.f32 %v2973, %v3640
        %v3647 = vmul.f32 %v2976, %v3640
        %v3648 = vmul.f32 %v2978, %v3640
        %v3649 = vmul.f32 %v3640, 0.0
        %3658 = vrot.lane.b32.xlu0 %v3642, 96
        %v3659 = vpop.permute.xlu0 %3658
        %3660 = vrot.lane.b32.xlu0 %v3643, 96
        %v3661 = vpop.permute.xlu0 %3660
        %3662 = vrot.lane.b32.xlu0 %v3644, 96
        %v3663 = vpop.permute.xlu0 %3662
        %3664 = vrot.lane.b32.xlu0 %v3645, 96
        %v3665 = vpop.permute.xlu0 %3664
        %3666 = vrot.lane.b32.xlu0 %v3646, 96
        %v3667 = vpop.permute.xlu0 %3666
        %3668 = vrot.lane.b32.xlu0 %v3647, 96
        %v3669 = vpop.permute.xlu0 %3668
        %3670 = vrot.lane.b32.xlu0 %v3648, 96
        %v3671 = vpop.permute.xlu0 %3670
        %3672 = vrot.lane.b32.xlu0 %v3649, 96
        %v3673 = vpop.permute.xlu0 %3672
        %v3682 = vadd.f32 %v3629, %v3659
        %v3683 = vadd.f32 %v3630, %v3661
        %v3684 = vadd.f32 %v3631, %v3663
        %v3685 = vadd.f32 %v3632, %v3665
        %v3686 = vadd.f32 %v3633, %v3667
        %v3687 = vadd.f32 %v3634, %v3669
        %v3688 = vadd.f32 %v3635, %v3671
        %v3689 = vadd.f32 %v3636, %v3673
        %v3690 = vperm.slane %v2912, 0
        %3692 = vrot.lane.b32.xlu0 %v3690, 32
        %v3693 = vpop.permute.xlu0 %3692
        %v3695 = vmul.f32 %v3556, %v3693
        %v3696 = vmul.f32 %v3557, %v3693
        %v3697 = vmul.f32 %v3558, %v3693
        %v3698 = vmul.f32 %v3559, %v3693
        %v3699 = vmul.f32 %v3560, %v3693
        %v3700 = vmul.f32 %v3561, %v3693
        %v3701 = vmul.f32 %v3562, %v3693
        %v3702 = vmul.f32 %v1369, %v3693
        %3711 = vrot.lane.b32.xlu0 %v3695, 96
        %v3712 = vpop.permute.xlu0 %3711
        %3713 = vrot.lane.b32.xlu0 %v3696, 96
        %v3714 = vpop.permute.xlu0 %3713
        %3715 = vrot.lane.b32.xlu0 %v3697, 96
        %v3716 = vpop.permute.xlu0 %3715
        %3717 = vrot.lane.b32.xlu0 %v3698, 96
        %v3718 = vpop.permute.xlu0 %3717
        %3719 = vrot.lane.b32.xlu0 %v3699, 96
        %v3720 = vpop.permute.xlu0 %3719
        %3721 = vrot.lane.b32.xlu0 %v3700, 96
        %v3722 = vpop.permute.xlu0 %3721
        %3723 = vrot.lane.b32.xlu0 %v3701, 96
        %v3724 = vpop.permute.xlu0 %3723
        %3725 = vrot.lane.b32.xlu0 %v3702, 96
        %v3726 = vpop.permute.xlu0 %3725
        %v3735 = vadd.f32 %v3682, %v3712
        %v3736 = vadd.f32 %v3683, %v3714
        %v3737 = vadd.f32 %v3684, %v3716
        %v3738 = vadd.f32 %v3685, %v3718
        %v3739 = vadd.f32 %v3686, %v3720
        %v3740 = vadd.f32 %v3687, %v3722
        %v3741 = vadd.f32 %v3688, %v3724
        %v3742 = vadd.f32 %v3689, %v3726
        %v3743 = vmul.f32 %v3735, 0.5
        %v3744 = vmul.f32 %v3736, 0.5
        %v3745 = vmul.f32 %v3737, 0.5
        %v3746 = vmul.f32 %v3738, 0.5
        %v3747 = vmul.f32 %v3739, 0.5
        %v3748 = vmul.f32 %v3740, 0.5
        %v3749 = vmul.f32 %v3741, 0.5
        %v3750 = vmul.f32 %v3742, 0.5
        %v3751 = vmul.f32 %v3735, 0.044715
        %v3752 = vmul.f32 %v3736, 0.044715
        %v3753 = vmul.f32 %v3737, 0.044715
        %v3754 = vmul.f32 %v3738, 0.044715
        %v3755 = vmul.f32 %v3739, 0.044715
        %v3756 = vmul.f32 %v3740, 0.044715
        %v3757 = vmul.f32 %v3741, 0.044715
        %v3758 = vmul.f32 %v3742, 0.044715
        %v3759 = vmul.f32 %v3751, %v3735
        %v3760 = vmul.f32 %v3752, %v3736
        %v3761 = vmul.f32 %v3753, %v3737
        %v3762 = vmul.f32 %v3754, %v3738
        %v3763 = vmul.f32 %v3755, %v3739
        %v3764 = vmul.f32 %v3756, %v3740
        %v3765 = vmul.f32 %v3757, %v3741
        %v3766 = vmul.f32 %v3758, %v3742
        %v3767 = vmul.f32 %v3759, %v3735
        %v3768 = vmul.f32 %v3760, %v3736
        %v3769 = vmul.f32 %v3761, %v3737
        %v3770 = vmul.f32 %v3762, %v3738
        %v3771 = vmul.f32 %v3763, %v3739
        %v3772 = vmul.f32 %v3764, %v3740
        %v3773 = vmul.f32 %v3765, %v3741
        %v3774 = vmul.f32 %v3766, %v3742
        %v3775 = vadd.f32 %v3735, %v3767
        %v3776 = vadd.f32 %v3736, %v3768
        %v3777 = vadd.f32 %v3737, %v3769
        %v3778 = vadd.f32 %v3738, %v3770
        %v3779 = vadd.f32 %v3739, %v3771
        %v3780 = vadd.f32 %v3740, %v3772
        %v3781 = vadd.f32 %v3741, %v3773
        %v3782 = vadd.f32 %v3742, %v3774
        %v3783 = vmul.f32 %v3775, 0.7978846
        %v3784 = vmul.f32 %v3776, 0.7978846
        %v3785 = vmul.f32 %v3777, 0.7978846
        %v3786 = vmul.f32 %v3778, 0.7978846
        %v3787 = vmul.f32 %v3779, 0.7978846
        %v3788 = vmul.f32 %v3780, 0.7978846
        %v3789 = vmul.f32 %v3781, 0.7978846
        %v3790 = vmul.f32 %v3782, 0.7978846
        %v3791 = vtanh.pop %v3783
        %v3792 = vtanh.pop %v3784
        %v3793 = vtanh.pop %v3785
        %v3794 = vtanh.pop %v3786
        %v3795 = vtanh.pop %v3787
        %v3796 = vtanh.pop %v3788
        %v3797 = vtanh.pop %v3789
        %v3798 = vtanh.pop %v3790
        %v3799 = vadd.f32 %v3791, 1.0
        %v3800 = vadd.f32 %v3792, 1.0
        %v3801 = vadd.f32 %v3793, 1.0
        %v3802 = vadd.f32 %v3794, 1.0
        %v3803 = vadd.f32 %v3795, 1.0
        %v3804 = vadd.f32 %v3796, 1.0
        %v3805 = vadd.f32 %v3797, 1.0
        %v3806 = vadd.f32 %v3798, 1.0
        %v3807 = vmul.f32 %v3743, %v3799
        %v3808 = vmul.f32 %v3744, %v3800
        %v3809 = vmul.f32 %v3745, %v3801
        %v3810 = vmul.f32 %v3746, %v3802
        %v3811 = vmul.f32 %v3747, %v3803
        %v3812 = vmul.f32 %v3748, %v3804
        %v3813 = vmul.f32 %v3749, %v3805
        %v3814 = vmul.f32 %v3750, %v3806
        %v3822 = vrot.slane %v3807, 7
        %v3823 = vrot.slane %v3808, 7
        %v3824 = vrot.slane %v3809, 7
        %v3825 = vrot.slane %v3810, 7
        %v3826 = vrot.slane %v3811, 7
        %v3827 = vrot.slane %v3812, 7
        %v3828 = vrot.slane %v3813, 7
        %v3836 = vsel %vm1164, 0.0, %v3822
        %v3837 = vsel %vm1164, 0.0, %v3823
        %v3838 = vsel %vm1164, 0.0, %v3824
        %v3839 = vsel %vm1164, 0.0, %v3825
        %v3840 = vsel %vm1164, 0.0, %v3826
        %v3841 = vsel %vm1164, 0.0, %v3827
        %v3842 = vsel %vm1164, 0.0, %v3828
        %v3843 = vperm.slane %v2913, 0
        %v3844 = vmul.f32 %v1242, %v3843
        %v3845 = vmul.f32 %v3836, %v3843
        %v3846 = vmul.f32 %v3837, %v3843
        %v3847 = vmul.f32 %v3838, %v3843
        %v3848 = vmul.f32 %v3839, %v3843
        %v3849 = vmul.f32 %v3840, %v3843
        %v3850 = vmul.f32 %v3841, %v3843
        %v3851 = vmul.f32 %v3842, %v3843
        %v3852 = vadd.f32 %v3844, 0.0
        %v3853 = vadd.f32 %v3845, 0.0
        %v3854 = vadd.f32 %v3846, 0.0
        %v3855 = vadd.f32 %v3847, 0.0
        %v3856 = vadd.f32 %v3848, 0.0
        %v3857 = vadd.f32 %v3849, 0.0
        %v3858 = vadd.f32 %v3850, 0.0
        %v3859 = vadd.f32 %v3851, 0.0
        %v3860 = vperm.slane %v2913, 1
        %v3861 = vmul.f32 %v3860, 0.0
        %v3862 = vmul.f32 %v3807, %v3860
        %v3863 = vmul.f32 %v3808, %v3860
        %v3864 = vmul.f32 %v3809, %v3860
        %v3865 = vmul.f32 %v3810, %v3860
        %v3866 = vmul.f32 %v3811, %v3860
        %v3867 = vmul.f32 %v3812, %v3860
        %v3868 = vmul.f32 %v3813, %v3860
        %v3869 = vadd.f32 %v3852, %v3861
        %v3870 = vadd.f32 %v3853, %v3862
        %v3871 = vadd.f32 %v3854, %v3863
        %v3872 = vadd.f32 %v3855, %v3864
        %v3873 = vadd.f32 %v3856, %v3865
        %v3874 = vadd.f32 %v3857, %v3866
        %v3875 = vadd.f32 %v3858, %v3867
        %v3876 = vadd.f32 %v3859, %v3868
        %v3877 = vrot.slane %v3807, 1
        %v3878 = vrot.slane %v3808, 1
        %v3879 = vrot.slane %v3809, 1
        %v3880 = vrot.slane %v3810, 1
        %v3881 = vrot.slane %v3811, 1
        %v3882 = vrot.slane %v3812, 1
        %v3883 = vrot.slane %v3813, 1
        %v3891 = vsel %vm1098, %v3877, 0.0
        %v3892 = vsel %vm1098, %v3878, 0.0
        %v3893 = vsel %vm1098, %v3879, 0.0
        %v3894 = vsel %vm1098, %v3880, 0.0
        %v3895 = vsel %vm1098, %v3881, 0.0
        %v3896 = vsel %vm1098, %v3882, 0.0
        %v3897 = vsel %vm1098, %v3883, 0.0
        %v3898 = vperm.slane %v2913, 2
        %v3899 = vmul.f32 %v1369, %v3898
        %v3900 = vmul.f32 %v3891, %v3898
        %v3901 = vmul.f32 %v3892, %v3898
        %v3902 = vmul.f32 %v3893, %v3898
        %v3903 = vmul.f32 %v3894, %v3898
        %v3904 = vmul.f32 %v3895, %v3898
        %v3905 = vmul.f32 %v3896, %v3898
        %v3906 = vmul.f32 %v3897, %v3898
        %v3907 = vadd.f32 %v3869, %v3899
        %v3908 = vadd.f32 %v3870, %v3900
        %v3909 = vadd.f32 %v3871, %v3901
        %v3910 = vadd.f32 %v3872, %v3902
        %v3911 = vadd.f32 %v3873, %v3903
        %v3912 = vadd.f32 %v3874, %v3904
        %v3913 = vadd.f32 %v3875, %v3905
        %v3914 = vadd.f32 %v3876, %v3906
        %v3916 = vrot.slane %v3814, 7
        %v3918 = vsel %vm1164, 0.0, %v3916
        %v3919 = vperm.slane %v2913, 3
        %v3920 = vmul.f32 %v3836, %v3919
        %v3921 = vmul.f32 %v3837, %v3919
        %v3922 = vmul.f32 %v3838, %v3919
        %v3923 = vmul.f32 %v3839, %v3919
        %v3924 = vmul.f32 %v3840, %v3919
        %v3925 = vmul.f32 %v3841, %v3919
        %v3926 = vmul.f32 %v3842, %v3919
        %v3927 = vmul.f32 %v3918, %v3919
        %v3928 = vadd.f32 %v3907, %v3920
        %v3929 = vadd.f32 %v3908, %v3921
        %v3930 = vadd.f32 %v3909, %v3922
        %v3931 = vadd.f32 %v3910, %v3923
        %v3932 = vadd.f32 %v3911, %v3924
        %v3933 = vadd.f32 %v3912, %v3925
        %v3934 = vadd.f32 %v3913, %v3926
        %v3935 = vadd.f32 %v3914, %v3927
        %v3936 = vperm.slane %v2913, 4
        %v3937 = vmul.f32 %v3807, %v3936
        %v3938 = vmul.f32 %v3808, %v3936
        %v3939 = vmul.f32 %v3809, %v3936
        %v3940 = vmul.f32 %v3810, %v3936
        %v3941 = vmul.f32 %v3811, %v3936
        %v3942 = vmul.f32 %v3812, %v3936
        %v3943 = vmul.f32 %v3813, %v3936
        %v3944 = vmul.f32 %v3814, %v3936
        %v3945 = vadd.f32 %v3928, %v3937
        %v3946 = vadd.f32 %v3929, %v3938
        %v3947 = vadd.f32 %v3930, %v3939
        %v3948 = vadd.f32 %v3931, %v3940
        %v3949 = vadd.f32 %v3932, %v3941
        %v3950 = vadd.f32 %v3933, %v3942
        %v3951 = vadd.f32 %v3934, %v3943
        %v3952 = vadd.f32 %v3935, %v3944
        %v3953 = vrot.slane %v3814, 1
        %v3955 = vsel %vm1098, %v3953, 0.0
        %v3956 = vperm.slane %v2913, 5
        %v3957 = vmul.f32 %v3891, %v3956
        %v3958 = vmul.f32 %v3892, %v3956
        %v3959 = vmul.f32 %v3893, %v3956
        %v3960 = vmul.f32 %v3894, %v3956
        %v3961 = vmul.f32 %v3895, %v3956
        %v3962 = vmul.f32 %v3896, %v3956
        %v3963 = vmul.f32 %v3897, %v3956
        %v3964 = vmul.f32 %v3955, %v3956
        %v3965 = vadd.f32 %v3945, %v3957
        %v3966 = vadd.f32 %v3946, %v3958
        %v3967 = vadd.f32 %v3947, %v3959
        %v3968 = vadd.f32 %v3948, %v3960
        %v3969 = vadd.f32 %v3949, %v3961
        %v3970 = vadd.f32 %v3950, %v3962
        %v3971 = vadd.f32 %v3951, %v3963
        %v3972 = vadd.f32 %v3952, %v3964
        %v3973 = vperm.slane %v2913, 6
        %v3974 = vmul.f32 %v3837, %v3973
        %v3975 = vmul.f32 %v3838, %v3973
        %v3976 = vmul.f32 %v3839, %v3973
        %v3977 = vmul.f32 %v3840, %v3973
        %v3978 = vmul.f32 %v3841, %v3973
        %v3979 = vmul.f32 %v3842, %v3973
        %v3980 = vmul.f32 %v3918, %v3973
        %v3981 = vmul.f32 %v1242, %v3973
        %v3982 = vadd.f32 %v3965, %v3974
        %v3983 = vadd.f32 %v3966, %v3975
        %v3984 = vadd.f32 %v3967, %v3976
        %v3985 = vadd.f32 %v3968, %v3977
        %v3986 = vadd.f32 %v3969, %v3978
        %v3987 = vadd.f32 %v3970, %v3979
        %v3988 = vadd.f32 %v3971, %v3980
        %v3989 = vadd.f32 %v3972, %v3981
        %v3990 = vperm.slane %v2913, 7
        %v3991 = vmul.f32 %v3808, %v3990
        %v3992 = vmul.f32 %v3809, %v3990
        %v3993 = vmul.f32 %v3810, %v3990
        %v3994 = vmul.f32 %v3811, %v3990
        %v3995 = vmul.f32 %v3812, %v3990
        %v3996 = vmul.f32 %v3813, %v3990
        %v3997 = vmul.f32 %v3814, %v3990
        %v3998 = vmul.f32 %v3990, 0.0
        %v3999 = vadd.f32 %v3982, %v3991
        %v4000 = vadd.f32 %v3983, %v3992
        %v4001 = vadd.f32 %v3984, %v3993
        %v4002 = vadd.f32 %v3985, %v3994
        %v4003 = vadd.f32 %v3986, %v3995
        %v4004 = vadd.f32 %v3987, %v3996
        %v4005 = vadd.f32 %v3988, %v3997
        %v4006 = vadd.f32 %v3989, %v3998
        %v4007 = vperm.slane %v2914, 0
        %v4008 = vmul.f32 %v3892, %v4007
        %v4009 = vmul.f32 %v3893, %v4007
        %v4010 = vmul.f32 %v3894, %v4007
        %v4011 = vmul.f32 %v3895, %v4007
        %v4012 = vmul.f32 %v3896, %v4007
        %v4013 = vmul.f32 %v3897, %v4007
        %v4014 = vmul.f32 %v3955, %v4007
        %v4015 = vmul.f32 %v1369, %v4007
        %v4016 = vadd.f32 %v3999, %v4008
        %v4017 = vadd.f32 %v4000, %v4009
        %v4018 = vadd.f32 %v4001, %v4010
        %v4019 = vadd.f32 %v4002, %v4011
        %v4020 = vadd.f32 %v4003, %v4012
        %v4021 = vadd.f32 %v4004, %v4013
        %v4022 = vadd.f32 %v4005, %v4014
        %v4023 = vadd.f32 %v4006, %v4015
        %v4024 = vadd.f32 %v2897, %v3310
        %v4025 = vadd.f32 %v2898, %v3312
        %v4026 = vadd.f32 %v2899, %v3315
        %v4027 = vadd.f32 %v2900, %v3317
        %v4028 = vadd.f32 %v2901, %v3320
        %v4029 = vadd.f32 %v2902, %v3322
        %v4030 = vadd.f32 %v2903, %v3325
        %v4031 = vadd.f32 %v2904, %v3327
        %v4032 = vadd.f32 %v4024, %v4016
        %v4033 = vadd.f32 %v4025, %v4017
        %v4034 = vadd.f32 %v4026, %v4018
        %v4035 = vadd.f32 %v4027, %v4019
        %v4036 = vadd.f32 %v4028, %v4020
        %v4037 = vadd.f32 %v4029, %v4021
        %v4038 = vadd.f32 %v4030, %v4022
        %v4039 = vadd.f32 %v4031, %v4023
        %v4040 = vsel %vm1264, %v4032, 0.0
        %4041 = vadd.xlane.f32.xlu0 %v4040
        %v4042 = vpop.xlane.xlu0 %4041
        %v4043 = vsel %vm1264, %v4033, 0.0
        %4044 = vadd.xlane.f32.xlu0 %v4043
        %v4045 = vpop.xlane.xlu0 %4044
        %v4046 = vsel %vm1264, %v4034, 0.0
        %4047 = vadd.xlane.f32.xlu0 %v4046
        %v4048 = vpop.xlane.xlu0 %4047
        %v4049 = vsel %vm1264, %v4035, 0.0
        %4050 = vadd.xlane.f32.xlu0 %v4049
        %v4051 = vpop.xlane.xlu0 %4050
        %v4052 = vsel %vm1264, %v4036, 0.0
        %4053 = vadd.xlane.f32.xlu0 %v4052
        %v4054 = vpop.xlane.xlu0 %4053
        %v4055 = vsel %vm1264, %v4037, 0.0
        %4056 = vadd.xlane.f32.xlu0 %v4055
        %v4057 = vpop.xlane.xlu0 %4056
        %v4058 = vsel %vm1264, %v4038, 0.0
        %4059 = vadd.xlane.f32.xlu0 %v4058
        %v4060 = vpop.xlane.xlu0 %4059
        %v4061 = vsel %vm1264, %v4039, 0.0
        %4062 = vadd.xlane.f32.xlu0 %v4061
        %v4063 = vpop.xlane.xlu0 %4062
        %v4064 = vrcp.pop 16.0
        %v4065 = vmul.f32 16.0, %v4064
        %v4066 = vsub.f32 1.0, %v4065
        %v4067 = vmul.f32 %v4064, %v4066
        %v4068 = vadd.f32 %v4064, %v4067
        %vm4069 = vweird.f32 %v4064
        %v4070 = vsel %vm4069, %v4064, %v4068
        %v4071 = vmul.f32 %v4042, %v4070
        %v4072 = vmul.f32 %v4045, %v4070
        %v4073 = vmul.f32 %v4048, %v4070
        %v4074 = vmul.f32 %v4051, %v4070
        %v4075 = vmul.f32 %v4054, %v4070
        %v4076 = vmul.f32 %v4057, %v4070
        %v4077 = vmul.f32 %v4060, %v4070
        %v4078 = vmul.f32 %v4063, %v4070
        %v4079 = vsub.f32 %v4032, %v4071
        %v4080 = vsub.f32 %v4033, %v4072
        %v4081 = vsub.f32 %v4034, %v4073
        %v4082 = vsub.f32 %v4035, %v4074
        %v4083 = vsub.f32 %v4036, %v4075
        %v4084 = vsub.f32 %v4037, %v4076
        %v4085 = vsub.f32 %v4038, %v4077
        %v4086 = vsub.f32 %v4039, %v4078
        %v4087 = vmul.f32 %v4079, %v4079
        %v4088 = vmul.f32 %v4080, %v4080
        %v4089 = vmul.f32 %v4081, %v4081
        %v4090 = vmul.f32 %v4082, %v4082
        %v4091 = vmul.f32 %v4083, %v4083
        %v4092 = vmul.f32 %v4084, %v4084
        %v4093 = vmul.f32 %v4085, %v4085
        %v4094 = vmul.f32 %v4086, %v4086
        %v4095 = vsel %vm1264, %v4087, 0.0
        %4096 = vadd.xlane.f32.xlu0 %v4095
        %v4097 = vpop.xlane.xlu0 %4096
        %v4098 = vsel %vm1264, %v4088, 0.0
        %4099 = vadd.xlane.f32.xlu0 %v4098
        %v4100 = vpop.xlane.xlu0 %4099
        %v4101 = vsel %vm1264, %v4089, 0.0
        %4102 = vadd.xlane.f32.xlu0 %v4101
        %v4103 = vpop.xlane.xlu0 %4102
        %v4104 = vsel %vm1264, %v4090, 0.0
        %4105 = vadd.xlane.f32.xlu0 %v4104
        %v4106 = vpop.xlane.xlu0 %4105
        %v4107 = vsel %vm1264, %v4091, 0.0
        %4108 = vadd.xlane.f32.xlu0 %v4107
        %v4109 = vpop.xlane.xlu0 %4108
        %v4110 = vsel %vm1264, %v4092, 0.0
        %4111 = vadd.xlane.f32.xlu0 %v4110
        %v4112 = vpop.xlane.xlu0 %4111
        %v4113 = vsel %vm1264, %v4093, 0.0
        %4114 = vadd.xlane.f32.xlu0 %v4113
        %v4115 = vpop.xlane.xlu0 %4114
        %v4116 = vsel %vm1264, %v4094, 0.0
        %4117 = vadd.xlane.f32.xlu0 %v4116
        %v4118 = vpop.xlane.xlu0 %4117
        %v4119 = vmul.f32 %v4097, %v4070
        %v4120 = vmul.f32 %v4100, %v4070
        %v4121 = vmul.f32 %v4103, %v4070
        %v4122 = vmul.f32 %v4106, %v4070
        %v4123 = vmul.f32 %v4109, %v4070
        %v4124 = vmul.f32 %v4112, %v4070
        %v4125 = vmul.f32 %v4115, %v4070
        %v4126 = vmul.f32 %v4118, %v4070
        %v4127 = vadd.f32 %v4119, 1e-05
        %v4128 = vadd.f32 %v4120, 1e-05
        %v4129 = vadd.f32 %v4121, 1e-05
        %v4130 = vadd.f32 %v4122, 1e-05
        %v4131 = vadd.f32 %v4123, 1e-05
        %v4132 = vadd.f32 %v4124, 1e-05
        %v4133 = vadd.f32 %v4125, 1e-05
        %v4134 = vadd.f32 %v4126, 1e-05
        %v4135 = vrsqrt.pop %v4127
        %v4136 = vmul.f32 %v4135, %v4127
        %v4137 = vmul.f32 %v4136, %v4135
        %v4138 = vmul.f32 0.5, %v4137
        %v4139 = vsub.f32 1.5, %v4138
        %v4140 = vmul.f32 %v4135, %v4139
        %vm4141 = vweird.f32 %v4127
        %vm4142 = vweird.f32 %v4135
        %vm4143 = vmor %vm4141, %vm4142
        %v4144 = vsel %vm4143, %v4135, %v4140
        %v4145 = vrsqrt.pop %v4128
        %v4146 = vmul.f32 %v4145, %v4128
        %v4147 = vmul.f32 %v4146, %v4145
        %v4148 = vmul.f32 0.5, %v4147
        %v4149 = vsub.f32 1.5, %v4148
        %v4150 = vmul.f32 %v4145, %v4149
        %vm4151 = vweird.f32 %v4128
        %vm4152 = vweird.f32 %v4145
        %vm4153 = vmor %vm4151, %vm4152
        %v4154 = vsel %vm4153, %v4145, %v4150
        %v4155 = vrsqrt.pop %v4129
        %v4156 = vmul.f32 %v4155, %v4129
        %v4157 = vmul.f32 %v4156, %v4155
        %v4158 = vmul.f32 0.5, %v4157
        %v4159 = vsub.f32 1.5, %v4158
        %v4160 = vmul.f32 %v4155, %v4159
        %vm4161 = vweird.f32 %v4129
        %vm4162 = vweird.f32 %v4155
        %vm4163 = vmor %vm4161, %vm4162
        %v4164 = vsel %vm4163, %v4155, %v4160
        %v4165 = vrsqrt.pop %v4130
        %v4166 = vmul.f32 %v4165, %v4130
        %v4167 = vmul.f32 %v4166, %v4165
        %v4168 = vmul.f32 0.5, %v4167
        %v4169 = vsub.f32 1.5, %v4168
        %v4170 = vmul.f32 %v4165, %v4169
        %vm4171 = vweird.f32 %v4130
        %vm4172 = vweird.f32 %v4165
        %vm4173 = vmor %vm4171, %vm4172
        %v4174 = vsel %vm4173, %v4165, %v4170
        %v4175 = vrsqrt.pop %v4131
        %v4176 = vmul.f32 %v4175, %v4131
        %v4177 = vmul.f32 %v4176, %v4175
        %v4178 = vmul.f32 0.5, %v4177
        %v4179 = vsub.f32 1.5, %v4178
        %v4180 = vmul.f32 %v4175, %v4179
        %vm4181 = vweird.f32 %v4131
        %vm4182 = vweird.f32 %v4175
        %vm4183 = vmor %vm4181, %vm4182
        %v4184 = vsel %vm4183, %v4175, %v4180
        %v4185 = vrsqrt.pop %v4132
        %v4186 = vmul.f32 %v4185, %v4132
        %v4187 = vmul.f32 %v4186, %v4185
        %v4188 = vmul.f32 0.5, %v4187
        %v4189 = vsub.f32 1.5, %v4188
        %v4190 = vmul.f32 %v4185, %v4189
        %vm4191 = vweird.f32 %v4132
        %vm4192 = vweird.f32 %v4185
        %vm4193 = vmor %vm4191, %vm4192
        %v4194 = vsel %vm4193, %v4185, %v4190
        %v4195 = vrsqrt.pop %v4133
        %v4196 = vmul.f32 %v4195, %v4133
        %v4197 = vmul.f32 %v4196, %v4195
        %v4198 = vmul.f32 0.5, %v4197
        %v4199 = vsub.f32 1.5, %v4198
        %v4200 = vmul.f32 %v4195, %v4199
        %vm4201 = vweird.f32 %v4133
        %vm4202 = vweird.f32 %v4195
        %vm4203 = vmor %vm4201, %vm4202
        %v4204 = vsel %vm4203, %v4195, %v4200
        %v4205 = vrsqrt.pop %v4134
        %v4206 = vmul.f32 %v4205, %v4134
        %v4207 = vmul.f32 %v4206, %v4205
        %v4208 = vmul.f32 0.5, %v4207
        %v4209 = vsub.f32 1.5, %v4208
        %v4210 = vmul.f32 %v4205, %v4209
        %vm4211 = vweird.f32 %v4134
        %vm4212 = vweird.f32 %v4205
        %vm4213 = vmor %vm4211, %vm4212
        %v4214 = vsel %vm4213, %v4205, %v4210
        %v4215 = vmul.f32 %v4079, %v4144
        %v4216 = vmul.f32 %v4080, %v4154
        %v4217 = vmul.f32 %v4081, %v4164
        %v4218 = vmul.f32 %v4082, %v4174
        %v4219 = vmul.f32 %v4083, %v4184
        %v4220 = vmul.f32 %v4084, %v4194
        %v4221 = vmul.f32 %v4085, %v4204
        %v4222 = vmul.f32 %v4086, %v4214
        %v4224 = vperm.slane %v2915, 0
        %v4226 = vmul.f32 %v4215, %v4224
        %v4227 = vmul.f32 %v4216, %v4224
        %v4228 = vmul.f32 %v4217, %v4224
        %v4229 = vmul.f32 %v4218, %v4224
        %v4230 = vmul.f32 %v4219, %v4224
        %v4231 = vmul.f32 %v4220, %v4224
        %v4232 = vmul.f32 %v4221, %v4224
        %v4233 = vmul.f32 %v4222, %v4224
        %v4235 = vperm.slane %v2916, 0
        %v4237 = vadd.f32 %v4226, %v4235
        %v4238 = vadd.f32 %v4227, %v4235
        %v4239 = vadd.f32 %v4228, %v4235
        %v4240 = vadd.f32 %v4229, %v4235
        %v4241 = vadd.f32 %v4230, %v4235
        %v4242 = vadd.f32 %v4231, %v4235
        %v4243 = vadd.f32 %v4232, %v4235
        %v4244 = vadd.f32 %v4233, %v4235
        %v4245 = vpack.c.bf16 %v4238, %v4237
        %v4246 = vpack.c.bf16 %v4240, %v4239
        %v4247 = vpack.c.bf16 %v4242, %v4241
        %v4248 = vpack.c.bf16 %v4244, %v4243
        %v4251 = vunpack.c.l.b16 %v2917
        %v4252 = vunpack.c.l.b16 %v2918
        %v4253 = vpack.c.b16 %v4252, %v4251
        %v4256 = vsel %vm1264, %v4245, 0
        %v4259 = vsel %vm1264, %v4246, 0
        %v4262 = vsel %vm1264, %v4247, 0
        %v4265 = vsel %vm1264, %v4248, 0
        %4267 = vmatpush.bf16.msra.mxu0 0
        %4268 = vmatpush.bf16.msra.mxu0 0
        %4269 = vmatpush.bf16.msra.mxu0 0
        %4270 = vmatpush.bf16.msra.mxu0 0
        %4271 = vmatpush.bf16.msra.mxu0 0
        %4272 = vmatpush.bf16.msra.mxu0 0
        %4273 = vmatpush.bf16.msra.mxu0 0
        %4274 = vmatpush.bf16.msra.mxu0 %v4253
        %4275 = vmatmul.bf16.gmra.mxu0 %v4256
        %v4276 = vpop.f32.mrf.mxu0
        %v4277 = vadd.f32 0.0, %v4276
        %v4278 = vpop.f32.mrf.mxu0
        %v4279 = vadd.f32 0.0, %v4278
        %4280 = vmatmul.bf16.gmra.mxu0 %v4259
        %v4281 = vpop.f32.mrf.mxu0
        %v4282 = vadd.f32 0.0, %v4281
        %v4283 = vpop.f32.mrf.mxu0
        %v4284 = vadd.f32 0.0, %v4283
        %4285 = vmatmul.bf16.gmra.mxu0 %v4262
        %v4286 = vpop.f32.mrf.mxu0
        %v4287 = vadd.f32 0.0, %v4286
        %v4288 = vpop.f32.mrf.mxu0
        %v4289 = vadd.f32 0.0, %v4288
        %4290 = vmatmul.bf16.gmra.mxu0 %v4265
        %v4291 = vpop.f32.mrf.mxu0
        %v4292 = vadd.f32 0.0, %v4291
        %v4293 = vpop.f32.mrf.mxu0
        %v4294 = vadd.f32 0.0, %v4293
        %4295 = vdwg.mxu0
        %v4296 = vmul.f32 %v4277, 0.5
        %v4297 = vmul.f32 %v4279, 0.5
        %v4298 = vmul.f32 %v4282, 0.5
        %v4299 = vmul.f32 %v4284, 0.5
        %v4300 = vmul.f32 %v4287, 0.5
        %v4301 = vmul.f32 %v4289, 0.5
        %v4302 = vmul.f32 %v4292, 0.5
        %v4303 = vmul.f32 %v4294, 0.5
        %v4304 = vmul.f32 %v4277, 0.044715
        %v4305 = vmul.f32 %v4279, 0.044715
        %v4306 = vmul.f32 %v4282, 0.044715
        %v4307 = vmul.f32 %v4284, 0.044715
        %v4308 = vmul.f32 %v4287, 0.044715
        %v4309 = vmul.f32 %v4289, 0.044715
        %v4310 = vmul.f32 %v4292, 0.044715
        %v4311 = vmul.f32 %v4294, 0.044715
        %v4312 = vmul.f32 %v4304, %v4277
        %v4313 = vmul.f32 %v4305, %v4279
        %v4314 = vmul.f32 %v4306, %v4282
        %v4315 = vmul.f32 %v4307, %v4284
        %v4316 = vmul.f32 %v4308, %v4287
        %v4317 = vmul.f32 %v4309, %v4289
        %v4318 = vmul.f32 %v4310, %v4292
        %v4319 = vmul.f32 %v4311, %v4294
        %v4320 = vmul.f32 %v4312, %v4277
        %v4321 = vmul.f32 %v4313, %v4279
        %v4322 = vmul.f32 %v4314, %v4282
        %v4323 = vmul.f32 %v4315, %v4284
        %v4324 = vmul.f32 %v4316, %v4287
        %v4325 = vmul.f32 %v4317, %v4289
        %v4326 = vmul.f32 %v4318, %v4292
        %v4327 = vmul.f32 %v4319, %v4294
        %v4328 = vadd.f32 %v4277, %v4320
        %v4329 = vadd.f32 %v4279, %v4321
        %v4330 = vadd.f32 %v4282, %v4322
        %v4331 = vadd.f32 %v4284, %v4323
        %v4332 = vadd.f32 %v4287, %v4324
        %v4333 = vadd.f32 %v4289, %v4325
        %v4334 = vadd.f32 %v4292, %v4326
        %v4335 = vadd.f32 %v4294, %v4327
        %v4336 = vmul.f32 %v4328, 0.7978846
        %v4337 = vmul.f32 %v4329, 0.7978846
        %v4338 = vmul.f32 %v4330, 0.7978846
        %v4339 = vmul.f32 %v4331, 0.7978846
        %v4340 = vmul.f32 %v4332, 0.7978846
        %v4341 = vmul.f32 %v4333, 0.7978846
        %v4342 = vmul.f32 %v4334, 0.7978846
        %v4343 = vmul.f32 %v4335, 0.7978846
        %v4344 = vtanh.pop %v4336
        %v4345 = vtanh.pop %v4337
        %v4346 = vtanh.pop %v4338
        %v4347 = vtanh.pop %v4339
        %v4348 = vtanh.pop %v4340
        %v4349 = vtanh.pop %v4341
        %v4350 = vtanh.pop %v4342
        %v4351 = vtanh.pop %v4343
        %v4352 = vadd.f32 %v4344, 1.0
        %v4353 = vadd.f32 %v4345, 1.0
        %v4354 = vadd.f32 %v4346, 1.0
        %v4355 = vadd.f32 %v4347, 1.0
        %v4356 = vadd.f32 %v4348, 1.0
        %v4357 = vadd.f32 %v4349, 1.0
        %v4358 = vadd.f32 %v4350, 1.0
        %v4359 = vadd.f32 %v4351, 1.0
        %v4360 = vmul.f32 %v4296, %v4352
        %v4361 = vmul.f32 %v4297, %v4353
        %v4362 = vmul.f32 %v4298, %v4354
        %v4363 = vmul.f32 %v4299, %v4355
        %v4364 = vmul.f32 %v4300, %v4356
        %v4365 = vmul.f32 %v4301, %v4357
        %v4366 = vmul.f32 %v4302, %v4358
        %v4367 = vmul.f32 %v4303, %v4359
        %v4375 = vrot.slane %v4360, 7
        %v4376 = vrot.slane %v4361, 7
        %v4377 = vrot.slane %v4362, 7
        %v4378 = vrot.slane %v4363, 7
        %v4379 = vrot.slane %v4364, 7
        %v4380 = vrot.slane %v4365, 7
        %v4381 = vrot.slane %v4366, 7
        %v4389 = vsel %vm1164, 0.0, %v4375
        %v4390 = vsel %vm1164, 0.0, %v4376
        %v4391 = vsel %vm1164, 0.0, %v4377
        %v4392 = vsel %vm1164, 0.0, %v4378
        %v4393 = vsel %vm1164, 0.0, %v4379
        %v4394 = vsel %vm1164, 0.0, %v4380
        %v4395 = vsel %vm1164, 0.0, %v4381
        %v4396 = vperm.slane %v2919, 0
        %v4397 = vmul.f32 %v1242, %v4396
        %v4398 = vmul.f32 %v4389, %v4396
        %v4399 = vmul.f32 %v4390, %v4396
        %v4400 = vmul.f32 %v4391, %v4396
        %v4401 = vmul.f32 %v4392, %v4396
        %v4402 = vmul.f32 %v4393, %v4396
        %v4403 = vmul.f32 %v4394, %v4396
        %v4404 = vmul.f32 %v4395, %v4396
        %v4405 = vadd.f32 %v4397, 0.0
        %v4406 = vadd.f32 %v4398, 0.0
        %v4407 = vadd.f32 %v4399, 0.0
        %v4408 = vadd.f32 %v4400, 0.0
        %v4409 = vadd.f32 %v4401, 0.0
        %v4410 = vadd.f32 %v4402, 0.0
        %v4411 = vadd.f32 %v4403, 0.0
        %v4412 = vadd.f32 %v4404, 0.0
        %v4413 = vperm.slane %v2919, 1
        %v4414 = vmul.f32 %v4413, 0.0
        %v4415 = vmul.f32 %v4360, %v4413
        %v4416 = vmul.f32 %v4361, %v4413
        %v4417 = vmul.f32 %v4362, %v4413
        %v4418 = vmul.f32 %v4363, %v4413
        %v4419 = vmul.f32 %v4364, %v4413
        %v4420 = vmul.f32 %v4365, %v4413
        %v4421 = vmul.f32 %v4366, %v4413
        %v4422 = vadd.f32 %v4405, %v4414
        %v4423 = vadd.f32 %v4406, %v4415
        %v4424 = vadd.f32 %v4407, %v4416
        %v4425 = vadd.f32 %v4408, %v4417
        %v4426 = vadd.f32 %v4409, %v4418
        %v4427 = vadd.f32 %v4410, %v4419
        %v4428 = vadd.f32 %v4411, %v4420
        %v4429 = vadd.f32 %v4412, %v4421
        %v4430 = vrot.slane %v4360, 1
        %v4431 = vrot.slane %v4361, 1
        %v4432 = vrot.slane %v4362, 1
        %v4433 = vrot.slane %v4363, 1
        %v4434 = vrot.slane %v4364, 1
        %v4435 = vrot.slane %v4365, 1
        %v4436 = vrot.slane %v4366, 1
        %v4444 = vsel %vm1098, %v4430, 0.0
        %v4445 = vsel %vm1098, %v4431, 0.0
        %v4446 = vsel %vm1098, %v4432, 0.0
        %v4447 = vsel %vm1098, %v4433, 0.0
        %v4448 = vsel %vm1098, %v4434, 0.0
        %v4449 = vsel %vm1098, %v4435, 0.0
        %v4450 = vsel %vm1098, %v4436, 0.0
        %v4451 = vperm.slane %v2919, 2
        %v4452 = vmul.f32 %v1369, %v4451
        %v4453 = vmul.f32 %v4444, %v4451
        %v4454 = vmul.f32 %v4445, %v4451
        %v4455 = vmul.f32 %v4446, %v4451
        %v4456 = vmul.f32 %v4447, %v4451
        %v4457 = vmul.f32 %v4448, %v4451
        %v4458 = vmul.f32 %v4449, %v4451
        %v4459 = vmul.f32 %v4450, %v4451
        %v4460 = vadd.f32 %v4422, %v4452
        %v4461 = vadd.f32 %v4423, %v4453
        %v4462 = vadd.f32 %v4424, %v4454
        %v4463 = vadd.f32 %v4425, %v4455
        %v4464 = vadd.f32 %v4426, %v4456
        %v4465 = vadd.f32 %v4427, %v4457
        %v4466 = vadd.f32 %v4428, %v4458
        %v4467 = vadd.f32 %v4429, %v4459
        %v4469 = vrot.slane %v4367, 7
        %v4471 = vsel %vm1164, 0.0, %v4469
        %v4472 = vperm.slane %v2919, 3
        %v4473 = vmul.f32 %v4389, %v4472
        %v4474 = vmul.f32 %v4390, %v4472
        %v4475 = vmul.f32 %v4391, %v4472
        %v4476 = vmul.f32 %v4392, %v4472
        %v4477 = vmul.f32 %v4393, %v4472
        %v4478 = vmul.f32 %v4394, %v4472
        %v4479 = vmul.f32 %v4395, %v4472
        %v4480 = vmul.f32 %v4471, %v4472
        %v4481 = vadd.f32 %v4460, %v4473
        %v4482 = vadd.f32 %v4461, %v4474
        %v4483 = vadd.f32 %v4462, %v4475
        %v4484 = vadd.f32 %v4463, %v4476
        %v4485 = vadd.f32 %v4464, %v4477
        %v4486 = vadd.f32 %v4465, %v4478
        %v4487 = vadd.f32 %v4466, %v4479
        %v4488 = vadd.f32 %v4467, %v4480
        %v4489 = vperm.slane %v2919, 4
        %v4490 = vmul.f32 %v4360, %v4489
        %v4491 = vmul.f32 %v4361, %v4489
        %v4492 = vmul.f32 %v4362, %v4489
        %v4493 = vmul.f32 %v4363, %v4489
        %v4494 = vmul.f32 %v4364, %v4489
        %v4495 = vmul.f32 %v4365, %v4489
        %v4496 = vmul.f32 %v4366, %v4489
        %v4497 = vmul.f32 %v4367, %v4489
        %v4498 = vadd.f32 %v4481, %v4490
        %v4499 = vadd.f32 %v4482, %v4491
        %v4500 = vadd.f32 %v4483, %v4492
        %v4501 = vadd.f32 %v4484, %v4493
        %v4502 = vadd.f32 %v4485, %v4494
        %v4503 = vadd.f32 %v4486, %v4495
        %v4504 = vadd.f32 %v4487, %v4496
        %v4505 = vadd.f32 %v4488, %v4497
        %v4506 = vrot.slane %v4367, 1
        %v4508 = vsel %vm1098, %v4506, 0.0
        %v4509 = vperm.slane %v2919, 5
        %v4510 = vmul.f32 %v4444, %v4509
        %v4511 = vmul.f32 %v4445, %v4509
        %v4512 = vmul.f32 %v4446, %v4509
        %v4513 = vmul.f32 %v4447, %v4509
        %v4514 = vmul.f32 %v4448, %v4509
        %v4515 = vmul.f32 %v4449, %v4509
        %v4516 = vmul.f32 %v4450, %v4509
        %v4517 = vmul.f32 %v4508, %v4509
        %v4518 = vadd.f32 %v4498, %v4510
        %v4519 = vadd.f32 %v4499, %v4511
        %v4520 = vadd.f32 %v4500, %v4512
        %v4521 = vadd.f32 %v4501, %v4513
        %v4522 = vadd.f32 %v4502, %v4514
        %v4523 = vadd.f32 %v4503, %v4515
        %v4524 = vadd.f32 %v4504, %v4516
        %v4525 = vadd.f32 %v4505, %v4517
        %v4526 = vperm.slane %v2919, 6
        %v4527 = vmul.f32 %v4390, %v4526
        %v4528 = vmul.f32 %v4391, %v4526
        %v4529 = vmul.f32 %v4392, %v4526
        %v4530 = vmul.f32 %v4393, %v4526
        %v4531 = vmul.f32 %v4394, %v4526
        %v4532 = vmul.f32 %v4395, %v4526
        %v4533 = vmul.f32 %v4471, %v4526
        %v4534 = vmul.f32 %v1242, %v4526
        %v4535 = vadd.f32 %v4518, %v4527
        %v4536 = vadd.f32 %v4519, %v4528
        %v4537 = vadd.f32 %v4520, %v4529
        %v4538 = vadd.f32 %v4521, %v4530
        %v4539 = vadd.f32 %v4522, %v4531
        %v4540 = vadd.f32 %v4523, %v4532
        %v4541 = vadd.f32 %v4524, %v4533
        %v4542 = vadd.f32 %v4525, %v4534
        %v4543 = vperm.slane %v2919, 7
        %v4544 = vmul.f32 %v4361, %v4543
        %v4545 = vmul.f32 %v4362, %v4543
        %v4546 = vmul.f32 %v4363, %v4543
        %v4547 = vmul.f32 %v4364, %v4543
        %v4548 = vmul.f32 %v4365, %v4543
        %v4549 = vmul.f32 %v4366, %v4543
        %v4550 = vmul.f32 %v4367, %v4543
        %v4551 = vmul.f32 %v4543, 0.0
        %v4552 = vadd.f32 %v4535, %v4544
        %v4553 = vadd.f32 %v4536, %v4545
        %v4554 = vadd.f32 %v4537, %v4546
        %v4555 = vadd.f32 %v4538, %v4547
        %v4556 = vadd.f32 %v4539, %v4548
        %v4557 = vadd.f32 %v4540, %v4549
        %v4558 = vadd.f32 %v4541, %v4550
        %v4559 = vadd.f32 %v4542, %v4551
        %v4560 = vperm.slane %v2920, 0
        %v4561 = vmul.f32 %v4445, %v4560
        %v4562 = vmul.f32 %v4446, %v4560
        %v4563 = vmul.f32 %v4447, %v4560
        %v4564 = vmul.f32 %v4448, %v4560
        %v4565 = vmul.f32 %v4449, %v4560
        %v4566 = vmul.f32 %v4450, %v4560
        %v4567 = vmul.f32 %v4508, %v4560
        %v4568 = vmul.f32 %v1369, %v4560
        %v4569 = vadd.f32 %v4552, %v4561
        %v4570 = vadd.f32 %v4553, %v4562
        %v4571 = vadd.f32 %v4554, %v4563
        %v4572 = vadd.f32 %v4555, %v4564
        %v4573 = vadd.f32 %v4556, %v4565
        %v4574 = vadd.f32 %v4557, %v4566
        %v4575 = vadd.f32 %v4558, %v4567
        %v4576 = vadd.f32 %v4559, %v4568
        %v4577 = vmul.f32 %v4569, 0.5
        %v4578 = vmul.f32 %v4570, 0.5
        %v4579 = vmul.f32 %v4571, 0.5
        %v4580 = vmul.f32 %v4572, 0.5
        %v4581 = vmul.f32 %v4573, 0.5
        %v4582 = vmul.f32 %v4574, 0.5
        %v4583 = vmul.f32 %v4575, 0.5
        %v4584 = vmul.f32 %v4576, 0.5
        %v4585 = vmul.f32 %v4569, 0.044715
        %v4586 = vmul.f32 %v4570, 0.044715
        %v4587 = vmul.f32 %v4571, 0.044715
        %v4588 = vmul.f32 %v4572, 0.044715
        %v4589 = vmul.f32 %v4573, 0.044715
        %v4590 = vmul.f32 %v4574, 0.044715
        %v4591 = vmul.f32 %v4575, 0.044715
        %v4592 = vmul.f32 %v4576, 0.044715
        %v4593 = vmul.f32 %v4585, %v4569
        %v4594 = vmul.f32 %v4586, %v4570
        %v4595 = vmul.f32 %v4587, %v4571
        %v4596 = vmul.f32 %v4588, %v4572
        %v4597 = vmul.f32 %v4589, %v4573
        %v4598 = vmul.f32 %v4590, %v4574
        %v4599 = vmul.f32 %v4591, %v4575
        %v4600 = vmul.f32 %v4592, %v4576
        %v4601 = vmul.f32 %v4593, %v4569
        %v4602 = vmul.f32 %v4594, %v4570
        %v4603 = vmul.f32 %v4595, %v4571
        %v4604 = vmul.f32 %v4596, %v4572
        %v4605 = vmul.f32 %v4597, %v4573
        %v4606 = vmul.f32 %v4598, %v4574
        %v4607 = vmul.f32 %v4599, %v4575
        %v4608 = vmul.f32 %v4600, %v4576
        %v4609 = vadd.f32 %v4569, %v4601
        %v4610 = vadd.f32 %v4570, %v4602
        %v4611 = vadd.f32 %v4571, %v4603
        %v4612 = vadd.f32 %v4572, %v4604
        %v4613 = vadd.f32 %v4573, %v4605
        %v4614 = vadd.f32 %v4574, %v4606
        %v4615 = vadd.f32 %v4575, %v4607
        %v4616 = vadd.f32 %v4576, %v4608
        %v4617 = vmul.f32 %v4609, 0.7978846
        %v4618 = vmul.f32 %v4610, 0.7978846
        %v4619 = vmul.f32 %v4611, 0.7978846
        %v4620 = vmul.f32 %v4612, 0.7978846
        %v4621 = vmul.f32 %v4613, 0.7978846
        %v4622 = vmul.f32 %v4614, 0.7978846
        %v4623 = vmul.f32 %v4615, 0.7978846
        %v4624 = vmul.f32 %v4616, 0.7978846
        %v4625 = vtanh.pop %v4617
        %v4626 = vtanh.pop %v4618
        %v4627 = vtanh.pop %v4619
        %v4628 = vtanh.pop %v4620
        %v4629 = vtanh.pop %v4621
        %v4630 = vtanh.pop %v4622
        %v4631 = vtanh.pop %v4623
        %v4632 = vtanh.pop %v4624
        %v4633 = vadd.f32 %v4625, 1.0
        %v4634 = vadd.f32 %v4626, 1.0
        %v4635 = vadd.f32 %v4627, 1.0
        %v4636 = vadd.f32 %v4628, 1.0
        %v4637 = vadd.f32 %v4629, 1.0
        %v4638 = vadd.f32 %v4630, 1.0
        %v4639 = vadd.f32 %v4631, 1.0
        %v4640 = vadd.f32 %v4632, 1.0
        %v4641 = vmul.f32 %v4577, %v4633
        %v4642 = vmul.f32 %v4578, %v4634
        %v4643 = vmul.f32 %v4579, %v4635
        %v4644 = vmul.f32 %v4580, %v4636
        %v4645 = vmul.f32 %v4581, %v4637
        %v4646 = vmul.f32 %v4582, %v4638
        %v4647 = vmul.f32 %v4583, %v4639
        %v4648 = vmul.f32 %v4584, %v4640
        %v4649 = vpack.c.bf16 %v4642, %v4641
        %v4650 = vpack.c.bf16 %v4644, %v4643
        %v4651 = vpack.c.bf16 %v4646, %v4645
        %v4652 = vpack.c.bf16 %v4648, %v4647
        %v4661 = vunpack.c.l.b16 %v2921
        %v4662 = vunpack.c.l.b16 %v2922
        %v4663 = vunpack.c.l.b16 %v2923
        %v4664 = vunpack.c.l.b16 %v2924
        %v4665 = vunpack.c.l.b16 %v2925
        %v4666 = vunpack.c.l.b16 %v2926
        %v4667 = vunpack.c.l.b16 %v2927
        %v4668 = vunpack.c.l.b16 %v2928
        %v4669 = vpack.c.b16 %v4662, %v4661
        %v4670 = vpack.c.b16 %v4664, %v4663
        %v4671 = vpack.c.b16 %v4666, %v4665
        %v4672 = vpack.c.b16 %v4668, %v4667
        %v4678 = vsel %vm3133, %v4649, 0
        %v4681 = vsel %vm3133, %v4650, 0
        %v4684 = vsel %vm3133, %v4651, 0
        %v4687 = vsel %vm3133, %v4652, 0
        %4689 = vmatpush.bf16.msra.mxu0 0
        %4690 = vmatpush.bf16.msra.mxu0 0
        %4691 = vmatpush.bf16.msra.mxu0 0
        %4692 = vmatpush.bf16.msra.mxu0 0
        %4693 = vmatpush.bf16.msra.mxu0 %v4672
        %4694 = vmatpush.bf16.msra.mxu0 %v4671
        %4695 = vmatpush.bf16.msra.mxu0 %v4670
        %4696 = vmatpush.bf16.msra.mxu0 %v4669
        %4697 = vmatmul.bf16.gmra.mxu0 %v4678
        %v4698 = vpop.f32.mrf.mxu0
        %v4699 = vadd.f32 0.0, %v4698
        %v4700 = vpop.f32.mrf.mxu0
        %v4701 = vadd.f32 0.0, %v4700
        %4702 = vmatmul.bf16.gmra.mxu0 %v4681
        %v4703 = vpop.f32.mrf.mxu0
        %v4704 = vadd.f32 0.0, %v4703
        %v4705 = vpop.f32.mrf.mxu0
        %v4706 = vadd.f32 0.0, %v4705
        %4707 = vmatmul.bf16.gmra.mxu0 %v4684
        %v4708 = vpop.f32.mrf.mxu0
        %v4709 = vadd.f32 0.0, %v4708
        %v4710 = vpop.f32.mrf.mxu0
        %v4711 = vadd.f32 0.0, %v4710
        %4712 = vmatmul.bf16.gmra.mxu0 %v4687
        %v4713 = vpop.f32.mrf.mxu0
        %v4714 = vadd.f32 0.0, %v4713
        %v4715 = vpop.f32.mrf.mxu0
        %v4716 = vadd.f32 0.0, %v4715
        %4717 = vdwg.mxu0
        %v4718 = vadd.f32 %v4032, %v4699
        %v4719 = vadd.f32 %v4033, %v4701
        %v4720 = vadd.f32 %v4034, %v4704
        %v4721 = vadd.f32 %v4035, %v4706
        %v4722 = vadd.f32 %v4036, %v4709
        %v4723 = vadd.f32 %v4037, %v4711
        %v4724 = vadd.f32 %v4038, %v4714
        %v4725 = vadd.f32 %v4039, %v4716
        %v4726 = vld [vmem:[%s1019] sm:$0xf]
        %v4727 = vld [vmem:[%s1019 + $0x4] sm:$0xf]
        %v4728 = vld [vmem:[%s1019 + $0x8] sm:$0xf]
        %v4729 = vld [vmem:[%s1019 + $0xc] sm:$0xf]
        %v4730 = vld [vmem:[%s1019 + $0x10] sm:$0xf]
        %v4731 = vld [vmem:[%s1019 + $0x14] sm:$0xf]
        %v4732 = vld [vmem:[%s1019 + $0x18] sm:$0xf]
        %v4733 = vld [vmem:[%s1019 + $0x1c] sm:$0xf]
        %v4734 = vld [vmem:[%s1019 + $0x20] sm:$0xf]
        %v4735 = vld [vmem:[%s1019 + $0x24] sm:$0xf]
        %v4736 = vld [vmem:[%s1019 + $0x28] sm:$0xf]
        %v4737 = vld [vmem:[%s1019 + $0x2c] sm:$0xf]
        %v4738 = vld [vmem:[%s1019 + $0x30] sm:$0xf]
        %v4739 = vld [vmem:[%s1019 + $0x34] sm:$0xf]
        %v4740 = vld [vmem:[%s1019 + $0x38] sm:$0xf]
        %v4741 = vld [vmem:[%s1019 + $0x3c] sm:$0xf]
        %v4742 = vld [vmem:[%s1019 + $0x40] sm:$0xf]
        %v4743 = vld [vmem:[%s1019 + $0x44] sm:$0xf]
        %v4751 = vrot.slane %v4718, 7
        %v4752 = vrot.slane %v4719, 7
        %v4753 = vrot.slane %v4720, 7
        %v4754 = vrot.slane %v4721, 7
        %v4755 = vrot.slane %v4722, 7
        %v4756 = vrot.slane %v4723, 7
        %v4757 = vrot.slane %v4724, 7
        %v4765 = vsel %vm1164, 0.0, %v4751
        %v4766 = vsel %vm1164, 0.0, %v4752
        %v4767 = vsel %vm1164, 0.0, %v4753
        %v4768 = vsel %vm1164, 0.0, %v4754
        %v4769 = vsel %vm1164, 0.0, %v4755
        %v4770 = vsel %vm1164, 0.0, %v4756
        %v4771 = vsel %vm1164, 0.0, %v4757
        %v4772 = vpack.c.bf16 %v4765, %v1242
        %v4773 = vpack.c.bf16 %v4767, %v4766
        %v4774 = vpack.c.bf16 %v4769, %v4768
        %v4775 = vpack.c.bf16 %v4771, %v4770
        %v4776 = vpack.c.bf16 %v4718, 0.0
        %v4777 = vpack.c.bf16 %v4720, %v4719
        %v4778 = vpack.c.bf16 %v4722, %v4721
        %v4779 = vpack.c.bf16 %v4724, %v4723
        %v4782 = vunpack.c.l.b16 %v4728
        %v4783 = vunpack.c.l.b16 %v4729
        %v4784 = vpack.c.b16 %v4783, %v4782
        %v4787 = vsel %vm1264, %v4776, 0
        %v4790 = vsel %vm1264, %v4777, 0
        %v4793 = vsel %vm1264, %v4778, 0
        %v4796 = vsel %vm1264, %v4779, 0
        %4798 = vmatpush.bf16.msra.mxu0 0
        %4799 = vmatpush.bf16.msra.mxu0 0
        %4800 = vmatpush.bf16.msra.mxu0 0
        %4801 = vmatpush.bf16.msra.mxu0 0
        %4802 = vmatpush.bf16.msra.mxu0 0
        %4803 = vmatpush.bf16.msra.mxu0 0
        %4804 = vmatpush.bf16.msra.mxu0 0
        %4805 = vmatpush.bf16.msra.mxu0 %v4784
        %4806 = vmatmul.bf16.gmra.mxu0 %v4787
        %v4807 = vpop.f32.mrf.mxu0
        %v4808 = vadd.f32 0.0, %v4807
        %v4809 = vpop.f32.mrf.mxu0
        %v4810 = vadd.f32 0.0, %v4809
        %4811 = vmatmul.bf16.gmra.mxu0 %v4790
        %v4812 = vpop.f32.mrf.mxu0
        %v4813 = vadd.f32 0.0, %v4812
        %v4814 = vpop.f32.mrf.mxu0
        %v4815 = vadd.f32 0.0, %v4814
        %4816 = vmatmul.bf16.gmra.mxu0 %v4793
        %v4817 = vpop.f32.mrf.mxu0
        %v4818 = vadd.f32 0.0, %v4817
        %v4819 = vpop.f32.mrf.mxu0
        %v4820 = vadd.f32 0.0, %v4819
        %4821 = vmatmul.bf16.gmra.mxu0 %v4796
        %v4822 = vpop.f32.mrf.mxu0
        %v4823 = vadd.f32 0.0, %v4822
        %v4824 = vpop.f32.mrf.mxu0
        %v4825 = vadd.f32 0.0, %v4824
        %4826 = vdwg.mxu0
        %v4829 = vunpack.c.l.b16 %v4726
        %v4830 = vunpack.c.l.b16 %v4727
        %v4831 = vpack.c.b16 %v4830, %v4829
        %v4834 = vsel %vm1264, %v4772, 0
        %v4837 = vsel %vm1264, %v4773, 0
        %v4840 = vsel %vm1264, %v4774, 0
        %v4843 = vsel %vm1264, %v4775, 0
        %4845 = vmatpush.bf16.msra.mxu0 0
        %4846 = vmatpush.bf16.msra.mxu0 0
        %4847 = vmatpush.bf16.msra.mxu0 0
        %4848 = vmatpush.bf16.msra.mxu0 0
        %4849 = vmatpush.bf16.msra.mxu0 0
        %4850 = vmatpush.bf16.msra.mxu0 0
        %4851 = vmatpush.bf16.msra.mxu0 0
        %4852 = vmatpush.bf16.msra.mxu0 %v4831
        %4853 = vmatmul.bf16.gmra.mxu0 %v4834
        %v4854 = vpop.f32.mrf.mxu0
        %v4855 = vadd.f32 %v4808, %v4854
        %v4856 = vpop.f32.mrf.mxu0
        %v4857 = vadd.f32 %v4810, %v4856
        %4858 = vmatmul.bf16.gmra.mxu0 %v4837
        %v4859 = vpop.f32.mrf.mxu0
        %v4860 = vadd.f32 %v4813, %v4859
        %v4861 = vpop.f32.mrf.mxu0
        %v4862 = vadd.f32 %v4815, %v4861
        %4863 = vmatmul.bf16.gmra.mxu0 %v4840
        %v4864 = vpop.f32.mrf.mxu0
        %v4865 = vadd.f32 %v4818, %v4864
        %v4866 = vpop.f32.mrf.mxu0
        %v4867 = vadd.f32 %v4820, %v4866
        %4868 = vmatmul.bf16.gmra.mxu0 %v4843
        %v4869 = vpop.f32.mrf.mxu0
        %v4870 = vadd.f32 %v4823, %v4869
        %v4871 = vpop.f32.mrf.mxu0
        %v4872 = vadd.f32 %v4825, %v4871
        %4873 = vdwg.mxu0
        %v4874 = vrot.slane %v4718, 1
        %v4875 = vrot.slane %v4719, 1
        %v4876 = vrot.slane %v4720, 1
        %v4877 = vrot.slane %v4721, 1
        %v4878 = vrot.slane %v4722, 1
        %v4879 = vrot.slane %v4723, 1
        %v4880 = vrot.slane %v4724, 1
        %v4888 = vsel %vm1098, %v4874, 0.0
        %v4889 = vsel %vm1098, %v4875, 0.0
        %v4890 = vsel %vm1098, %v4876, 0.0
        %v4891 = vsel %vm1098, %v4877, 0.0
        %v4892 = vsel %vm1098, %v4878, 0.0
        %v4893 = vsel %vm1098, %v4879, 0.0
        %v4894 = vsel %vm1098, %v4880, 0.0
        %v4895 = vpack.c.bf16 %v4888, %v1369
        %v4896 = vpack.c.bf16 %v4890, %v4889
        %v4897 = vpack.c.bf16 %v4892, %v4891
        %v4898 = vpack.c.bf16 %v4894, %v4893
        %v4901 = vunpack.c.l.b16 %v4730
        %v4902 = vunpack.c.l.b16 %v4731
        %v4903 = vpack.c.b16 %v4902, %v4901
        %v4906 = vsel %vm1264, %v4895, 0
        %v4909 = vsel %vm1264, %v4896, 0
        %v4912 = vsel %vm1264, %v4897, 0
        %v4915 = vsel %vm1264, %v4898, 0
        %4917 = vmatpush.bf16.msra.mxu0 0
        %4918 = vmatpush.bf16.msra.mxu0 0
        %4919 = vmatpush.bf16.msra.mxu0 0
        %4920 = vmatpush.bf16.msra.mxu0 0
        %4921 = vmatpush.bf16.msra.mxu0 0
        %4922 = vmatpush.bf16.msra.mxu0 0
        %4923 = vmatpush.bf16.msra.mxu0 0
        %4924 = vmatpush.bf16.msra.mxu0 %v4903
        %4925 = vmatmul.bf16.gmra.mxu0 %v4906
        %v4926 = vpop.f32.mrf.mxu0
        %v4927 = vadd.f32 0.0, %v4926
        %v4928 = vpop.f32.mrf.mxu0
        %v4929 = vadd.f32 0.0, %v4928
        %4930 = vmatmul.bf16.gmra.mxu0 %v4909
        %v4931 = vpop.f32.mrf.mxu0
        %v4932 = vadd.f32 0.0, %v4931
        %v4933 = vpop.f32.mrf.mxu0
        %v4934 = vadd.f32 0.0, %v4933
        %4935 = vmatmul.bf16.gmra.mxu0 %v4912
        %v4936 = vpop.f32.mrf.mxu0
        %v4937 = vadd.f32 0.0, %v4936
        %v4938 = vpop.f32.mrf.mxu0
        %v4939 = vadd.f32 0.0, %v4938
        %4940 = vmatmul.bf16.gmra.mxu0 %v4915
        %v4941 = vpop.f32.mrf.mxu0
        %v4942 = vadd.f32 0.0, %v4941
        %v4943 = vpop.f32.mrf.mxu0
        %v4944 = vadd.f32 0.0, %v4943
        %4945 = vdwg.mxu0
        %v4946 = vadd.f32 %v4855, %v4927
        %v4947 = vadd.f32 %v4857, %v4929
        %v4948 = vadd.f32 %v4860, %v4932
        %v4949 = vadd.f32 %v4862, %v4934
        %v4950 = vadd.f32 %v4865, %v4937
        %v4951 = vadd.f32 %v4867, %v4939
        %v4952 = vadd.f32 %v4870, %v4942
        %v4953 = vadd.f32 %v4872, %v4944
        %v4955 = vrot.slane %v4725, 7
        %v4957 = vsel %vm1164, 0.0, %v4955
        %v4958 = vpack.c.bf16 %v4766, %v4765
        %v4959 = vpack.c.bf16 %v4768, %v4767
        %v4960 = vpack.c.bf16 %v4770, %v4769
        %v4961 = vpack.c.bf16 %v4957, %v4771
        %v4964 = vunpack.c.l.b16 %v4732
        %v4965 = vunpack.c.l.b16 %v4733
        %v4966 = vpack.c.b16 %v4965, %v4964
        %v4969 = vsel %vm1264, %v4958, 0
        %v4972 = vsel %vm1264, %v4959, 0
        %v4975 = vsel %vm1264, %v4960, 0
        %v4978 = vsel %vm1264, %v4961, 0
        %4980 = vmatpush.bf16.msra.mxu0 0
        %4981 = vmatpush.bf16.msra.mxu0 0
        %4982 = vmatpush.bf16.msra.mxu0 0
        %4983 = vmatpush.bf16.msra.mxu0 0
        %4984 = vmatpush.bf16.msra.mxu0 0
        %4985 = vmatpush.bf16.msra.mxu0 0
        %4986 = vmatpush.bf16.msra.mxu0 0
        %4987 = vmatpush.bf16.msra.mxu0 %v4966
        %4988 = vmatmul.bf16.gmra.mxu0 %v4969
        %v4989 = vpop.f32.mrf.mxu0
        %v4990 = vadd.f32 0.0, %v4989
        %v4991 = vpop.f32.mrf.mxu0
        %v4992 = vadd.f32 0.0, %v4991
        %4993 = vmatmul.bf16.gmra.mxu0 %v4972
        %v4994 = vpop.f32.mrf.mxu0
        %v4995 = vadd.f32 0.0, %v4994
        %v4996 = vpop.f32.mrf.mxu0
        %v4997 = vadd.f32 0.0, %v4996
        %4998 = vmatmul.bf16.gmra.mxu0 %v4975
        %v4999 = vpop.f32.mrf.mxu0
        %v5000 = vadd.f32 0.0, %v4999
        %v5001 = vpop.f32.mrf.mxu0
        %v5002 = vadd.f32 0.0, %v5001
        %5003 = vmatmul.bf16.gmra.mxu0 %v4978
        %v5004 = vpop.f32.mrf.mxu0
        %v5005 = vadd.f32 0.0, %v5004
        %v5006 = vpop.f32.mrf.mxu0
        %v5007 = vadd.f32 0.0, %v5006
        %5008 = vdwg.mxu0
        %v5009 = vadd.f32 %v4946, %v4990
        %v5010 = vadd.f32 %v4947, %v4992
        %v5011 = vadd.f32 %v4948, %v4995
        %v5012 = vadd.f32 %v4949, %v4997
        %v5013 = vadd.f32 %v4950, %v5000
        %v5014 = vadd.f32 %v4951, %v5002
        %v5015 = vadd.f32 %v4952, %v5005
        %v5016 = vadd.f32 %v4953, %v5007
        %v5017 = vpack.c.bf16 %v4719, %v4718
        %v5018 = vpack.c.bf16 %v4721, %v4720
        %v5019 = vpack.c.bf16 %v4723, %v4722
        %v5020 = vpack.c.bf16 %v4725, %v4724
        %v5023 = vunpack.c.l.b16 %v4734
        %v5024 = vunpack.c.l.b16 %v4735
        %v5025 = vpack.c.b16 %v5024, %v5023
        %v5028 = vsel %vm1264, %v5017, 0
        %v5031 = vsel %vm1264, %v5018, 0
        %v5034 = vsel %vm1264, %v5019, 0
        %v5037 = vsel %vm1264, %v5020, 0
        %5039 = vmatpush.bf16.msra.mxu0 0
        %5040 = vmatpush.bf16.msra.mxu0 0
        %5041 = vmatpush.bf16.msra.mxu0 0
        %5042 = vmatpush.bf16.msra.mxu0 0
        %5043 = vmatpush.bf16.msra.mxu0 0
        %5044 = vmatpush.bf16.msra.mxu0 0
        %5045 = vmatpush.bf16.msra.mxu0 0
        %5046 = vmatpush.bf16.msra.mxu0 %v5025
        %5047 = vmatmul.bf16.gmra.mxu0 %v5028
        %v5048 = vpop.f32.mrf.mxu0
        %v5049 = vadd.f32 0.0, %v5048
        %v5050 = vpop.f32.mrf.mxu0
        %v5051 = vadd.f32 0.0, %v5050
        %5052 = vmatmul.bf16.gmra.mxu0 %v5031
        %v5053 = vpop.f32.mrf.mxu0
        %v5054 = vadd.f32 0.0, %v5053
        %v5055 = vpop.f32.mrf.mxu0
        %v5056 = vadd.f32 0.0, %v5055
        %5057 = vmatmul.bf16.gmra.mxu0 %v5034
        %v5058 = vpop.f32.mrf.mxu0
        %v5059 = vadd.f32 0.0, %v5058
        %v5060 = vpop.f32.mrf.mxu0
        %v5061 = vadd.f32 0.0, %v5060
        %5062 = vmatmul.bf16.gmra.mxu0 %v5037
        %v5063 = vpop.f32.mrf.mxu0
        %v5064 = vadd.f32 0.0, %v5063
        %v5065 = vpop.f32.mrf.mxu0
        %v5066 = vadd.f32 0.0, %v5065
        %5067 = vdwg.mxu0
        %v5068 = vadd.f32 %v5009, %v5049
        %v5069 = vadd.f32 %v5010, %v5051
        %v5070 = vadd.f32 %v5011, %v5054
        %v5071 = vadd.f32 %v5012, %v5056
        %v5072 = vadd.f32 %v5013, %v5059
        %v5073 = vadd.f32 %v5014, %v5061
        %v5074 = vadd.f32 %v5015, %v5064
        %v5075 = vadd.f32 %v5016, %v5066
        %v5076 = vrot.slane %v4725, 1
        %v5078 = vsel %vm1098, %v5076, 0.0
        %v5079 = vpack.c.bf16 %v4889, %v4888
        %v5080 = vpack.c.bf16 %v4891, %v4890
        %v5081 = vpack.c.bf16 %v4893, %v4892
        %v5082 = vpack.c.bf16 %v5078, %v4894
        %v5085 = vunpack.c.l.b16 %v4736
        %v5086 = vunpack.c.l.b16 %v4737
        %v5087 = vpack.c.b16 %v5086, %v5085
        %v5090 = vsel %vm1264, %v5079, 0
        %v5093 = vsel %vm1264, %v5080, 0
        %v5096 = vsel %vm1264, %v5081, 0
        %v5099 = vsel %vm1264, %v5082, 0
        %5101 = vmatpush.bf16.msra.mxu0 0
        %5102 = vmatpush.bf16.msra.mxu0 0
        %5103 = vmatpush.bf16.msra.mxu0 0
        %5104 = vmatpush.bf16.msra.mxu0 0
        %5105 = vmatpush.bf16.msra.mxu0 0
        %5106 = vmatpush.bf16.msra.mxu0 0
        %5107 = vmatpush.bf16.msra.mxu0 0
        %5108 = vmatpush.bf16.msra.mxu0 %v5087
        %5109 = vmatmul.bf16.gmra.mxu0 %v5090
        %v5110 = vpop.f32.mrf.mxu0
        %v5111 = vadd.f32 0.0, %v5110
        %v5112 = vpop.f32.mrf.mxu0
        %v5113 = vadd.f32 0.0, %v5112
        %5114 = vmatmul.bf16.gmra.mxu0 %v5093
        %v5115 = vpop.f32.mrf.mxu0
        %v5116 = vadd.f32 0.0, %v5115
        %v5117 = vpop.f32.mrf.mxu0
        %v5118 = vadd.f32 0.0, %v5117
        %5119 = vmatmul.bf16.gmra.mxu0 %v5096
        %v5120 = vpop.f32.mrf.mxu0
        %v5121 = vadd.f32 0.0, %v5120
        %v5122 = vpop.f32.mrf.mxu0
        %v5123 = vadd.f32 0.0, %v5122
        %5124 = vmatmul.bf16.gmra.mxu0 %v5099
        %v5125 = vpop.f32.mrf.mxu0
        %v5126 = vadd.f32 0.0, %v5125
        %v5127 = vpop.f32.mrf.mxu0
        %v5128 = vadd.f32 0.0, %v5127
        %5129 = vdwg.mxu0
        %v5130 = vadd.f32 %v5068, %v5111
        %v5131 = vadd.f32 %v5069, %v5113
        %v5132 = vadd.f32 %v5070, %v5116
        %v5133 = vadd.f32 %v5071, %v5118
        %v5134 = vadd.f32 %v5072, %v5121
        %v5135 = vadd.f32 %v5073, %v5123
        %v5136 = vadd.f32 %v5074, %v5126
        %v5137 = vadd.f32 %v5075, %v5128
        %v5138 = vpack.c.bf16 %v1242, %v4957
        %v5141 = vunpack.c.l.b16 %v4738
        %v5142 = vunpack.c.l.b16 %v4739
        %v5143 = vpack.c.b16 %v5142, %v5141
        %v5146 = vsel %vm1264, %v5138, 0
        %5148 = vmatpush.bf16.msra.mxu0 0
        %5149 = vmatpush.bf16.msra.mxu0 0
        %5150 = vmatpush.bf16.msra.mxu0 0
        %5151 = vmatpush.bf16.msra.mxu0 0
        %5152 = vmatpush.bf16.msra.mxu0 0
        %5153 = vmatpush.bf16.msra.mxu0 0
        %5154 = vmatpush.bf16.msra.mxu0 0
        %5155 = vmatpush.bf16.msra.mxu0 %v5143
        %5156 = vmatmul.bf16.gmra.mxu0 %v4837
        %v5157 = vpop.f32.mrf.mxu0
        %v5158 = vadd.f32 0.0, %v5157
        %v5159 = vpop.f32.mrf.mxu0
        %v5160 = vadd.f32 0.0, %v5159
        %5161 = vmatmul.bf16.gmra.mxu0 %v4840
        %v5162 = vpop.f32.mrf.mxu0
        %v5163 = vadd.f32 0.0, %v5162
        %v5164 = vpop.f32.mrf.mxu0
        %v5165 = vadd.f32 0.0, %v5164
        %5166 = vmatmul.bf16.gmra.mxu0 %v4843
        %v5167 = vpop.f32.mrf.mxu0
        %v5168 = vadd.f32 0.0, %v5167
        %v5169 = vpop.f32.mrf.mxu0
        %v5170 = vadd.f32 0.0, %v5169
        %5171 = vmatmul.bf16.gmra.mxu0 %v5146
        %v5172 = vpop.f32.mrf.mxu0
        %v5173 = vadd.f32 0.0, %v5172
        %v5174 = vpop.f32.mrf.mxu0
        %v5175 = vadd.f32 0.0, %v5174
        %5176 = vdwg.mxu0
        %v5177 = vadd.f32 %v5130, %v5158
        %v5178 = vadd.f32 %v5131, %v5160
        %v5179 = vadd.f32 %v5132, %v5163
        %v5180 = vadd.f32 %v5133, %v5165
        %v5181 = vadd.f32 %v5134, %v5168
        %v5182 = vadd.f32 %v5135, %v5170
        %v5183 = vadd.f32 %v5136, %v5173
        %v5184 = vadd.f32 %v5137, %v5175
        %v5185 = vpack.c.bf16 0.0, %v4725
        %v5188 = vunpack.c.l.b16 %v4740
        %v5189 = vunpack.c.l.b16 %v4741
        %v5190 = vpack.c.b16 %v5189, %v5188
        %v5193 = vsel %vm1264, %v5185, 0
        %5195 = vmatpush.bf16.msra.mxu0 0
        %5196 = vmatpush.bf16.msra.mxu0 0
        %5197 = vmatpush.bf16.msra.mxu0 0
        %5198 = vmatpush.bf16.msra.mxu0 0
        %5199 = vmatpush.bf16.msra.mxu0 0
        %5200 = vmatpush.bf16.msra.mxu0 0
        %5201 = vmatpush.bf16.msra.mxu0 0
        %5202 = vmatpush.bf16.msra.mxu0 %v5190
        %5203 = vmatmul.bf16.gmra.mxu0 %v4790
        %v5204 = vpop.f32.mrf.mxu0
        %v5205 = vadd.f32 0.0, %v5204
        %v5206 = vpop.f32.mrf.mxu0
        %v5207 = vadd.f32 0.0, %v5206
        %5208 = vmatmul.bf16.gmra.mxu0 %v4793
        %v5209 = vpop.f32.mrf.mxu0
        %v5210 = vadd.f32 0.0, %v5209
        %v5211 = vpop.f32.mrf.mxu0
        %v5212 = vadd.f32 0.0, %v5211
        %5213 = vmatmul.bf16.gmra.mxu0 %v4796
        %v5214 = vpop.f32.mrf.mxu0
        %v5215 = vadd.f32 0.0, %v5214
        %v5216 = vpop.f32.mrf.mxu0
        %v5217 = vadd.f32 0.0, %v5216
        %5218 = vmatmul.bf16.gmra.mxu0 %v5193
        %v5219 = vpop.f32.mrf.mxu0
        %v5220 = vadd.f32 0.0, %v5219
        %v5221 = vpop.f32.mrf.mxu0
        %v5222 = vadd.f32 0.0, %v5221
        %5223 = vdwg.mxu0
        %v5224 = vadd.f32 %v5177, %v5205
        %v5225 = vadd.f32 %v5178, %v5207
        %v5226 = vadd.f32 %v5179, %v5210
        %v5227 = vadd.f32 %v5180, %v5212
        %v5228 = vadd.f32 %v5181, %v5215
        %v5229 = vadd.f32 %v5182, %v5217
        %v5230 = vadd.f32 %v5183, %v5220
        %v5231 = vadd.f32 %v5184, %v5222
        %v5232 = vpack.c.bf16 %v1369, %v5078
        %v5235 = vunpack.c.l.b16 %v4742
        %v5236 = vunpack.c.l.b16 %v4743
        %v5237 = vpack.c.b16 %v5236, %v5235
        %v5240 = vsel %vm1264, %v5232, 0
        %5242 = vmatpush.bf16.msra.mxu0 0
        %5243 = vmatpush.bf16.msra.mxu0 0
        %5244 = vmatpush.bf16.msra.mxu0 0
        %5245 = vmatpush.bf16.msra.mxu0 0
        %5246 = vmatpush.bf16.msra.mxu0 0
        %5247 = vmatpush.bf16.msra.mxu0 0
        %5248 = vmatpush.bf16.msra.mxu0 0
        %5249 = vmatpush.bf16.msra.mxu0 %v5237
        %5250 = vmatmul.bf16.gmra.mxu0 %v4909
        %v5251 = vpop.f32.mrf.mxu0
        %v5252 = vadd.f32 0.0, %v5251
        %v5253 = vpop.f32.mrf.mxu0
        %v5254 = vadd.f32 0.0, %v5253
        %5255 = vmatmul.bf16.gmra.mxu0 %v4912
        %v5256 = vpop.f32.mrf.mxu0
        %v5257 = vadd.f32 0.0, %v5256
        %v5258 = vpop.f32.mrf.mxu0
        %v5259 = vadd.f32 0.0, %v5258
        %5260 = vmatmul.bf16.gmra.mxu0 %v4915
        %v5261 = vpop.f32.mrf.mxu0
        %v5262 = vadd.f32 0.0, %v5261
        %v5263 = vpop.f32.mrf.mxu0
        %v5264 = vadd.f32 0.0, %v5263
        %5265 = vmatmul.bf16.gmra.mxu0 %v5240
        %v5266 = vpop.f32.mrf.mxu0
        %v5267 = vadd.f32 0.0, %v5266
        %v5268 = vpop.f32.mrf.mxu0
        %v5269 = vadd.f32 0.0, %v5268
        %5270 = vdwg.mxu0
        %v5271 = vadd.f32 %v5224, %v5252
        %v5272 = vadd.f32 %v5225, %v5254
        %v5273 = vadd.f32 %v5226, %v5257
        %v5274 = vadd.f32 %v5227, %v5259
        %v5275 = vadd.f32 %v5228, %v5262
        %v5276 = vadd.f32 %v5229, %v5264
        %v5277 = vadd.f32 %v5230, %v5267
        %v5278 = vadd.f32 %v5231, %v5269
        %v5279 = vmax.f32 %v5271, 0.0
        %v5280 = vmax.f32 %v5272, 0.0
        %v5281 = vmax.f32 %v5273, 0.0
        %v5282 = vmax.f32 %v5274, 0.0
        %v5283 = vmax.f32 %v5275, 0.0
        %v5284 = vmax.f32 %v5276, 0.0
        %v5285 = vmax.f32 %v5277, 0.0
        %v5286 = vmax.f32 %v5278, 0.0
        %s5287 = scalar_lea.vmem %s1019, 72
        %v5288 = vld [vmem:[%s5287] sm:$0xf]
        %v5289 = vld [vmem:[%s5287 + $0x4] sm:$0xf]
        %v5290 = vld [vmem:[%s5287 + $0x8] sm:$0xf]
        %v5291 = vld [vmem:[%s5287 + $0xc] sm:$0xf]
        %v5292 = vld [vmem:[%s5287 + $0x10] sm:$0xf]
        %v5293 = vld [vmem:[%s5287 + $0x14] sm:$0xf]
        %v5294 = vld [vmem:[%s5287 + $0x18] sm:$0xf]
        %v5295 = vld [vmem:[%s5287 + $0x1c] sm:$0xf]
        %v5296 = vld [vmem:[%s5287 + $0x20] sm:$0xf]
        %v5297 = vld [vmem:[%s5287 + $0x24] sm:$0xf]
        %v5298 = vld [vmem:[%s5287 + $0x28] sm:$0xf]
        %v5299 = vld [vmem:[%s5287 + $0x2c] sm:$0xf]
        %v5300 = vld [vmem:[%s5287 + $0x30] sm:$0xf]
        %v5301 = vld [vmem:[%s5287 + $0x34] sm:$0xf]
        %v5302 = vld [vmem:[%s5287 + $0x38] sm:$0xf]
        %v5303 = vld [vmem:[%s5287 + $0x3c] sm:$0xf]
        %v5304 = vld [vmem:[%s5287 + $0x40] sm:$0xf]
        %v5305 = vld [vmem:[%s5287 + $0x44] sm:$0xf]
        %v5313 = vrot.slane %v5279, 7
        %v5314 = vrot.slane %v5280, 7
        %v5315 = vrot.slane %v5281, 7
        %v5316 = vrot.slane %v5282, 7
        %v5317 = vrot.slane %v5283, 7
        %v5318 = vrot.slane %v5284, 7
        %v5319 = vrot.slane %v5285, 7
        %v5327 = vsel %vm1164, 0.0, %v5313
        %v5328 = vsel %vm1164, 0.0, %v5314
        %v5329 = vsel %vm1164, 0.0, %v5315
        %v5330 = vsel %vm1164, 0.0, %v5316
        %v5331 = vsel %vm1164, 0.0, %v5317
        %v5332 = vsel %vm1164, 0.0, %v5318
        %v5333 = vsel %vm1164, 0.0, %v5319
        %v5334 = vpack.c.bf16 %v5327, %v1242
        %v5335 = vpack.c.bf16 %v5329, %v5328
        %v5336 = vpack.c.bf16 %v5331, %v5330
        %v5337 = vpack.c.bf16 %v5333, %v5332
        %v5338 = vpack.c.bf16 %v5279, 0.0
        %v5339 = vpack.c.bf16 %v5281, %v5280
        %v5340 = vpack.c.bf16 %v5283, %v5282
        %v5341 = vpack.c.bf16 %v5285, %v5284
        %v5344 = vunpack.c.l.b16 %v5290
        %v5345 = vunpack.c.l.b16 %v5291
        %v5346 = vpack.c.b16 %v5345, %v5344
        %v5349 = vsel %vm1264, %v5338, 0
        %v5352 = vsel %vm1264, %v5339, 0
        %v5355 = vsel %vm1264, %v5340, 0
        %v5358 = vsel %vm1264, %v5341, 0
        %5360 = vmatpush.bf16.msra.mxu0 0
        %5361 = vmatpush.bf16.msra.mxu0 0
        %5362 = vmatpush.bf16.msra.mxu0 0
        %5363 = vmatpush.bf16.msra.mxu0 0
        %5364 = vmatpush.bf16.msra.mxu0 0
        %5365 = vmatpush.bf16.msra.mxu0 0
        %5366 = vmatpush.bf16.msra.mxu0 0
        %5367 = vmatpush.bf16.msra.mxu0 %v5346
        %5368 = vmatmul.bf16.gmra.mxu0 %v5349
        %v5369 = vpop.f32.mrf.mxu0
        %v5370 = vadd.f32 0.0, %v5369
        %v5371 = vpop.f32.mrf.mxu0
        %v5372 = vadd.f32 0.0, %v5371
        %5373 = vmatmul.bf16.gmra.mxu0 %v5352
        %v5374 = vpop.f32.mrf.mxu0
        %v5375 = vadd.f32 0.0, %v5374
        %v5376 = vpop.f32.mrf.mxu0
        %v5377 = vadd.f32 0.0, %v5376
        %5378 = vmatmul.bf16.gmra.mxu0 %v5355
        %v5379 = vpop.f32.mrf.mxu0
        %v5380 = vadd.f32 0.0, %v5379
        %v5381 = vpop.f32.mrf.mxu0
        %v5382 = vadd.f32 0.0, %v5381
        %5383 = vmatmul.bf16.gmra.mxu0 %v5358
        %v5384 = vpop.f32.mrf.mxu0
        %v5385 = vadd.f32 0.0, %v5384
        %v5386 = vpop.f32.mrf.mxu0
        %v5387 = vadd.f32 0.0, %v5386
        %5388 = vdwg.mxu0
        %v5391 = vunpack.c.l.b16 %v5288
        %v5392 = vunpack.c.l.b16 %v5289
        %v5393 = vpack.c.b16 %v5392, %v5391
        %v5396 = vsel %vm1264, %v5334, 0
        %v5399 = vsel %vm1264, %v5335, 0
        %v5402 = vsel %vm1264, %v5336, 0
        %v5405 = vsel %vm1264, %v5337, 0
        %5407 = vmatpush.bf16.msra.mxu0 0
        %5408 = vmatpush.bf16.msra.mxu0 0
        %5409 = vmatpush.bf16.msra.mxu0 0
        %5410 = vmatpush.bf16.msra.mxu0 0
        %5411 = vmatpush.bf16.msra.mxu0 0
        %5412 = vmatpush.bf16.msra.mxu0 0
        %5413 = vmatpush.bf16.msra.mxu0 0
        %5414 = vmatpush.bf16.msra.mxu0 %v5393
        %5415 = vmatmul.bf16.gmra.mxu0 %v5396
        %v5416 = vpop.f32.mrf.mxu0
        %v5417 = vadd.f32 %v5370, %v5416
        %v5418 = vpop.f32.mrf.mxu0
        %v5419 = vadd.f32 %v5372, %v5418
        %5420 = vmatmul.bf16.gmra.mxu0 %v5399
        %v5421 = vpop.f32.mrf.mxu0
        %v5422 = vadd.f32 %v5375, %v5421
        %v5423 = vpop.f32.mrf.mxu0
        %v5424 = vadd.f32 %v5377, %v5423
        %5425 = vmatmul.bf16.gmra.mxu0 %v5402
        %v5426 = vpop.f32.mrf.mxu0
        %v5427 = vadd.f32 %v5380, %v5426
        %v5428 = vpop.f32.mrf.mxu0
        %v5429 = vadd.f32 %v5382, %v5428
        %5430 = vmatmul.bf16.gmra.mxu0 %v5405
        %v5431 = vpop.f32.mrf.mxu0
        %v5432 = vadd.f32 %v5385, %v5431
        %v5433 = vpop.f32.mrf.mxu0
        %v5434 = vadd.f32 %v5387, %v5433
        %5435 = vdwg.mxu0
        %v5436 = vrot.slane %v5279, 1
        %v5437 = vrot.slane %v5280, 1
        %v5438 = vrot.slane %v5281, 1
        %v5439 = vrot.slane %v5282, 1
        %v5440 = vrot.slane %v5283, 1
        %v5441 = vrot.slane %v5284, 1
        %v5442 = vrot.slane %v5285, 1
        %v5450 = vsel %vm1098, %v5436, 0.0
        %v5451 = vsel %vm1098, %v5437, 0.0
        %v5452 = vsel %vm1098, %v5438, 0.0
        %v5453 = vsel %vm1098, %v5439, 0.0
        %v5454 = vsel %vm1098, %v5440, 0.0
        %v5455 = vsel %vm1098, %v5441, 0.0
        %v5456 = vsel %vm1098, %v5442, 0.0
        %v5457 = vpack.c.bf16 %v5450, %v1369
        %v5458 = vpack.c.bf16 %v5452, %v5451
        %v5459 = vpack.c.bf16 %v5454, %v5453
        %v5460 = vpack.c.bf16 %v5456, %v5455
        %v5463 = vunpack.c.l.b16 %v5292
        %v5464 = vunpack.c.l.b16 %v5293
        %v5465 = vpack.c.b16 %v5464, %v5463
        %v5468 = vsel %vm1264, %v5457, 0
        %v5471 = vsel %vm1264, %v5458, 0
        %v5474 = vsel %vm1264, %v5459, 0
        %v5477 = vsel %vm1264, %v5460, 0
        %5479 = vmatpush.bf16.msra.mxu0 0
        %5480 = vmatpush.bf16.msra.mxu0 0
        %5481 = vmatpush.bf16.msra.mxu0 0
        %5482 = vmatpush.bf16.msra.mxu0 0
        %5483 = vmatpush.bf16.msra.mxu0 0
        %5484 = vmatpush.bf16.msra.mxu0 0
        %5485 = vmatpush.bf16.msra.mxu0 0
        %5486 = vmatpush.bf16.msra.mxu0 %v5465
        %5487 = vmatmul.bf16.gmra.mxu0 %v5468
        %v5488 = vpop.f32.mrf.mxu0
        %v5489 = vadd.f32 0.0, %v5488
        %v5490 = vpop.f32.mrf.mxu0
        %v5491 = vadd.f32 0.0, %v5490
        %5492 = vmatmul.bf16.gmra.mxu0 %v5471
        %v5493 = vpop.f32.mrf.mxu0
        %v5494 = vadd.f32 0.0, %v5493
        %v5495 = vpop.f32.mrf.mxu0
        %v5496 = vadd.f32 0.0, %v5495
        %5497 = vmatmul.bf16.gmra.mxu0 %v5474
        %v5498 = vpop.f32.mrf.mxu0
        %v5499 = vadd.f32 0.0, %v5498
        %v5500 = vpop.f32.mrf.mxu0
        %v5501 = vadd.f32 0.0, %v5500
        %5502 = vmatmul.bf16.gmra.mxu0 %v5477
        %v5503 = vpop.f32.mrf.mxu0
        %v5504 = vadd.f32 0.0, %v5503
        %v5505 = vpop.f32.mrf.mxu0
        %v5506 = vadd.f32 0.0, %v5505
        %5507 = vdwg.mxu0
        %v5508 = vadd.f32 %v5417, %v5489
        %v5509 = vadd.f32 %v5419, %v5491
        %v5510 = vadd.f32 %v5422, %v5494
        %v5511 = vadd.f32 %v5424, %v5496
        %v5512 = vadd.f32 %v5427, %v5499
        %v5513 = vadd.f32 %v5429, %v5501
        %v5514 = vadd.f32 %v5432, %v5504
        %v5515 = vadd.f32 %v5434, %v5506
        %v5517 = vrot.slane %v5286, 7
        %v5519 = vsel %vm1164, 0.0, %v5517
        %v5520 = vpack.c.bf16 %v5328, %v5327
        %v5521 = vpack.c.bf16 %v5330, %v5329
        %v5522 = vpack.c.bf16 %v5332, %v5331
        %v5523 = vpack.c.bf16 %v5519, %v5333
        %v5526 = vunpack.c.l.b16 %v5294
        %v5527 = vunpack.c.l.b16 %v5295
        %v5528 = vpack.c.b16 %v5527, %v5526
        %v5531 = vsel %vm1264, %v5520, 0
        %v5534 = vsel %vm1264, %v5521, 0
        %v5537 = vsel %vm1264, %v5522, 0
        %v5540 = vsel %vm1264, %v5523, 0
        %5542 = vmatpush.bf16.msra.mxu0 0
        %5543 = vmatpush.bf16.msra.mxu0 0
        %5544 = vmatpush.bf16.msra.mxu0 0
        %5545 = vmatpush.bf16.msra.mxu0 0
        %5546 = vmatpush.bf16.msra.mxu0 0
        %5547 = vmatpush.bf16.msra.mxu0 0
        %5548 = vmatpush.bf16.msra.mxu0 0
        %5549 = vmatpush.bf16.msra.mxu0 %v5528
        %5550 = vmatmul.bf16.gmra.mxu0 %v5531
        %v5551 = vpop.f32.mrf.mxu0
        %v5552 = vadd.f32 0.0, %v5551
        %v5553 = vpop.f32.mrf.mxu0
        %v5554 = vadd.f32 0.0, %v5553
        %5555 = vmatmul.bf16.gmra.mxu0 %v5534
        %v5556 = vpop.f32.mrf.mxu0
        %v5557 = vadd.f32 0.0, %v5556
        %v5558 = vpop.f32.mrf.mxu0
        %v5559 = vadd.f32 0.0, %v5558
        %5560 = vmatmul.bf16.gmra.mxu0 %v5537
        %v5561 = vpop.f32.mrf.mxu0
        %v5562 = vadd.f32 0.0, %v5561
        %v5563 = vpop.f32.mrf.mxu0
        %v5564 = vadd.f32 0.0, %v5563
        %5565 = vmatmul.bf16.gmra.mxu0 %v5540
        %v5566 = vpop.f32.mrf.mxu0
        %v5567 = vadd.f32 0.0, %v5566
        %v5568 = vpop.f32.mrf.mxu0
        %v5569 = vadd.f32 0.0, %v5568
        %5570 = vdwg.mxu0
        %v5571 = vadd.f32 %v5508, %v5552
        %v5572 = vadd.f32 %v5509, %v5554
        %v5573 = vadd.f32 %v5510, %v5557
        %v5574 = vadd.f32 %v5511, %v5559
        %v5575 = vadd.f32 %v5512, %v5562
        %v5576 = vadd.f32 %v5513, %v5564
        %v5577 = vadd.f32 %v5514, %v5567
        %v5578 = vadd.f32 %v5515, %v5569
        %v5579 = vpack.c.bf16 %v5280, %v5279
        %v5580 = vpack.c.bf16 %v5282, %v5281
        %v5581 = vpack.c.bf16 %v5284, %v5283
        %v5582 = vpack.c.bf16 %v5286, %v5285
        %v5585 = vunpack.c.l.b16 %v5296
        %v5586 = vunpack.c.l.b16 %v5297
        %v5587 = vpack.c.b16 %v5586, %v5585
        %v5590 = vsel %vm1264, %v5579, 0
        %v5593 = vsel %vm1264, %v5580, 0
        %v5596 = vsel %vm1264, %v5581, 0
        %v5599 = vsel %vm1264, %v5582, 0
        %5601 = vmatpush.bf16.msra.mxu0 0
        %5602 = vmatpush.bf16.msra.mxu0 0
        %5603 = vmatpush.bf16.msra.mxu0 0
        %5604 = vmatpush.bf16.msra.mxu0 0
        %5605 = vmatpush.bf16.msra.mxu0 0
        %5606 = vmatpush.bf16.msra.mxu0 0
        %5607 = vmatpush.bf16.msra.mxu0 0
        %5608 = vmatpush.bf16.msra.mxu0 %v5587
        %5609 = vmatmul.bf16.gmra.mxu0 %v5590
        %v5610 = vpop.f32.mrf.mxu0
        %v5611 = vadd.f32 0.0, %v5610
        %v5612 = vpop.f32.mrf.mxu0
        %v5613 = vadd.f32 0.0, %v5612
        %5614 = vmatmul.bf16.gmra.mxu0 %v5593
        %v5615 = vpop.f32.mrf.mxu0
        %v5616 = vadd.f32 0.0, %v5615
        %v5617 = vpop.f32.mrf.mxu0
        %v5618 = vadd.f32 0.0, %v5617
        %5619 = vmatmul.bf16.gmra.mxu0 %v5596
        %v5620 = vpop.f32.mrf.mxu0
        %v5621 = vadd.f32 0.0, %v5620
        %v5622 = vpop.f32.mrf.mxu0
        %v5623 = vadd.f32 0.0, %v5622
        %5624 = vmatmul.bf16.gmra.mxu0 %v5599
        %v5625 = vpop.f32.mrf.mxu0
        %v5626 = vadd.f32 0.0, %v5625
        %v5627 = vpop.f32.mrf.mxu0
        %v5628 = vadd.f32 0.0, %v5627
        %5629 = vdwg.mxu0
        %v5630 = vadd.f32 %v5571, %v5611
        %v5631 = vadd.f32 %v5572, %v5613
        %v5632 = vadd.f32 %v5573, %v5616
        %v5633 = vadd.f32 %v5574, %v5618
        %v5634 = vadd.f32 %v5575, %v5621
        %v5635 = vadd.f32 %v5576, %v5623
        %v5636 = vadd.f32 %v5577, %v5626
        %v5637 = vadd.f32 %v5578, %v5628
        %v5638 = vrot.slane %v5286, 1
        %v5640 = vsel %vm1098, %v5638, 0.0
        %v5641 = vpack.c.bf16 %v5451, %v5450
        %v5642 = vpack.c.bf16 %v5453, %v5452
        %v5643 = vpack.c.bf16 %v5455, %v5454
        %v5644 = vpack.c.bf16 %v5640, %v5456
        %v5647 = vunpack.c.l.b16 %v5298
        %v5648 = vunpack.c.l.b16 %v5299
        %v5649 = vpack.c.b16 %v5648, %v5647
        %v5652 = vsel %vm1264, %v5641, 0
        %v5655 = vsel %vm1264, %v5642, 0
        %v5658 = vsel %vm1264, %v5643, 0
        %v5661 = vsel %vm1264, %v5644, 0
        %5663 = vmatpush.bf16.msra.mxu0 0
        %5664 = vmatpush.bf16.msra.mxu0 0
        %5665 = vmatpush.bf16.msra.mxu0 0
        %5666 = vmatpush.bf16.msra.mxu0 0
        %5667 = vmatpush.bf16.msra.mxu0 0
        %5668 = vmatpush.bf16.msra.mxu0 0
        %5669 = vmatpush.bf16.msra.mxu0 0
        %5670 = vmatpush.bf16.msra.mxu0 %v5649
        %5671 = vmatmul.bf16.gmra.mxu0 %v5652
        %v5672 = vpop.f32.mrf.mxu0
        %v5673 = vadd.f32 0.0, %v5672
        %v5674 = vpop.f32.mrf.mxu0
        %v5675 = vadd.f32 0.0, %v5674
        %5676 = vmatmul.bf16.gmra.mxu0 %v5655
        %v5677 = vpop.f32.mrf.mxu0
        %v5678 = vadd.f32 0.0, %v5677
        %v5679 = vpop.f32.mrf.mxu0
        %v5680 = vadd.f32 0.0, %v5679
        %5681 = vmatmul.bf16.gmra.mxu0 %v5658
        %v5682 = vpop.f32.mrf.mxu0
        %v5683 = vadd.f32 0.0, %v5682
        %v5684 = vpop.f32.mrf.mxu0
        %v5685 = vadd.f32 0.0, %v5684
        %5686 = vmatmul.bf16.gmra.mxu0 %v5661
        %v5687 = vpop.f32.mrf.mxu0
        %v5688 = vadd.f32 0.0, %v5687
        %v5689 = vpop.f32.mrf.mxu0
        %v5690 = vadd.f32 0.0, %v5689
        %5691 = vdwg.mxu0
        %v5692 = vadd.f32 %v5630, %v5673
        %v5693 = vadd.f32 %v5631, %v5675
        %v5694 = vadd.f32 %v5632, %v5678
        %v5695 = vadd.f32 %v5633, %v5680
        %v5696 = vadd.f32 %v5634, %v5683
        %v5697 = vadd.f32 %v5635, %v5685
        %v5698 = vadd.f32 %v5636, %v5688
        %v5699 = vadd.f32 %v5637, %v5690
        %v5700 = vpack.c.bf16 %v1242, %v5519
        %v5703 = vunpack.c.l.b16 %v5300
        %v5704 = vunpack.c.l.b16 %v5301
        %v5705 = vpack.c.b16 %v5704, %v5703
        %v5708 = vsel %vm1264, %v5700, 0
        %5710 = vmatpush.bf16.msra.mxu0 0
        %5711 = vmatpush.bf16.msra.mxu0 0
        %5712 = vmatpush.bf16.msra.mxu0 0
        %5713 = vmatpush.bf16.msra.mxu0 0
        %5714 = vmatpush.bf16.msra.mxu0 0
        %5715 = vmatpush.bf16.msra.mxu0 0
        %5716 = vmatpush.bf16.msra.mxu0 0
        %5717 = vmatpush.bf16.msra.mxu0 %v5705
        %5718 = vmatmul.bf16.gmra.mxu0 %v5399
        %v5719 = vpop.f32.mrf.mxu0
        %v5720 = vadd.f32 0.0, %v5719
        %v5721 = vpop.f32.mrf.mxu0
        %v5722 = vadd.f32 0.0, %v5721
        %5723 = vmatmul.bf16.gmra.mxu0 %v5402
        %v5724 = vpop.f32.mrf.mxu0
        %v5725 = vadd.f32 0.0, %v5724
        %v5726 = vpop.f32.mrf.mxu0
        %v5727 = vadd.f32 0.0, %v5726
        %5728 = vmatmul.bf16.gmra.mxu0 %v5405
        %v5729 = vpop.f32.mrf.mxu0
        %v5730 = vadd.f32 0.0, %v5729
        %v5731 = vpop.f32.mrf.mxu0
        %v5732 = vadd.f32 0.0, %v5731
        %5733 = vmatmul.bf16.gmra.mxu0 %v5708
        %v5734 = vpop.f32.mrf.mxu0
        %v5735 = vadd.f32 0.0, %v5734
        %v5736 = vpop.f32.mrf.mxu0
        %v5737 = vadd.f32 0.0, %v5736
        %5738 = vdwg.mxu0
        %v5739 = vadd.f32 %v5692, %v5720
        %v5740 = vadd.f32 %v5693, %v5722
        %v5741 = vadd.f32 %v5694, %v5725
        %v5742 = vadd.f32 %v5695, %v5727
        %v5743 = vadd.f32 %v5696, %v5730
        %v5744 = vadd.f32 %v5697, %v5732
        %v5745 = vadd.f32 %v5698, %v5735
        %v5746 = vadd.f32 %v5699, %v5737
        %v5747 = vpack.c.bf16 0.0, %v5286
        %v5750 = vunpack.c.l.b16 %v5302
        %v5751 = vunpack.c.l.b16 %v5303
        %v5752 = vpack.c.b16 %v5751, %v5750
        %v5755 = vsel %vm1264, %v5747, 0
        %5757 = vmatpush.bf16.msra.mxu0 0
        %5758 = vmatpush.bf16.msra.mxu0 0
        %5759 = vmatpush.bf16.msra.mxu0 0
        %5760 = vmatpush.bf16.msra.mxu0 0
        %5761 = vmatpush.bf16.msra.mxu0 0
        %5762 = vmatpush.bf16.msra.mxu0 0
        %5763 = vmatpush.bf16.msra.mxu0 0
        %5764 = vmatpush.bf16.msra.mxu0 %v5752
        %5765 = vmatmul.bf16.gmra.mxu0 %v5352
        %v5766 = vpop.f32.mrf.mxu0
        %v5767 = vadd.f32 0.0, %v5766
        %v5768 = vpop.f32.mrf.mxu0
        %v5769 = vadd.f32 0.0, %v5768
        %5770 = vmatmul.bf16.gmra.mxu0 %v5355
        %v5771 = vpop.f32.mrf.mxu0
        %v5772 = vadd.f32 0.0, %v5771
        %v5773 = vpop.f32.mrf.mxu0
        %v5774 = vadd.f32 0.0, %v5773
        %5775 = vmatmul.bf16.gmra.mxu0 %v5358
        %v5776 = vpop.f32.mrf.mxu0
        %v5777 = vadd.f32 0.0, %v5776
        %v5778 = vpop.f32.mrf.mxu0
        %v5779 = vadd.f32 0.0, %v5778
        %5780 = vmatmul.bf16.gmra.mxu0 %v5755
        %v5781 = vpop.f32.mrf.mxu0
        %v5782 = vadd.f32 0.0, %v5781
        %v5783 = vpop.f32.mrf.mxu0
        %v5784 = vadd.f32 0.0, %v5783
        %5785 = vdwg.mxu0
        %v5786 = vadd.f32 %v5739, %v5767
        %v5787 = vadd.f32 %v5740, %v5769
        %v5788 = vadd.f32 %v5741, %v5772
        %v5789 = vadd.f32 %v5742, %v5774
        %v5790 = vadd.f32 %v5743, %v5777
        %v5791 = vadd.f32 %v5744, %v5779
        %v5792 = vadd.f32 %v5745, %v5782
        %v5793 = vadd.f32 %v5746, %v5784
        %v5794 = vpack.c.bf16 %v1369, %v5640
        %v5797 = vunpack.c.l.b16 %v5304
        %v5798 = vunpack.c.l.b16 %v5305
        %v5799 = vpack.c.b16 %v5798, %v5797
        %v5802 = vsel %vm1264, %v5794, 0
        %5804 = vmatpush.bf16.msra.mxu0 0
        %5805 = vmatpush.bf16.msra.mxu0 0
        %5806 = vmatpush.bf16.msra.mxu0 0
        %5807 = vmatpush.bf16.msra.mxu0 0
        %5808 = vmatpush.bf16.msra.mxu0 0
        %5809 = vmatpush.bf16.msra.mxu0 0
        %5810 = vmatpush.bf16.msra.mxu0 0
        %5811 = vmatpush.bf16.msra.mxu0 %v5799
        %5812 = vmatmul.bf16.gmra.mxu0 %v5471
        %v5813 = vpop.f32.mrf.mxu0
        %v5814 = vadd.f32 0.0, %v5813
        %v5815 = vpop.f32.mrf.mxu0
        %v5816 = vadd.f32 0.0, %v5815
        %5817 = vmatmul.bf16.gmra.mxu0 %v5474
        %v5818 = vpop.f32.mrf.mxu0
        %v5819 = vadd.f32 0.0, %v5818
        %v5820 = vpop.f32.mrf.mxu0
        %v5821 = vadd.f32 0.0, %v5820
        %5822 = vmatmul.bf16.gmra.mxu0 %v5477
        %v5823 = vpop.f32.mrf.mxu0
        %v5824 = vadd.f32 0.0, %v5823
        %v5825 = vpop.f32.mrf.mxu0
        %v5826 = vadd.f32 0.0, %v5825
        %5827 = vmatmul.bf16.gmra.mxu0 %v5802
        %v5828 = vpop.f32.mrf.mxu0
        %v5829 = vadd.f32 0.0, %v5828
        %v5830 = vpop.f32.mrf.mxu0
        %v5831 = vadd.f32 0.0, %v5830
        %5832 = vdwg.mxu0
        %v5833 = vadd.f32 %v5786, %v5814
        %v5834 = vadd.f32 %v5787, %v5816
        %v5835 = vadd.f32 %v5788, %v5819
        %v5836 = vadd.f32 %v5789, %v5821
        %v5837 = vadd.f32 %v5790, %v5824
        %v5838 = vadd.f32 %v5791, %v5826
        %v5839 = vadd.f32 %v5792, %v5829
        %v5840 = vadd.f32 %v5793, %v5831
        %v5841 = vadd.f32 %v5833, %v4718
        %v5842 = vadd.f32 %v5834, %v4719
        %v5843 = vadd.f32 %v5835, %v4720
        %v5844 = vadd.f32 %v5836, %v4721
        %v5845 = vadd.f32 %v5837, %v4722
        %v5846 = vadd.f32 %v5838, %v4723
        %v5847 = vadd.f32 %v5839, %v4724
        %v5848 = vadd.f32 %v5840, %v4725
        %v5849 = vmax.f32 %v5841, 0.0
        %v5850 = vmax.f32 %v5842, 0.0
        %v5851 = vmax.f32 %v5843, 0.0
        %v5852 = vmax.f32 %v5844, 0.0
        %v5853 = vmax.f32 %v5845, 0.0
        %v5854 = vmax.f32 %v5846, 0.0
        %v5855 = vmax.f32 %v5847, 0.0
        %v5856 = vmax.f32 %v5848, 0.0
        %s5857 = scalar_lea.vmem %s1019, 144
        %v5858 = vld [vmem:[%s5857] sm:$0xf]
        %v5859 = vld [vmem:[%s5857 + $0x4] sm:$0xf]
        %v5860 = vld [vmem:[%s5857 + $0x8] sm:$0xf]
        %v5861 = vld [vmem:[%s5857 + $0xc] sm:$0xf]
        %v5862 = vld [vmem:[%s5857 + $0x10] sm:$0xf]
        %v5863 = vld [vmem:[%s5857 + $0x14] sm:$0xf]
        %v5864 = vld [vmem:[%s5857 + $0x18] sm:$0xf]
        %v5865 = vld [vmem:[%s5857 + $0x1c] sm:$0xf]
        %v5866 = vld [vmem:[%s5857 + $0x20] sm:$0xf]
        %v5867 = vld [vmem:[%s5857 + $0x24] sm:$0xf]
        %v5868 = vld [vmem:[%s5857 + $0x28] sm:$0xf]
        %v5869 = vld [vmem:[%s5857 + $0x2c] sm:$0xf]
        %v5870 = vld [vmem:[%s5857 + $0x30] sm:$0xf]
        %v5871 = vld [vmem:[%s5857 + $0x34] sm:$0xf]
        %v5872 = vld [vmem:[%s5857 + $0x38] sm:$0xf]
        %v5873 = vld [vmem:[%s5857 + $0x3c] sm:$0xf]
        %v5874 = vld [vmem:[%s5857 + $0x40] sm:$0xf]
        %v5875 = vld [vmem:[%s5857 + $0x44] sm:$0xf]
        %v5883 = vrot.slane %v5849, 7
        %v5884 = vrot.slane %v5850, 7
        %v5885 = vrot.slane %v5851, 7
        %v5886 = vrot.slane %v5852, 7
        %v5887 = vrot.slane %v5853, 7
        %v5888 = vrot.slane %v5854, 7
        %v5889 = vrot.slane %v5855, 7
        %v5897 = vsel %vm1164, 0.0, %v5883
        %v5898 = vsel %vm1164, 0.0, %v5884
        %v5899 = vsel %vm1164, 0.0, %v5885
        %v5900 = vsel %vm1164, 0.0, %v5886
        %v5901 = vsel %vm1164, 0.0, %v5887
        %v5902 = vsel %vm1164, 0.0, %v5888
        %v5903 = vsel %vm1164, 0.0, %v5889
        %v5904 = vpack.c.bf16 %v5897, %v1242
        %v5905 = vpack.c.bf16 %v5899, %v5898
        %v5906 = vpack.c.bf16 %v5901, %v5900
        %v5907 = vpack.c.bf16 %v5903, %v5902
        %v5908 = vpack.c.bf16 %v5849, 0.0
        %v5909 = vpack.c.bf16 %v5851, %v5850
        %v5910 = vpack.c.bf16 %v5853, %v5852
        %v5911 = vpack.c.bf16 %v5855, %v5854
        %v5914 = vunpack.c.l.b16 %v5860
        %v5915 = vunpack.c.l.b16 %v5861
        %v5916 = vpack.c.b16 %v5915, %v5914
        %v5919 = vsel %vm1264, %v5908, 0
        %v5922 = vsel %vm1264, %v5909, 0
        %v5925 = vsel %vm1264, %v5910, 0
        %v5928 = vsel %vm1264, %v5911, 0
        %5930 = vmatpush.bf16.msra.mxu0 0
        %5931 = vmatpush.bf16.msra.mxu0 0
        %5932 = vmatpush.bf16.msra.mxu0 0
        %5933 = vmatpush.bf16.msra.mxu0 0
        %5934 = vmatpush.bf16.msra.mxu0 0
        %5935 = vmatpush.bf16.msra.mxu0 0
        %5936 = vmatpush.bf16.msra.mxu0 0
        %5937 = vmatpush.bf16.msra.mxu0 %v5916
        %5938 = vmatmul.bf16.gmra.mxu0 %v5919
        %v5939 = vpop.f32.mrf.mxu0
        %v5940 = vadd.f32 0.0, %v5939
        %v5941 = vpop.f32.mrf.mxu0
        %v5942 = vadd.f32 0.0, %v5941
        %5943 = vmatmul.bf16.gmra.mxu0 %v5922
        %v5944 = vpop.f32.mrf.mxu0
        %v5945 = vadd.f32 0.0, %v5944
        %v5946 = vpop.f32.mrf.mxu0
        %v5947 = vadd.f32 0.0, %v5946
        %5948 = vmatmul.bf16.gmra.mxu0 %v5925
        %v5949 = vpop.f32.mrf.mxu0
        %v5950 = vadd.f32 0.0, %v5949
        %v5951 = vpop.f32.mrf.mxu0
        %v5952 = vadd.f32 0.0, %v5951
        %5953 = vmatmul.bf16.gmra.mxu0 %v5928
        %v5954 = vpop.f32.mrf.mxu0
        %v5955 = vadd.f32 0.0, %v5954
        %v5956 = vpop.f32.mrf.mxu0
        %v5957 = vadd.f32 0.0, %v5956
        %5958 = vdwg.mxu0
        %v5961 = vunpack.c.l.b16 %v5858
        %v5962 = vunpack.c.l.b16 %v5859
        %v5963 = vpack.c.b16 %v5962, %v5961
        %v5966 = vsel %vm1264, %v5904, 0
        %v5969 = vsel %vm1264, %v5905, 0
        %v5972 = vsel %vm1264, %v5906, 0
        %v5975 = vsel %vm1264, %v5907, 0
        %5977 = vmatpush.bf16.msra.mxu0 0
        %5978 = vmatpush.bf16.msra.mxu0 0
        %5979 = vmatpush.bf16.msra.mxu0 0
        %5980 = vmatpush.bf16.msra.mxu0 0
        %5981 = vmatpush.bf16.msra.mxu0 0
        %5982 = vmatpush.bf16.msra.mxu0 0
        %5983 = vmatpush.bf16.msra.mxu0 0
        %5984 = vmatpush.bf16.msra.mxu0 %v5963
        %5985 = vmatmul.bf16.gmra.mxu0 %v5966
        %v5986 = vpop.f32.mrf.mxu0
        %v5987 = vadd.f32 %v5940, %v5986
        %v5988 = vpop.f32.mrf.mxu0
        %v5989 = vadd.f32 %v5942, %v5988
        %5990 = vmatmul.bf16.gmra.mxu0 %v5969
        %v5991 = vpop.f32.mrf.mxu0
        %v5992 = vadd.f32 %v5945, %v5991
        %v5993 = vpop.f32.mrf.mxu0
        %v5994 = vadd.f32 %v5947, %v5993
        %5995 = vmatmul.bf16.gmra.mxu0 %v5972
        %v5996 = vpop.f32.mrf.mxu0
        %v5997 = vadd.f32 %v5950, %v5996
        %v5998 = vpop.f32.mrf.mxu0
        %v5999 = vadd.f32 %v5952, %v5998
        %6000 = vmatmul.bf16.gmra.mxu0 %v5975
        %v6001 = vpop.f32.mrf.mxu0
        %v6002 = vadd.f32 %v5955, %v6001
        %v6003 = vpop.f32.mrf.mxu0
        %v6004 = vadd.f32 %v5957, %v6003
        %6005 = vdwg.mxu0
        %v6006 = vrot.slane %v5849, 1
        %v6007 = vrot.slane %v5850, 1
        %v6008 = vrot.slane %v5851, 1
        %v6009 = vrot.slane %v5852, 1
        %v6010 = vrot.slane %v5853, 1
        %v6011 = vrot.slane %v5854, 1
        %v6012 = vrot.slane %v5855, 1
        %v6020 = vsel %vm1098, %v6006, 0.0
        %v6021 = vsel %vm1098, %v6007, 0.0
        %v6022 = vsel %vm1098, %v6008, 0.0
        %v6023 = vsel %vm1098, %v6009, 0.0
        %v6024 = vsel %vm1098, %v6010, 0.0
        %v6025 = vsel %vm1098, %v6011, 0.0
        %v6026 = vsel %vm1098, %v6012, 0.0
        %v6027 = vpack.c.bf16 %v6020, %v1369
        %v6028 = vpack.c.bf16 %v6022, %v6021
        %v6029 = vpack.c.bf16 %v6024, %v6023
        %v6030 = vpack.c.bf16 %v6026, %v6025
        %v6033 = vunpack.c.l.b16 %v5862
        %v6034 = vunpack.c.l.b16 %v5863
        %v6035 = vpack.c.b16 %v6034, %v6033
        %v6038 = vsel %vm1264, %v6027, 0
        %v6041 = vsel %vm1264, %v6028, 0
        %v6044 = vsel %vm1264, %v6029, 0
        %v6047 = vsel %vm1264, %v6030, 0
        %6049 = vmatpush.bf16.msra.mxu0 0
        %6050 = vmatpush.bf16.msra.mxu0 0
        %6051 = vmatpush.bf16.msra.mxu0 0
        %6052 = vmatpush.bf16.msra.mxu0 0
        %6053 = vmatpush.bf16.msra.mxu0 0
        %6054 = vmatpush.bf16.msra.mxu0 0
        %6055 = vmatpush.bf16.msra.mxu0 0
        %6056 = vmatpush.bf16.msra.mxu0 %v6035
        %6057 = vmatmul.bf16.gmra.mxu0 %v6038
        %v6058 = vpop.f32.mrf.mxu0
        %v6059 = vadd.f32 0.0, %v6058
        %v6060 = vpop.f32.mrf.mxu0
        %v6061 = vadd.f32 0.0, %v6060
        %6062 = vmatmul.bf16.gmra.mxu0 %v6041
        %v6063 = vpop.f32.mrf.mxu0
        %v6064 = vadd.f32 0.0, %v6063
        %v6065 = vpop.f32.mrf.mxu0
        %v6066 = vadd.f32 0.0, %v6065
        %6067 = vmatmul.bf16.gmra.mxu0 %v6044
        %v6068 = vpop.f32.mrf.mxu0
        %v6069 = vadd.f32 0.0, %v6068
        %v6070 = vpop.f32.mrf.mxu0
        %v6071 = vadd.f32 0.0, %v6070
        %6072 = vmatmul.bf16.gmra.mxu0 %v6047
        %v6073 = vpop.f32.mrf.mxu0
        %v6074 = vadd.f32 0.0, %v6073
        %v6075 = vpop.f32.mrf.mxu0
        %v6076 = vadd.f32 0.0, %v6075
        %6077 = vdwg.mxu0
        %v6078 = vadd.f32 %v5987, %v6059
        %v6079 = vadd.f32 %v5989, %v6061
        %v6080 = vadd.f32 %v5992, %v6064
        %v6081 = vadd.f32 %v5994, %v6066
        %v6082 = vadd.f32 %v5997, %v6069
        %v6083 = vadd.f32 %v5999, %v6071
        %v6084 = vadd.f32 %v6002, %v6074
        %v6085 = vadd.f32 %v6004, %v6076
        %v6087 = vrot.slane %v5856, 7
        %v6089 = vsel %vm1164, 0.0, %v6087
        %v6090 = vpack.c.bf16 %v5898, %v5897
        %v6091 = vpack.c.bf16 %v5900, %v5899
        %v6092 = vpack.c.bf16 %v5902, %v5901
        %v6093 = vpack.c.bf16 %v6089, %v5903
        %v6096 = vunpack.c.l.b16 %v5864
        %v6097 = vunpack.c.l.b16 %v5865
        %v6098 = vpack.c.b16 %v6097, %v6096
        %v6101 = vsel %vm1264, %v6090, 0
        %v6104 = vsel %vm1264, %v6091, 0
        %v6107 = vsel %vm1264, %v6092, 0
        %v6110 = vsel %vm1264, %v6093, 0
        %6112 = vmatpush.bf16.msra.mxu0 0
        %6113 = vmatpush.bf16.msra.mxu0 0
        %6114 = vmatpush.bf16.msra.mxu0 0
        %6115 = vmatpush.bf16.msra.mxu0 0
        %6116 = vmatpush.bf16.msra.mxu0 0
        %6117 = vmatpush.bf16.msra.mxu0 0
        %6118 = vmatpush.bf16.msra.mxu0 0
        %6119 = vmatpush.bf16.msra.mxu0 %v6098
        %6120 = vmatmul.bf16.gmra.mxu0 %v6101
        %v6121 = vpop.f32.mrf.mxu0
        %v6122 = vadd.f32 0.0, %v6121
        %v6123 = vpop.f32.mrf.mxu0
        %v6124 = vadd.f32 0.0, %v6123
        %6125 = vmatmul.bf16.gmra.mxu0 %v6104
        %v6126 = vpop.f32.mrf.mxu0
        %v6127 = vadd.f32 0.0, %v6126
        %v6128 = vpop.f32.mrf.mxu0
        %v6129 = vadd.f32 0.0, %v6128
        %6130 = vmatmul.bf16.gmra.mxu0 %v6107
        %v6131 = vpop.f32.mrf.mxu0
        %v6132 = vadd.f32 0.0, %v6131
        %v6133 = vpop.f32.mrf.mxu0
        %v6134 = vadd.f32 0.0, %v6133
        %6135 = vmatmul.bf16.gmra.mxu0 %v6110
        %v6136 = vpop.f32.mrf.mxu0
        %v6137 = vadd.f32 0.0, %v6136
        %v6138 = vpop.f32.mrf.mxu0
        %v6139 = vadd.f32 0.0, %v6138
        %6140 = vdwg.mxu0
        %v6141 = vadd.f32 %v6078, %v6122
        %v6142 = vadd.f32 %v6079, %v6124
        %v6143 = vadd.f32 %v6080, %v6127
        %v6144 = vadd.f32 %v6081, %v6129
        %v6145 = vadd.f32 %v6082, %v6132
        %v6146 = vadd.f32 %v6083, %v6134
        %v6147 = vadd.f32 %v6084, %v6137
        %v6148 = vadd.f32 %v6085, %v6139
        %v6149 = vpack.c.bf16 %v5850, %v5849
        %v6150 = vpack.c.bf16 %v5852, %v5851
        %v6151 = vpack.c.bf16 %v5854, %v5853
        %v6152 = vpack.c.bf16 %v5856, %v5855
        %v6155 = vunpack.c.l.b16 %v5866
        %v6156 = vunpack.c.l.b16 %v5867
        %v6157 = vpack.c.b16 %v6156, %v6155
        %v6160 = vsel %vm1264, %v6149, 0
        %v6163 = vsel %vm1264, %v6150, 0
        %v6166 = vsel %vm1264, %v6151, 0
        %v6169 = vsel %vm1264, %v6152, 0
        %6171 = vmatpush.bf16.msra.mxu0 0
        %6172 = vmatpush.bf16.msra.mxu0 0
        %6173 = vmatpush.bf16.msra.mxu0 0
        %6174 = vmatpush.bf16.msra.mxu0 0
        %6175 = vmatpush.bf16.msra.mxu0 0
        %6176 = vmatpush.bf16.msra.mxu0 0
        %6177 = vmatpush.bf16.msra.mxu0 0
        %6178 = vmatpush.bf16.msra.mxu0 %v6157
        %6179 = vmatmul.bf16.gmra.mxu0 %v6160
        %v6180 = vpop.f32.mrf.mxu0
        %v6181 = vadd.f32 0.0, %v6180
        %v6182 = vpop.f32.mrf.mxu0
        %v6183 = vadd.f32 0.0, %v6182
        %6184 = vmatmul.bf16.gmra.mxu0 %v6163
        %v6185 = vpop.f32.mrf.mxu0
        %v6186 = vadd.f32 0.0, %v6185
        %v6187 = vpop.f32.mrf.mxu0
        %v6188 = vadd.f32 0.0, %v6187
        %6189 = vmatmul.bf16.gmra.mxu0 %v6166
        %v6190 = vpop.f32.mrf.mxu0
        %v6191 = vadd.f32 0.0, %v6190
        %v6192 = vpop.f32.mrf.mxu0
        %v6193 = vadd.f32 0.0, %v6192
        %6194 = vmatmul.bf16.gmra.mxu0 %v6169
        %v6195 = vpop.f32.mrf.mxu0
        %v6196 = vadd.f32 0.0, %v6195
        %v6197 = vpop.f32.mrf.mxu0
        %v6198 = vadd.f32 0.0, %v6197
        %6199 = vdwg.mxu0
        %v6200 = vadd.f32 %v6141, %v6181
        %v6201 = vadd.f32 %v6142, %v6183
        %v6202 = vadd.f32 %v6143, %v6186
        %v6203 = vadd.f32 %v6144, %v6188
        %v6204 = vadd.f32 %v6145, %v6191
        %v6205 = vadd.f32 %v6146, %v6193
        %v6206 = vadd.f32 %v6147, %v6196
        %v6207 = vadd.f32 %v6148, %v6198
        %v6208 = vrot.slane %v5856, 1
        %v6210 = vsel %vm1098, %v6208, 0.0
        %v6211 = vpack.c.bf16 %v6021, %v6020
        %v6212 = vpack.c.bf16 %v6023, %v6022
        %v6213 = vpack.c.bf16 %v6025, %v6024
        %v6214 = vpack.c.bf16 %v6210, %v6026
        %v6217 = vunpack.c.l.b16 %v5868
        %v6218 = vunpack.c.l.b16 %v5869
        %v6219 = vpack.c.b16 %v6218, %v6217
        %v6222 = vsel %vm1264, %v6211, 0
        %v6225 = vsel %vm1264, %v6212, 0
        %v6228 = vsel %vm1264, %v6213, 0
        %v6231 = vsel %vm1264, %v6214, 0
        %6233 = vmatpush.bf16.msra.mxu0 0
        %6234 = vmatpush.bf16.msra.mxu0 0
        %6235 = vmatpush.bf16.msra.mxu0 0
        %6236 = vmatpush.bf16.msra.mxu0 0
        %6237 = vmatpush.bf16.msra.mxu0 0
        %6238 = vmatpush.bf16.msra.mxu0 0
        %6239 = vmatpush.bf16.msra.mxu0 0
        %6240 = vmatpush.bf16.msra.mxu0 %v6219
        %6241 = vmatmul.bf16.gmra.mxu0 %v6222
        %v6242 = vpop.f32.mrf.mxu0
        %v6243 = vadd.f32 0.0, %v6242
        %v6244 = vpop.f32.mrf.mxu0
        %v6245 = vadd.f32 0.0, %v6244
        %6246 = vmatmul.bf16.gmra.mxu0 %v6225
        %v6247 = vpop.f32.mrf.mxu0
        %v6248 = vadd.f32 0.0, %v6247
        %v6249 = vpop.f32.mrf.mxu0
        %v6250 = vadd.f32 0.0, %v6249
        %6251 = vmatmul.bf16.gmra.mxu0 %v6228
        %v6252 = vpop.f32.mrf.mxu0
        %v6253 = vadd.f32 0.0, %v6252
        %v6254 = vpop.f32.mrf.mxu0
        %v6255 = vadd.f32 0.0, %v6254
        %6256 = vmatmul.bf16.gmra.mxu0 %v6231
        %v6257 = vpop.f32.mrf.mxu0
        %v6258 = vadd.f32 0.0, %v6257
        %v6259 = vpop.f32.mrf.mxu0
        %v6260 = vadd.f32 0.0, %v6259
        %6261 = vdwg.mxu0
        %v6262 = vadd.f32 %v6200, %v6243
        %v6263 = vadd.f32 %v6201, %v6245
        %v6264 = vadd.f32 %v6202, %v6248
        %v6265 = vadd.f32 %v6203, %v6250
        %v6266 = vadd.f32 %v6204, %v6253
        %v6267 = vadd.f32 %v6205, %v6255
        %v6268 = vadd.f32 %v6206, %v6258
        %v6269 = vadd.f32 %v6207, %v6260
        %v6270 = vpack.c.bf16 %v1242, %v6089
        %v6273 = vunpack.c.l.b16 %v5870
        %v6274 = vunpack.c.l.b16 %v5871
        %v6275 = vpack.c.b16 %v6274, %v6273
        %v6278 = vsel %vm1264, %v6270, 0
        %6280 = vmatpush.bf16.msra.mxu0 0
        %6281 = vmatpush.bf16.msra.mxu0 0
        %6282 = vmatpush.bf16.msra.mxu0 0
        %6283 = vmatpush.bf16.msra.mxu0 0
        %6284 = vmatpush.bf16.msra.mxu0 0
        %6285 = vmatpush.bf16.msra.mxu0 0
        %6286 = vmatpush.bf16.msra.mxu0 0
        %6287 = vmatpush.bf16.msra.mxu0 %v6275
        %6288 = vmatmul.bf16.gmra.mxu0 %v5969
        %v6289 = vpop.f32.mrf.mxu0
        %v6290 = vadd.f32 0.0, %v6289
        %v6291 = vpop.f32.mrf.mxu0
        %v6292 = vadd.f32 0.0, %v6291
        %6293 = vmatmul.bf16.gmra.mxu0 %v5972
        %v6294 = vpop.f32.mrf.mxu0
        %v6295 = vadd.f32 0.0, %v6294
        %v6296 = vpop.f32.mrf.mxu0
        %v6297 = vadd.f32 0.0, %v6296
        %6298 = vmatmul.bf16.gmra.mxu0 %v5975
        %v6299 = vpop.f32.mrf.mxu0
        %v6300 = vadd.f32 0.0, %v6299
        %v6301 = vpop.f32.mrf.mxu0
        %v6302 = vadd.f32 0.0, %v6301
        %6303 = vmatmul.bf16.gmra.mxu0 %v6278
        %v6304 = vpop.f32.mrf.mxu0
        %v6305 = vadd.f32 0.0, %v6304
        %v6306 = vpop.f32.mrf.mxu0
        %v6307 = vadd.f32 0.0, %v6306
        %6308 = vdwg.mxu0
        %v6309 = vadd.f32 %v6262, %v6290
        %v6310 = vadd.f32 %v6263, %v6292
        %v6311 = vadd.f32 %v6264, %v6295
        %v6312 = vadd.f32 %v6265, %v6297
        %v6313 = vadd.f32 %v6266, %v6300
        %v6314 = vadd.f32 %v6267, %v6302
        %v6315 = vadd.f32 %v6268, %v6305
        %v6316 = vadd.f32 %v6269, %v6307
        %v6317 = vpack.c.bf16 0.0, %v5856
        %v6320 = vunpack.c.l.b16 %v5872
        %v6321 = vunpack.c.l.b16 %v5873
        %v6322 = vpack.c.b16 %v6321, %v6320
        %v6325 = vsel %vm1264, %v6317, 0
        %6327 = vmatpush.bf16.msra.mxu0 0
        %6328 = vmatpush.bf16.msra.mxu0 0
        %6329 = vmatpush.bf16.msra.mxu0 0
        %6330 = vmatpush.bf16.msra.mxu0 0
        %6331 = vmatpush.bf16.msra.mxu0 0
        %6332 = vmatpush.bf16.msra.mxu0 0
        %6333 = vmatpush.bf16.msra.mxu0 0
        %6334 = vmatpush.bf16.msra.mxu0 %v6322
        %6335 = vmatmul.bf16.gmra.mxu0 %v5922
        %v6336 = vpop.f32.mrf.mxu0
        %v6337 = vadd.f32 0.0, %v6336
        %v6338 = vpop.f32.mrf.mxu0
        %v6339 = vadd.f32 0.0, %v6338
        %6340 = vmatmul.bf16.gmra.mxu0 %v5925
        %v6341 = vpop.f32.mrf.mxu0
        %v6342 = vadd.f32 0.0, %v6341
        %v6343 = vpop.f32.mrf.mxu0
        %v6344 = vadd.f32 0.0, %v6343
        %6345 = vmatmul.bf16.gmra.mxu0 %v5928
        %v6346 = vpop.f32.mrf.mxu0
        %v6347 = vadd.f32 0.0, %v6346
        %v6348 = vpop.f32.mrf.mxu0
        %v6349 = vadd.f32 0.0, %v6348
        %6350 = vmatmul.bf16.gmra.mxu0 %v6325
        %v6351 = vpop.f32.mrf.mxu0
        %v6352 = vadd.f32 0.0, %v6351
        %v6353 = vpop.f32.mrf.mxu0
        %v6354 = vadd.f32 0.0, %v6353
        %6355 = vdwg.mxu0
        %v6356 = vadd.f32 %v6309, %v6337
        %v6357 = vadd.f32 %v6310, %v6339
        %v6358 = vadd.f32 %v6311, %v6342
        %v6359 = vadd.f32 %v6312, %v6344
        %v6360 = vadd.f32 %v6313, %v6347
        %v6361 = vadd.f32 %v6314, %v6349
        %v6362 = vadd.f32 %v6315, %v6352
        %v6363 = vadd.f32 %v6316, %v6354
        %v6364 = vpack.c.bf16 %v1369, %v6210
        %v6367 = vunpack.c.l.b16 %v5874
        %v6368 = vunpack.c.l.b16 %v5875
        %v6369 = vpack.c.b16 %v6368, %v6367
        %v6372 = vsel %vm1264, %v6364, 0
        %6374 = vmatpush.bf16.msra.mxu0 0
        %6375 = vmatpush.bf16.msra.mxu0 0
        %6376 = vmatpush.bf16.msra.mxu0 0
        %6377 = vmatpush.bf16.msra.mxu0 0
        %6378 = vmatpush.bf16.msra.mxu0 0
        %6379 = vmatpush.bf16.msra.mxu0 0
        %6380 = vmatpush.bf16.msra.mxu0 0
        %6381 = vmatpush.bf16.msra.mxu0 %v6369
        %6382 = vmatmul.bf16.gmra.mxu0 %v6041
        %v6383 = vpop.f32.mrf.mxu0
        %v6384 = vadd.f32 0.0, %v6383
        %v6385 = vpop.f32.mrf.mxu0
        %v6386 = vadd.f32 0.0, %v6385
        %6387 = vmatmul.bf16.gmra.mxu0 %v6044
        %v6388 = vpop.f32.mrf.mxu0
        %v6389 = vadd.f32 0.0, %v6388
        %v6390 = vpop.f32.mrf.mxu0
        %v6391 = vadd.f32 0.0, %v6390
        %6392 = vmatmul.bf16.gmra.mxu0 %v6047
        %v6393 = vpop.f32.mrf.mxu0
        %v6394 = vadd.f32 0.0, %v6393
        %v6395 = vpop.f32.mrf.mxu0
        %v6396 = vadd.f32 0.0, %v6395
        %6397 = vmatmul.bf16.gmra.mxu0 %v6372
        %v6398 = vpop.f32.mrf.mxu0
        %v6399 = vadd.f32 0.0, %v6398
        %v6400 = vpop.f32.mrf.mxu0
        %v6401 = vadd.f32 0.0, %v6400
        %6402 = vdwg.mxu0
        %v6403 = vadd.f32 %v6356, %v6384
        %v6404 = vadd.f32 %v6357, %v6386
        %v6405 = vadd.f32 %v6358, %v6389
        %v6406 = vadd.f32 %v6359, %v6391
        %v6407 = vadd.f32 %v6360, %v6394
        %v6408 = vadd.f32 %v6361, %v6396
        %v6409 = vadd.f32 %v6362, %v6399
        %v6410 = vadd.f32 %v6363, %v6401
        %v6411 = vld [vmem:[%s1022] sm:$0x1]
        %v6413 = vperm.slane %v6411, 0
        %v6415 = vadd.f32 %v6403, %v6413
        %v6416 = vadd.f32 %v6404, %v6413
        %v6417 = vadd.f32 %v6405, %v6413
        %v6418 = vadd.f32 %v6406, %v6413
        %v6419 = vadd.f32 %v6407, %v6413
        %v6420 = vadd.f32 %v6408, %v6413
        %v6421 = vadd.f32 %v6409, %v6413
        %v6422 = vadd.f32 %v6410, %v6413
        %v6423 = vpack.c.bf16 %v6416, %v6415
        %v6424 = vpack.c.bf16 %v6418, %v6417
        %v6425 = vpack.c.bf16 %v6420, %v6419
        %v6426 = vpack.c.bf16 %v6422, %v6421
        %v6427 = vld [vmem:[%s1027] sm:$0xf]
        %v6428 = vld [vmem:[%s1027 + $0x4] sm:$0xf]
        %v6431 = vunpack.c.l.b16 %v6427
        %v6432 = vunpack.c.l.b16 %v6428
        %v6433 = vpack.c.b16 %v6432, %v6431
        %v6436 = vsel %vm1264, %v6423, 0
        %v6439 = vsel %vm1264, %v6424, 0
        %v6442 = vsel %vm1264, %v6425, 0
        %v6445 = vsel %vm1264, %v6426, 0
        %6447 = vmatpush.bf16.msra.mxu0 0
        %6448 = vmatpush.bf16.msra.mxu0 0
        %6449 = vmatpush.bf16.msra.mxu0 0
        %6450 = vmatpush.bf16.msra.mxu0 0
        %6451 = vmatpush.bf16.msra.mxu0 0
        %6452 = vmatpush.bf16.msra.mxu0 0
        %6453 = vmatpush.bf16.msra.mxu0 0
        %6454 = vmatpush.bf16.msra.mxu0 %v6433
        %6455 = vmatmul.bf16.gmra.mxu0 %v6436
        %v6456 = vpop.f32.mrf.mxu0
        %v6457 = vadd.f32 0.0, %v6456
        %v6458 = vpop.f32.mrf.mxu0
        %v6459 = vadd.f32 0.0, %v6458
        %6460 = vmatmul.bf16.gmra.mxu0 %v6439
        %v6461 = vpop.f32.mrf.mxu0
        %v6462 = vadd.f32 0.0, %v6461
        %v6463 = vpop.f32.mrf.mxu0
        %v6464 = vadd.f32 0.0, %v6463
        %6465 = vmatmul.bf16.gmra.mxu0 %v6442
        %v6466 = vpop.f32.mrf.mxu0
        %v6467 = vadd.f32 0.0, %v6466
        %v6468 = vpop.f32.mrf.mxu0
        %v6469 = vadd.f32 0.0, %v6468
        %6470 = vmatmul.bf16.gmra.mxu0 %v6445
        %v6471 = vpop.f32.mrf.mxu0
        %v6472 = vadd.f32 0.0, %v6471
        %v6473 = vpop.f32.mrf.mxu0
        %v6474 = vadd.f32 0.0, %v6473
        %6475 = vdwg.mxu0
        %v6476 = vadd.f32 %v1050, %v6457
        %v6477 = vadd.f32 %v1051, %v6459
        %v6478 = vadd.f32 %v1052, %v6462
        %v6479 = vadd.f32 %v1053, %v6464
        %v6480 = vadd.f32 %v1054, %v6467
        %v6481 = vadd.f32 %v1055, %v6469
        %v6482 = vadd.f32 %v1056, %v6472
        %v6483 = vadd.f32 %v1057, %v6474
        %v6484 = vld [vmem:[%s1030] sm:$0x1]
        %v6486 = vperm.slane %v6484, 0
        %v6488 = vadd.f32 %v6476, %v6486
        %v6489 = vadd.f32 %v6477, %v6486
        %v6490 = vadd.f32 %v6478, %v6486
        %v6491 = vadd.f32 %v6479, %v6486
        %v6492 = vadd.f32 %v6480, %v6486
        %v6493 = vadd.f32 %v6481, %v6486
        %v6494 = vadd.f32 %v6482, %v6486
        %v6495 = vadd.f32 %v6483, %v6486
        %6496 = vst.msk [vmem:[%s943] sm:$0xff] %vm1085, %v6488
        %6497 = vst.msk [vmem:[%s943 + $0x8] sm:$0xff] %vm1085, %v6489
        %6498 = vst.msk [vmem:[%s943 + $0x10] sm:$0xff] %vm1085, %v6490
        %6499 = vst.msk [vmem:[%s943 + $0x18] sm:$0xff] %vm1085, %v6491
        %6500 = vst.msk [vmem:[%s943 + $0x20] sm:$0xff] %vm1085, %v6492
        %6501 = vst.msk [vmem:[%s943 + $0x28] sm:$0xff] %vm1085, %v6493
        %6502 = vst.msk [vmem:[%s943 + $0x30] sm:$0xff] %vm1085, %v6494
        %6503 = vst.msk [vmem:[%s943 + $0x38] sm:$0xff] %vm1085, %v6495
        %p6504 = scmp.eq.s32.totalorder %s43, 7
        // Predicated region
        $region113: #{modelnet_forward.1} parent=103 // pred_check
          %p6505 = pneg %p6504
        $region114: #{modelnet_forward.1} parent=103 // pred_check_branch
          %6507 = sbr.rel (%p6505) target = $region116
        $region115: #{modelnet_forward.1} parent=103 // pred_region
          %v6508 = vpack.c.bf16 %v6489, %v6488
          %v6509 = vpack.c.bf16 %v6491, %v6490
          %v6510 = vpack.c.bf16 %v6493, %v6492
          %v6511 = vpack.c.bf16 %v6495, %v6494
          %v6512 = vld [vmem:[%s1] sm:$0xf]
          %v6513 = vld [vmem:[%s1 + $0x4] sm:$0xf]
          %v6514 = vld [vmem:[%s1 + $0x8] sm:$0xf]
          %v6515 = vld [vmem:[%s1 + $0xc] sm:$0xf]
          %v6520 = vunpack.c.l.b16 %v6512
          %v6521 = vunpack.c.l.b16 %v6513
          %v6522 = vunpack.c.l.b16 %v6514
          %v6523 = vunpack.c.l.b16 %v6515
          %v6524 = vpack.c.b16 %v6521, %v6520
          %v6525 = vpack.c.b16 %v6523, %v6522
          %v6528 = vsel %vm1085, %v6508, 0
          %v6531 = vsel %vm1085, %v6509, 0
          %v6534 = vsel %vm1085, %v6510, 0
          %v6537 = vsel %vm1085, %v6511, 0
          %v6540 = vand.u32 %v6525, %v1101
          %6542 = vmatpush.bf16.msra.mxu0 0
          %6543 = vmatpush.bf16.msra.mxu0 0
          %6544 = vmatpush.bf16.msra.mxu0 0
          %6545 = vmatpush.bf16.msra.mxu0 0
          %6546 = vmatpush.bf16.msra.mxu0 0
          %6547 = vmatpush.bf16.msra.mxu0 0
          %6548 = vmatpush.bf16.msra.mxu0 %v6540
          %6549 = vmatpush.bf16.msra.mxu0 %v6524
          %6550 = vmatmul.bf16.gmra.mxu0 %v6528
          %v6551 = vpop.f32.mrf.mxu0
          %v6552 = vadd.f32 0.0, %v6551
          %v6553 = vpop.f32.mrf.mxu0
          %v6554 = vadd.f32 0.0, %v6553
          %6555 = vmatmul.bf16.gmra.mxu0 %v6531
          %v6556 = vpop.f32.mrf.mxu0
          %v6557 = vadd.f32 0.0, %v6556
          %v6558 = vpop.f32.mrf.mxu0
          %v6559 = vadd.f32 0.0, %v6558
          %6560 = vmatmul.bf16.gmra.mxu0 %v6534
          %v6561 = vpop.f32.mrf.mxu0
          %v6562 = vadd.f32 0.0, %v6561
          %v6563 = vpop.f32.mrf.mxu0
          %v6564 = vadd.f32 0.0, %v6563
          %6565 = vmatmul.bf16.gmra.mxu0 %v6537
          %v6566 = vpop.f32.mrf.mxu0
          %v6567 = vadd.f32 0.0, %v6566
          %v6568 = vpop.f32.mrf.mxu0
          %v6569 = vadd.f32 0.0, %v6568
          %6570 = vdwg.mxu0
          %6571 = vst.msk [vmem:[%s1035] sm:$0xff] %vm1151, %v6552
          %6572 = vst.msk [vmem:[%s1035 + $0x8] sm:$0xff] %vm1151, %v6554
          %6573 = vst.msk [vmem:[%s1035 + $0x10] sm:$0xff] %vm1151, %v6557
          %6574 = vst.msk [vmem:[%s1035 + $0x18] sm:$0xff] %vm1151, %v6559
          %6575 = vst.msk [vmem:[%s1035 + $0x20] sm:$0xff] %vm1151, %v6562
          %6576 = vst.msk [vmem:[%s1035 + $0x28] sm:$0xff] %vm1151, %v6564
          %6577 = vst.msk [vmem:[%s1035 + $0x30] sm:$0xff] %vm1151, %v6567
          %6578 = vst.msk [vmem:[%s1035 + $0x38] sm:$0xff] %vm1151, %v6569
        $region116: #{modelnet_forward.1} parent=103 // pred_fallthru
          _
        %s6579 = sand.u32 %s594, 1
        %s6580 = scalar_lea.sflag [#allocation3], %s6579
        %s6581 = sand.u32 %s594, 1
        %s6582 = smul.addr %s6581, 64
        %s6583 = scalar_lea.vmem [#allocation5], %s6582
        %p6584 = scmp.lt.s32.totalorder %s42, 1
        %s6585 = scalar_select %p6584, %s42, 1
        %s6586 = smul.addr %s6585, 8
        %s6587 = smul.addr %s6586, 8
        %s6588 = scalar_lea.vmem %s22, %s6587
        // Predicated region
        $region117: #{modelnet_forward.1} parent=103 // pred_check
          %p6589 = pneg %p604
        $region118: #{modelnet_forward.1} parent=103 // pred_check_branch
          %6591 = sbr.rel (%p6589) target = $region120
        $region119: #{modelnet_forward.1} parent=103 // pred_region
          %6593 = vsyncadd %s6580, 0
          %s6594 = smul.addr %s42, 8
          %s6595 = smul.addr %s6594, 8
          %s6596 = scalar_lea.hbm %s21, %s6595
          %s6597 = sshll.u32 %s6583, 4
          %s6598 = int_to_ptr.vmem [resolvable:$true] %s6597
          %s6599 = sshll.u32 %s6596, 4
          %s6600 = int_to_ptr.hbm [resolvable:$true] %s6599
          %6605 = dma.vmem_to_hbm [thread:$0]  %s6598, 1024, %s6600, %s6580, 128, 128, 8
        $region120: #{modelnet_forward.1} parent=103 // pred_fallthru
          _
        // Predicated region
        $region121: #{modelnet_forward.1} parent=103 // pred_check
          %p6606 = pneg %p630
        $region122: #{modelnet_forward.1} parent=103 // pred_check_branch
          %6608 = sbr.rel (%p6606) target = $region124
        $region123: #{modelnet_forward.1} parent=103 // pred_region
          _
        $region124: #{modelnet_forward.1} parent=103 // pred_fallthru
          _
      $region104: #{modelnet_forward.1} parent=5 // pred_fallthru
        _
      %p6609 = scmp.le.s32.totalorder 2, %s33
      // Predicated region
      $region125: #{modelnet_forward.1} parent=5 // pred_check
        %p6610 = pneg %p6609
      $region126: #{modelnet_forward.1} parent=5 // pred_check_branch
        %6612 = sbr.rel (%p6610) target = $region128
      $region127: #{modelnet_forward.1} parent=5 // pred_region
        %s6613 = ssub.s32 %s33, 2
        // Predicated region
        $region129: #{modelnet_forward.1} parent=127 // pred_check
          %p6614 = pneg %p610
        $region130: #{modelnet_forward.1} parent=127 // pred_check_branch
          %6616 = sbr.rel (%p6614) target = $region132
        $region131: #{modelnet_forward.1} parent=127 // pred_region
          %s6617 = sand.u32 %s595, 1
          %s6618 = scalar_lea.sflag [#allocation3], %s6617
          %s6619 = sand.u32 %s595, 1
          %s6620 = smul.addr %s6619, 64
          %s6621 = scalar_lea.vmem [#allocation5], %s6620
          %6623 = dma.done %s6618, 1024
        $region132: #{modelnet_forward.1} parent=127 // pred_fallthru
          _
        // Predicated region
        $region133: #{modelnet_forward.1} parent=127 // pred_check
          %p6624 = pneg %p636
        $region134: #{modelnet_forward.1} parent=127 // pred_check_branch
          %6626 = sbr.rel (%p6624) target = $region136
        $region135: #{modelnet_forward.1} parent=127 // pred_region
          %p6627 = scmp.lt.s32.totalorder %s44, 1
          %s6628 = scalar_select %p6627, %s44, 1
          %s6629 = smul.addr %s6628, 8
          %s6630 = smul.addr %s6629, 8
          %s6631 = scalar_lea.vmem %s22, %s6630
        $region136: #{modelnet_forward.1} parent=127 // pred_fallthru
          _
      $region128: #{modelnet_forward.1} parent=5 // pred_fallthru
        _
    $region6: #{modelnet_forward.1} parent=1 // loop_footer
      %s37 = sadd.s32 1, %s33
    $region7: #{modelnet_forward.1} parent=1 // loop_footer_branch
      %32 = sbr.rel target = $region3
    $region8: #{modelnet_forward.1} parent=1 // loop_exit
      _
    %6632 = vsyncpa [#allocation3], 1
    %s6633 = scalar_lea.sflag [#allocation3], 1
    %6634 = vsyncpa %s6633, 1
    %6635 = vsyncpa [#allocation4], 1
    %s6636 = scalar_lea.sflag [#allocation4], 1
    %6637 = vsyncpa %s6636, 1

</llo_original>
